<compile_context>
chip_gen: v7x
topology: tpu7x:2x2x1
jax: 0.10.0
libtpu: 0.0.40
codegen_flags: <defaults>
</compile_context>

<pallas_src>
import functools
import math

import jax
import jax.numpy as jnp
from jax.experimental import pallas as pl
from jax.experimental.pallas import tpu as pltpu


def _stransformer_kernel(
    q_ref, k_ref, v_ref,            # (M, C) data slabs, M = T*N, rows are (t, n)
    adj_big_ref,                    # (M, M) block-diag (over T) normalized adjacency
    ds_ref,                         # (N, C) spatial embedding
    w_pack_ref,                     # (6, C, C): Wq, Wk, Wv (block-diag over heads), w_fc, w_fs, w_fg
    gcn_w1_ref, gcn_w2_ref,         # (C, 2C), (2C, C)
    w_ff1_ref, w_ff2_ref,           # (C, FE), (FE, C)
    bias_c_ref,                     # (9, C): gcn_b2, b_fc, g1, b1, g2, b2, b_ff2, b_fs, b_fg
    gcn_b1_ref, b_ff1_ref,          # (1, 2C), (1, FE)
    out_ref,                        # (M, C)
    *, heads, n_nodes, n_time):
    eps = 1e-5
    f32 = jnp.float32
    N, T, H = n_nodes, n_time, heads

    q = q_ref[...].astype(f32)            # (M, C)  original query (GCN input)
    k = k_ref[...].astype(f32)
    v = v_ref[...].astype(f32)
    adj_big = adj_big_ref[...]            # (M, M)
    d_s = ds_ref[...]                     # (N, C)
    bias_c = bias_c_ref[...]              # (9, C)

    M, C = q.shape
    per_dim = C // H
    scale = 1.0 / math.sqrt(float(C))

    def brow(i):                          # (1, C) bias row
        return bias_c[i:i + 1, :]

    # ---------------- GCN branch (original query, normalized adjacency) ----------
    # adj_big is block-diagonal over T, so one matmul applies adj_n per timestep
    # to all T slabs at once.
    s1 = jnp.dot(q, gcn_w1_ref[...], preferred_element_type=f32)           # (M, 2C)
    h1 = jnp.dot(adj_big, s1, preferred_element_type=f32) + gcn_b1_ref[...]
    h1 = jnp.maximum(h1, 0.0)
    # TODO(synk): F.dropout between gc1 and gc2 is inference-mode identity here.
    s2 = jnp.dot(h1, gcn_w2_ref[...], preferred_element_type=f32)          # (M, C)
    h2 = jnp.dot(adj_big, s2, preferred_element_type=f32) + brow(0)
    h2m = h2 - jnp.max(h2, axis=-1, keepdims=True)
    x_g = h2m - jnp.log(jnp.sum(jnp.exp(h2m), axis=-1, keepdims=True))     # (M, C)

    # ---------------- add spatial embedding (broadcast over T) -------------------
    d_s3 = d_s[None, :, :]                                                 # (1, N, C)
    q3 = q.reshape(T, N, C) + d_s3                                         # layout no-op reshape
    k3 = k.reshape(T, N, C) + d_s3
    v3 = v.reshape(T, N, C) + d_s3
    q_plus = q3.reshape(M, C)
    k_plus = k3.reshape(M, C)
    v_plus = v3.reshape(M, C)

    # ---------------- spatial self-attention (reference quirks preserved) --------
    # NOTE: in the reference, `query` is overwritten by `values`, so queries are
    # projected from the value tensor; softmax is over the *query* node axis and
    # the scale is 1/sqrt(embed_size).
    qp = jnp.dot(v_plus, w_pack_ref[0], preferred_element_type=f32)        # (M, C)
    kp = jnp.dot(k_plus, w_pack_ref[1], preferred_element_type=f32)
    vp = jnp.dot(v_plus, w_pack_ref[2], preferred_element_type=f32)

    qp = (qp * scale).reshape(T, N, C)                                     # scale folded in once
    kp = kp.reshape(T, N, C)
    vp = vp.reshape(T, N, C)

    lane = jax.lax.broadcasted_iota(jnp.int32, (1, 1, C), 2)               # (1,1,C)

    attn3 = None
    for h in range(H):
        hm = (lane >= h * per_dim) & (lane < (h + 1) * per_dim)            # head lane mask
        k_h = jnp.where(hm, kp, 0.0)                                       # (T, N, C)
        v_h = jnp.where(hm, vp, 0.0)
        # per-timestep (N, N) scores for this head; no cross-timestep waste, no mask
        s = jnp.einsum('tqc,tkc->tqk', qp, k_h,
                       preferred_element_type=f32)                         # (T, N, N)
        s = s - jnp.max(s, axis=1, keepdims=True)                          # softmax over q axis
        p = jnp.exp(s)
        a = p * pl.reciprocal(jnp.sum(p, axis=1, keepdims=True), approx=True)
        o_h = jnp.einsum('tqk,tkc->tqc', a, v_h,
                         preferred_element_type=f32)                       # (T, N, C), head cols only
        attn3 = o_h if attn3 is None else attn3 + o_h

    attn_out = jnp.dot(attn3.reshape(M, C), w_pack_ref[3],
                       preferred_element_type=f32) + brow(1)               # fc

    # ---------------- norm1 (LayerNorm over embed); dropout -> identity ----------
    x1 = attn_out + q_plus
    m1 = jnp.mean(x1, axis=-1, keepdims=True)
    var1 = jnp.mean((x1 - m1) ** 2, axis=-1, keepdims=True)
    m_s = (x1 - m1) * jax.lax.rsqrt(var1 + eps) * brow(2) + brow(3)

    # ---------------- feed forward ----------------
    f = jnp.dot(m_s, w_ff1_ref[...], preferred_element_type=f32) + b_ff1_ref[...]
    f = jnp.maximum(f, 0.0)
    f = jnp.dot(f, w_ff2_ref[...], preferred_element_type=f32) + brow(6)

    # ---------------- norm2; dropout -> identity ----------------
    x2 = f + m_s
    m2 = jnp.mean(x2, axis=-1, keepdims=True)
    var2 = jnp.mean((x2 - m2) ** 2, axis=-1, keepdims=True)
    u_s = (x2 - m2) * jax.lax.rsqrt(var2 + eps) * brow(4) + brow(5)

    # ---------------- gated fusion ----------------
    gs = jnp.dot(u_s, w_pack_ref[4], preferred_element_type=f32) + brow(7)
    gg = jnp.dot(x_g, w_pack_ref[5], preferred_element_type=f32) + brow(8)
    g = jax.nn.sigmoid(gs + gg)
    out_ref[...] = (g * u_s + (1.0 - g) * x_g).astype(out_ref.dtype)


def stransformer_forward(query, key, value, adj, params, *, heads):
    B, N, T, C = query.shape
    M = T * N
    eps = 1e-5

    # ---- hoisted, grid-invariant precomputation (tiny XLA ops) ----
    adj = adj.astype(jnp.float32)
    a_mean = jnp.mean(adj)
    a_var = jnp.mean((adj - a_mean) ** 2)
    adj_n = (adj - a_mean) * jax.lax.rsqrt(a_var + eps)          # InstanceNorm2d(1)
    adj_big = jnp.kron(jnp.eye(T, dtype=jnp.float32), adj_n)     # (M, M) block-diag over T

    # D_S = embed_linear(D_S parameter)  (parameter == un-normalized adj at init)
    d_s = jnp.dot(adj, params["w_embed"]) + params["b_embed"]    # (N, C)

    eye_h = jnp.eye(heads, dtype=jnp.float32)
    w_pack = jnp.stack([jnp.kron(eye_h, params["wq"]),           # block-diag over heads
                        jnp.kron(eye_h, params["wk"]),
                        jnp.kron(eye_h, params["wv"]),
                        params["w_fc"], params["w_fs"], params["w_fg"]])  # (6, C, C)

    bias_c = jnp.concatenate(
        [params["gcn_b2"], params["b_fc"],
         params["gamma1"], params["beta1"], params["gamma2"], params["beta2"],
         params["b_ff2"], params["b_fs"], params["b_fg"]], axis=0)        # (9, C)

    # ---- contiguous, per-batch (T*N, C) slabs for the kernel ----
    q2 = jnp.transpose(query, (0, 2, 1, 3)).reshape(B, M, C)
    k2 = jnp.transpose(key, (0, 2, 1, 3)).reshape(B, M, C)
    v2 = jnp.transpose(value, (0, 2, 1, 3)).reshape(B, M, C)

    data_spec = pl.BlockSpec((None, M, C), lambda b: (b, 0, 0))

    def const_spec(x):
        nd = x.ndim
        return pl.BlockSpec(x.shape, lambda b, _nd=nd: (0,) * _nd)

    consts = [adj_big, d_s, w_pack,
              params["gcn_w1"], params["gcn_w2"],
              params["w_ff1"], params["w_ff2"],
              bias_c, params["gcn_b1"], params["b_ff1"]]

    kernel = functools.partial(_stransformer_kernel, heads=heads, n_nodes=N, n_time=T)

    out2 = pl.pallas_call(
        kernel,
        out_shape=jax.ShapeDtypeStruct((B, M, C), query.dtype),
        grid=(B,),
        in_specs=[data_spec, data_spec, data_spec] + [const_spec(c) for c in consts],
        out_specs=data_spec,
        compiler_params=pltpu.CompilerParams(
            dimension_semantics=("parallel",)),   # B >= 2 -> shards across v7x's 2 TCs
    )(q2, k2, v2, *consts)

    return jnp.transpose(out2.reshape(B, T, N, C), (0, 2, 1, 3))


def init_params(key, N, C, heads, forward_expansion):
    ks = jax.random.split(key, 20)
    per_dim = C // heads
    fe = forward_expansion * C

    def u(k, shape, fan):
        b = 1.0 / math.sqrt(fan)
        return jax.random.uniform(k, shape, jnp.float32, -b, b)

    return {
        "w_embed": u(ks[0], (N, C), N),          # Linear(N, C), stored (in, out)
        "b_embed": u(ks[1], (1, C), N),
        "gcn_w1": u(ks[2], (C, 2 * C), 2 * C),   # GraphConvolution(C, 2C)
        "gcn_b1": u(ks[3], (1, 2 * C), 2 * C),
        "gcn_w2": u(ks[4], (2 * C, C), C),       # GraphConvolution(2C, C)
        "gcn_b2": u(ks[5], (1, C), C),
        "wq": u(ks[6], (per_dim, per_dim), per_dim),
        "wk": u(ks[7], (per_dim, per_dim), per_dim),
        "wv": u(ks[8], (per_dim, per_dim), per_dim),
        "w_fc": u(ks[9], (C, C), C),
        "b_fc": u(ks[10], (1, C), C),
        "gamma1": jnp.ones((1, C), jnp.float32),
        "beta1": jnp.zeros((1, C), jnp.float32),
        "gamma2": jnp.ones((1, C), jnp.float32),
        "beta2": jnp.zeros((1, C), jnp.float32),
        "w_ff1": u(ks[11], (C, fe), C),
        "b_ff1": u(ks[12], (1, fe), C),
        "w_ff2": u(ks[13], (fe, C), fe),
        "b_ff2": u(ks[14], (1, C), fe),
        "w_fs": u(ks[15], (C, C), C),
        "b_fs": u(ks[16], (1, C), C),
        "w_fg": u(ks[17], (C, C), C),
        "b_fg": u(ks[18], (1, C), C),
    }


if __name__ == "__main__":
    # Small shapes consistent with the module: adj is (N, N), inputs are (B, N, T, C).
    B, N, T, C = 2, 16, 8, 32
    heads, forward_expansion = 4, 2

    root = jax.random.PRNGKey(0)
    kq, kk, kv, ka, kp = jax.random.split(root, 5)
    query = jax.random.normal(kq, (B, N, T, C), jnp.float32)
    key_in = jax.random.normal(kk, (B, N, T, C), jnp.float32)
    value = jax.random.normal(kv, (B, N, T, C), jnp.float32)
    adj = jax.random.uniform(ka, (N, N), jnp.float32)
    params = init_params(kp, N, C, heads, forward_expansion)

    # TODO(synk): all dropout layers are treated as inference-mode identity.
    out = stransformer_forward(query, key_in, value, adj, params, heads=heads)
    out = jax.block_until_ready(out)
    assert out.shape == (B, N, T, C) and bool(jnp.all(jnp.isfinite(out)))
    print("KERNEL_OK")
</pallas_src>

<mosaic_0001>
module attributes {stable_mosaic.version = 11 : i64} {
  func.func @_stransformer_kernel(%arg0: i32, %arg1: memref<1x128x32xf32, #tpu.memory_space<vmem>>, %arg2: memref<1x128x32xf32, #tpu.memory_space<vmem>>, %arg3: memref<1x128x32xf32, #tpu.memory_space<vmem>>, %arg4: memref<128x128xf32, #tpu.memory_space<vmem>>, %arg5: memref<16x32xf32, #tpu.memory_space<vmem>>, %arg6: memref<6x32x32xf32, #tpu.memory_space<vmem>>, %arg7: memref<32x64xf32, #tpu.memory_space<vmem>>, %arg8: memref<64x32xf32, #tpu.memory_space<vmem>>, %arg9: memref<32x64xf32, #tpu.memory_space<vmem>>, %arg10: memref<64x32xf32, #tpu.memory_space<vmem>>, %arg11: memref<9x32xf32, #tpu.memory_space<vmem>>, %arg12: memref<1x64xf32, #tpu.memory_space<vmem>>, %arg13: memref<1x64xf32, #tpu.memory_space<vmem>>, %arg14: memref<1x128x32xf32, #tpu.memory_space<vmem>>) attributes {dimension_semantics = [#tpu.dimension_semantics<parallel>], iteration_bounds = array<i64: 2>, scalar_prefetch = 0 : i64, scratch_operands = 0 : i64, tpu.core_type = #tpu.core_type<tc>, window_params = [{transform_indices = @transform_0, window_bounds = array<i64: 1, 128, 32>}, {transform_indices = @transform_1, window_bounds = array<i64: 1, 128, 32>}, {transform_indices = @transform_2, window_bounds = array<i64: 1, 128, 32>}, {pipeline_mode = #tpu.pipeline_mode<synchronous>, transform_indices = @transform_3, window_bounds = array<i64: 128, 128>}, {pipeline_mode = #tpu.pipeline_mode<synchronous>, transform_indices = @transform_4, window_bounds = array<i64: 16, 32>}, {pipeline_mode = #tpu.pipeline_mode<synchronous>, transform_indices = @transform_5, window_bounds = array<i64: 6, 32, 32>}, {pipeline_mode = #tpu.pipeline_mode<synchronous>, transform_indices = @transform_6, window_bounds = array<i64: 32, 64>}, {pipeline_mode = #tpu.pipeline_mode<synchronous>, transform_indices = @transform_7, window_bounds = array<i64: 64, 32>}, {pipeline_mode = #tpu.pipeline_mode<synchronous>, transform_indices = @transform_8, window_bounds = array<i64: 32, 64>}, {pipeline_mode = #tpu.pipeline_mode<synchronous>, transform_indices = @transform_9, window_bounds = array<i64: 64, 32>}, {pipeline_mode = #tpu.pipeline_mode<synchronous>, transform_indices = @transform_10, window_bounds = array<i64: 9, 32>}, {pipeline_mode = #tpu.pipeline_mode<synchronous>, transform_indices = @transform_11, window_bounds = array<i64: 1, 64>}, {pipeline_mode = #tpu.pipeline_mode<synchronous>, transform_indices = @transform_12, window_bounds = array<i64: 1, 64>}, {transform_indices = @transform_13, window_bounds = array<i64: 1, 128, 32>}]} {
    %c0 = arith.constant 0 : index
    %c0_0 = arith.constant 0 : index
    %c0_1 = arith.constant 0 : index
    %0 = vector.load %arg1[%c0, %c0_0, %c0_1] : memref<1x128x32xf32, #tpu.memory_space<vmem>>, vector<1x128x32xf32>
    %1 = vector.shape_cast %0 : vector<1x128x32xf32> to vector<128x32xf32>
    %c0_2 = arith.constant 0 : index
    %c0_3 = arith.constant 0 : index
    %c0_4 = arith.constant 0 : index
    %2 = vector.load %arg2[%c0_2, %c0_3, %c0_4] : memref<1x128x32xf32, #tpu.memory_space<vmem>>, vector<1x128x32xf32>
    %3 = vector.shape_cast %2 : vector<1x128x32xf32> to vector<128x32xf32>
    %c0_5 = arith.constant 0 : index
    %c0_6 = arith.constant 0 : index
    %c0_7 = arith.constant 0 : index
    %4 = vector.load %arg3[%c0_5, %c0_6, %c0_7] : memref<1x128x32xf32, #tpu.memory_space<vmem>>, vector<1x128x32xf32>
    %5 = vector.shape_cast %4 : vector<1x128x32xf32> to vector<128x32xf32>
    %c0_8 = arith.constant 0 : index
    %c0_9 = arith.constant 0 : index
    %6 = vector.load %arg4[%c0_8, %c0_9] : memref<128x128xf32, #tpu.memory_space<vmem>>, vector<128x128xf32>
    %c0_10 = arith.constant 0 : index
    %c0_11 = arith.constant 0 : index
    %7 = vector.load %arg5[%c0_10, %c0_11] : memref<16x32xf32, #tpu.memory_space<vmem>>, vector<16x32xf32>
    %c0_12 = arith.constant 0 : index
    %c0_13 = arith.constant 0 : index
    %8 = vector.load %arg11[%c0_12, %c0_13] : memref<9x32xf32, #tpu.memory_space<vmem>>, vector<9x32xf32>
    %c0_14 = arith.constant 0 : index
    %c0_15 = arith.constant 0 : index
    %9 = vector.load %arg7[%c0_14, %c0_15] : memref<32x64xf32, #tpu.memory_space<vmem>>, vector<32x64xf32>
    %cst = arith.constant dense<0.000000e+00> : vector<128x64xf32>
    %10 = tpu.matmul %1, %9, %cst {dimension_numbers = #tpu.dot_dimension_numbers<[1], [0], [0], [1], [0, 0, 1, 1], [], []>} : vector<128x32xf32>, vector<32x64xf32>, vector<128x64xf32> -> vector<128x64xf32>
    %cst_16 = arith.constant dense<0.000000e+00> : vector<128x64xf32>
    %11 = tpu.matmul %6, %10, %cst_16 {dimension_numbers = #tpu.dot_dimension_numbers<[1], [0], [0], [1], [0, 0, 1, 1], [], []>} : vector<128x128xf32>, vector<128x64xf32>, vector<128x64xf32> -> vector<128x64xf32>
    %c0_17 = arith.constant 0 : index
    %c0_18 = arith.constant 0 : index
    %12 = vector.load %arg12[%c0_17, %c0_18] : memref<1x64xf32, #tpu.memory_space<vmem>>, vector<1x64xf32>
    %13 = vector.broadcast %12 : vector<1x64xf32> to vector<128x64xf32>
    %14 = arith.addf %11, %13 : vector<128x64xf32>
    %cst_19 = arith.constant 0.000000e+00 : f32
    %15 = vector.broadcast %cst_19 : f32 to vector<128x64xf32>
    %16 = arith.maximumf %14, %15 : vector<128x64xf32>
    %c0_20 = arith.constant 0 : index
    %c0_21 = arith.constant 0 : index
    %17 = vector.load %arg8[%c0_20, %c0_21] : memref<64x32xf32, #tpu.memory_space<vmem>>, vector<64x32xf32>
    %cst_22 = arith.constant dense<0.000000e+00> : vector<128x32xf32>
    %18 = tpu.matmul %16, %17, %cst_22 {dimension_numbers = #tpu.dot_dimension_numbers<[1], [0], [0], [1], [0, 0, 1, 1], [], []>} : vector<128x64xf32>, vector<64x32xf32>, vector<128x32xf32> -> vector<128x32xf32>
    %cst_23 = arith.constant dense<0.000000e+00> : vector<128x32xf32>
    %19 = tpu.matmul %6, %18, %cst_23 {dimension_numbers = #tpu.dot_dimension_numbers<[1], [0], [0], [1], [0, 0, 1, 1], [], []>} : vector<128x128xf32>, vector<128x32xf32>, vector<128x32xf32> -> vector<128x32xf32>
    %20 = vector.extract_strided_slice %8 {offsets = [0, 0], sizes = [1, 32], strides = [1, 1]} : vector<9x32xf32> to vector<1x32xf32>
    %21 = vector.broadcast %20 : vector<1x32xf32> to vector<128x32xf32>
    %22 = arith.addf %19, %21 : vector<128x32xf32>
    %cst_24 = arith.constant dense<0xFF800000> : vector<128xf32>
    %23 = vector.multi_reduction <maximumf>, %22, %cst_24 [1] : vector<128x32xf32> to vector<128xf32>
    %24 = vector.shape_cast %23 : vector<128xf32> to vector<128x1xf32>
    %25 = vector.broadcast %24 : vector<128x1xf32> to vector<128x32xf32>
    %26 = arith.subf %22, %25 : vector<128x32xf32>
    %27 = math.exp %26 : vector<128x32xf32>
    %cst_25 = arith.constant dense<0.000000e+00> : vector<128xf32>
    %28 = vector.multi_reduction <add>, %27, %cst_25 [1] : vector<128x32xf32> to vector<128xf32>
    %29 = vector.shape_cast %28 : vector<128xf32> to vector<128x1xf32>
    %30 = math.log %29 : vector<128x1xf32>
    %31 = vector.broadcast %30 : vector<128x1xf32> to vector<128x32xf32>
    %32 = arith.subf %26, %31 : vector<128x32xf32>
    %33 = vector.shape_cast %7 : vector<16x32xf32> to vector<1x16x32xf32>
    %34 = vector.shape_cast %1 : vector<128x32xf32> to vector<8x16x32xf32>
    %35 = vector.broadcast %33 : vector<1x16x32xf32> to vector<8x16x32xf32>
    %36 = arith.addf %34, %35 : vector<8x16x32xf32>
    %37 = vector.shape_cast %3 : vector<128x32xf32> to vector<8x16x32xf32>
    %38 = vector.broadcast %33 : vector<1x16x32xf32> to vector<8x16x32xf32>
    %39 = arith.addf %37, %38 : vector<8x16x32xf32>
    %40 = vector.shape_cast %5 : vector<128x32xf32> to vector<8x16x32xf32>
    %41 = vector.broadcast %33 : vector<1x16x32xf32> to vector<8x16x32xf32>
    %42 = arith.addf %40, %41 : vector<8x16x32xf32>
    %43 = vector.shape_cast %36 : vector<8x16x32xf32> to vector<128x32xf32>
    %44 = vector.shape_cast %39 : vector<8x16x32xf32> to vector<128x32xf32>
    %45 = vector.shape_cast %42 : vector<8x16x32xf32> to vector<128x32xf32>
    %c0_26 = arith.constant 0 : index
    %c0_27 = arith.constant 0 : index
    %c0_28 = arith.constant 0 : index
    %46 = vector.load %arg6[%c0_26, %c0_27, %c0_28] : memref<6x32x32xf32, #tpu.memory_space<vmem>>, vector<1x32x32xf32>
    %47 = vector.shape_cast %46 : vector<1x32x32xf32> to vector<32x32xf32>
    %cst_29 = arith.constant dense<0.000000e+00> : vector<128x32xf32>
    %48 = tpu.matmul %45, %47, %cst_29 {dimension_numbers = #tpu.dot_dimension_numbers<[1], [0], [0], [1], [0, 0, 1, 1], [], []>} : vector<128x32xf32>, vector<32x32xf32>, vector<128x32xf32> -> vector<128x32xf32>
    %c1 = arith.constant 1 : index
    %c0_30 = arith.constant 0 : index
    %c0_31 = arith.constant 0 : index
    %49 = vector.load %arg6[%c1, %c0_30, %c0_31] : memref<6x32x32xf32, #tpu.memory_space<vmem>>, vector<1x32x32xf32>
    %50 = vector.shape_cast %49 : vector<1x32x32xf32> to vector<32x32xf32>
    %cst_32 = arith.constant dense<0.000000e+00> : vector<128x32xf32>
    %51 = tpu.matmul %44, %50, %cst_32 {dimension_numbers = #tpu.dot_dimension_numbers<[1], [0], [0], [1], [0, 0, 1, 1], [], []>} : vector<128x32xf32>, vector<32x32xf32>, vector<128x32xf32> -> vector<128x32xf32>
    %c2 = arith.constant 2 : index
    %c0_33 = arith.constant 0 : index
    %c0_34 = arith.constant 0 : index
    %52 = vector.load %arg6[%c2, %c0_33, %c0_34] : memref<6x32x32xf32, #tpu.memory_space<vmem>>, vector<1x32x32xf32>
    %53 = vector.shape_cast %52 : vector<1x32x32xf32> to vector<32x32xf32>
    %cst_35 = arith.constant dense<0.000000e+00> : vector<128x32xf32>
    %54 = tpu.matmul %45, %53, %cst_35 {dimension_numbers = #tpu.dot_dimension_numbers<[1], [0], [0], [1], [0, 0, 1, 1], [], []>} : vector<128x32xf32>, vector<32x32xf32>, vector<128x32xf32> -> vector<128x32xf32>
    %cst_36 = arith.constant 0.176776692 : f32
    %55 = vector.broadcast %cst_36 : f32 to vector<128x32xf32>
    %56 = arith.mulf %48, %55 : vector<128x32xf32>
    %57 = vector.shape_cast %56 : vector<128x32xf32> to vector<8x16x32xf32>
    %58 = vector.shape_cast %51 : vector<128x32xf32> to vector<8x16x32xf32>
    %59 = vector.shape_cast %54 : vector<128x32xf32> to vector<8x16x32xf32>
    %60 = tpu.iota {dimensions = array<i32: 2>} : vector<1x1x32xi32>
    %c0_i32 = arith.constant 0 : i32
    %61 = vector.broadcast %c0_i32 : i32 to vector<1x1x32xi32>
    %62 = arith.cmpi sge, %60, %61 : vector<1x1x32xi32>
    %c8_i32 = arith.constant 8 : i32
    %63 = vector.broadcast %c8_i32 : i32 to vector<1x1x32xi32>
    %64 = arith.cmpi slt, %60, %63 : vector<1x1x32xi32>
    %65 = arith.andi %62, %64 : vector<1x1x32xi1>
    %cst_37 = arith.constant 0.000000e+00 : f32
    %66 = vector.shape_cast %65 : vector<1x1x32xi1> to vector<1x1x32xi1>
    %67 = vector.broadcast %66 : vector<1x1x32xi1> to vector<8x16x32xi1>
    %68 = vector.broadcast %cst_37 : f32 to vector<8x16x32xf32>
    %69 = arith.select %67, %58, %68 : vector<8x16x32xi1>, vector<8x16x32xf32>
    %cst_38 = arith.constant 0.000000e+00 : f32
    %70 = vector.shape_cast %65 : vector<1x1x32xi1> to vector<1x1x32xi1>
    %71 = vector.broadcast %70 : vector<1x1x32xi1> to vector<8x16x32xi1>
    %72 = vector.broadcast %cst_38 : f32 to vector<8x16x32xf32>
    %73 = arith.select %71, %59, %72 : vector<8x16x32xi1>, vector<8x16x32xf32>
    "tpu.trace_start"() <{level = 10 : i32, message = "tqc,tkc->tqk"}> : () -> ()
    %cst_39 = arith.constant dense<0.000000e+00> : vector<8x16x16xf32>
    %74 = tpu.matmul %57, %69, %cst_39 {dimension_numbers = #tpu.dot_dimension_numbers<[2], [2], [1], [1], [0, 0, 0, 1, 1, 1], [0], [0]>} : vector<8x16x32xf32>, vector<8x16x32xf32>, vector<8x16x16xf32> -> vector<8x16x16xf32>
    "tpu.trace_stop"() : () -> ()
    %cst_40 = arith.constant dense<0xFF800000> : vector<8x16xf32>
    %75 = vector.multi_reduction <maximumf>, %74, %cst_40 [1] : vector<8x16x16xf32> to vector<8x16xf32>
    %76 = vector.shape_cast %75 : vector<8x16xf32> to vector<8x1x16xf32>
    %77 = vector.broadcast %76 : vector<8x1x16xf32> to vector<8x16x16xf32>
    %78 = arith.subf %74, %77 : vector<8x16x16xf32>
    %79 = math.exp %78 : vector<8x16x16xf32>
    %cst_41 = arith.constant dense<0.000000e+00> : vector<8x16xf32>
    %80 = vector.multi_reduction <add>, %79, %cst_41 [1] : vector<8x16x16xf32> to vector<8x16xf32>
    %81 = vector.shape_cast %80 : vector<8x16xf32> to vector<8x1x16xf32>
    %82 = tpu.reciprocal %81 {approx = true} : vector<8x1x16xf32> -> vector<8x1x16xf32>
    %83 = vector.broadcast %82 : vector<8x1x16xf32> to vector<8x16x16xf32>
    %84 = arith.mulf %79, %83 : vector<8x16x16xf32>
    "tpu.trace_start"() <{level = 10 : i32, message = "tqk,tkc->tqc"}> : () -> ()
    %cst_42 = arith.constant dense<0.000000e+00> : vector<8x16x32xf32>
    %85 = tpu.matmul %84, %73, %cst_42 {dimension_numbers = #tpu.dot_dimension_numbers<[2], [1], [1], [2], [0, 0, 0, 1, 1, 2], [0], [0]>} : vector<8x16x16xf32>, vector<8x16x32xf32>, vector<8x16x32xf32> -> vector<8x16x32xf32>
    %c8_i32_43 = arith.constant 8 : i32
    "tpu.trace_stop"() : () -> ()
    %86 = vector.broadcast %c8_i32_43 : i32 to vector<1x1x32xi32>
    %87 = arith.cmpi sge, %60, %86 : vector<1x1x32xi32>
    %c16_i32 = arith.constant 16 : i32
    %88 = vector.broadcast %c16_i32 : i32 to vector<1x1x32xi32>
    %89 = arith.cmpi slt, %60, %88 : vector<1x1x32xi32>
    %90 = arith.andi %87, %89 : vector<1x1x32xi1>
    %cst_44 = arith.constant 0.000000e+00 : f32
    %91 = vector.shape_cast %90 : vector<1x1x32xi1> to vector<1x1x32xi1>
    %92 = vector.broadcast %91 : vector<1x1x32xi1> to vector<8x16x32xi1>
    %93 = vector.broadcast %cst_44 : f32 to vector<8x16x32xf32>
    %94 = arith.select %92, %58, %93 : vector<8x16x32xi1>, vector<8x16x32xf32>
    %cst_45 = arith.constant 0.000000e+00 : f32
    %95 = vector.shape_cast %90 : vector<1x1x32xi1> to vector<1x1x32xi1>
    %96 = vector.broadcast %95 : vector<1x1x32xi1> to vector<8x16x32xi1>
    %97 = vector.broadcast %cst_45 : f32 to vector<8x16x32xf32>
    %98 = arith.select %96, %59, %97 : vector<8x16x32xi1>, vector<8x16x32xf32>
    "tpu.trace_start"() <{level = 10 : i32, message = "tqc,tkc->tqk"}> : () -> ()
    %cst_46 = arith.constant dense<0.000000e+00> : vector<8x16x16xf32>
    %99 = tpu.matmul %57, %94, %cst_46 {dimension_numbers = #tpu.dot_dimension_numbers<[2], [2], [1], [1], [0, 0, 0, 1, 1, 1], [0], [0]>} : vector<8x16x32xf32>, vector<8x16x32xf32>, vector<8x16x16xf32> -> vector<8x16x16xf32>
    "tpu.trace_stop"() : () -> ()
    %cst_47 = arith.constant dense<0xFF800000> : vector<8x16xf32>
    %100 = vector.multi_reduction <maximumf>, %99, %cst_47 [1] : vector<8x16x16xf32> to vector<8x16xf32>
    %101 = vector.shape_cast %100 : vector<8x16xf32> to vector<8x1x16xf32>
    %102 = vector.broadcast %101 : vector<8x1x16xf32> to vector<8x16x16xf32>
    %103 = arith.subf %99, %102 : vector<8x16x16xf32>
    %104 = math.exp %103 : vector<8x16x16xf32>
    %cst_48 = arith.constant dense<0.000000e+00> : vector<8x16xf32>
    %105 = vector.multi_reduction <add>, %104, %cst_48 [1] : vector<8x16x16xf32> to vector<8x16xf32>
    %106 = vector.shape_cast %105 : vector<8x16xf32> to vector<8x1x16xf32>
    %107 = tpu.reciprocal %106 {approx = true} : vector<8x1x16xf32> -> vector<8x1x16xf32>
    %108 = vector.broadcast %107 : vector<8x1x16xf32> to vector<8x16x16xf32>
    %109 = arith.mulf %104, %108 : vector<8x16x16xf32>
    "tpu.trace_start"() <{level = 10 : i32, message = "tqk,tkc->tqc"}> : () -> ()
    %cst_49 = arith.constant dense<0.000000e+00> : vector<8x16x32xf32>
    %110 = tpu.matmul %109, %98, %cst_49 {dimension_numbers = #tpu.dot_dimension_numbers<[2], [1], [1], [2], [0, 0, 0, 1, 1, 2], [0], [0]>} : vector<8x16x16xf32>, vector<8x16x32xf32>, vector<8x16x32xf32> -> vector<8x16x32xf32>
    "tpu.trace_stop"() : () -> ()
    %111 = arith.addf %85, %110 : vector<8x16x32xf32>
    %c16_i32_50 = arith.constant 16 : i32
    %112 = vector.broadcast %c16_i32_50 : i32 to vector<1x1x32xi32>
    %113 = arith.cmpi sge, %60, %112 : vector<1x1x32xi32>
    %c24_i32 = arith.constant 24 : i32
    %114 = vector.broadcast %c24_i32 : i32 to vector<1x1x32xi32>
    %115 = arith.cmpi slt, %60, %114 : vector<1x1x32xi32>
    %116 = arith.andi %113, %115 : vector<1x1x32xi1>
    %cst_51 = arith.constant 0.000000e+00 : f32
    %117 = vector.shape_cast %116 : vector<1x1x32xi1> to vector<1x1x32xi1>
    %118 = vector.broadcast %117 : vector<1x1x32xi1> to vector<8x16x32xi1>
    %119 = vector.broadcast %cst_51 : f32 to vector<8x16x32xf32>
    %120 = arith.select %118, %58, %119 : vector<8x16x32xi1>, vector<8x16x32xf32>
    %cst_52 = arith.constant 0.000000e+00 : f32
    %121 = vector.shape_cast %116 : vector<1x1x32xi1> to vector<1x1x32xi1>
    %122 = vector.broadcast %121 : vector<1x1x32xi1> to vector<8x16x32xi1>
    %123 = vector.broadcast %cst_52 : f32 to vector<8x16x32xf32>
    %124 = arith.select %122, %59, %123 : vector<8x16x32xi1>, vector<8x16x32xf32>
    "tpu.trace_start"() <{level = 10 : i32, message = "tqc,tkc->tqk"}> : () -> ()
    %cst_53 = arith.constant dense<0.000000e+00> : vector<8x16x16xf32>
    %125 = tpu.matmul %57, %120, %cst_53 {dimension_numbers = #tpu.dot_dimension_numbers<[2], [2], [1], [1], [0, 0, 0, 1, 1, 1], [0], [0]>} : vector<8x16x32xf32>, vector<8x16x32xf32>, vector<8x16x16xf32> -> vector<8x16x16xf32>
    "tpu.trace_stop"() : () -> ()
    %cst_54 = arith.constant dense<0xFF800000> : vector<8x16xf32>
    %126 = vector.multi_reduction <maximumf>, %125, %cst_54 [1] : vector<8x16x16xf32> to vector<8x16xf32>
    %127 = vector.shape_cast %126 : vector<8x16xf32> to vector<8x1x16xf32>
    %128 = vector.broadcast %127 : vector<8x1x16xf32> to vector<8x16x16xf32>
    %129 = arith.subf %125, %128 : vector<8x16x16xf32>
    %130 = math.exp %129 : vector<8x16x16xf32>
    %cst_55 = arith.constant dense<0.000000e+00> : vector<8x16xf32>
    %131 = vector.multi_reduction <add>, %130, %cst_55 [1] : vector<8x16x16xf32> to vector<8x16xf32>
    %132 = vector.shape_cast %131 : vector<8x16xf32> to vector<8x1x16xf32>
    %133 = tpu.reciprocal %132 {approx = true} : vector<8x1x16xf32> -> vector<8x1x16xf32>
    %134 = vector.broadcast %133 : vector<8x1x16xf32> to vector<8x16x16xf32>
    %135 = arith.mulf %130, %134 : vector<8x16x16xf32>
    "tpu.trace_start"() <{level = 10 : i32, message = "tqk,tkc->tqc"}> : () -> ()
    %cst_56 = arith.constant dense<0.000000e+00> : vector<8x16x32xf32>
    %136 = tpu.matmul %135, %124, %cst_56 {dimension_numbers = #tpu.dot_dimension_numbers<[2], [1], [1], [2], [0, 0, 0, 1, 1, 2], [0], [0]>} : vector<8x16x16xf32>, vector<8x16x32xf32>, vector<8x16x32xf32> -> vector<8x16x32xf32>
    "tpu.trace_stop"() : () -> ()
    %137 = arith.addf %111, %136 : vector<8x16x32xf32>
    %c24_i32_57 = arith.constant 24 : i32
    %138 = vector.broadcast %c24_i32_57 : i32 to vector<1x1x32xi32>
    %139 = arith.cmpi sge, %60, %138 : vector<1x1x32xi32>
    %c32_i32 = arith.constant 32 : i32
    %140 = vector.broadcast %c32_i32 : i32 to vector<1x1x32xi32>
    %141 = arith.cmpi slt, %60, %140 : vector<1x1x32xi32>
    %142 = arith.andi %139, %141 : vector<1x1x32xi1>
    %cst_58 = arith.constant 0.000000e+00 : f32
    %143 = vector.shape_cast %142 : vector<1x1x32xi1> to vector<1x1x32xi1>
    %144 = vector.broadcast %143 : vector<1x1x32xi1> to vector<8x16x32xi1>
    %145 = vector.broadcast %cst_58 : f32 to vector<8x16x32xf32>
    %146 = arith.select %144, %58, %145 : vector<8x16x32xi1>, vector<8x16x32xf32>
    %cst_59 = arith.constant 0.000000e+00 : f32
    %147 = vector.shape_cast %142 : vector<1x1x32xi1> to vector<1x1x32xi1>
    %148 = vector.broadcast %147 : vector<1x1x32xi1> to vector<8x16x32xi1>
    %149 = vector.broadcast %cst_59 : f32 to vector<8x16x32xf32>
    %150 = arith.select %148, %59, %149 : vector<8x16x32xi1>, vector<8x16x32xf32>
    "tpu.trace_start"() <{level = 10 : i32, message = "tqc,tkc->tqk"}> : () -> ()
    %cst_60 = arith.constant dense<0.000000e+00> : vector<8x16x16xf32>
    %151 = tpu.matmul %57, %146, %cst_60 {dimension_numbers = #tpu.dot_dimension_numbers<[2], [2], [1], [1], [0, 0, 0, 1, 1, 1], [0], [0]>} : vector<8x16x32xf32>, vector<8x16x32xf32>, vector<8x16x16xf32> -> vector<8x16x16xf32>
    "tpu.trace_stop"() : () -> ()
    %cst_61 = arith.constant dense<0xFF800000> : vector<8x16xf32>
    %152 = vector.multi_reduction <maximumf>, %151, %cst_61 [1] : vector<8x16x16xf32> to vector<8x16xf32>
    %153 = vector.shape_cast %152 : vector<8x16xf32> to vector<8x1x16xf32>
    %154 = vector.broadcast %153 : vector<8x1x16xf32> to vector<8x16x16xf32>
    %155 = arith.subf %151, %154 : vector<8x16x16xf32>
    %156 = math.exp %155 : vector<8x16x16xf32>
    %cst_62 = arith.constant dense<0.000000e+00> : vector<8x16xf32>
    %157 = vector.multi_reduction <add>, %156, %cst_62 [1] : vector<8x16x16xf32> to vector<8x16xf32>
    %158 = vector.shape_cast %157 : vector<8x16xf32> to vector<8x1x16xf32>
    %159 = tpu.reciprocal %158 {approx = true} : vector<8x1x16xf32> -> vector<8x1x16xf32>
    %160 = vector.broadcast %159 : vector<8x1x16xf32> to vector<8x16x16xf32>
    %161 = arith.mulf %156, %160 : vector<8x16x16xf32>
    "tpu.trace_start"() <{level = 10 : i32, message = "tqk,tkc->tqc"}> : () -> ()
    %cst_63 = arith.constant dense<0.000000e+00> : vector<8x16x32xf32>
    %162 = tpu.matmul %161, %150, %cst_63 {dimension_numbers = #tpu.dot_dimension_numbers<[2], [1], [1], [2], [0, 0, 0, 1, 1, 2], [0], [0]>} : vector<8x16x16xf32>, vector<8x16x32xf32>, vector<8x16x32xf32> -> vector<8x16x32xf32>
    "tpu.trace_stop"() : () -> ()
    %163 = arith.addf %137, %162 : vector<8x16x32xf32>
    %164 = vector.shape_cast %163 : vector<8x16x32xf32> to vector<128x32xf32>
    %c3 = arith.constant 3 : index
    %c0_64 = arith.constant 0 : index
    %c0_65 = arith.constant 0 : index
    %165 = vector.load %arg6[%c3, %c0_64, %c0_65] : memref<6x32x32xf32, #tpu.memory_space<vmem>>, vector<1x32x32xf32>
    %166 = vector.shape_cast %165 : vector<1x32x32xf32> to vector<32x32xf32>
    %cst_66 = arith.constant dense<0.000000e+00> : vector<128x32xf32>
    %167 = tpu.matmul %164, %166, %cst_66 {dimension_numbers = #tpu.dot_dimension_numbers<[1], [0], [0], [1], [0, 0, 1, 1], [], []>} : vector<128x32xf32>, vector<32x32xf32>, vector<128x32xf32> -> vector<128x32xf32>
    %168 = vector.extract_strided_slice %8 {offsets = [1, 0], sizes = [1, 32], strides = [1, 1]} : vector<9x32xf32> to vector<1x32xf32>
    %169 = vector.broadcast %168 : vector<1x32xf32> to vector<128x32xf32>
    %170 = arith.addf %167, %169 : vector<128x32xf32>
    %171 = arith.addf %170, %43 : vector<128x32xf32>
    %cst_67 = arith.constant dense<0.000000e+00> : vector<128xf32>
    %172 = vector.multi_reduction <add>, %171, %cst_67 [1] : vector<128x32xf32> to vector<128xf32>
    %173 = vector.shape_cast %172 : vector<128xf32> to vector<128x1xf32>
    %cst_68 = arith.constant 3.200000e+01 : f32
    %174 = vector.broadcast %cst_68 : f32 to vector<128x1xf32>
    %175 = arith.divf %173, %174 : vector<128x1xf32>
    %176 = vector.broadcast %175 : vector<128x1xf32> to vector<128x32xf32>
    %177 = arith.subf %171, %176 : vector<128x32xf32>
    %178 = arith.mulf %177, %177 : vector<128x32xf32>
    %cst_69 = arith.constant dense<0.000000e+00> : vector<128xf32>
    %179 = vector.multi_reduction <add>, %178, %cst_69 [1] : vector<128x32xf32> to vector<128xf32>
    %180 = vector.shape_cast %179 : vector<128xf32> to vector<128x1xf32>
    %cst_70 = arith.constant 3.200000e+01 : f32
    %181 = vector.broadcast %cst_70 : f32 to vector<128x1xf32>
    %182 = arith.divf %180, %181 : vector<128x1xf32>
    %183 = vector.broadcast %175 : vector<128x1xf32> to vector<128x32xf32>
    %184 = arith.subf %171, %183 : vector<128x32xf32>
    %cst_71 = arith.constant 9.99999974E-6 : f32
    %185 = vector.broadcast %cst_71 : f32 to vector<128x1xf32>
    %186 = arith.addf %182, %185 : vector<128x1xf32>
    %187 = math.rsqrt %186 : vector<128x1xf32>
    %188 = vector.broadcast %187 : vector<128x1xf32> to vector<128x32xf32>
    %189 = arith.mulf %184, %188 : vector<128x32xf32>
    %190 = vector.extract_strided_slice %8 {offsets = [2, 0], sizes = [1, 32], strides = [1, 1]} : vector<9x32xf32> to vector<1x32xf32>
    %191 = vector.broadcast %190 : vector<1x32xf32> to vector<128x32xf32>
    %192 = arith.mulf %189, %191 : vector<128x32xf32>
    %193 = vector.extract_strided_slice %8 {offsets = [3, 0], sizes = [1, 32], strides = [1, 1]} : vector<9x32xf32> to vector<1x32xf32>
    %194 = vector.broadcast %193 : vector<1x32xf32> to vector<128x32xf32>
    %195 = arith.addf %192, %194 : vector<128x32xf32>
    %c0_72 = arith.constant 0 : index
    %c0_73 = arith.constant 0 : index
    %196 = vector.load %arg9[%c0_72, %c0_73] : memref<32x64xf32, #tpu.memory_space<vmem>>, vector<32x64xf32>
    %cst_74 = arith.constant dense<0.000000e+00> : vector<128x64xf32>
    %197 = tpu.matmul %195, %196, %cst_74 {dimension_numbers = #tpu.dot_dimension_numbers<[1], [0], [0], [1], [0, 0, 1, 1], [], []>} : vector<128x32xf32>, vector<32x64xf32>, vector<128x64xf32> -> vector<128x64xf32>
    %c0_75 = arith.constant 0 : index
    %c0_76 = arith.constant 0 : index
    %198 = vector.load %arg13[%c0_75, %c0_76] : memref<1x64xf32, #tpu.memory_space<vmem>>, vector<1x64xf32>
    %199 = vector.broadcast %198 : vector<1x64xf32> to vector<128x64xf32>
    %200 = arith.addf %197, %199 : vector<128x64xf32>
    %cst_77 = arith.constant 0.000000e+00 : f32
    %201 = vector.broadcast %cst_77 : f32 to vector<128x64xf32>
    %202 = arith.maximumf %200, %201 : vector<128x64xf32>
    %c0_78 = arith.constant 0 : index
    %c0_79 = arith.constant 0 : index
    %203 = vector.load %arg10[%c0_78, %c0_79] : memref<64x32xf32, #tpu.memory_space<vmem>>, vector<64x32xf32>
    %cst_80 = arith.constant dense<0.000000e+00> : vector<128x32xf32>
    %204 = tpu.matmul %202, %203, %cst_80 {dimension_numbers = #tpu.dot_dimension_numbers<[1], [0], [0], [1], [0, 0, 1, 1], [], []>} : vector<128x64xf32>, vector<64x32xf32>, vector<128x32xf32> -> vector<128x32xf32>
    %205 = vector.extract_strided_slice %8 {offsets = [6, 0], sizes = [1, 32], strides = [1, 1]} : vector<9x32xf32> to vector<1x32xf32>
    %206 = vector.broadcast %205 : vector<1x32xf32> to vector<128x32xf32>
    %207 = arith.addf %204, %206 : vector<128x32xf32>
    %208 = arith.addf %207, %195 : vector<128x32xf32>
    %cst_81 = arith.constant dense<0.000000e+00> : vector<128xf32>
    %209 = vector.multi_reduction <add>, %208, %cst_81 [1] : vector<128x32xf32> to vector<128xf32>
    %210 = vector.shape_cast %209 : vector<128xf32> to vector<128x1xf32>
    %cst_82 = arith.constant 3.200000e+01 : f32
    %211 = vector.broadcast %cst_82 : f32 to vector<128x1xf32>
    %212 = arith.divf %210, %211 : vector<128x1xf32>
    %213 = vector.broadcast %212 : vector<128x1xf32> to vector<128x32xf32>
    %214 = arith.subf %208, %213 : vector<128x32xf32>
    %215 = arith.mulf %214, %214 : vector<128x32xf32>
    %cst_83 = arith.constant dense<0.000000e+00> : vector<128xf32>
    %216 = vector.multi_reduction <add>, %215, %cst_83 [1] : vector<128x32xf32> to vector<128xf32>
    %217 = vector.shape_cast %216 : vector<128xf32> to vector<128x1xf32>
    %cst_84 = arith.constant 3.200000e+01 : f32
    %218 = vector.broadcast %cst_84 : f32 to vector<128x1xf32>
    %219 = arith.divf %217, %218 : vector<128x1xf32>
    %220 = vector.broadcast %212 : vector<128x1xf32> to vector<128x32xf32>
    %221 = arith.subf %208, %220 : vector<128x32xf32>
    %cst_85 = arith.constant 9.99999974E-6 : f32
    %222 = vector.broadcast %cst_85 : f32 to vector<128x1xf32>
    %223 = arith.addf %219, %222 : vector<128x1xf32>
    %224 = math.rsqrt %223 : vector<128x1xf32>
    %225 = vector.broadcast %224 : vector<128x1xf32> to vector<128x32xf32>
    %226 = arith.mulf %221, %225 : vector<128x32xf32>
    %227 = vector.extract_strided_slice %8 {offsets = [4, 0], sizes = [1, 32], strides = [1, 1]} : vector<9x32xf32> to vector<1x32xf32>
    %228 = vector.broadcast %227 : vector<1x32xf32> to vector<128x32xf32>
    %229 = arith.mulf %226, %228 : vector<128x32xf32>
    %230 = vector.extract_strided_slice %8 {offsets = [5, 0], sizes = [1, 32], strides = [1, 1]} : vector<9x32xf32> to vector<1x32xf32>
    %231 = vector.broadcast %230 : vector<1x32xf32> to vector<128x32xf32>
    %232 = arith.addf %229, %231 : vector<128x32xf32>
    %c4 = arith.constant 4 : index
    %c0_86 = arith.constant 0 : index
    %c0_87 = arith.constant 0 : index
    %233 = vector.load %arg6[%c4, %c0_86, %c0_87] : memref<6x32x32xf32, #tpu.memory_space<vmem>>, vector<1x32x32xf32>
    %234 = vector.shape_cast %233 : vector<1x32x32xf32> to vector<32x32xf32>
    %cst_88 = arith.constant dense<0.000000e+00> : vector<128x32xf32>
    %235 = tpu.matmul %232, %234, %cst_88 {dimension_numbers = #tpu.dot_dimension_numbers<[1], [0], [0], [1], [0, 0, 1, 1], [], []>} : vector<128x32xf32>, vector<32x32xf32>, vector<128x32xf32> -> vector<128x32xf32>
    %236 = vector.extract_strided_slice %8 {offsets = [7, 0], sizes = [1, 32], strides = [1, 1]} : vector<9x32xf32> to vector<1x32xf32>
    %237 = vector.broadcast %236 : vector<1x32xf32> to vector<128x32xf32>
    %238 = arith.addf %235, %237 : vector<128x32xf32>
    %c5 = arith.constant 5 : index
    %c0_89 = arith.constant 0 : index
    %c0_90 = arith.constant 0 : index
    %239 = vector.load %arg6[%c5, %c0_89, %c0_90] : memref<6x32x32xf32, #tpu.memory_space<vmem>>, vector<1x32x32xf32>
    %240 = vector.shape_cast %239 : vector<1x32x32xf32> to vector<32x32xf32>
    %cst_91 = arith.constant dense<0.000000e+00> : vector<128x32xf32>
    %241 = tpu.matmul %32, %240, %cst_91 {dimension_numbers = #tpu.dot_dimension_numbers<[1], [0], [0], [1], [0, 0, 1, 1], [], []>} : vector<128x32xf32>, vector<32x32xf32>, vector<128x32xf32> -> vector<128x32xf32>
    %242 = vector.extract_strided_slice %8 {offsets = [8, 0], sizes = [1, 32], strides = [1, 1]} : vector<9x32xf32> to vector<1x32xf32>
    %243 = vector.broadcast %242 : vector<1x32xf32> to vector<128x32xf32>
    %244 = arith.addf %241, %243 : vector<128x32xf32>
    %245 = arith.addf %238, %244 : vector<128x32xf32>
    %246 = arith.negf %245 : vector<128x32xf32>
    %247 = math.exp %246 : vector<128x32xf32>
    %cst_92 = arith.constant 1.000000e+00 : f32
    %248 = vector.broadcast %cst_92 : f32 to vector<128x32xf32>
    %249 = arith.addf %248, %247 : vector<128x32xf32>
    %250 = arith.divf %248, %249 : vector<128x32xf32>
    %251 = arith.mulf %250, %232 : vector<128x32xf32>
    %cst_93 = arith.constant 1.000000e+00 : f32
    %252 = vector.broadcast %cst_93 : f32 to vector<128x32xf32>
    %253 = arith.subf %252, %250 : vector<128x32xf32>
    %254 = arith.mulf %253, %32 : vector<128x32xf32>
    %255 = arith.addf %251, %254 : vector<128x32xf32>
    %c0_94 = arith.constant 0 : index
    %c0_95 = arith.constant 0 : index
    %c0_96 = arith.constant 0 : index
    %256 = vector.load %arg14[%c0_94, %c0_95, %c0_96] : memref<1x128x32xf32, #tpu.memory_space<vmem>>, vector<1x128x32xf32>
    %257 = vector.shape_cast %256 : vector<1x128x32xf32> to vector<128x32xf32>
    %258 = vector.shape_cast %255 : vector<128x32xf32> to vector<1x128x32xf32>
    tpu.vector_store %arg14[%c0_94, %c0_95, %c0_96], %258 {strides = array<i32>} : memref<1x128x32xf32, #tpu.memory_space<vmem>>, vector<1x128x32xf32>,
    return
  }
  func.func @transform_0(%arg0: i32) -> (i32, i32, i32) {
    %c0_i32 = arith.constant 0 : i32
    %c0_i32_0 = arith.constant 0 : i32
    %c0_i32_1 = arith.constant 0 : i32
    return %arg0, %c0_i32, %c0_i32_0 : i32, i32, i32
  }
  func.func @transform_1(%arg0: i32) -> (i32, i32, i32) {
    %c0_i32 = arith.constant 0 : i32
    %c0_i32_0 = arith.constant 0 : i32
    %c0_i32_1 = arith.constant 0 : i32
    return %arg0, %c0_i32, %c0_i32_0 : i32, i32, i32
  }
  func.func @transform_2(%arg0: i32) -> (i32, i32, i32) {
    %c0_i32 = arith.constant 0 : i32
    %c0_i32_0 = arith.constant 0 : i32
    %c0_i32_1 = arith.constant 0 : i32
    return %arg0, %c0_i32, %c0_i32_0 : i32, i32, i32
  }
  func.func @transform_3(%arg0: i32) -> (i32, i32) {
    %c0_i32 = arith.constant 0 : i32
    %c0_i32_0 = arith.constant 0 : i32
    %c0_i32_1 = arith.constant 0 : i32
    return %c0_i32, %c0_i32_0 : i32, i32
  }
  func.func @transform_4(%arg0: i32) -> (i32, i32) {
    %c0_i32 = arith.constant 0 : i32
    %c0_i32_0 = arith.constant 0 : i32
    %c0_i32_1 = arith.constant 0 : i32
    return %c0_i32, %c0_i32_0 : i32, i32
  }
  func.func @transform_5(%arg0: i32) -> (i32, i32, i32) {
    %c0_i32 = arith.constant 0 : i32
    %c0_i32_0 = arith.constant 0 : i32
    %c0_i32_1 = arith.constant 0 : i32
    %c0_i32_2 = arith.constant 0 : i32
    return %c0_i32, %c0_i32_0, %c0_i32_1 : i32, i32, i32
  }
  func.func @transform_6(%arg0: i32) -> (i32, i32) {
    %c0_i32 = arith.constant 0 : i32
    %c0_i32_0 = arith.constant 0 : i32
    %c0_i32_1 = arith.constant 0 : i32
    return %c0_i32, %c0_i32_0 : i32, i32
  }
  func.func @transform_7(%arg0: i32) -> (i32, i32) {
    %c0_i32 = arith.constant 0 : i32
    %c0_i32_0 = arith.constant 0 : i32
    %c0_i32_1 = arith.constant 0 : i32
    return %c0_i32, %c0_i32_0 : i32, i32
  }
  func.func @transform_8(%arg0: i32) -> (i32, i32) {
    %c0_i32 = arith.constant 0 : i32
    %c0_i32_0 = arith.constant 0 : i32
    %c0_i32_1 = arith.constant 0 : i32
    return %c0_i32, %c0_i32_0 : i32, i32
  }
  func.func @transform_9(%arg0: i32) -> (i32, i32) {
    %c0_i32 = arith.constant 0 : i32
    %c0_i32_0 = arith.constant 0 : i32
    %c0_i32_1 = arith.constant 0 : i32
    return %c0_i32, %c0_i32_0 : i32, i32
  }
  func.func @transform_10(%arg0: i32) -> (i32, i32) {
    %c0_i32 = arith.constant 0 : i32
    %c0_i32_0 = arith.constant 0 : i32
    %c0_i32_1 = arith.constant 0 : i32
    return %c0_i32, %c0_i32_0 : i32, i32
  }
  func.func @transform_11(%arg0: i32) -> (i32, i32) {
    %c0_i32 = arith.constant 0 : i32
    %c0_i32_0 = arith.constant 0 : i32
    %c0_i32_1 = arith.constant 0 : i32
    return %c0_i32, %c0_i32_0 : i32, i32
  }
  func.func @transform_12(%arg0: i32) -> (i32, i32) {
    %c0_i32 = arith.constant 0 : i32
    %c0_i32_0 = arith.constant 0 : i32
    %c0_i32_1 = arith.constant 0 : i32
    return %c0_i32, %c0_i32_0 : i32, i32
  }
  func.func @transform_13(%arg0: i32) -> (i32, i32, i32) {
    %c0_i32 = arith.constant 0 : i32
    %c0_i32_0 = arith.constant 0 : i32
    %c0_i32_1 = arith.constant 0 : i32
    return %arg0, %c0_i32, %c0_i32_0 : i32, i32, i32
  }
}

</mosaic_0001>

<llo_original>
// kernel: tpu_custom_call.1
$region0: #{tpu_custom_call.1}
  #allocation0 [shape = 'u32[]', space=smem, size = 0x4, offset = 0x4, fixed_abs, tag = 'smem constant byte address 0x4 - core index']
  #allocation1 [shape = 'u32[144,128]{1,0:T(1,128)}', space=vmem, size = 0x12000, scoped, tag = 'internal scratch']
  %s0 = inlined_call_operand.vmem [shape: f32[2,128,32], index: 0, kind: input, shape index: {}]
  %s1 = inlined_call_operand.vmem [shape: f32[2,128,32], index: 1, kind: input, shape index: {}]
  %s2 = inlined_call_operand.vmem [shape: f32[2,128,32], index: 2, kind: input, shape index: {}]
  %s3 = inlined_call_operand.vmem [shape: f32[128,128], index: 3, kind: input, shape index: {}]
  %s4 = inlined_call_operand.vmem [shape: f32[16,32], index: 4, kind: input, shape index: {}]
  %s5 = inlined_call_operand.vmem [shape: f32[6,32,32], index: 5, kind: input, shape index: {}]
  %s6 = inlined_call_operand.vmem [shape: f32[32,64], index: 6, kind: input, shape index: {}]
  %s7 = inlined_call_operand.vmem [shape: f32[64,32], index: 7, kind: input, shape index: {}]
  %s8 = inlined_call_operand.vmem [shape: f32[32,64], index: 8, kind: input, shape index: {}]
  %s9 = inlined_call_operand.vmem [shape: f32[64,32], index: 9, kind: input, shape index: {}]
  %s10 = inlined_call_operand.vmem [shape: f32[9,32], index: 10, kind: input, shape index: {}]
  %s11 = inlined_call_operand.vmem [shape: f32[1,64], index: 11, kind: input, shape index: {}]
  %s12 = inlined_call_operand.vmem [shape: f32[1,64], index: 12, kind: input, shape index: {}]
  %s13 = inlined_call_operand.vmem [shape: f32[2,128,32], index: 13, kind: output, shape index: {}]
  %s14 = sld [smem:[#allocation0]]
  $region85: #{tpu_custom_call.1} parent=0
    _
  %s16 = ssub.s32 1, %s14
  %s17 = scalar_select 0, %s16, %s14
  loop: start=0, step=1, limit=4
  $region2: #{tpu_custom_call.1} parent=0 // loop_pre_header
    _
  $region3: #{tpu_custom_call.1} parent=0 // loop_header
    %s19 = sphi 0, %s23
    %p20 = scmp.ge.s32.totalorder %s19, 4
    %s29 = sphi 0, %s31
    %s32 = sphi 0, %s29
    %s33 = sphi 0, %s32
    %s49 = sphi 0, %s33
    %s55 = sphi 0, %s57
    %s58 = sphi 0, %s55
    %s59 = sphi 0, %s58
    %s75 = sphi 0, %s59
    %s81 = sphi 0, %s83
    %s84 = sphi 0, %s81
    %s85 = sphi 0, %s84
    %s101 = sphi 0, %s85
    %s105 = sphi 0, %s105
    %s107 = sphi 0, %s105
    %s108 = sphi 0, %s107
    %s122 = sphi 0, %s108
    %s126 = sphi 0, %s126
    %s128 = sphi 0, %s126
    %s129 = sphi 0, %s128
    %s143 = sphi 0, %s129
    %s147 = sphi 0, %s147
    %s149 = sphi 0, %s147
    %s150 = sphi 0, %s149
    %s164 = sphi 0, %s150
    %s168 = sphi 0, %s168
    %s170 = sphi 0, %s168
    %s171 = sphi 0, %s170
    %s185 = sphi 0, %s171
    %s189 = sphi 0, %s189
    %s191 = sphi 0, %s189
    %s192 = sphi 0, %s191
    %s206 = sphi 0, %s192
    %s210 = sphi 0, %s210
    %s212 = sphi 0, %s210
    %s213 = sphi 0, %s212
    %s227 = sphi 0, %s213
    %s231 = sphi 0, %s231
    %s233 = sphi 0, %s231
    %s234 = sphi 0, %s233
    %s248 = sphi 0, %s234
    %s252 = sphi 0, %s252
    %s254 = sphi 0, %s252
    %s255 = sphi 0, %s254
    %s269 = sphi 0, %s255
    %s273 = sphi 0, %s273
    %s275 = sphi 0, %s273
    %s276 = sphi 0, %s275
    %s290 = sphi 0, %s276
    %s294 = sphi 0, %s294
    %s296 = sphi 0, %s294
    %s297 = sphi 0, %s296
    %s311 = sphi 0, %s297
    %s317 = sphi 0, %s319
    %s320 = sphi 0, %s317
    %s321 = sphi 0, %s320
    %s337 = sphi 0, %s321
  $region4: #{tpu_custom_call.1} parent=0 // loop_header_branch
    %22 = sbr.rel (%p20) target = $region8
  $region5: #{tpu_custom_call.1} parent=0 // loop_body
    %s24 = ssub.s32 %s19, 1
    %s25 = ssub.s32 %s19, 2
    %s26 = sadd.s32 %s19, 1
    %s27 = ssub.s32 %s19, %s26
    %p28 = scmp.eq.s32.totalorder %s27, 0
    %s30 = sadd.s32 %s29, 1
    %s31 = scalar_select %p28, %s29, %s30
    %p34 = pneg %p28
    %p35 = scmp.eq.s32.totalorder %s19, 1
    %p36 = por %p34, %p35
    %p37 = scmp.ne.s32.totalorder %s29, %s32
    %p38 = scmp.eq.s32.totalorder %s19, 0
    %p39 = por %p37, %p38
    %p40 = scmp.ne.s32.totalorder %s29, %s32
    %p41 = scmp.eq.s32.totalorder %s24, 1
    %p42 = por %p40, %p41
    %p43 = scmp.ne.s32.totalorder %s32, %s33
    %p44 = scmp.eq.s32.totalorder %s24, 0
    %p45 = por %p43, %p44
    %p46 = scmp.ne.s32.totalorder %s32, %s33
    %p47 = scmp.eq.s32.totalorder %s25, 1
    %p48 = por %p46, %p47
    %p50 = scmp.ne.s32.totalorder %s33, %s49
    %p51 = scmp.eq.s32.totalorder %s25, 0
    %p52 = por %p50, %p51
    %s53 = ssub.s32 %s19, %s26
    %p54 = scmp.eq.s32.totalorder %s53, 0
    %s56 = sadd.s32 %s55, 1
    %s57 = scalar_select %p54, %s55, %s56
    %p60 = pneg %p54
    %p61 = scmp.eq.s32.totalorder %s19, 1
    %p62 = por %p60, %p61
    %p63 = scmp.ne.s32.totalorder %s55, %s58
    %p64 = scmp.eq.s32.totalorder %s19, 0
    %p65 = por %p63, %p64
    %p66 = scmp.ne.s32.totalorder %s55, %s58
    %p67 = scmp.eq.s32.totalorder %s24, 1
    %p68 = por %p66, %p67
    %p69 = scmp.ne.s32.totalorder %s58, %s59
    %p70 = scmp.eq.s32.totalorder %s24, 0
    %p71 = por %p69, %p70
    %p72 = scmp.ne.s32.totalorder %s58, %s59
    %p73 = scmp.eq.s32.totalorder %s25, 1
    %p74 = por %p72, %p73
    %p76 = scmp.ne.s32.totalorder %s59, %s75
    %p77 = scmp.eq.s32.totalorder %s25, 0
    %p78 = por %p76, %p77
    %s79 = ssub.s32 %s19, %s26
    %p80 = scmp.eq.s32.totalorder %s79, 0
    %s82 = sadd.s32 %s81, 1
    %s83 = scalar_select %p80, %s81, %s82
    %p86 = pneg %p80
    %p87 = scmp.eq.s32.totalorder %s19, 1
    %p88 = por %p86, %p87
    %p89 = scmp.ne.s32.totalorder %s81, %s84
    %p90 = scmp.eq.s32.totalorder %s19, 0
    %p91 = por %p89, %p90
    %p92 = scmp.ne.s32.totalorder %s81, %s84
    %p93 = scmp.eq.s32.totalorder %s24, 1
    %p94 = por %p92, %p93
    %p95 = scmp.ne.s32.totalorder %s84, %s85
    %p96 = scmp.eq.s32.totalorder %s24, 0
    %p97 = por %p95, %p96
    %p98 = scmp.ne.s32.totalorder %s84, %s85
    %p99 = scmp.eq.s32.totalorder %s25, 1
    %p100 = por %p98, %p99
    %p102 = scmp.ne.s32.totalorder %s85, %s101
    %p103 = scmp.eq.s32.totalorder %s25, 0
    %p104 = por %p102, %p103
    %s106 = sadd.s32 %s105, 1
    %p109 = scmp.eq.s32.totalorder %s19, 1
    %p110 = scmp.ne.s32.totalorder %s105, %s107
    %p111 = scmp.eq.s32.totalorder %s19, 0
    %p112 = por %p110, %p111
    %p113 = scmp.ne.s32.totalorder %s105, %s107
    %p114 = scmp.eq.s32.totalorder %s24, 1
    %p115 = por %p113, %p114
    %p116 = scmp.ne.s32.totalorder %s107, %s108
    %p117 = scmp.eq.s32.totalorder %s24, 0
    %p118 = por %p116, %p117
    %p119 = scmp.ne.s32.totalorder %s107, %s108
    %p120 = scmp.eq.s32.totalorder %s25, 1
    %p121 = por %p119, %p120
    %p123 = scmp.ne.s32.totalorder %s108, %s122
    %p124 = scmp.eq.s32.totalorder %s25, 0
    %p125 = por %p123, %p124
    %s127 = sadd.s32 %s126, 1
    %p130 = scmp.eq.s32.totalorder %s19, 1
    %p131 = scmp.ne.s32.totalorder %s126, %s128
    %p132 = scmp.eq.s32.totalorder %s19, 0
    %p133 = por %p131, %p132
    %p134 = scmp.ne.s32.totalorder %s126, %s128
    %p135 = scmp.eq.s32.totalorder %s24, 1
    %p136 = por %p134, %p135
    %p137 = scmp.ne.s32.totalorder %s128, %s129
    %p138 = scmp.eq.s32.totalorder %s24, 0
    %p139 = por %p137, %p138
    %p140 = scmp.ne.s32.totalorder %s128, %s129
    %p141 = scmp.eq.s32.totalorder %s25, 1
    %p142 = por %p140, %p141
    %p144 = scmp.ne.s32.totalorder %s129, %s143
    %p145 = scmp.eq.s32.totalorder %s25, 0
    %p146 = por %p144, %p145
    %s148 = sadd.s32 %s147, 1
    %p151 = scmp.eq.s32.totalorder %s19, 1
    %p152 = scmp.ne.s32.totalorder %s147, %s149
    %p153 = scmp.eq.s32.totalorder %s19, 0
    %p154 = por %p152, %p153
    %p155 = scmp.ne.s32.totalorder %s147, %s149
    %p156 = scmp.eq.s32.totalorder %s24, 1
    %p157 = por %p155, %p156
    %p158 = scmp.ne.s32.totalorder %s149, %s150
    %p159 = scmp.eq.s32.totalorder %s24, 0
    %p160 = por %p158, %p159
    %p161 = scmp.ne.s32.totalorder %s149, %s150
    %p162 = scmp.eq.s32.totalorder %s25, 1
    %p163 = por %p161, %p162
    %p165 = scmp.ne.s32.totalorder %s150, %s164
    %p166 = scmp.eq.s32.totalorder %s25, 0
    %p167 = por %p165, %p166
    %s169 = sadd.s32 %s168, 1
    %p172 = scmp.eq.s32.totalorder %s19, 1
    %p173 = scmp.ne.s32.totalorder %s168, %s170
    %p174 = scmp.eq.s32.totalorder %s19, 0
    %p175 = por %p173, %p174
    %p176 = scmp.ne.s32.totalorder %s168, %s170
    %p177 = scmp.eq.s32.totalorder %s24, 1
    %p178 = por %p176, %p177
    %p179 = scmp.ne.s32.totalorder %s170, %s171
    %p180 = scmp.eq.s32.totalorder %s24, 0
    %p181 = por %p179, %p180
    %p182 = scmp.ne.s32.totalorder %s170, %s171
    %p183 = scmp.eq.s32.totalorder %s25, 1
    %p184 = por %p182, %p183
    %p186 = scmp.ne.s32.totalorder %s171, %s185
    %p187 = scmp.eq.s32.totalorder %s25, 0
    %p188 = por %p186, %p187
    %s190 = sadd.s32 %s189, 1
    %p193 = scmp.eq.s32.totalorder %s19, 1
    %p194 = scmp.ne.s32.totalorder %s189, %s191
    %p195 = scmp.eq.s32.totalorder %s19, 0
    %p196 = por %p194, %p195
    %p197 = scmp.ne.s32.totalorder %s189, %s191
    %p198 = scmp.eq.s32.totalorder %s24, 1
    %p199 = por %p197, %p198
    %p200 = scmp.ne.s32.totalorder %s191, %s192
    %p201 = scmp.eq.s32.totalorder %s24, 0
    %p202 = por %p200, %p201
    %p203 = scmp.ne.s32.totalorder %s191, %s192
    %p204 = scmp.eq.s32.totalorder %s25, 1
    %p205 = por %p203, %p204
    %p207 = scmp.ne.s32.totalorder %s192, %s206
    %p208 = scmp.eq.s32.totalorder %s25, 0
    %p209 = por %p207, %p208
    %s211 = sadd.s32 %s210, 1
    %p214 = scmp.eq.s32.totalorder %s19, 1
    %p215 = scmp.ne.s32.totalorder %s210, %s212
    %p216 = scmp.eq.s32.totalorder %s19, 0
    %p217 = por %p215, %p216
    %p218 = scmp.ne.s32.totalorder %s210, %s212
    %p219 = scmp.eq.s32.totalorder %s24, 1
    %p220 = por %p218, %p219
    %p221 = scmp.ne.s32.totalorder %s212, %s213
    %p222 = scmp.eq.s32.totalorder %s24, 0
    %p223 = por %p221, %p222
    %p224 = scmp.ne.s32.totalorder %s212, %s213
    %p225 = scmp.eq.s32.totalorder %s25, 1
    %p226 = por %p224, %p225
    %p228 = scmp.ne.s32.totalorder %s213, %s227
    %p229 = scmp.eq.s32.totalorder %s25, 0
    %p230 = por %p228, %p229
    %s232 = sadd.s32 %s231, 1
    %p235 = scmp.eq.s32.totalorder %s19, 1
    %p236 = scmp.ne.s32.totalorder %s231, %s233
    %p237 = scmp.eq.s32.totalorder %s19, 0
    %p238 = por %p236, %p237
    %p239 = scmp.ne.s32.totalorder %s231, %s233
    %p240 = scmp.eq.s32.totalorder %s24, 1
    %p241 = por %p239, %p240
    %p242 = scmp.ne.s32.totalorder %s233, %s234
    %p243 = scmp.eq.s32.totalorder %s24, 0
    %p244 = por %p242, %p243
    %p245 = scmp.ne.s32.totalorder %s233, %s234
    %p246 = scmp.eq.s32.totalorder %s25, 1
    %p247 = por %p245, %p246
    %p249 = scmp.ne.s32.totalorder %s234, %s248
    %p250 = scmp.eq.s32.totalorder %s25, 0
    %p251 = por %p249, %p250
    %s253 = sadd.s32 %s252, 1
    %p256 = scmp.eq.s32.totalorder %s19, 1
    %p257 = scmp.ne.s32.totalorder %s252, %s254
    %p258 = scmp.eq.s32.totalorder %s19, 0
    %p259 = por %p257, %p258
    %p260 = scmp.ne.s32.totalorder %s252, %s254
    %p261 = scmp.eq.s32.totalorder %s24, 1
    %p262 = por %p260, %p261
    %p263 = scmp.ne.s32.totalorder %s254, %s255
    %p264 = scmp.eq.s32.totalorder %s24, 0
    %p265 = por %p263, %p264
    %p266 = scmp.ne.s32.totalorder %s254, %s255
    %p267 = scmp.eq.s32.totalorder %s25, 1
    %p268 = por %p266, %p267
    %p270 = scmp.ne.s32.totalorder %s255, %s269
    %p271 = scmp.eq.s32.totalorder %s25, 0
    %p272 = por %p270, %p271
    %s274 = sadd.s32 %s273, 1
    %p277 = scmp.eq.s32.totalorder %s19, 1
    %p278 = scmp.ne.s32.totalorder %s273, %s275
    %p279 = scmp.eq.s32.totalorder %s19, 0
    %p280 = por %p278, %p279
    %p281 = scmp.ne.s32.totalorder %s273, %s275
    %p282 = scmp.eq.s32.totalorder %s24, 1
    %p283 = por %p281, %p282
    %p284 = scmp.ne.s32.totalorder %s275, %s276
    %p285 = scmp.eq.s32.totalorder %s24, 0
    %p286 = por %p284, %p285
    %p287 = scmp.ne.s32.totalorder %s275, %s276
    %p288 = scmp.eq.s32.totalorder %s25, 1
    %p289 = por %p287, %p288
    %p291 = scmp.ne.s32.totalorder %s276, %s290
    %p292 = scmp.eq.s32.totalorder %s25, 0
    %p293 = por %p291, %p292
    %s295 = sadd.s32 %s294, 1
    %p298 = scmp.eq.s32.totalorder %s19, 1
    %p299 = scmp.ne.s32.totalorder %s294, %s296
    %p300 = scmp.eq.s32.totalorder %s19, 0
    %p301 = por %p299, %p300
    %p302 = scmp.ne.s32.totalorder %s294, %s296
    %p303 = scmp.eq.s32.totalorder %s24, 1
    %p304 = por %p302, %p303
    %p305 = scmp.ne.s32.totalorder %s296, %s297
    %p306 = scmp.eq.s32.totalorder %s24, 0
    %p307 = por %p305, %p306
    %p308 = scmp.ne.s32.totalorder %s296, %s297
    %p309 = scmp.eq.s32.totalorder %s25, 1
    %p310 = por %p308, %p309
    %p312 = scmp.ne.s32.totalorder %s297, %s311
    %p313 = scmp.eq.s32.totalorder %s25, 0
    %p314 = por %p312, %p313
    %s315 = ssub.s32 %s19, %s26
    %p316 = scmp.eq.s32.totalorder %s315, 0
    %s318 = sadd.s32 %s317, 1
    %s319 = scalar_select %p316, %s317, %s318
    %p322 = pneg %p316
    %p323 = scmp.eq.s32.totalorder %s19, 1
    %p324 = por %p322, %p323
    %p325 = scmp.ne.s32.totalorder %s317, %s320
    %p326 = scmp.eq.s32.totalorder %s19, 0
    %p327 = por %p325, %p326
    %p328 = scmp.ne.s32.totalorder %s317, %s320
    %p329 = scmp.eq.s32.totalorder %s24, 1
    %p330 = por %p328, %p329
    %p331 = scmp.ne.s32.totalorder %s320, %s321
    %p332 = scmp.eq.s32.totalorder %s24, 0
    %p333 = por %p331, %p332
    %p334 = scmp.ne.s32.totalorder %s320, %s321
    %p335 = scmp.eq.s32.totalorder %s25, 1
    %p336 = por %p334, %p335
    %p338 = scmp.ne.s32.totalorder %s321, %s337
    %p339 = scmp.eq.s32.totalorder %s25, 0
    %p340 = por %p338, %p339
    %p341 = scmp.le.s32.totalorder 1, %s19
    %p342 = scmp.lt.s32.totalorder %s19, 3
    %p343 = pnand %p341, %p342
    %p344 = pneg %p343
    // Predicated region
    $region9: #{tpu_custom_call.1} parent=5 // pred_check
      _
    $region10: #{tpu_custom_call.1} parent=5 // pred_check_branch
      %346 = sbr.rel (%p343) target = $region12
    $region11: #{tpu_custom_call.1} parent=5 // pred_region
      %s347 = ssub.s32 %s19, 1
      // Predicated region
      $region13: #{tpu_custom_call.1} parent=11 // pred_check
        %p348 = pneg %p118
      $region14: #{tpu_custom_call.1} parent=11 // pred_check_branch
        %350 = sbr.rel (%p348) target = $region16
      $region15: #{tpu_custom_call.1} parent=11 // pred_region
        _
      $region16: #{tpu_custom_call.1} parent=11 // pred_fallthru
        _
      // Predicated region
      $region17: #{tpu_custom_call.1} parent=11 // pred_check
        %p351 = pneg %p139
      $region18: #{tpu_custom_call.1} parent=11 // pred_check_branch
        %353 = sbr.rel (%p351) target = $region20
      $region19: #{tpu_custom_call.1} parent=11 // pred_region
        _
      $region20: #{tpu_custom_call.1} parent=11 // pred_fallthru
        _
      // Predicated region
      $region21: #{tpu_custom_call.1} parent=11 // pred_check
        %p354 = pneg %p160
      $region22: #{tpu_custom_call.1} parent=11 // pred_check_branch
        %356 = sbr.rel (%p354) target = $region24
      $region23: #{tpu_custom_call.1} parent=11 // pred_region
        _
      $region24: #{tpu_custom_call.1} parent=11 // pred_fallthru
        _
      // Predicated region
      $region25: #{tpu_custom_call.1} parent=11 // pred_check
        %p357 = pneg %p181
      $region26: #{tpu_custom_call.1} parent=11 // pred_check_branch
        %359 = sbr.rel (%p357) target = $region28
      $region27: #{tpu_custom_call.1} parent=11 // pred_region
        _
      $region28: #{tpu_custom_call.1} parent=11 // pred_fallthru
        _
      // Predicated region
      $region29: #{tpu_custom_call.1} parent=11 // pred_check
        %p360 = pneg %p202
      $region30: #{tpu_custom_call.1} parent=11 // pred_check_branch
        %362 = sbr.rel (%p360) target = $region32
      $region31: #{tpu_custom_call.1} parent=11 // pred_region
        _
      $region32: #{tpu_custom_call.1} parent=11 // pred_fallthru
        _
      // Predicated region
      $region33: #{tpu_custom_call.1} parent=11 // pred_check
        %p363 = pneg %p223
      $region34: #{tpu_custom_call.1} parent=11 // pred_check_branch
        %365 = sbr.rel (%p363) target = $region36
      $region35: #{tpu_custom_call.1} parent=11 // pred_region
        _
      $region36: #{tpu_custom_call.1} parent=11 // pred_fallthru
        _
      // Predicated region
      $region37: #{tpu_custom_call.1} parent=11 // pred_check
        %p366 = pneg %p244
      $region38: #{tpu_custom_call.1} parent=11 // pred_check_branch
        %368 = sbr.rel (%p366) target = $region40
      $region39: #{tpu_custom_call.1} parent=11 // pred_region
        _
      $region40: #{tpu_custom_call.1} parent=11 // pred_fallthru
        _
      // Predicated region
      $region41: #{tpu_custom_call.1} parent=11 // pred_check
        %p369 = pneg %p265
      $region42: #{tpu_custom_call.1} parent=11 // pred_check_branch
        %371 = sbr.rel (%p369) target = $region44
      $region43: #{tpu_custom_call.1} parent=11 // pred_region
        _
      $region44: #{tpu_custom_call.1} parent=11 // pred_fallthru
        _
      // Predicated region
      $region45: #{tpu_custom_call.1} parent=11 // pred_check
        %p372 = pneg %p286
      $region46: #{tpu_custom_call.1} parent=11 // pred_check_branch
        %374 = sbr.rel (%p372) target = $region48
      $region47: #{tpu_custom_call.1} parent=11 // pred_region
        _
      $region48: #{tpu_custom_call.1} parent=11 // pred_fallthru
        _
      // Predicated region
      $region49: #{tpu_custom_call.1} parent=11 // pred_check
        %p375 = pneg %p307
      $region50: #{tpu_custom_call.1} parent=11 // pred_check_branch
        %377 = sbr.rel (%p375) target = $region52
      $region51: #{tpu_custom_call.1} parent=11 // pred_region
        _
      $region52: #{tpu_custom_call.1} parent=11 // pred_fallthru
        _
    $region12: #{tpu_custom_call.1} parent=5 // pred_fallthru
      _
    %p378 = scmp.lt.s32.totalorder %s19, 2
    // Predicated region
    $region53: #{tpu_custom_call.1} parent=5 // pred_check
      %p379 = pneg %p378
    $region54: #{tpu_custom_call.1} parent=5 // pred_check_branch
      %381 = sbr.rel (%p379) target = $region56
    $region55: #{tpu_custom_call.1} parent=5 // pred_region
      // Predicated region
      $region57: #{tpu_custom_call.1} parent=55 // pred_check
        %p382 = pneg %p39
      $region58: #{tpu_custom_call.1} parent=55 // pred_check_branch
        %384 = sbr.rel (%p382) target = $region60
      $region59: #{tpu_custom_call.1} parent=55 // pred_region
        %p385 = scmp.lt.s32.totalorder %s19, 1
        %s386 = scalar_select %p385, %s19, 1
        %s387 = smul.addr %s386, 16
        %s388 = smul.addr %s387, 8
        %s389 = scalar_lea.vmem %s0, %s388
      $region60: #{tpu_custom_call.1} parent=55 // pred_fallthru
        _
      // Predicated region
      $region61: #{tpu_custom_call.1} parent=55 // pred_check
        %p390 = pneg %p65
      $region62: #{tpu_custom_call.1} parent=55 // pred_check_branch
        %392 = sbr.rel (%p390) target = $region64
      $region63: #{tpu_custom_call.1} parent=55 // pred_region
        %p393 = scmp.lt.s32.totalorder %s19, 1
        %s394 = scalar_select %p393, %s19, 1
        %s395 = smul.addr %s394, 16
        %s396 = smul.addr %s395, 8
        %s397 = scalar_lea.vmem %s1, %s396
      $region64: #{tpu_custom_call.1} parent=55 // pred_fallthru
        _
      // Predicated region
      $region65: #{tpu_custom_call.1} parent=55 // pred_check
        %p398 = pneg %p91
      $region66: #{tpu_custom_call.1} parent=55 // pred_check_branch
        %400 = sbr.rel (%p398) target = $region68
      $region67: #{tpu_custom_call.1} parent=55 // pred_region
        %p401 = scmp.lt.s32.totalorder %s19, 1
        %s402 = scalar_select %p401, %s19, 1
        %s403 = smul.addr %s402, 16
        %s404 = smul.addr %s403, 8
        %s405 = scalar_lea.vmem %s2, %s404
      $region68: #{tpu_custom_call.1} parent=55 // pred_fallthru
        _
    $region56: #{tpu_custom_call.1} parent=5 // pred_fallthru
      _
    %p406 = scmp.le.s32.totalorder 1, %s19
    %p407 = scmp.lt.s32.totalorder %s19, 3
    %p408 = pnand %p406, %p407
    %p409 = pneg %p408
    // Predicated region
    $region69: #{tpu_custom_call.1} parent=5 // pred_check
      _
    $region70: #{tpu_custom_call.1} parent=5 // pred_check_branch
      %411 = sbr.rel (%p408) target = $region72
    $region71: #{tpu_custom_call.1} parent=5 // pred_region
      %s412 = ssub.s32 %s19, 1
      %p413 = scmp.lt.s32.totalorder %s24, 1
      %s414 = scalar_select %p413, %s24, 1
      %s415 = smul.addr %s414, 16
      %s416 = smul.addr %s415, 8
      %s417 = scalar_lea.vmem %s0, %s416
      %p418 = pneg %p45
      %p419 = pneg %p42
      %p420 = scmp.lt.s32.totalorder %s24, 1
      %s421 = scalar_select %p420, %s24, 1
      %s422 = smul.addr %s421, 16
      %s423 = smul.addr %s422, 8
      %s424 = scalar_lea.vmem %s1, %s423
      %p425 = pneg %p71
      %p426 = pneg %p68
      %p427 = scmp.lt.s32.totalorder %s24, 1
      %s428 = scalar_select %p427, %s24, 1
      %s429 = smul.addr %s428, 16
      %s430 = smul.addr %s429, 8
      %s431 = scalar_lea.vmem %s2, %s430
      %p432 = pneg %p97
      %p433 = pneg %p94
      %p434 = pneg %p118
      %p435 = pneg %p115
      %p436 = pneg %p139
      %p437 = pneg %p136
      %p438 = pneg %p160
      %p439 = pneg %p157
      %p440 = pneg %p181
      %p441 = pneg %p178
      %p442 = pneg %p202
      %p443 = pneg %p199
      %p444 = pneg %p223
      %p445 = pneg %p220
      %p446 = pneg %p244
      %p447 = pneg %p241
      %p448 = pneg %p265
      %p449 = pneg %p262
      %p450 = pneg %p286
      %p451 = pneg %p283
      %p452 = pneg %p307
      %p453 = pneg %p304
      %p454 = pneg %p333
      %p455 = pneg %p330
      %p456 = scmp.lt.s32.totalorder %s24, 1
      %s457 = scalar_select %p456, %s24, 1
      %s458 = smul.addr %s457, 16
      %s459 = smul.addr %s458, 8
      %s460 = scalar_lea.vmem %s13, %s459
      %p461 = scmp.lt.s32.totalorder %s24, 1
      %s462 = scalar_select %p461, %s24, 1
      %s463 = smul.addr %s462, 16
      %s464 = smul.addr %s463, 8
      %s465 = scalar_lea.vmem %s0, %s464
      %p466 = scmp.lt.s32.totalorder %s24, 1
      %s467 = scalar_select %p466, %s24, 1
      %s468 = smul.addr %s467, 16
      %s469 = smul.addr %s468, 8
      %s470 = scalar_lea.vmem %s1, %s469
      %p471 = scmp.lt.s32.totalorder %s24, 1
      %s472 = scalar_select %p471, %s24, 1
      %s473 = smul.addr %s472, 16
      %s474 = smul.addr %s473, 8
      %s475 = scalar_lea.vmem %s2, %s474
      %p476 = scmp.lt.s32.totalorder %s24, 1
      %s477 = scalar_select %p476, %s24, 1
      %s478 = smul.addr %s477, 16
      %s479 = smul.addr %s478, 8
      %s480 = scalar_lea.vmem %s13, %s479
      %v481 = vld [vmem:[%s465] sm:$0xff]
      %v482 = vld [vmem:[%s465 + $0x8] sm:$0xff]
      %v483 = vld [vmem:[%s465 + $0x10] sm:$0xff]
      %v484 = vld [vmem:[%s465 + $0x18] sm:$0xff]
      %v485 = vld [vmem:[%s465 + $0x20] sm:$0xff]
      %v486 = vld [vmem:[%s465 + $0x28] sm:$0xff]
      %v487 = vld [vmem:[%s465 + $0x30] sm:$0xff]
      %v488 = vld [vmem:[%s465 + $0x38] sm:$0xff]
      %v489 = vld [vmem:[%s465 + $0x40] sm:$0xff]
      %v490 = vld [vmem:[%s465 + $0x48] sm:$0xff]
      %v491 = vld [vmem:[%s465 + $0x50] sm:$0xff]
      %v492 = vld [vmem:[%s465 + $0x58] sm:$0xff]
      %v493 = vld [vmem:[%s465 + $0x60] sm:$0xff]
      %v494 = vld [vmem:[%s465 + $0x68] sm:$0xff]
      %v495 = vld [vmem:[%s465 + $0x70] sm:$0xff]
      %v496 = vld [vmem:[%s465 + $0x78] sm:$0xff]
      %v497 = vld [vmem:[%s470] sm:$0xff]
      %v498 = vld [vmem:[%s470 + $0x8] sm:$0xff]
      %v499 = vld [vmem:[%s470 + $0x10] sm:$0xff]
      %v500 = vld [vmem:[%s470 + $0x18] sm:$0xff]
      %v501 = vld [vmem:[%s470 + $0x20] sm:$0xff]
      %v502 = vld [vmem:[%s470 + $0x28] sm:$0xff]
      %v503 = vld [vmem:[%s470 + $0x30] sm:$0xff]
      %v504 = vld [vmem:[%s470 + $0x38] sm:$0xff]
      %v505 = vld [vmem:[%s470 + $0x40] sm:$0xff]
      %v506 = vld [vmem:[%s470 + $0x48] sm:$0xff]
      %v507 = vld [vmem:[%s470 + $0x50] sm:$0xff]
      %v508 = vld [vmem:[%s470 + $0x58] sm:$0xff]
      %v509 = vld [vmem:[%s470 + $0x60] sm:$0xff]
      %v510 = vld [vmem:[%s470 + $0x68] sm:$0xff]
      %v511 = vld [vmem:[%s470 + $0x70] sm:$0xff]
      %v512 = vld [vmem:[%s470 + $0x78] sm:$0xff]
      %v513 = vld [vmem:[%s475] sm:$0xff]
      %v514 = vld [vmem:[%s475 + $0x8] sm:$0xff]
      %v515 = vld [vmem:[%s475 + $0x10] sm:$0xff]
      %v516 = vld [vmem:[%s475 + $0x18] sm:$0xff]
      %v517 = vld [vmem:[%s475 + $0x20] sm:$0xff]
      %v518 = vld [vmem:[%s475 + $0x28] sm:$0xff]
      %v519 = vld [vmem:[%s475 + $0x30] sm:$0xff]
      %v520 = vld [vmem:[%s475 + $0x38] sm:$0xff]
      %v521 = vld [vmem:[%s475 + $0x40] sm:$0xff]
      %v522 = vld [vmem:[%s475 + $0x48] sm:$0xff]
      %v523 = vld [vmem:[%s475 + $0x50] sm:$0xff]
      %v524 = vld [vmem:[%s475 + $0x58] sm:$0xff]
      %v525 = vld [vmem:[%s475 + $0x60] sm:$0xff]
      %v526 = vld [vmem:[%s475 + $0x68] sm:$0xff]
      %v527 = vld [vmem:[%s475 + $0x70] sm:$0xff]
      %v528 = vld [vmem:[%s475 + $0x78] sm:$0xff]
      %v529 = vld [vmem:[%s3] sm:$0xff]
      %v530 = vld [vmem:[%s3 + $0x8] sm:$0xff]
      %v531 = vld [vmem:[%s3 + $0x10] sm:$0xff]
      %v532 = vld [vmem:[%s3 + $0x18] sm:$0xff]
      %v533 = vld [vmem:[%s3 + $0x20] sm:$0xff]
      %v534 = vld [vmem:[%s3 + $0x28] sm:$0xff]
      %v535 = vld [vmem:[%s3 + $0x30] sm:$0xff]
      %v536 = vld [vmem:[%s3 + $0x38] sm:$0xff]
      %v537 = vld [vmem:[%s3 + $0x40] sm:$0xff]
      %v538 = vld [vmem:[%s3 + $0x48] sm:$0xff]
      %v539 = vld [vmem:[%s3 + $0x50] sm:$0xff]
      %v540 = vld [vmem:[%s3 + $0x58] sm:$0xff]
      %v541 = vld [vmem:[%s3 + $0x60] sm:$0xff]
      %v542 = vld [vmem:[%s3 + $0x68] sm:$0xff]
      %v543 = vld [vmem:[%s3 + $0x70] sm:$0xff]
      %v544 = vld [vmem:[%s3 + $0x78] sm:$0xff]
      %v545 = vld [vmem:[%s4] sm:$0xff]
      %v546 = vld [vmem:[%s4 + $0x8] sm:$0xff]
      %v547 = vld [vmem:[%s10] sm:$0xff]
      %v548 = vld [vmem:[%s10 + $0x8] sm:$0x1]
      %v549 = vld [vmem:[%s6] sm:$0xff]
      %v550 = vld [vmem:[%s6 + $0x8] sm:$0xff]
      %v551 = vld [vmem:[%s6 + $0x10] sm:$0xff]
      %v552 = vld [vmem:[%s6 + $0x18] sm:$0xff]
      %vm553 = vcmask 261120
      %v555 = vsel %vm553, %v481, 0
      %v558 = vsel %vm553, %v482, 0
      %v561 = vsel %vm553, %v483, 0
      %v564 = vsel %vm553, %v484, 0
      %v567 = vsel %vm553, %v485, 0
      %v570 = vsel %vm553, %v486, 0
      %v573 = vsel %vm553, %v487, 0
      %v576 = vsel %vm553, %v488, 0
      %v579 = vsel %vm553, %v489, 0
      %v582 = vsel %vm553, %v490, 0
      %v585 = vsel %vm553, %v491, 0
      %v588 = vsel %vm553, %v492, 0
      %v591 = vsel %vm553, %v493, 0
      %v594 = vsel %vm553, %v494, 0
      %v597 = vsel %vm553, %v495, 0
      %v600 = vsel %vm553, %v496, 0
      %602 = vmatprep.subr.mxu0 0.0
      %603 = vmatpush1.msra.mxu0 %v549
      %604 = vmatprep.subr.mxu0 0.0
      %605 = vmatpush1.msra.mxu0 %v550
      %606 = vmatprep.subr.mxu0 0.0
      %607 = vmatpush1.msra.mxu0 %v551
      %608 = vmatprep.subr.mxu0 0.0
      %609 = vmatpush1.msra.mxu0 %v552
      %610 = vmatprep.subr.mxu0 0.0
      %611 = vmatpush1.msra.mxu0 0.0
      %612 = vmatprep.subr.mxu0 0.0
      %613 = vmatpush1.msra.mxu0 0.0
      %614 = vmatprep.subr.mxu0 0.0
      %615 = vmatpush1.msra.mxu0 0.0
      %616 = vmatprep.subr.mxu0 0.0
      %617 = vmatpush1.msra.mxu0 0.0
      %618 = vmatprep.subr.mxu0 0.0
      %619 = vmatpush1.msra.mxu0 0.0
      %620 = vmatprep.subr.mxu0 0.0
      %621 = vmatpush1.msra.mxu0 0.0
      %622 = vmatprep.subr.mxu0 0.0
      %623 = vmatpush1.msra.mxu0 0.0
      %624 = vmatprep.subr.mxu0 0.0
      %625 = vmatpush1.msra.mxu0 0.0
      %626 = vmatprep.subr.mxu0 0.0
      %627 = vmatpush1.msra.mxu0 0.0
      %628 = vmatprep.subr.mxu0 0.0
      %629 = vmatpush1.msra.mxu0 0.0
      %630 = vmatprep.subr.mxu0 0.0
      %631 = vmatpush1.msra.mxu0 0.0
      %632 = vmatprep.subr.mxu0 0.0
      %633 = vmatpush1.msra.mxu0 0.0
      %634 = vmatprep.subr.mxu0 0.0
      %635 = vmatpush1.msra.mxu0 0.0
      %636 = vmatprep.subr.mxu0 0.0
      %637 = vmatpush1.msra.mxu0 0.0
      %638 = vmatprep.subr.mxu0 0.0
      %639 = vmatpush1.msra.mxu0 0.0
      %640 = vmatprep.subr.mxu0 0.0
      %641 = vmatpush1.msra.mxu0 0.0
      %642 = vmatprep.subr.mxu0 0.0
      %643 = vmatpush1.msra.mxu0 0.0
      %644 = vmatprep.subr.mxu0 0.0
      %645 = vmatpush1.msra.mxu0 0.0
      %646 = vmatprep.subr.mxu0 0.0
      %647 = vmatpush1.msra.mxu0 0.0
      %648 = vmatprep.subr.mxu0 0.0
      %649 = vmatpush1.msra.mxu0 0.0
      %650 = vmatprep.subr.mxu0 0.0
      %651 = vmatpush1.msra.mxu0 0.0
      %652 = vmatprep.subr.mxu0 0.0
      %653 = vmatpush1.msra.mxu0 0.0
      %654 = vmatprep.subr.mxu0 0.0
      %655 = vmatpush1.msra.mxu0 0.0
      %656 = vmatprep.subr.mxu0 0.0
      %657 = vmatpush1.msra.mxu0 0.0
      %658 = vmatprep.subr.mxu0 0.0
      %659 = vmatpush1.msra.mxu0 0.0
      %660 = vmatprep.subr.mxu0 0.0
      %661 = vmatpush1.msra.mxu0 0.0
      %662 = vmatprep.subr.mxu0 0.0
      %663 = vmatpush1.msra.mxu0 0.0
      %664 = vmatprep.subr.mxu0 0.0
      %665 = vmatpush1.msra.mxu0 0.0
      %666 = vmatprep.mubr.f32.mxu0 0.0
      %667 = vmatmul.mubr.f32.gmra.mrb[0].mxu0 %v555
      %v668 = vpop.f32.mrb[0].mxu0
      %v669 = vadd.f32 0.0, %v668
      %v670 = vpop.f32.mrb[0].mxu0
      %671 = vmatprep.mubr.f32.mxu0 0.0
      %672 = vmatmul.mubr.f32.gmra.mrb[0].mxu0 %v558
      %v673 = vpop.f32.mrb[0].mxu0
      %v674 = vadd.f32 0.0, %v673
      %v675 = vpop.f32.mrb[0].mxu0
      %676 = vmatprep.mubr.f32.mxu0 0.0
      %677 = vmatmul.mubr.f32.gmra.mrb[0].mxu0 %v561
      %v678 = vpop.f32.mrb[0].mxu0
      %v679 = vadd.f32 0.0, %v678
      %v680 = vpop.f32.mrb[0].mxu0
      %681 = vmatprep.mubr.f32.mxu0 0.0
      %682 = vmatmul.mubr.f32.gmra.mrb[0].mxu0 %v564
      %v683 = vpop.f32.mrb[0].mxu0
      %v684 = vadd.f32 0.0, %v683
      %v685 = vpop.f32.mrb[0].mxu0
      %686 = vmatprep.mubr.f32.mxu0 0.0
      %687 = vmatmul.mubr.f32.gmra.mrb[0].mxu0 %v567
      %v688 = vpop.f32.mrb[0].mxu0
      %v689 = vadd.f32 0.0, %v688
      %v690 = vpop.f32.mrb[0].mxu0
      %691 = vmatprep.mubr.f32.mxu0 0.0
      %692 = vmatmul.mubr.f32.gmra.mrb[0].mxu0 %v570
      %v693 = vpop.f32.mrb[0].mxu0
      %v694 = vadd.f32 0.0, %v693
      %v695 = vpop.f32.mrb[0].mxu0
      %696 = vmatprep.mubr.f32.mxu0 0.0
      %697 = vmatmul.mubr.f32.gmra.mrb[0].mxu0 %v573
      %v698 = vpop.f32.mrb[0].mxu0
      %v699 = vadd.f32 0.0, %v698
      %v700 = vpop.f32.mrb[0].mxu0
      %701 = vmatprep.mubr.f32.mxu0 0.0
      %702 = vmatmul.mubr.f32.gmra.mrb[0].mxu0 %v576
      %v703 = vpop.f32.mrb[0].mxu0
      %v704 = vadd.f32 0.0, %v703
      %v705 = vpop.f32.mrb[0].mxu0
      %706 = vmatprep.mubr.f32.mxu0 0.0
      %707 = vmatmul.mubr.f32.gmra.mrb[0].mxu0 %v579
      %v708 = vpop.f32.mrb[0].mxu0
      %v709 = vadd.f32 0.0, %v708
      %v710 = vpop.f32.mrb[0].mxu0
      %711 = vmatprep.mubr.f32.mxu0 0.0
      %712 = vmatmul.mubr.f32.gmra.mrb[0].mxu0 %v582
      %v713 = vpop.f32.mrb[0].mxu0
      %v714 = vadd.f32 0.0, %v713
      %v715 = vpop.f32.mrb[0].mxu0
      %716 = vmatprep.mubr.f32.mxu0 0.0
      %717 = vmatmul.mubr.f32.gmra.mrb[0].mxu0 %v585
      %v718 = vpop.f32.mrb[0].mxu0
      %v719 = vadd.f32 0.0, %v718
      %v720 = vpop.f32.mrb[0].mxu0
      %721 = vmatprep.mubr.f32.mxu0 0.0
      %722 = vmatmul.mubr.f32.gmra.mrb[0].mxu0 %v588
      %v723 = vpop.f32.mrb[0].mxu0
      %v724 = vadd.f32 0.0, %v723
      %v725 = vpop.f32.mrb[0].mxu0
      %726 = vmatprep.mubr.f32.mxu0 0.0
      %727 = vmatmul.mubr.f32.gmra.mrb[0].mxu0 %v591
      %v728 = vpop.f32.mrb[0].mxu0
      %v729 = vadd.f32 0.0, %v728
      %v730 = vpop.f32.mrb[0].mxu0
      %731 = vmatprep.mubr.f32.mxu0 0.0
      %732 = vmatmul.mubr.f32.gmra.mrb[0].mxu0 %v594
      %v733 = vpop.f32.mrb[0].mxu0
      %v734 = vadd.f32 0.0, %v733
      %v735 = vpop.f32.mrb[0].mxu0
      %736 = vmatprep.mubr.f32.mxu0 0.0
      %737 = vmatmul.mubr.f32.gmra.mrb[0].mxu0 %v597
      %v738 = vpop.f32.mrb[0].mxu0
      %v739 = vadd.f32 0.0, %v738
      %v740 = vpop.f32.mrb[0].mxu0
      %741 = vmatprep.mubr.f32.mxu0 0.0
      %742 = vmatmul.mubr.f32.gmra.mrb[0].mxu0 %v600
      %v743 = vpop.f32.mrb[0].mxu0
      %v744 = vadd.f32 0.0, %v743
      %v745 = vpop.f32.mrb[0].mxu0
      %746 = vdwg.mxu0
      %v747 = vld [vmem:[%s11] sm:$0x1]
      %v749 = vlaneseq
      %v750 = vshrl.u32 %v749, 7
      %v751 = vsub.s32 0, %v750
      %v752 = vrot.slane %v747, %v751
      %754 = vmatprep.subr.mxu0 0.0
      %755 = vmatpush1.msra.mxu0 %v669
      %756 = vmatprep.subr.mxu0 0.0
      %757 = vmatpush1.msra.mxu0 %v674
      %758 = vmatprep.subr.mxu0 0.0
      %759 = vmatpush1.msra.mxu0 %v679
      %760 = vmatprep.subr.mxu0 0.0
      %761 = vmatpush1.msra.mxu0 %v684
      %762 = vmatprep.subr.mxu0 0.0
      %763 = vmatpush1.msra.mxu0 %v689
      %764 = vmatprep.subr.mxu0 0.0
      %765 = vmatpush1.msra.mxu0 %v694
      %766 = vmatprep.subr.mxu0 0.0
      %767 = vmatpush1.msra.mxu0 %v699
      %768 = vmatprep.subr.mxu0 0.0
      %769 = vmatpush1.msra.mxu0 %v704
      %770 = vmatprep.subr.mxu0 0.0
      %771 = vmatpush1.msra.mxu0 %v709
      %772 = vmatprep.subr.mxu0 0.0
      %773 = vmatpush1.msra.mxu0 %v714
      %774 = vmatprep.subr.mxu0 0.0
      %775 = vmatpush1.msra.mxu0 %v719
      %776 = vmatprep.subr.mxu0 0.0
      %777 = vmatpush1.msra.mxu0 %v724
      %778 = vmatprep.subr.mxu0 0.0
      %779 = vmatpush1.msra.mxu0 %v729
      %780 = vmatprep.subr.mxu0 0.0
      %781 = vmatpush1.msra.mxu0 %v734
      %782 = vmatprep.subr.mxu0 0.0
      %783 = vmatpush1.msra.mxu0 %v739
      %784 = vmatprep.subr.mxu0 0.0
      %785 = vmatpush1.msra.mxu0 %v744
      %786 = vmatprep.subr.mxu0 0.0
      %787 = vmatpush1.msra.mxu0 0.0
      %788 = vmatprep.subr.mxu0 0.0
      %789 = vmatpush1.msra.mxu0 0.0
      %790 = vmatprep.subr.mxu0 0.0
      %791 = vmatpush1.msra.mxu0 0.0
      %792 = vmatprep.subr.mxu0 0.0
      %793 = vmatpush1.msra.mxu0 0.0
      %794 = vmatprep.subr.mxu0 0.0
      %795 = vmatpush1.msra.mxu0 0.0
      %796 = vmatprep.subr.mxu0 0.0
      %797 = vmatpush1.msra.mxu0 0.0
      %798 = vmatprep.subr.mxu0 0.0
      %799 = vmatpush1.msra.mxu0 0.0
      %800 = vmatprep.subr.mxu0 0.0
      %801 = vmatpush1.msra.mxu0 0.0
      %802 = vmatprep.subr.mxu0 0.0
      %803 = vmatpush1.msra.mxu0 0.0
      %804 = vmatprep.subr.mxu0 0.0
      %805 = vmatpush1.msra.mxu0 0.0
      %806 = vmatprep.subr.mxu0 0.0
      %807 = vmatpush1.msra.mxu0 0.0
      %808 = vmatprep.subr.mxu0 0.0
      %809 = vmatpush1.msra.mxu0 0.0
      %810 = vmatprep.subr.mxu0 0.0
      %811 = vmatpush1.msra.mxu0 0.0
      %812 = vmatprep.subr.mxu0 0.0
      %813 = vmatpush1.msra.mxu0 0.0
      %814 = vmatprep.subr.mxu0 0.0
      %815 = vmatpush1.msra.mxu0 0.0
      %816 = vmatprep.subr.mxu0 0.0
      %817 = vmatpush1.msra.mxu0 0.0
      %818 = vmatprep.mubr.f32.mxu0 0.0
      %819 = vmatmul.mubr.f32.gmra.mrb[0].mxu0 %v529
      %v820 = vpop.f32.mrb[0].mxu0
      %v821 = vadd.f32 %v752, %v820
      %v822 = vpop.f32.mrb[0].mxu0
      %823 = vmatprep.mubr.f32.mxu0 0.0
      %824 = vmatmul.mubr.f32.gmra.mrb[0].mxu0 %v530
      %v825 = vpop.f32.mrb[0].mxu0
      %v826 = vadd.f32 %v752, %v825
      %v827 = vpop.f32.mrb[0].mxu0
      %828 = vmatprep.mubr.f32.mxu0 0.0
      %829 = vmatmul.mubr.f32.gmra.mrb[0].mxu0 %v531
      %v830 = vpop.f32.mrb[0].mxu0
      %v831 = vadd.f32 %v752, %v830
      %v832 = vpop.f32.mrb[0].mxu0
      %833 = vmatprep.mubr.f32.mxu0 0.0
      %834 = vmatmul.mubr.f32.gmra.mrb[0].mxu0 %v532
      %v835 = vpop.f32.mrb[0].mxu0
      %v836 = vadd.f32 %v752, %v835
      %v837 = vpop.f32.mrb[0].mxu0
      %838 = vmatprep.mubr.f32.mxu0 0.0
      %839 = vmatmul.mubr.f32.gmra.mrb[0].mxu0 %v533
      %v840 = vpop.f32.mrb[0].mxu0
      %v841 = vadd.f32 %v752, %v840
      %v842 = vpop.f32.mrb[0].mxu0
      %843 = vmatprep.mubr.f32.mxu0 0.0
      %844 = vmatmul.mubr.f32.gmra.mrb[0].mxu0 %v534
      %v845 = vpop.f32.mrb[0].mxu0
      %v846 = vadd.f32 %v752, %v845
      %v847 = vpop.f32.mrb[0].mxu0
      %848 = vmatprep.mubr.f32.mxu0 0.0
      %849 = vmatmul.mubr.f32.gmra.mrb[0].mxu0 %v535
      %v850 = vpop.f32.mrb[0].mxu0
      %v851 = vadd.f32 %v752, %v850
      %v852 = vpop.f32.mrb[0].mxu0
      %853 = vmatprep.mubr.f32.mxu0 0.0
      %854 = vmatmul.mubr.f32.gmra.mrb[0].mxu0 %v536
      %v855 = vpop.f32.mrb[0].mxu0
      %v856 = vadd.f32 %v752, %v855
      %v857 = vpop.f32.mrb[0].mxu0
      %858 = vmatprep.mubr.f32.mxu0 0.0
      %859 = vmatmul.mubr.f32.gmra.mrb[0].mxu0 %v537
      %v860 = vpop.f32.mrb[0].mxu0
      %v861 = vadd.f32 %v752, %v860
      %v862 = vpop.f32.mrb[0].mxu0
      %863 = vmatprep.mubr.f32.mxu0 0.0
      %864 = vmatmul.mubr.f32.gmra.mrb[0].mxu0 %v538
      %v865 = vpop.f32.mrb[0].mxu0
      %v866 = vadd.f32 %v752, %v865
      %v867 = vpop.f32.mrb[0].mxu0
      %868 = vmatprep.mubr.f32.mxu0 0.0
      %869 = vmatmul.mubr.f32.gmra.mrb[0].mxu0 %v539
      %v870 = vpop.f32.mrb[0].mxu0
      %v871 = vadd.f32 %v752, %v870
      %v872 = vpop.f32.mrb[0].mxu0
      %873 = vmatprep.mubr.f32.mxu0 0.0
      %874 = vmatmul.mubr.f32.gmra.mrb[0].mxu0 %v540
      %v875 = vpop.f32.mrb[0].mxu0
      %v876 = vadd.f32 %v752, %v875
      %v877 = vpop.f32.mrb[0].mxu0
      %878 = vmatprep.mubr.f32.mxu0 0.0
      %879 = vmatmul.mubr.f32.gmra.mrb[0].mxu0 %v541
      %v880 = vpop.f32.mrb[0].mxu0
      %v881 = vadd.f32 %v752, %v880
      %v882 = vpop.f32.mrb[0].mxu0
      %883 = vmatprep.mubr.f32.mxu0 0.0
      %884 = vmatmul.mubr.f32.gmra.mrb[0].mxu0 %v542
      %v885 = vpop.f32.mrb[0].mxu0
      %v886 = vadd.f32 %v752, %v885
      %v887 = vpop.f32.mrb[0].mxu0
      %888 = vmatprep.mubr.f32.mxu0 0.0
      %889 = vmatmul.mubr.f32.gmra.mrb[0].mxu0 %v543
      %v890 = vpop.f32.mrb[0].mxu0
      %v891 = vadd.f32 %v752, %v890
      %v892 = vpop.f32.mrb[0].mxu0
      %893 = vmatprep.mubr.f32.mxu0 0.0
      %894 = vmatmul.mubr.f32.gmra.mrb[0].mxu0 %v544
      %v895 = vpop.f32.mrb[0].mxu0
      %v896 = vadd.f32 %v752, %v895
      %v897 = vpop.f32.mrb[0].mxu0
      %898 = vdwg.mxu0
      %v899 = vmax.f32 %v821, 0.0
      %v900 = vmax.f32 %v826, 0.0
      %v901 = vmax.f32 %v831, 0.0
      %v902 = vmax.f32 %v836, 0.0
      %v903 = vmax.f32 %v841, 0.0
      %v904 = vmax.f32 %v846, 0.0
      %v905 = vmax.f32 %v851, 0.0
      %v906 = vmax.f32 %v856, 0.0
      %v907 = vmax.f32 %v861, 0.0
      %v908 = vmax.f32 %v866, 0.0
      %v909 = vmax.f32 %v871, 0.0
      %v910 = vmax.f32 %v876, 0.0
      %v911 = vmax.f32 %v881, 0.0
      %v912 = vmax.f32 %v886, 0.0
      %v913 = vmax.f32 %v891, 0.0
      %v914 = vmax.f32 %v896, 0.0
      %v915 = vld [vmem:[%s7] sm:$0xff]
      %v916 = vld [vmem:[%s7 + $0x8] sm:$0xff]
      %v917 = vld [vmem:[%s7 + $0x10] sm:$0xff]
      %v918 = vld [vmem:[%s7 + $0x18] sm:$0xff]
      %v919 = vld [vmem:[%s7 + $0x20] sm:$0xff]
      %v920 = vld [vmem:[%s7 + $0x28] sm:$0xff]
      %v921 = vld [vmem:[%s7 + $0x30] sm:$0xff]
      %v922 = vld [vmem:[%s7 + $0x38] sm:$0xff]
      %vm923 = vcmask 523264
      %v925 = vsel %vm923, %v899, 0
      %v928 = vsel %vm923, %v900, 0
      %v931 = vsel %vm923, %v901, 0
      %v934 = vsel %vm923, %v902, 0
      %v937 = vsel %vm923, %v903, 0
      %v940 = vsel %vm923, %v904, 0
      %v943 = vsel %vm923, %v905, 0
      %v946 = vsel %vm923, %v906, 0
      %v949 = vsel %vm923, %v907, 0
      %v952 = vsel %vm923, %v908, 0
      %v955 = vsel %vm923, %v909, 0
      %v958 = vsel %vm923, %v910, 0
      %v961 = vsel %vm923, %v911, 0
      %v964 = vsel %vm923, %v912, 0
      %v967 = vsel %vm923, %v913, 0
      %v970 = vsel %vm923, %v914, 0
      %972 = vmatprep.subr.mxu0 0.0
      %973 = vmatpush1.msra.mxu0 %v915
      %974 = vmatprep.subr.mxu0 0.0
      %975 = vmatpush1.msra.mxu0 %v916
      %976 = vmatprep.subr.mxu0 0.0
      %977 = vmatpush1.msra.mxu0 %v917
      %978 = vmatprep.subr.mxu0 0.0
      %979 = vmatpush1.msra.mxu0 %v918
      %980 = vmatprep.subr.mxu0 0.0
      %981 = vmatpush1.msra.mxu0 %v919
      %982 = vmatprep.subr.mxu0 0.0
      %983 = vmatpush1.msra.mxu0 %v920
      %984 = vmatprep.subr.mxu0 0.0
      %985 = vmatpush1.msra.mxu0 %v921
      %986 = vmatprep.subr.mxu0 0.0
      %987 = vmatpush1.msra.mxu0 %v922
      %988 = vmatprep.subr.mxu0 0.0
      %989 = vmatpush1.msra.mxu0 0.0
      %990 = vmatprep.subr.mxu0 0.0
      %991 = vmatpush1.msra.mxu0 0.0
      %992 = vmatprep.subr.mxu0 0.0
      %993 = vmatpush1.msra.mxu0 0.0
      %994 = vmatprep.subr.mxu0 0.0
      %995 = vmatpush1.msra.mxu0 0.0
      %996 = vmatprep.subr.mxu0 0.0
      %997 = vmatpush1.msra.mxu0 0.0
      %998 = vmatprep.subr.mxu0 0.0
      %999 = vmatpush1.msra.mxu0 0.0
      %1000 = vmatprep.subr.mxu0 0.0
      %1001 = vmatpush1.msra.mxu0 0.0
      %1002 = vmatprep.subr.mxu0 0.0
      %1003 = vmatpush1.msra.mxu0 0.0
      %1004 = vmatprep.subr.mxu0 0.0
      %1005 = vmatpush1.msra.mxu0 0.0
      %1006 = vmatprep.subr.mxu0 0.0
      %1007 = vmatpush1.msra.mxu0 0.0
      %1008 = vmatprep.subr.mxu0 0.0
      %1009 = vmatpush1.msra.mxu0 0.0
      %1010 = vmatprep.subr.mxu0 0.0
      %1011 = vmatpush1.msra.mxu0 0.0
      %1012 = vmatprep.subr.mxu0 0.0
      %1013 = vmatpush1.msra.mxu0 0.0
      %1014 = vmatprep.subr.mxu0 0.0
      %1015 = vmatpush1.msra.mxu0 0.0
      %1016 = vmatprep.subr.mxu0 0.0
      %1017 = vmatpush1.msra.mxu0 0.0
      %1018 = vmatprep.subr.mxu0 0.0
      %1019 = vmatpush1.msra.mxu0 0.0
      %1020 = vmatprep.subr.mxu0 0.0
      %1021 = vmatpush1.msra.mxu0 0.0
      %1022 = vmatprep.subr.mxu0 0.0
      %1023 = vmatpush1.msra.mxu0 0.0
      %1024 = vmatprep.subr.mxu0 0.0
      %1025 = vmatpush1.msra.mxu0 0.0
      %1026 = vmatprep.subr.mxu0 0.0
      %1027 = vmatpush1.msra.mxu0 0.0
      %1028 = vmatprep.subr.mxu0 0.0
      %1029 = vmatpush1.msra.mxu0 0.0
      %1030 = vmatprep.subr.mxu0 0.0
      %1031 = vmatpush1.msra.mxu0 0.0
      %1032 = vmatprep.subr.mxu0 0.0
      %1033 = vmatpush1.msra.mxu0 0.0
      %1034 = vmatprep.subr.mxu0 0.0
      %1035 = vmatpush1.msra.mxu0 0.0
      %1036 = vmatprep.mubr.f32.mxu0 0.0
      %1037 = vmatmul.mubr.f32.gmra.mrb[0].mxu0 %v925
      %v1038 = vpop.f32.mrb[0].mxu0
      %v1039 = vadd.f32 0.0, %v1038
      %v1040 = vpop.f32.mrb[0].mxu0
      %1041 = vmatprep.mubr.f32.mxu0 0.0
      %1042 = vmatmul.mubr.f32.gmra.mrb[0].mxu0 %v928
      %v1043 = vpop.f32.mrb[0].mxu0
      %v1044 = vadd.f32 0.0, %v1043
      %v1045 = vpop.f32.mrb[0].mxu0
      %1046 = vmatprep.mubr.f32.mxu0 0.0
      %1047 = vmatmul.mubr.f32.gmra.mrb[0].mxu0 %v931
      %v1048 = vpop.f32.mrb[0].mxu0
      %v1049 = vadd.f32 0.0, %v1048
      %v1050 = vpop.f32.mrb[0].mxu0
      %1051 = vmatprep.mubr.f32.mxu0 0.0
      %1052 = vmatmul.mubr.f32.gmra.mrb[0].mxu0 %v934
      %v1053 = vpop.f32.mrb[0].mxu0
      %v1054 = vadd.f32 0.0, %v1053
      %v1055 = vpop.f32.mrb[0].mxu0
      %1056 = vmatprep.mubr.f32.mxu0 0.0
      %1057 = vmatmul.mubr.f32.gmra.mrb[0].mxu0 %v937
      %v1058 = vpop.f32.mrb[0].mxu0
      %v1059 = vadd.f32 0.0, %v1058
      %v1060 = vpop.f32.mrb[0].mxu0
      %1061 = vmatprep.mubr.f32.mxu0 0.0
      %1062 = vmatmul.mubr.f32.gmra.mrb[0].mxu0 %v940
      %v1063 = vpop.f32.mrb[0].mxu0
      %v1064 = vadd.f32 0.0, %v1063
      %v1065 = vpop.f32.mrb[0].mxu0
      %1066 = vmatprep.mubr.f32.mxu0 0.0
      %1067 = vmatmul.mubr.f32.gmra.mrb[0].mxu0 %v943
      %v1068 = vpop.f32.mrb[0].mxu0
      %v1069 = vadd.f32 0.0, %v1068
      %v1070 = vpop.f32.mrb[0].mxu0
      %1071 = vmatprep.mubr.f32.mxu0 0.0
      %1072 = vmatmul.mubr.f32.gmra.mrb[0].mxu0 %v946
      %v1073 = vpop.f32.mrb[0].mxu0
      %v1074 = vadd.f32 0.0, %v1073
      %v1075 = vpop.f32.mrb[0].mxu0
      %1076 = vmatprep.mubr.f32.mxu0 0.0
      %1077 = vmatmul.mubr.f32.gmra.mrb[0].mxu0 %v949
      %v1078 = vpop.f32.mrb[0].mxu0
      %v1079 = vadd.f32 0.0, %v1078
      %v1080 = vpop.f32.mrb[0].mxu0
      %1081 = vmatprep.mubr.f32.mxu0 0.0
      %1082 = vmatmul.mubr.f32.gmra.mrb[0].mxu0 %v952
      %v1083 = vpop.f32.mrb[0].mxu0
      %v1084 = vadd.f32 0.0, %v1083
      %v1085 = vpop.f32.mrb[0].mxu0
      %1086 = vmatprep.mubr.f32.mxu0 0.0
      %1087 = vmatmul.mubr.f32.gmra.mrb[0].mxu0 %v955
      %v1088 = vpop.f32.mrb[0].mxu0
      %v1089 = vadd.f32 0.0, %v1088
      %v1090 = vpop.f32.mrb[0].mxu0
      %1091 = vmatprep.mubr.f32.mxu0 0.0
      %1092 = vmatmul.mubr.f32.gmra.mrb[0].mxu0 %v958
      %v1093 = vpop.f32.mrb[0].mxu0
      %v1094 = vadd.f32 0.0, %v1093
      %v1095 = vpop.f32.mrb[0].mxu0
      %1096 = vmatprep.mubr.f32.mxu0 0.0
      %1097 = vmatmul.mubr.f32.gmra.mrb[0].mxu0 %v961
      %v1098 = vpop.f32.mrb[0].mxu0
      %v1099 = vadd.f32 0.0, %v1098
      %v1100 = vpop.f32.mrb[0].mxu0
      %1101 = vmatprep.mubr.f32.mxu0 0.0
      %1102 = vmatmul.mubr.f32.gmra.mrb[0].mxu0 %v964
      %v1103 = vpop.f32.mrb[0].mxu0
      %v1104 = vadd.f32 0.0, %v1103
      %v1105 = vpop.f32.mrb[0].mxu0
      %1106 = vmatprep.mubr.f32.mxu0 0.0
      %1107 = vmatmul.mubr.f32.gmra.mrb[0].mxu0 %v967
      %v1108 = vpop.f32.mrb[0].mxu0
      %v1109 = vadd.f32 0.0, %v1108
      %v1110 = vpop.f32.mrb[0].mxu0
      %1111 = vmatprep.mubr.f32.mxu0 0.0
      %1112 = vmatmul.mubr.f32.gmra.mrb[0].mxu0 %v970
      %v1113 = vpop.f32.mrb[0].mxu0
      %v1114 = vadd.f32 0.0, %v1113
      %v1115 = vpop.f32.mrb[0].mxu0
      %1116 = vdwg.mxu0
      %v1117 = vlaneseq
      %v1118 = vshrl.u32 %v1117, 7
      %v1119 = vsub.s32 0, %v1118
      %v1120 = vrot.slane %v547, %v1119
      %1121 = vmatprep.subr.mxu0 0.0
      %1122 = vmatpush1.msra.mxu0 %v1039
      %1123 = vmatprep.subr.mxu0 0.0
      %1124 = vmatpush1.msra.mxu0 %v1044
      %1125 = vmatprep.subr.mxu0 0.0
      %1126 = vmatpush1.msra.mxu0 %v1049
      %1127 = vmatprep.subr.mxu0 0.0
      %1128 = vmatpush1.msra.mxu0 %v1054
      %1129 = vmatprep.subr.mxu0 0.0
      %1130 = vmatpush1.msra.mxu0 %v1059
      %1131 = vmatprep.subr.mxu0 0.0
      %1132 = vmatpush1.msra.mxu0 %v1064
      %1133 = vmatprep.subr.mxu0 0.0
      %1134 = vmatpush1.msra.mxu0 %v1069
      %1135 = vmatprep.subr.mxu0 0.0
      %1136 = vmatpush1.msra.mxu0 %v1074
      %1137 = vmatprep.subr.mxu0 0.0
      %1138 = vmatpush1.msra.mxu0 %v1079
      %1139 = vmatprep.subr.mxu0 0.0
      %1140 = vmatpush1.msra.mxu0 %v1084
      %1141 = vmatprep.subr.mxu0 0.0
      %1142 = vmatpush1.msra.mxu0 %v1089
      %1143 = vmatprep.subr.mxu0 0.0
      %1144 = vmatpush1.msra.mxu0 %v1094
      %1145 = vmatprep.subr.mxu0 0.0
      %1146 = vmatpush1.msra.mxu0 %v1099
      %1147 = vmatprep.subr.mxu0 0.0
      %1148 = vmatpush1.msra.mxu0 %v1104
      %1149 = vmatprep.subr.mxu0 0.0
      %1150 = vmatpush1.msra.mxu0 %v1109
      %1151 = vmatprep.subr.mxu0 0.0
      %1152 = vmatpush1.msra.mxu0 %v1114
      %1153 = vmatprep.subr.mxu0 0.0
      %1154 = vmatpush1.msra.mxu0 0.0
      %1155 = vmatprep.subr.mxu0 0.0
      %1156 = vmatpush1.msra.mxu0 0.0
      %1157 = vmatprep.subr.mxu0 0.0
      %1158 = vmatpush1.msra.mxu0 0.0
      %1159 = vmatprep.subr.mxu0 0.0
      %1160 = vmatpush1.msra.mxu0 0.0
      %1161 = vmatprep.subr.mxu0 0.0
      %1162 = vmatpush1.msra.mxu0 0.0
      %1163 = vmatprep.subr.mxu0 0.0
      %1164 = vmatpush1.msra.mxu0 0.0
      %1165 = vmatprep.subr.mxu0 0.0
      %1166 = vmatpush1.msra.mxu0 0.0
      %1167 = vmatprep.subr.mxu0 0.0
      %1168 = vmatpush1.msra.mxu0 0.0
      %1169 = vmatprep.subr.mxu0 0.0
      %1170 = vmatpush1.msra.mxu0 0.0
      %1171 = vmatprep.subr.mxu0 0.0
      %1172 = vmatpush1.msra.mxu0 0.0
      %1173 = vmatprep.subr.mxu0 0.0
      %1174 = vmatpush1.msra.mxu0 0.0
      %1175 = vmatprep.subr.mxu0 0.0
      %1176 = vmatpush1.msra.mxu0 0.0
      %1177 = vmatprep.subr.mxu0 0.0
      %1178 = vmatpush1.msra.mxu0 0.0
      %1179 = vmatprep.subr.mxu0 0.0
      %1180 = vmatpush1.msra.mxu0 0.0
      %1181 = vmatprep.subr.mxu0 0.0
      %1182 = vmatpush1.msra.mxu0 0.0
      %1183 = vmatprep.subr.mxu0 0.0
      %1184 = vmatpush1.msra.mxu0 0.0
      %1185 = vmatprep.mubr.f32.mxu0 0.0
      %1186 = vmatmul.mubr.f32.gmra.mrb[0].mxu0 %v529
      %v1187 = vpop.f32.mrb[0].mxu0
      %v1188 = vadd.f32 %v1120, %v1187
      %v1189 = vpop.f32.mrb[0].mxu0
      %1190 = vmatprep.mubr.f32.mxu0 0.0
      %1191 = vmatmul.mubr.f32.gmra.mrb[0].mxu0 %v530
      %v1192 = vpop.f32.mrb[0].mxu0
      %v1193 = vadd.f32 %v1120, %v1192
      %v1194 = vpop.f32.mrb[0].mxu0
      %1195 = vmatprep.mubr.f32.mxu0 0.0
      %1196 = vmatmul.mubr.f32.gmra.mrb[0].mxu0 %v531
      %v1197 = vpop.f32.mrb[0].mxu0
      %v1198 = vadd.f32 %v1120, %v1197
      %v1199 = vpop.f32.mrb[0].mxu0
      %1200 = vmatprep.mubr.f32.mxu0 0.0
      %1201 = vmatmul.mubr.f32.gmra.mrb[0].mxu0 %v532
      %v1202 = vpop.f32.mrb[0].mxu0
      %v1203 = vadd.f32 %v1120, %v1202
      %v1204 = vpop.f32.mrb[0].mxu0
      %1205 = vmatprep.mubr.f32.mxu0 0.0
      %1206 = vmatmul.mubr.f32.gmra.mrb[0].mxu0 %v533
      %v1207 = vpop.f32.mrb[0].mxu0
      %v1208 = vadd.f32 %v1120, %v1207
      %v1209 = vpop.f32.mrb[0].mxu0
      %1210 = vmatprep.mubr.f32.mxu0 0.0
      %1211 = vmatmul.mubr.f32.gmra.mrb[0].mxu0 %v534
      %v1212 = vpop.f32.mrb[0].mxu0
      %v1213 = vadd.f32 %v1120, %v1212
      %v1214 = vpop.f32.mrb[0].mxu0
      %1215 = vmatprep.mubr.f32.mxu0 0.0
      %1216 = vmatmul.mubr.f32.gmra.mrb[0].mxu0 %v535
      %v1217 = vpop.f32.mrb[0].mxu0
      %v1218 = vadd.f32 %v1120, %v1217
      %v1219 = vpop.f32.mrb[0].mxu0
      %1220 = vmatprep.mubr.f32.mxu0 0.0
      %1221 = vmatmul.mubr.f32.gmra.mrb[0].mxu0 %v536
      %v1222 = vpop.f32.mrb[0].mxu0
      %v1223 = vadd.f32 %v1120, %v1222
      %v1224 = vpop.f32.mrb[0].mxu0
      %1225 = vmatprep.mubr.f32.mxu0 0.0
      %1226 = vmatmul.mubr.f32.gmra.mrb[0].mxu0 %v537
      %v1227 = vpop.f32.mrb[0].mxu0
      %v1228 = vadd.f32 %v1120, %v1227
      %v1229 = vpop.f32.mrb[0].mxu0
      %1230 = vmatprep.mubr.f32.mxu0 0.0
      %1231 = vmatmul.mubr.f32.gmra.mrb[0].mxu0 %v538
      %v1232 = vpop.f32.mrb[0].mxu0
      %v1233 = vadd.f32 %v1120, %v1232
      %v1234 = vpop.f32.mrb[0].mxu0
      %1235 = vmatprep.mubr.f32.mxu0 0.0
      %1236 = vmatmul.mubr.f32.gmra.mrb[0].mxu0 %v539
      %v1237 = vpop.f32.mrb[0].mxu0
      %v1238 = vadd.f32 %v1120, %v1237
      %v1239 = vpop.f32.mrb[0].mxu0
      %1240 = vmatprep.mubr.f32.mxu0 0.0
      %1241 = vmatmul.mubr.f32.gmra.mrb[0].mxu0 %v540
      %v1242 = vpop.f32.mrb[0].mxu0
      %v1243 = vadd.f32 %v1120, %v1242
      %v1244 = vpop.f32.mrb[0].mxu0
      %1245 = vmatprep.mubr.f32.mxu0 0.0
      %1246 = vmatmul.mubr.f32.gmra.mrb[0].mxu0 %v541
      %v1247 = vpop.f32.mrb[0].mxu0
      %v1248 = vadd.f32 %v1120, %v1247
      %v1249 = vpop.f32.mrb[0].mxu0
      %1250 = vmatprep.mubr.f32.mxu0 0.0
      %1251 = vmatmul.mubr.f32.gmra.mrb[0].mxu0 %v542
      %v1252 = vpop.f32.mrb[0].mxu0
      %v1253 = vadd.f32 %v1120, %v1252
      %v1254 = vpop.f32.mrb[0].mxu0
      %1255 = vmatprep.mubr.f32.mxu0 0.0
      %1256 = vmatmul.mubr.f32.gmra.mrb[0].mxu0 %v543
      %v1257 = vpop.f32.mrb[0].mxu0
      %v1258 = vadd.f32 %v1120, %v1257
      %v1259 = vpop.f32.mrb[0].mxu0
      %1260 = vmatprep.mubr.f32.mxu0 0.0
      %1261 = vmatmul.mubr.f32.gmra.mrb[0].mxu0 %v544
      %v1262 = vpop.f32.mrb[0].mxu0
      %v1263 = vadd.f32 %v1120, %v1262
      %v1264 = vpop.f32.mrb[0].mxu0
      %1265 = vdwg.mxu0
      %v1266 = vsel %vm553, %v1188, -inf
      %1267 = vmax.xlane.f32.xlu0 %v1266
      %v1268 = vpop.xlane.xlu0 %1267
      %v1269 = vsel %vm553, %v1193, -inf
      %1270 = vmax.xlane.f32.xlu0 %v1269
      %v1271 = vpop.xlane.xlu0 %1270
      %v1272 = vsel %vm553, %v1198, -inf
      %1273 = vmax.xlane.f32.xlu0 %v1272
      %v1274 = vpop.xlane.xlu0 %1273
      %v1275 = vsel %vm553, %v1203, -inf
      %1276 = vmax.xlane.f32.xlu0 %v1275
      %v1277 = vpop.xlane.xlu0 %1276
      %v1278 = vsel %vm553, %v1208, -inf
      %1279 = vmax.xlane.f32.xlu0 %v1278
      %v1280 = vpop.xlane.xlu0 %1279
      %v1281 = vsel %vm553, %v1213, -inf
      %1282 = vmax.xlane.f32.xlu0 %v1281
      %v1283 = vpop.xlane.xlu0 %1282
      %v1284 = vsel %vm553, %v1218, -inf
      %1285 = vmax.xlane.f32.xlu0 %v1284
      %v1286 = vpop.xlane.xlu0 %1285
      %v1287 = vsel %vm553, %v1223, -inf
      %1288 = vmax.xlane.f32.xlu0 %v1287
      %v1289 = vpop.xlane.xlu0 %1288
      %v1290 = vsel %vm553, %v1228, -inf
      %1291 = vmax.xlane.f32.xlu0 %v1290
      %v1292 = vpop.xlane.xlu0 %1291
      %v1293 = vsel %vm553, %v1233, -inf
      %1294 = vmax.xlane.f32.xlu0 %v1293
      %v1295 = vpop.xlane.xlu0 %1294
      %v1296 = vsel %vm553, %v1238, -inf
      %1297 = vmax.xlane.f32.xlu0 %v1296
      %v1298 = vpop.xlane.xlu0 %1297
      %v1299 = vsel %vm553, %v1243, -inf
      %1300 = vmax.xlane.f32.xlu0 %v1299
      %v1301 = vpop.xlane.xlu0 %1300
      %v1302 = vsel %vm553, %v1248, -inf
      %1303 = vmax.xlane.f32.xlu0 %v1302
      %v1304 = vpop.xlane.xlu0 %1303
      %v1305 = vsel %vm553, %v1253, -inf
      %1306 = vmax.xlane.f32.xlu0 %v1305
      %v1307 = vpop.xlane.xlu0 %1306
      %v1308 = vsel %vm553, %v1258, -inf
      %1309 = vmax.xlane.f32.xlu0 %v1308
      %v1310 = vpop.xlane.xlu0 %1309
      %v1311 = vsel %vm553, %v1263, -inf
      %1312 = vmax.xlane.f32.xlu0 %v1311
      %v1313 = vpop.xlane.xlu0 %1312
      %v1314 = vsub.f32 %v1188, %v1268
      %v1315 = vsub.f32 %v1193, %v1271
      %v1316 = vsub.f32 %v1198, %v1274
      %v1317 = vsub.f32 %v1203, %v1277
      %v1318 = vsub.f32 %v1208, %v1280
      %v1319 = vsub.f32 %v1213, %v1283
      %v1320 = vsub.f32 %v1218, %v1286
      %v1321 = vsub.f32 %v1223, %v1289
      %v1322 = vsub.f32 %v1228, %v1292
      %v1323 = vsub.f32 %v1233, %v1295
      %v1324 = vsub.f32 %v1238, %v1298
      %v1325 = vsub.f32 %v1243, %v1301
      %v1326 = vsub.f32 %v1248, %v1304
      %v1327 = vsub.f32 %v1253, %v1307
      %v1328 = vsub.f32 %v1258, %v1310
      %v1329 = vsub.f32 %v1263, %v1313
      %v1330 = vmul.f32 %v1314, 1.442695
      %v1331 = vpow.pop %v1330
      %v1332 = vmul.f32 %v1315, 1.442695
      %v1333 = vpow.pop %v1332
      %v1334 = vmul.f32 %v1316, 1.442695
      %v1335 = vpow.pop %v1334
      %v1336 = vmul.f32 %v1317, 1.442695
      %v1337 = vpow.pop %v1336
      %v1338 = vmul.f32 %v1318, 1.442695
      %v1339 = vpow.pop %v1338
      %v1340 = vmul.f32 %v1319, 1.442695
      %v1341 = vpow.pop %v1340
      %v1342 = vmul.f32 %v1320, 1.442695
      %v1343 = vpow.pop %v1342
      %v1344 = vmul.f32 %v1321, 1.442695
      %v1345 = vpow.pop %v1344
      %v1346 = vmul.f32 %v1322, 1.442695
      %v1347 = vpow.pop %v1346
      %v1348 = vmul.f32 %v1323, 1.442695
      %v1349 = vpow.pop %v1348
      %v1350 = vmul.f32 %v1324, 1.442695
      %v1351 = vpow.pop %v1350
      %v1352 = vmul.f32 %v1325, 1.442695
      %v1353 = vpow.pop %v1352
      %v1354 = vmul.f32 %v1326, 1.442695
      %v1355 = vpow.pop %v1354
      %v1356 = vmul.f32 %v1327, 1.442695
      %v1357 = vpow.pop %v1356
      %v1358 = vmul.f32 %v1328, 1.442695
      %v1359 = vpow.pop %v1358
      %v1360 = vmul.f32 %v1329, 1.442695
      %v1361 = vpow.pop %v1360
      %v1362 = vsel %vm553, %v1331, 0.0
      %1363 = vadd.xlane.f32.xlu0 %v1362
      %v1364 = vpop.xlane.xlu0 %1363
      %v1365 = vsel %vm553, %v1333, 0.0
      %1366 = vadd.xlane.f32.xlu0 %v1365
      %v1367 = vpop.xlane.xlu0 %1366
      %v1368 = vsel %vm553, %v1335, 0.0
      %1369 = vadd.xlane.f32.xlu0 %v1368
      %v1370 = vpop.xlane.xlu0 %1369
      %v1371 = vsel %vm553, %v1337, 0.0
      %1372 = vadd.xlane.f32.xlu0 %v1371
      %v1373 = vpop.xlane.xlu0 %1372
      %v1374 = vsel %vm553, %v1339, 0.0
      %1375 = vadd.xlane.f32.xlu0 %v1374
      %v1376 = vpop.xlane.xlu0 %1375
      %v1377 = vsel %vm553, %v1341, 0.0
      %1378 = vadd.xlane.f32.xlu0 %v1377
      %v1379 = vpop.xlane.xlu0 %1378
      %v1380 = vsel %vm553, %v1343, 0.0
      %1381 = vadd.xlane.f32.xlu0 %v1380
      %v1382 = vpop.xlane.xlu0 %1381
      %v1383 = vsel %vm553, %v1345, 0.0
      %1384 = vadd.xlane.f32.xlu0 %v1383
      %v1385 = vpop.xlane.xlu0 %1384
      %v1386 = vsel %vm553, %v1347, 0.0
      %1387 = vadd.xlane.f32.xlu0 %v1386
      %v1388 = vpop.xlane.xlu0 %1387
      %v1389 = vsel %vm553, %v1349, 0.0
      %1390 = vadd.xlane.f32.xlu0 %v1389
      %v1391 = vpop.xlane.xlu0 %1390
      %v1392 = vsel %vm553, %v1351, 0.0
      %1393 = vadd.xlane.f32.xlu0 %v1392
      %v1394 = vpop.xlane.xlu0 %1393
      %v1395 = vsel %vm553, %v1353, 0.0
      %1396 = vadd.xlane.f32.xlu0 %v1395
      %v1397 = vpop.xlane.xlu0 %1396
      %v1398 = vsel %vm553, %v1355, 0.0
      %1399 = vadd.xlane.f32.xlu0 %v1398
      %v1400 = vpop.xlane.xlu0 %1399
      %v1401 = vsel %vm553, %v1357, 0.0
      %1402 = vadd.xlane.f32.xlu0 %v1401
      %v1403 = vpop.xlane.xlu0 %1402
      %v1404 = vsel %vm553, %v1359, 0.0
      %1405 = vadd.xlane.f32.xlu0 %v1404
      %v1406 = vpop.xlane.xlu0 %1405
      %v1407 = vsel %vm553, %v1361, 0.0
      %1408 = vadd.xlane.f32.xlu0 %v1407
      %v1409 = vpop.xlane.xlu0 %1408
      %v1410 = vlog2.pop %v1364
      %v1411 = vmul.f32 %v1410, 0.6931472
      %v1412 = vlog2.pop %v1367
      %v1413 = vmul.f32 %v1412, 0.6931472
      %v1414 = vlog2.pop %v1370
      %v1415 = vmul.f32 %v1414, 0.6931472
      %v1416 = vlog2.pop %v1373
      %v1417 = vmul.f32 %v1416, 0.6931472
      %v1418 = vlog2.pop %v1376
      %v1419 = vmul.f32 %v1418, 0.6931472
      %v1420 = vlog2.pop %v1379
      %v1421 = vmul.f32 %v1420, 0.6931472
      %v1422 = vlog2.pop %v1382
      %v1423 = vmul.f32 %v1422, 0.6931472
      %v1424 = vlog2.pop %v1385
      %v1425 = vmul.f32 %v1424, 0.6931472
      %v1426 = vlog2.pop %v1388
      %v1427 = vmul.f32 %v1426, 0.6931472
      %v1428 = vlog2.pop %v1391
      %v1429 = vmul.f32 %v1428, 0.6931472
      %v1430 = vlog2.pop %v1394
      %v1431 = vmul.f32 %v1430, 0.6931472
      %v1432 = vlog2.pop %v1397
      %v1433 = vmul.f32 %v1432, 0.6931472
      %v1434 = vlog2.pop %v1400
      %v1435 = vmul.f32 %v1434, 0.6931472
      %v1436 = vlog2.pop %v1403
      %v1437 = vmul.f32 %v1436, 0.6931472
      %v1438 = vlog2.pop %v1406
      %v1439 = vmul.f32 %v1438, 0.6931472
      %v1440 = vlog2.pop %v1409
      %v1441 = vmul.f32 %v1440, 0.6931472
      %v1442 = vsub.f32 %v1314, %v1411
      %v1443 = vsub.f32 %v1315, %v1413
      %v1444 = vsub.f32 %v1316, %v1415
      %v1445 = vsub.f32 %v1317, %v1417
      %v1446 = vsub.f32 %v1318, %v1419
      %v1447 = vsub.f32 %v1319, %v1421
      %v1448 = vsub.f32 %v1320, %v1423
      %v1449 = vsub.f32 %v1321, %v1425
      %v1450 = vsub.f32 %v1322, %v1427
      %v1451 = vsub.f32 %v1323, %v1429
      %v1452 = vsub.f32 %v1324, %v1431
      %v1453 = vsub.f32 %v1325, %v1433
      %v1454 = vsub.f32 %v1326, %v1435
      %v1455 = vsub.f32 %v1327, %v1437
      %v1456 = vsub.f32 %v1328, %v1439
      %v1457 = vsub.f32 %v1329, %v1441
      %v1458 = vadd.f32 %v481, %v545
      %v1459 = vadd.f32 %v482, %v546
      %v1460 = vadd.f32 %v483, %v545
      %v1461 = vadd.f32 %v484, %v546
      %v1462 = vadd.f32 %v485, %v545
      %v1463 = vadd.f32 %v486, %v546
      %v1464 = vadd.f32 %v487, %v545
      %v1465 = vadd.f32 %v488, %v546
      %v1466 = vadd.f32 %v489, %v545
      %v1467 = vadd.f32 %v490, %v546
      %v1468 = vadd.f32 %v491, %v545
      %v1469 = vadd.f32 %v492, %v546
      %v1470 = vadd.f32 %v493, %v545
      %v1471 = vadd.f32 %v494, %v546
      %v1472 = vadd.f32 %v495, %v545
      %v1473 = vadd.f32 %v496, %v546
      %v1474 = vadd.f32 %v497, %v545
      %v1475 = vadd.f32 %v498, %v546
      %v1476 = vadd.f32 %v499, %v545
      %v1477 = vadd.f32 %v500, %v546
      %v1478 = vadd.f32 %v501, %v545
      %v1479 = vadd.f32 %v502, %v546
      %v1480 = vadd.f32 %v503, %v545
      %v1481 = vadd.f32 %v504, %v546
      %v1482 = vadd.f32 %v505, %v545
      %v1483 = vadd.f32 %v506, %v546
      %v1484 = vadd.f32 %v507, %v545
      %v1485 = vadd.f32 %v508, %v546
      %v1486 = vadd.f32 %v509, %v545
      %v1487 = vadd.f32 %v510, %v546
      %v1488 = vadd.f32 %v511, %v545
      %v1489 = vadd.f32 %v512, %v546
      %v1490 = vadd.f32 %v513, %v545
      %v1491 = vadd.f32 %v514, %v546
      %v1492 = vadd.f32 %v515, %v545
      %v1493 = vadd.f32 %v516, %v546
      %v1494 = vadd.f32 %v517, %v545
      %v1495 = vadd.f32 %v518, %v546
      %v1496 = vadd.f32 %v519, %v545
      %v1497 = vadd.f32 %v520, %v546
      %v1498 = vadd.f32 %v521, %v545
      %v1499 = vadd.f32 %v522, %v546
      %v1500 = vadd.f32 %v523, %v545
      %v1501 = vadd.f32 %v524, %v546
      %v1502 = vadd.f32 %v525, %v545
      %v1503 = vadd.f32 %v526, %v546
      %v1504 = vadd.f32 %v527, %v545
      %v1505 = vadd.f32 %v528, %v546
      %v1506 = vld [vmem:[%s5] sm:$0xff]
      %v1507 = vld [vmem:[%s5 + $0x8] sm:$0xff]
      %v1508 = vld [vmem:[%s5 + $0x10] sm:$0xff]
      %v1509 = vld [vmem:[%s5 + $0x18] sm:$0xff]
      %v1511 = vsel %vm553, %v1490, 0
      %v1514 = vsel %vm553, %v1491, 0
      %v1517 = vsel %vm553, %v1492, 0
      %v1520 = vsel %vm553, %v1493, 0
      %v1523 = vsel %vm553, %v1494, 0
      %v1526 = vsel %vm553, %v1495, 0
      %v1529 = vsel %vm553, %v1496, 0
      %v1532 = vsel %vm553, %v1497, 0
      %v1535 = vsel %vm553, %v1498, 0
      %v1538 = vsel %vm553, %v1499, 0
      %v1541 = vsel %vm553, %v1500, 0
      %v1544 = vsel %vm553, %v1501, 0
      %v1547 = vsel %vm553, %v1502, 0
      %v1550 = vsel %vm553, %v1503, 0
      %v1553 = vsel %vm553, %v1504, 0
      %v1556 = vsel %vm553, %v1505, 0
      %1558 = vmatprep.subr.mxu0 0.0
      %1559 = vmatpush1.msra.mxu0 %v1506
      %1560 = vmatprep.subr.mxu0 0.0
      %1561 = vmatpush1.msra.mxu0 %v1507
      %1562 = vmatprep.subr.mxu0 0.0
      %1563 = vmatpush1.msra.mxu0 %v1508
      %1564 = vmatprep.subr.mxu0 0.0
      %1565 = vmatpush1.msra.mxu0 %v1509
      %1566 = vmatprep.subr.mxu0 0.0
      %1567 = vmatpush1.msra.mxu0 0.0
      %1568 = vmatprep.subr.mxu0 0.0
      %1569 = vmatpush1.msra.mxu0 0.0
      %1570 = vmatprep.subr.mxu0 0.0
      %1571 = vmatpush1.msra.mxu0 0.0
      %1572 = vmatprep.subr.mxu0 0.0
      %1573 = vmatpush1.msra.mxu0 0.0
      %1574 = vmatprep.subr.mxu0 0.0
      %1575 = vmatpush1.msra.mxu0 0.0
      %1576 = vmatprep.subr.mxu0 0.0
      %1577 = vmatpush1.msra.mxu0 0.0
      %1578 = vmatprep.subr.mxu0 0.0
      %1579 = vmatpush1.msra.mxu0 0.0
      %1580 = vmatprep.subr.mxu0 0.0
      %1581 = vmatpush1.msra.mxu0 0.0
      %1582 = vmatprep.subr.mxu0 0.0
      %1583 = vmatpush1.msra.mxu0 0.0
      %1584 = vmatprep.subr.mxu0 0.0
      %1585 = vmatpush1.msra.mxu0 0.0
      %1586 = vmatprep.subr.mxu0 0.0
      %1587 = vmatpush1.msra.mxu0 0.0
      %1588 = vmatprep.subr.mxu0 0.0
      %1589 = vmatpush1.msra.mxu0 0.0
      %1590 = vmatprep.subr.mxu0 0.0
      %1591 = vmatpush1.msra.mxu0 0.0
      %1592 = vmatprep.subr.mxu0 0.0
      %1593 = vmatpush1.msra.mxu0 0.0
      %1594 = vmatprep.subr.mxu0 0.0
      %1595 = vmatpush1.msra.mxu0 0.0
      %1596 = vmatprep.subr.mxu0 0.0
      %1597 = vmatpush1.msra.mxu0 0.0
      %1598 = vmatprep.subr.mxu0 0.0
      %1599 = vmatpush1.msra.mxu0 0.0
      %1600 = vmatprep.subr.mxu0 0.0
      %1601 = vmatpush1.msra.mxu0 0.0
      %1602 = vmatprep.subr.mxu0 0.0
      %1603 = vmatpush1.msra.mxu0 0.0
      %1604 = vmatprep.subr.mxu0 0.0
      %1605 = vmatpush1.msra.mxu0 0.0
      %1606 = vmatprep.subr.mxu0 0.0
      %1607 = vmatpush1.msra.mxu0 0.0
      %1608 = vmatprep.subr.mxu0 0.0
      %1609 = vmatpush1.msra.mxu0 0.0
      %1610 = vmatprep.subr.mxu0 0.0
      %1611 = vmatpush1.msra.mxu0 0.0
      %1612 = vmatprep.subr.mxu0 0.0
      %1613 = vmatpush1.msra.mxu0 0.0
      %1614 = vmatprep.subr.mxu0 0.0
      %1615 = vmatpush1.msra.mxu0 0.0
      %1616 = vmatprep.subr.mxu0 0.0
      %1617 = vmatpush1.msra.mxu0 0.0
      %1618 = vmatprep.subr.mxu0 0.0
      %1619 = vmatpush1.msra.mxu0 0.0
      %1620 = vmatprep.subr.mxu0 0.0
      %1621 = vmatpush1.msra.mxu0 0.0
      %1622 = vmatprep.mubr.f32.mxu0 0.0
      %1623 = vmatmul.mubr.f32.gmra.mrb[0].mxu0 %v1511
      %v1624 = vpop.f32.mrb[0].mxu0
      %v1625 = vadd.f32 0.0, %v1624
      %v1626 = vpop.f32.mrb[0].mxu0
      %1627 = vmatprep.mubr.f32.mxu0 0.0
      %1628 = vmatmul.mubr.f32.gmra.mrb[0].mxu0 %v1514
      %v1629 = vpop.f32.mrb[0].mxu0
      %v1630 = vadd.f32 0.0, %v1629
      %v1631 = vpop.f32.mrb[0].mxu0
      %1632 = vmatprep.mubr.f32.mxu0 0.0
      %1633 = vmatmul.mubr.f32.gmra.mrb[0].mxu0 %v1517
      %v1634 = vpop.f32.mrb[0].mxu0
      %v1635 = vadd.f32 0.0, %v1634
      %v1636 = vpop.f32.mrb[0].mxu0
      %1637 = vmatprep.mubr.f32.mxu0 0.0
      %1638 = vmatmul.mubr.f32.gmra.mrb[0].mxu0 %v1520
      %v1639 = vpop.f32.mrb[0].mxu0
      %v1640 = vadd.f32 0.0, %v1639
      %v1641 = vpop.f32.mrb[0].mxu0
      %1642 = vmatprep.mubr.f32.mxu0 0.0
      %1643 = vmatmul.mubr.f32.gmra.mrb[0].mxu0 %v1523
      %v1644 = vpop.f32.mrb[0].mxu0
      %v1645 = vadd.f32 0.0, %v1644
      %v1646 = vpop.f32.mrb[0].mxu0
      %1647 = vmatprep.mubr.f32.mxu0 0.0
      %1648 = vmatmul.mubr.f32.gmra.mrb[0].mxu0 %v1526
      %v1649 = vpop.f32.mrb[0].mxu0
      %v1650 = vadd.f32 0.0, %v1649
      %v1651 = vpop.f32.mrb[0].mxu0
      %1652 = vmatprep.mubr.f32.mxu0 0.0
      %1653 = vmatmul.mubr.f32.gmra.mrb[0].mxu0 %v1529
      %v1654 = vpop.f32.mrb[0].mxu0
      %v1655 = vadd.f32 0.0, %v1654
      %v1656 = vpop.f32.mrb[0].mxu0
      %1657 = vmatprep.mubr.f32.mxu0 0.0
      %1658 = vmatmul.mubr.f32.gmra.mrb[0].mxu0 %v1532
      %v1659 = vpop.f32.mrb[0].mxu0
      %v1660 = vadd.f32 0.0, %v1659
      %v1661 = vpop.f32.mrb[0].mxu0
      %1662 = vmatprep.mubr.f32.mxu0 0.0
      %1663 = vmatmul.mubr.f32.gmra.mrb[0].mxu0 %v1535
      %v1664 = vpop.f32.mrb[0].mxu0
      %v1665 = vadd.f32 0.0, %v1664
      %v1666 = vpop.f32.mrb[0].mxu0
      %1667 = vmatprep.mubr.f32.mxu0 0.0
      %1668 = vmatmul.mubr.f32.gmra.mrb[0].mxu0 %v1538
      %v1669 = vpop.f32.mrb[0].mxu0
      %v1670 = vadd.f32 0.0, %v1669
      %v1671 = vpop.f32.mrb[0].mxu0
      %1672 = vmatprep.mubr.f32.mxu0 0.0
      %1673 = vmatmul.mubr.f32.gmra.mrb[0].mxu0 %v1541
      %v1674 = vpop.f32.mrb[0].mxu0
      %v1675 = vadd.f32 0.0, %v1674
      %v1676 = vpop.f32.mrb[0].mxu0
      %1677 = vmatprep.mubr.f32.mxu0 0.0
      %1678 = vmatmul.mubr.f32.gmra.mrb[0].mxu0 %v1544
      %v1679 = vpop.f32.mrb[0].mxu0
      %v1680 = vadd.f32 0.0, %v1679
      %v1681 = vpop.f32.mrb[0].mxu0
      %1682 = vmatprep.mubr.f32.mxu0 0.0
      %1683 = vmatmul.mubr.f32.gmra.mrb[0].mxu0 %v1547
      %v1684 = vpop.f32.mrb[0].mxu0
      %v1685 = vadd.f32 0.0, %v1684
      %v1686 = vpop.f32.mrb[0].mxu0
      %1687 = vmatprep.mubr.f32.mxu0 0.0
      %1688 = vmatmul.mubr.f32.gmra.mrb[0].mxu0 %v1550
      %v1689 = vpop.f32.mrb[0].mxu0
      %v1690 = vadd.f32 0.0, %v1689
      %v1691 = vpop.f32.mrb[0].mxu0
      %1692 = vmatprep.mubr.f32.mxu0 0.0
      %1693 = vmatmul.mubr.f32.gmra.mrb[0].mxu0 %v1553
      %v1694 = vpop.f32.mrb[0].mxu0
      %v1695 = vadd.f32 0.0, %v1694
      %v1696 = vpop.f32.mrb[0].mxu0
      %1697 = vmatprep.mubr.f32.mxu0 0.0
      %1698 = vmatmul.mubr.f32.gmra.mrb[0].mxu0 %v1556
      %v1699 = vpop.f32.mrb[0].mxu0
      %v1700 = vadd.f32 0.0, %v1699
      %v1701 = vpop.f32.mrb[0].mxu0
      %1702 = vdwg.mxu0
      %s1703 = scalar_lea.vmem %s5, 32
      %v1704 = vld [vmem:[%s1703] sm:$0xff]
      %v1705 = vld [vmem:[%s1703 + $0x8] sm:$0xff]
      %v1706 = vld [vmem:[%s1703 + $0x10] sm:$0xff]
      %v1707 = vld [vmem:[%s1703 + $0x18] sm:$0xff]
      %v1709 = vsel %vm553, %v1474, 0
      %v1712 = vsel %vm553, %v1475, 0
      %v1715 = vsel %vm553, %v1476, 0
      %v1718 = vsel %vm553, %v1477, 0
      %v1721 = vsel %vm553, %v1478, 0
      %v1724 = vsel %vm553, %v1479, 0
      %v1727 = vsel %vm553, %v1480, 0
      %v1730 = vsel %vm553, %v1481, 0
      %v1733 = vsel %vm553, %v1482, 0
      %v1736 = vsel %vm553, %v1483, 0
      %v1739 = vsel %vm553, %v1484, 0
      %v1742 = vsel %vm553, %v1485, 0
      %v1745 = vsel %vm553, %v1486, 0
      %v1748 = vsel %vm553, %v1487, 0
      %v1751 = vsel %vm553, %v1488, 0
      %v1754 = vsel %vm553, %v1489, 0
      %1756 = vmatprep.subr.mxu0 0.0
      %1757 = vmatpush1.msra.mxu0 %v1704
      %1758 = vmatprep.subr.mxu0 0.0
      %1759 = vmatpush1.msra.mxu0 %v1705
      %1760 = vmatprep.subr.mxu0 0.0
      %1761 = vmatpush1.msra.mxu0 %v1706
      %1762 = vmatprep.subr.mxu0 0.0
      %1763 = vmatpush1.msra.mxu0 %v1707
      %1764 = vmatprep.subr.mxu0 0.0
      %1765 = vmatpush1.msra.mxu0 0.0
      %1766 = vmatprep.subr.mxu0 0.0
      %1767 = vmatpush1.msra.mxu0 0.0
      %1768 = vmatprep.subr.mxu0 0.0
      %1769 = vmatpush1.msra.mxu0 0.0
      %1770 = vmatprep.subr.mxu0 0.0
      %1771 = vmatpush1.msra.mxu0 0.0
      %1772 = vmatprep.subr.mxu0 0.0
      %1773 = vmatpush1.msra.mxu0 0.0
      %1774 = vmatprep.subr.mxu0 0.0
      %1775 = vmatpush1.msra.mxu0 0.0
      %1776 = vmatprep.subr.mxu0 0.0
      %1777 = vmatpush1.msra.mxu0 0.0
      %1778 = vmatprep.subr.mxu0 0.0
      %1779 = vmatpush1.msra.mxu0 0.0
      %1780 = vmatprep.subr.mxu0 0.0
      %1781 = vmatpush1.msra.mxu0 0.0
      %1782 = vmatprep.subr.mxu0 0.0
      %1783 = vmatpush1.msra.mxu0 0.0
      %1784 = vmatprep.subr.mxu0 0.0
      %1785 = vmatpush1.msra.mxu0 0.0
      %1786 = vmatprep.subr.mxu0 0.0
      %1787 = vmatpush1.msra.mxu0 0.0
      %1788 = vmatprep.subr.mxu0 0.0
      %1789 = vmatpush1.msra.mxu0 0.0
      %1790 = vmatprep.subr.mxu0 0.0
      %1791 = vmatpush1.msra.mxu0 0.0
      %1792 = vmatprep.subr.mxu0 0.0
      %1793 = vmatpush1.msra.mxu0 0.0
      %1794 = vmatprep.subr.mxu0 0.0
      %1795 = vmatpush1.msra.mxu0 0.0
      %1796 = vmatprep.subr.mxu0 0.0
      %1797 = vmatpush1.msra.mxu0 0.0
      %1798 = vmatprep.subr.mxu0 0.0
      %1799 = vmatpush1.msra.mxu0 0.0
      %1800 = vmatprep.subr.mxu0 0.0
      %1801 = vmatpush1.msra.mxu0 0.0
      %1802 = vmatprep.subr.mxu0 0.0
      %1803 = vmatpush1.msra.mxu0 0.0
      %1804 = vmatprep.subr.mxu0 0.0
      %1805 = vmatpush1.msra.mxu0 0.0
      %1806 = vmatprep.subr.mxu0 0.0
      %1807 = vmatpush1.msra.mxu0 0.0
      %1808 = vmatprep.subr.mxu0 0.0
      %1809 = vmatpush1.msra.mxu0 0.0
      %1810 = vmatprep.subr.mxu0 0.0
      %1811 = vmatpush1.msra.mxu0 0.0
      %1812 = vmatprep.subr.mxu0 0.0
      %1813 = vmatpush1.msra.mxu0 0.0
      %1814 = vmatprep.subr.mxu0 0.0
      %1815 = vmatpush1.msra.mxu0 0.0
      %1816 = vmatprep.subr.mxu0 0.0
      %1817 = vmatpush1.msra.mxu0 0.0
      %1818 = vmatprep.subr.mxu0 0.0
      %1819 = vmatpush1.msra.mxu0 0.0
      %1820 = vmatprep.mubr.f32.mxu0 0.0
      %1821 = vmatmul.mubr.f32.gmra.mrb[0].mxu0 %v1709
      %v1822 = vpop.f32.mrb[0].mxu0
      %v1823 = vadd.f32 0.0, %v1822
      %v1824 = vpop.f32.mrb[0].mxu0
      %1825 = vmatprep.mubr.f32.mxu0 0.0
      %1826 = vmatmul.mubr.f32.gmra.mrb[0].mxu0 %v1712
      %v1827 = vpop.f32.mrb[0].mxu0
      %v1828 = vadd.f32 0.0, %v1827
      %v1829 = vpop.f32.mrb[0].mxu0
      %1830 = vmatprep.mubr.f32.mxu0 0.0
      %1831 = vmatmul.mubr.f32.gmra.mrb[0].mxu0 %v1715
      %v1832 = vpop.f32.mrb[0].mxu0
      %v1833 = vadd.f32 0.0, %v1832
      %v1834 = vpop.f32.mrb[0].mxu0
      %1835 = vmatprep.mubr.f32.mxu0 0.0
      %1836 = vmatmul.mubr.f32.gmra.mrb[0].mxu0 %v1718
      %v1837 = vpop.f32.mrb[0].mxu0
      %v1838 = vadd.f32 0.0, %v1837
      %v1839 = vpop.f32.mrb[0].mxu0
      %1840 = vmatprep.mubr.f32.mxu0 0.0
      %1841 = vmatmul.mubr.f32.gmra.mrb[0].mxu0 %v1721
      %v1842 = vpop.f32.mrb[0].mxu0
      %v1843 = vadd.f32 0.0, %v1842
      %v1844 = vpop.f32.mrb[0].mxu0
      %1845 = vmatprep.mubr.f32.mxu0 0.0
      %1846 = vmatmul.mubr.f32.gmra.mrb[0].mxu0 %v1724
      %v1847 = vpop.f32.mrb[0].mxu0
      %v1848 = vadd.f32 0.0, %v1847
      %v1849 = vpop.f32.mrb[0].mxu0
      %1850 = vmatprep.mubr.f32.mxu0 0.0
      %1851 = vmatmul.mubr.f32.gmra.mrb[0].mxu0 %v1727
      %v1852 = vpop.f32.mrb[0].mxu0
      %v1853 = vadd.f32 0.0, %v1852
      %v1854 = vpop.f32.mrb[0].mxu0
      %1855 = vmatprep.mubr.f32.mxu0 0.0
      %1856 = vmatmul.mubr.f32.gmra.mrb[0].mxu0 %v1730
      %v1857 = vpop.f32.mrb[0].mxu0
      %v1858 = vadd.f32 0.0, %v1857
      %v1859 = vpop.f32.mrb[0].mxu0
      %1860 = vmatprep.mubr.f32.mxu0 0.0
      %1861 = vmatmul.mubr.f32.gmra.mrb[0].mxu0 %v1733
      %v1862 = vpop.f32.mrb[0].mxu0
      %v1863 = vadd.f32 0.0, %v1862
      %v1864 = vpop.f32.mrb[0].mxu0
      %1865 = vmatprep.mubr.f32.mxu0 0.0
      %1866 = vmatmul.mubr.f32.gmra.mrb[0].mxu0 %v1736
      %v1867 = vpop.f32.mrb[0].mxu0
      %v1868 = vadd.f32 0.0, %v1867
      %v1869 = vpop.f32.mrb[0].mxu0
      %1870 = vmatprep.mubr.f32.mxu0 0.0
      %1871 = vmatmul.mubr.f32.gmra.mrb[0].mxu0 %v1739
      %v1872 = vpop.f32.mrb[0].mxu0
      %v1873 = vadd.f32 0.0, %v1872
      %v1874 = vpop.f32.mrb[0].mxu0
      %1875 = vmatprep.mubr.f32.mxu0 0.0
      %1876 = vmatmul.mubr.f32.gmra.mrb[0].mxu0 %v1742
      %v1877 = vpop.f32.mrb[0].mxu0
      %v1878 = vadd.f32 0.0, %v1877
      %v1879 = vpop.f32.mrb[0].mxu0
      %1880 = vmatprep.mubr.f32.mxu0 0.0
      %1881 = vmatmul.mubr.f32.gmra.mrb[0].mxu0 %v1745
      %v1882 = vpop.f32.mrb[0].mxu0
      %v1883 = vadd.f32 0.0, %v1882
      %v1884 = vpop.f32.mrb[0].mxu0
      %1885 = vmatprep.mubr.f32.mxu0 0.0
      %1886 = vmatmul.mubr.f32.gmra.mrb[0].mxu0 %v1748
      %v1887 = vpop.f32.mrb[0].mxu0
      %v1888 = vadd.f32 0.0, %v1887
      %v1889 = vpop.f32.mrb[0].mxu0
      %1890 = vmatprep.mubr.f32.mxu0 0.0
      %1891 = vmatmul.mubr.f32.gmra.mrb[0].mxu0 %v1751
      %v1892 = vpop.f32.mrb[0].mxu0
      %v1893 = vadd.f32 0.0, %v1892
      %v1894 = vpop.f32.mrb[0].mxu0
      %1895 = vmatprep.mubr.f32.mxu0 0.0
      %1896 = vmatmul.mubr.f32.gmra.mrb[0].mxu0 %v1754
      %v1897 = vpop.f32.mrb[0].mxu0
      %v1898 = vadd.f32 0.0, %v1897
      %v1899 = vpop.f32.mrb[0].mxu0
      %1900 = vdwg.mxu0
      %s1901 = scalar_lea.vmem %s5, 64
      %v1902 = vld [vmem:[%s1901] sm:$0xff]
      %v1903 = vld [vmem:[%s1901 + $0x8] sm:$0xff]
      %v1904 = vld [vmem:[%s1901 + $0x10] sm:$0xff]
      %v1905 = vld [vmem:[%s1901 + $0x18] sm:$0xff]
      %1906 = vmatprep.subr.mxu0 0.0
      %1907 = vmatpush1.msra.mxu0 %v1902
      %1908 = vmatprep.subr.mxu0 0.0
      %1909 = vmatpush1.msra.mxu0 %v1903
      %1910 = vmatprep.subr.mxu0 0.0
      %1911 = vmatpush1.msra.mxu0 %v1904
      %1912 = vmatprep.subr.mxu0 0.0
      %1913 = vmatpush1.msra.mxu0 %v1905
      %1914 = vmatprep.subr.mxu0 0.0
      %1915 = vmatpush1.msra.mxu0 0.0
      %1916 = vmatprep.subr.mxu0 0.0
      %1917 = vmatpush1.msra.mxu0 0.0
      %1918 = vmatprep.subr.mxu0 0.0
      %1919 = vmatpush1.msra.mxu0 0.0
      %1920 = vmatprep.subr.mxu0 0.0
      %1921 = vmatpush1.msra.mxu0 0.0
      %1922 = vmatprep.subr.mxu0 0.0
      %1923 = vmatpush1.msra.mxu0 0.0
      %1924 = vmatprep.subr.mxu0 0.0
      %1925 = vmatpush1.msra.mxu0 0.0
      %1926 = vmatprep.subr.mxu0 0.0
      %1927 = vmatpush1.msra.mxu0 0.0
      %1928 = vmatprep.subr.mxu0 0.0
      %1929 = vmatpush1.msra.mxu0 0.0
      %1930 = vmatprep.subr.mxu0 0.0
      %1931 = vmatpush1.msra.mxu0 0.0
      %1932 = vmatprep.subr.mxu0 0.0
      %1933 = vmatpush1.msra.mxu0 0.0
      %1934 = vmatprep.subr.mxu0 0.0
      %1935 = vmatpush1.msra.mxu0 0.0
      %1936 = vmatprep.subr.mxu0 0.0
      %1937 = vmatpush1.msra.mxu0 0.0
      %1938 = vmatprep.subr.mxu0 0.0
      %1939 = vmatpush1.msra.mxu0 0.0
      %1940 = vmatprep.subr.mxu0 0.0
      %1941 = vmatpush1.msra.mxu0 0.0
      %1942 = vmatprep.subr.mxu0 0.0
      %1943 = vmatpush1.msra.mxu0 0.0
      %1944 = vmatprep.subr.mxu0 0.0
      %1945 = vmatpush1.msra.mxu0 0.0
      %1946 = vmatprep.subr.mxu0 0.0
      %1947 = vmatpush1.msra.mxu0 0.0
      %1948 = vmatprep.subr.mxu0 0.0
      %1949 = vmatpush1.msra.mxu0 0.0
      %1950 = vmatprep.subr.mxu0 0.0
      %1951 = vmatpush1.msra.mxu0 0.0
      %1952 = vmatprep.subr.mxu0 0.0
      %1953 = vmatpush1.msra.mxu0 0.0
      %1954 = vmatprep.subr.mxu0 0.0
      %1955 = vmatpush1.msra.mxu0 0.0
      %1956 = vmatprep.subr.mxu0 0.0
      %1957 = vmatpush1.msra.mxu0 0.0
      %1958 = vmatprep.subr.mxu0 0.0
      %1959 = vmatpush1.msra.mxu0 0.0
      %1960 = vmatprep.subr.mxu0 0.0
      %1961 = vmatpush1.msra.mxu0 0.0
      %1962 = vmatprep.subr.mxu0 0.0
      %1963 = vmatpush1.msra.mxu0 0.0
      %1964 = vmatprep.subr.mxu0 0.0
      %1965 = vmatpush1.msra.mxu0 0.0
      %1966 = vmatprep.subr.mxu0 0.0
      %1967 = vmatpush1.msra.mxu0 0.0
      %1968 = vmatprep.subr.mxu0 0.0
      %1969 = vmatpush1.msra.mxu0 0.0
      %1970 = vmatprep.mubr.f32.mxu0 0.0
      %1971 = vmatmul.mubr.f32.gmra.mrb[0].mxu0 %v1511
      %v1972 = vpop.f32.mrb[0].mxu0
      %v1973 = vadd.f32 0.0, %v1972
      %v1974 = vpop.f32.mrb[0].mxu0
      %1975 = vmatprep.mubr.f32.mxu0 0.0
      %1976 = vmatmul.mubr.f32.gmra.mrb[0].mxu0 %v1514
      %v1977 = vpop.f32.mrb[0].mxu0
      %v1978 = vadd.f32 0.0, %v1977
      %v1979 = vpop.f32.mrb[0].mxu0
      %1980 = vmatprep.mubr.f32.mxu0 0.0
      %1981 = vmatmul.mubr.f32.gmra.mrb[0].mxu0 %v1517
      %v1982 = vpop.f32.mrb[0].mxu0
      %v1983 = vadd.f32 0.0, %v1982
      %v1984 = vpop.f32.mrb[0].mxu0
      %1985 = vmatprep.mubr.f32.mxu0 0.0
      %1986 = vmatmul.mubr.f32.gmra.mrb[0].mxu0 %v1520
      %v1987 = vpop.f32.mrb[0].mxu0
      %v1988 = vadd.f32 0.0, %v1987
      %v1989 = vpop.f32.mrb[0].mxu0
      %1990 = vmatprep.mubr.f32.mxu0 0.0
      %1991 = vmatmul.mubr.f32.gmra.mrb[0].mxu0 %v1523
      %v1992 = vpop.f32.mrb[0].mxu0
      %v1993 = vadd.f32 0.0, %v1992
      %v1994 = vpop.f32.mrb[0].mxu0
      %1995 = vmatprep.mubr.f32.mxu0 0.0
      %1996 = vmatmul.mubr.f32.gmra.mrb[0].mxu0 %v1526
      %v1997 = vpop.f32.mrb[0].mxu0
      %v1998 = vadd.f32 0.0, %v1997
      %v1999 = vpop.f32.mrb[0].mxu0
      %2000 = vmatprep.mubr.f32.mxu0 0.0
      %2001 = vmatmul.mubr.f32.gmra.mrb[0].mxu0 %v1529
      %v2002 = vpop.f32.mrb[0].mxu0
      %v2003 = vadd.f32 0.0, %v2002
      %v2004 = vpop.f32.mrb[0].mxu0
      %2005 = vmatprep.mubr.f32.mxu0 0.0
      %2006 = vmatmul.mubr.f32.gmra.mrb[0].mxu0 %v1532
      %v2007 = vpop.f32.mrb[0].mxu0
      %v2008 = vadd.f32 0.0, %v2007
      %v2009 = vpop.f32.mrb[0].mxu0
      %2010 = vmatprep.mubr.f32.mxu0 0.0
      %2011 = vmatmul.mubr.f32.gmra.mrb[0].mxu0 %v1535
      %v2012 = vpop.f32.mrb[0].mxu0
      %v2013 = vadd.f32 0.0, %v2012
      %v2014 = vpop.f32.mrb[0].mxu0
      %2015 = vmatprep.mubr.f32.mxu0 0.0
      %2016 = vmatmul.mubr.f32.gmra.mrb[0].mxu0 %v1538
      %v2017 = vpop.f32.mrb[0].mxu0
      %v2018 = vadd.f32 0.0, %v2017
      %v2019 = vpop.f32.mrb[0].mxu0
      %2020 = vmatprep.mubr.f32.mxu0 0.0
      %2021 = vmatmul.mubr.f32.gmra.mrb[0].mxu0 %v1541
      %v2022 = vpop.f32.mrb[0].mxu0
      %v2023 = vadd.f32 0.0, %v2022
      %v2024 = vpop.f32.mrb[0].mxu0
      %2025 = vmatprep.mubr.f32.mxu0 0.0
      %2026 = vmatmul.mubr.f32.gmra.mrb[0].mxu0 %v1544
      %v2027 = vpop.f32.mrb[0].mxu0
      %v2028 = vadd.f32 0.0, %v2027
      %v2029 = vpop.f32.mrb[0].mxu0
      %2030 = vmatprep.mubr.f32.mxu0 0.0
      %2031 = vmatmul.mubr.f32.gmra.mrb[0].mxu0 %v1547
      %v2032 = vpop.f32.mrb[0].mxu0
      %v2033 = vadd.f32 0.0, %v2032
      %v2034 = vpop.f32.mrb[0].mxu0
      %2035 = vmatprep.mubr.f32.mxu0 0.0
      %2036 = vmatmul.mubr.f32.gmra.mrb[0].mxu0 %v1550
      %v2037 = vpop.f32.mrb[0].mxu0
      %v2038 = vadd.f32 0.0, %v2037
      %v2039 = vpop.f32.mrb[0].mxu0
      %2040 = vmatprep.mubr.f32.mxu0 0.0
      %2041 = vmatmul.mubr.f32.gmra.mrb[0].mxu0 %v1553
      %v2042 = vpop.f32.mrb[0].mxu0
      %v2043 = vadd.f32 0.0, %v2042
      %v2044 = vpop.f32.mrb[0].mxu0
      %2045 = vmatprep.mubr.f32.mxu0 0.0
      %2046 = vmatmul.mubr.f32.gmra.mrb[0].mxu0 %v1556
      %v2047 = vpop.f32.mrb[0].mxu0
      %v2048 = vadd.f32 0.0, %v2047
      %v2049 = vpop.f32.mrb[0].mxu0
      %2050 = vdwg.mxu0
      %v2051 = vmul.f32 %v1625, 0.17677669
      %v2052 = vmul.f32 %v1630, 0.17677669
      %v2053 = vmul.f32 %v1635, 0.17677669
      %v2054 = vmul.f32 %v1640, 0.17677669
      %v2055 = vmul.f32 %v1645, 0.17677669
      %v2056 = vmul.f32 %v1650, 0.17677669
      %v2057 = vmul.f32 %v1655, 0.17677669
      %v2058 = vmul.f32 %v1660, 0.17677669
      %v2059 = vmul.f32 %v1665, 0.17677669
      %v2060 = vmul.f32 %v1670, 0.17677669
      %v2061 = vmul.f32 %v1675, 0.17677669
      %v2062 = vmul.f32 %v1680, 0.17677669
      %v2063 = vmul.f32 %v1685, 0.17677669
      %v2064 = vmul.f32 %v1690, 0.17677669
      %v2065 = vmul.f32 %v1695, 0.17677669
      %v2066 = vmul.f32 %v1700, 0.17677669
      %v2067 = vlaneseq
      %v2068 = vand.u32 %v2067, 127
      %vm2069 = vcmp.ge.s32.totalorder %v2068, 0
      %vm2070 = vcmp.lt.s32.totalorder %v2068, 8
      %vm2071 = vmand %vm2069, %vm2070
      %v2072 = vsel %vm2071, 1, 0
      %vm2073 = vcmp.eq.s32.totalorder %v2072, 1
      %v2074 = vsel %vm2073, %v1823, 0.0
      %v2075 = vsel %vm2073, %v1828, 0.0
      %v2076 = vsel %vm2073, %v1833, 0.0
      %v2077 = vsel %vm2073, %v1838, 0.0
      %v2078 = vsel %vm2073, %v1843, 0.0
      %v2079 = vsel %vm2073, %v1848, 0.0
      %v2080 = vsel %vm2073, %v1853, 0.0
      %v2081 = vsel %vm2073, %v1858, 0.0
      %v2082 = vsel %vm2073, %v1863, 0.0
      %v2083 = vsel %vm2073, %v1868, 0.0
      %v2084 = vsel %vm2073, %v1873, 0.0
      %v2085 = vsel %vm2073, %v1878, 0.0
      %v2086 = vsel %vm2073, %v1883, 0.0
      %v2087 = vsel %vm2073, %v1888, 0.0
      %v2088 = vsel %vm2073, %v1893, 0.0
      %v2089 = vsel %vm2073, %v1898, 0.0
      %v2090 = vsel %vm2073, %v1973, 0.0
      %v2091 = vsel %vm2073, %v1978, 0.0
      %v2092 = vsel %vm2073, %v1983, 0.0
      %v2093 = vsel %vm2073, %v1988, 0.0
      %v2094 = vsel %vm2073, %v1993, 0.0
      %v2095 = vsel %vm2073, %v1998, 0.0
      %v2096 = vsel %vm2073, %v2003, 0.0
      %v2097 = vsel %vm2073, %v2008, 0.0
      %v2098 = vsel %vm2073, %v2013, 0.0
      %v2099 = vsel %vm2073, %v2018, 0.0
      %v2100 = vsel %vm2073, %v2023, 0.0
      %v2101 = vsel %vm2073, %v2028, 0.0
      %v2102 = vsel %vm2073, %v2033, 0.0
      %v2103 = vsel %vm2073, %v2038, 0.0
      %v2104 = vsel %vm2073, %v2043, 0.0
      %v2105 = vsel %vm2073, %v2048, 0.0
      %v2107 = vsel %vm553, %v2051, 0
      %v2110 = vsel %vm553, %v2052, 0
      %v2113 = vsel %vm553, %v2074, 0
      %v2116 = vsel %vm553, %v2075, 0
      %2118 = vmatprep.subr.mxu0 0.0
      %2119 = vmatpush1.xpose.msra.mxu0 %v2113
      %2120 = vmatprep.subr.mxu0 0.0
      %2121 = vmatpush1.xpose.msra.mxu0 %v2116
      %2122 = vmatprep.subr.mxu0 0.0
      %2123 = vmatpush1.xpose.msra.mxu0 0.0
      %2124 = vmatprep.subr.mxu0 0.0
      %2125 = vmatpush1.xpose.msra.mxu0 0.0
      %2126 = vmatprep.subr.mxu0 0.0
      %2127 = vmatpush1.xpose.msra.mxu0 0.0
      %2128 = vmatprep.subr.mxu0 0.0
      %2129 = vmatpush1.xpose.msra.mxu0 0.0
      %2130 = vmatprep.subr.mxu0 0.0
      %2131 = vmatpush1.xpose.msra.mxu0 0.0
      %2132 = vmatprep.subr.mxu0 0.0
      %2133 = vmatpush1.xpose.msra.mxu0 0.0
      %2134 = vmatprep.subr.mxu0 0.0
      %2135 = vmatpush1.xpose.msra.mxu0 0.0
      %2136 = vmatprep.subr.mxu0 0.0
      %2137 = vmatpush1.xpose.msra.mxu0 0.0
      %2138 = vmatprep.subr.mxu0 0.0
      %2139 = vmatpush1.xpose.msra.mxu0 0.0
      %2140 = vmatprep.subr.mxu0 0.0
      %2141 = vmatpush1.xpose.msra.mxu0 0.0
      %2142 = vmatprep.subr.mxu0 0.0
      %2143 = vmatpush1.xpose.msra.mxu0 0.0
      %2144 = vmatprep.subr.mxu0 0.0
      %2145 = vmatpush1.xpose.msra.mxu0 0.0
      %2146 = vmatprep.subr.mxu0 0.0
      %2147 = vmatpush1.xpose.msra.mxu0 0.0
      %2148 = vmatprep.subr.mxu0 0.0
      %2149 = vmatpush1.xpose.msra.mxu0 0.0
      %2150 = vmatprep.subr.mxu0 0.0
      %2151 = vmatpush1.xpose.msra.mxu0 0.0
      %2152 = vmatprep.subr.mxu0 0.0
      %2153 = vmatpush1.xpose.msra.mxu0 0.0
      %2154 = vmatprep.subr.mxu0 0.0
      %2155 = vmatpush1.xpose.msra.mxu0 0.0
      %2156 = vmatprep.subr.mxu0 0.0
      %2157 = vmatpush1.xpose.msra.mxu0 0.0
      %2158 = vmatprep.subr.mxu0 0.0
      %2159 = vmatpush1.xpose.msra.mxu0 0.0
      %2160 = vmatprep.subr.mxu0 0.0
      %2161 = vmatpush1.xpose.msra.mxu0 0.0
      %2162 = vmatprep.subr.mxu0 0.0
      %2163 = vmatpush1.xpose.msra.mxu0 0.0
      %2164 = vmatprep.subr.mxu0 0.0
      %2165 = vmatpush1.xpose.msra.mxu0 0.0
      %2166 = vmatprep.subr.mxu0 0.0
      %2167 = vmatpush1.xpose.msra.mxu0 0.0
      %2168 = vmatprep.subr.mxu0 0.0
      %2169 = vmatpush1.xpose.msra.mxu0 0.0
      %2170 = vmatprep.subr.mxu0 0.0
      %2171 = vmatpush1.xpose.msra.mxu0 0.0
      %2172 = vmatprep.subr.mxu0 0.0
      %2173 = vmatpush1.xpose.msra.mxu0 0.0
      %2174 = vmatprep.subr.mxu0 0.0
      %2175 = vmatpush1.xpose.msra.mxu0 0.0
      %2176 = vmatprep.subr.mxu0 0.0
      %2177 = vmatpush1.xpose.msra.mxu0 0.0
      %2178 = vmatprep.subr.mxu0 0.0
      %2179 = vmatpush1.xpose.msra.mxu0 0.0
      %2180 = vmatprep.subr.mxu0 0.0
      %2181 = vmatpush1.xpose.msra.mxu0 0.0
      %2182 = vmatprep.mubr.f32.mxu0 0.0
      %2183 = vmatmul.mubr.f32.gmra.mrb[0].mxu0 %v2107
      %v2184 = vpop.f32.mrb[0].mxu0
      %v2185 = vadd.f32 0.0, %v2184
      %v2186 = vpop.f32.mrb[0].mxu0
      %2187 = vmatprep.mubr.f32.mxu0 0.0
      %2188 = vmatmul.mubr.f32.gmra.mrb[0].mxu0 %v2110
      %v2189 = vpop.f32.mrb[0].mxu0
      %v2190 = vadd.f32 0.0, %v2189
      %v2191 = vpop.f32.mrb[0].mxu0
      %2192 = vdwg.mxu0
      %v2194 = vsel %vm553, %v2053, 0
      %v2197 = vsel %vm553, %v2054, 0
      %v2200 = vsel %vm553, %v2076, 0
      %v2203 = vsel %vm553, %v2077, 0
      %2205 = vmatprep.subr.mxu0 0.0
      %2206 = vmatpush1.xpose.msra.mxu0 %v2200
      %2207 = vmatprep.subr.mxu0 0.0
      %2208 = vmatpush1.xpose.msra.mxu0 %v2203
      %2209 = vmatprep.subr.mxu0 0.0
      %2210 = vmatpush1.xpose.msra.mxu0 0.0
      %2211 = vmatprep.subr.mxu0 0.0
      %2212 = vmatpush1.xpose.msra.mxu0 0.0
      %2213 = vmatprep.subr.mxu0 0.0
      %2214 = vmatpush1.xpose.msra.mxu0 0.0
      %2215 = vmatprep.subr.mxu0 0.0
      %2216 = vmatpush1.xpose.msra.mxu0 0.0
      %2217 = vmatprep.subr.mxu0 0.0
      %2218 = vmatpush1.xpose.msra.mxu0 0.0
      %2219 = vmatprep.subr.mxu0 0.0
      %2220 = vmatpush1.xpose.msra.mxu0 0.0
      %2221 = vmatprep.subr.mxu0 0.0
      %2222 = vmatpush1.xpose.msra.mxu0 0.0
      %2223 = vmatprep.subr.mxu0 0.0
      %2224 = vmatpush1.xpose.msra.mxu0 0.0
      %2225 = vmatprep.subr.mxu0 0.0
      %2226 = vmatpush1.xpose.msra.mxu0 0.0
      %2227 = vmatprep.subr.mxu0 0.0
      %2228 = vmatpush1.xpose.msra.mxu0 0.0
      %2229 = vmatprep.subr.mxu0 0.0
      %2230 = vmatpush1.xpose.msra.mxu0 0.0
      %2231 = vmatprep.subr.mxu0 0.0
      %2232 = vmatpush1.xpose.msra.mxu0 0.0
      %2233 = vmatprep.subr.mxu0 0.0
      %2234 = vmatpush1.xpose.msra.mxu0 0.0
      %2235 = vmatprep.subr.mxu0 0.0
      %2236 = vmatpush1.xpose.msra.mxu0 0.0
      %2237 = vmatprep.subr.mxu0 0.0
      %2238 = vmatpush1.xpose.msra.mxu0 0.0
      %2239 = vmatprep.subr.mxu0 0.0
      %2240 = vmatpush1.xpose.msra.mxu0 0.0
      %2241 = vmatprep.subr.mxu0 0.0
      %2242 = vmatpush1.xpose.msra.mxu0 0.0
      %2243 = vmatprep.subr.mxu0 0.0
      %2244 = vmatpush1.xpose.msra.mxu0 0.0
      %2245 = vmatprep.subr.mxu0 0.0
      %2246 = vmatpush1.xpose.msra.mxu0 0.0
      %2247 = vmatprep.subr.mxu0 0.0
      %2248 = vmatpush1.xpose.msra.mxu0 0.0
      %2249 = vmatprep.subr.mxu0 0.0
      %2250 = vmatpush1.xpose.msra.mxu0 0.0
      %2251 = vmatprep.subr.mxu0 0.0
      %2252 = vmatpush1.xpose.msra.mxu0 0.0
      %2253 = vmatprep.subr.mxu0 0.0
      %2254 = vmatpush1.xpose.msra.mxu0 0.0
      %2255 = vmatprep.subr.mxu0 0.0
      %2256 = vmatpush1.xpose.msra.mxu0 0.0
      %2257 = vmatprep.subr.mxu0 0.0
      %2258 = vmatpush1.xpose.msra.mxu0 0.0
      %2259 = vmatprep.subr.mxu0 0.0
      %2260 = vmatpush1.xpose.msra.mxu0 0.0
      %2261 = vmatprep.subr.mxu0 0.0
      %2262 = vmatpush1.xpose.msra.mxu0 0.0
      %2263 = vmatprep.subr.mxu0 0.0
      %2264 = vmatpush1.xpose.msra.mxu0 0.0
      %2265 = vmatprep.subr.mxu0 0.0
      %2266 = vmatpush1.xpose.msra.mxu0 0.0
      %2267 = vmatprep.subr.mxu0 0.0
      %2268 = vmatpush1.xpose.msra.mxu0 0.0
      %2269 = vmatprep.mubr.f32.mxu0 0.0
      %2270 = vmatmul.mubr.f32.gmra.mrb[0].mxu0 %v2194
      %v2271 = vpop.f32.mrb[0].mxu0
      %v2272 = vadd.f32 0.0, %v2271
      %v2273 = vpop.f32.mrb[0].mxu0
      %2274 = vmatprep.mubr.f32.mxu0 0.0
      %2275 = vmatmul.mubr.f32.gmra.mrb[0].mxu0 %v2197
      %v2276 = vpop.f32.mrb[0].mxu0
      %v2277 = vadd.f32 0.0, %v2276
      %v2278 = vpop.f32.mrb[0].mxu0
      %2279 = vdwg.mxu0
      %v2281 = vsel %vm553, %v2055, 0
      %v2284 = vsel %vm553, %v2056, 0
      %v2287 = vsel %vm553, %v2078, 0
      %v2290 = vsel %vm553, %v2079, 0
      %2292 = vmatprep.subr.mxu0 0.0
      %2293 = vmatpush1.xpose.msra.mxu0 %v2287
      %2294 = vmatprep.subr.mxu0 0.0
      %2295 = vmatpush1.xpose.msra.mxu0 %v2290
      %2296 = vmatprep.subr.mxu0 0.0
      %2297 = vmatpush1.xpose.msra.mxu0 0.0
      %2298 = vmatprep.subr.mxu0 0.0
      %2299 = vmatpush1.xpose.msra.mxu0 0.0
      %2300 = vmatprep.subr.mxu0 0.0
      %2301 = vmatpush1.xpose.msra.mxu0 0.0
      %2302 = vmatprep.subr.mxu0 0.0
      %2303 = vmatpush1.xpose.msra.mxu0 0.0
      %2304 = vmatprep.subr.mxu0 0.0
      %2305 = vmatpush1.xpose.msra.mxu0 0.0
      %2306 = vmatprep.subr.mxu0 0.0
      %2307 = vmatpush1.xpose.msra.mxu0 0.0
      %2308 = vmatprep.subr.mxu0 0.0
      %2309 = vmatpush1.xpose.msra.mxu0 0.0
      %2310 = vmatprep.subr.mxu0 0.0
      %2311 = vmatpush1.xpose.msra.mxu0 0.0
      %2312 = vmatprep.subr.mxu0 0.0
      %2313 = vmatpush1.xpose.msra.mxu0 0.0
      %2314 = vmatprep.subr.mxu0 0.0
      %2315 = vmatpush1.xpose.msra.mxu0 0.0
      %2316 = vmatprep.subr.mxu0 0.0
      %2317 = vmatpush1.xpose.msra.mxu0 0.0
      %2318 = vmatprep.subr.mxu0 0.0
      %2319 = vmatpush1.xpose.msra.mxu0 0.0
      %2320 = vmatprep.subr.mxu0 0.0
      %2321 = vmatpush1.xpose.msra.mxu0 0.0
      %2322 = vmatprep.subr.mxu0 0.0
      %2323 = vmatpush1.xpose.msra.mxu0 0.0
      %2324 = vmatprep.subr.mxu0 0.0
      %2325 = vmatpush1.xpose.msra.mxu0 0.0
      %2326 = vmatprep.subr.mxu0 0.0
      %2327 = vmatpush1.xpose.msra.mxu0 0.0
      %2328 = vmatprep.subr.mxu0 0.0
      %2329 = vmatpush1.xpose.msra.mxu0 0.0
      %2330 = vmatprep.subr.mxu0 0.0
      %2331 = vmatpush1.xpose.msra.mxu0 0.0
      %2332 = vmatprep.subr.mxu0 0.0
      %2333 = vmatpush1.xpose.msra.mxu0 0.0
      %2334 = vmatprep.subr.mxu0 0.0
      %2335 = vmatpush1.xpose.msra.mxu0 0.0
      %2336 = vmatprep.subr.mxu0 0.0
      %2337 = vmatpush1.xpose.msra.mxu0 0.0
      %2338 = vmatprep.subr.mxu0 0.0
      %2339 = vmatpush1.xpose.msra.mxu0 0.0
      %2340 = vmatprep.subr.mxu0 0.0
      %2341 = vmatpush1.xpose.msra.mxu0 0.0
      %2342 = vmatprep.subr.mxu0 0.0
      %2343 = vmatpush1.xpose.msra.mxu0 0.0
      %2344 = vmatprep.subr.mxu0 0.0
      %2345 = vmatpush1.xpose.msra.mxu0 0.0
      %2346 = vmatprep.subr.mxu0 0.0
      %2347 = vmatpush1.xpose.msra.mxu0 0.0
      %2348 = vmatprep.subr.mxu0 0.0
      %2349 = vmatpush1.xpose.msra.mxu0 0.0
      %2350 = vmatprep.subr.mxu0 0.0
      %2351 = vmatpush1.xpose.msra.mxu0 0.0
      %2352 = vmatprep.subr.mxu0 0.0
      %2353 = vmatpush1.xpose.msra.mxu0 0.0
      %2354 = vmatprep.subr.mxu0 0.0
      %2355 = vmatpush1.xpose.msra.mxu0 0.0
      %2356 = vmatprep.mubr.f32.mxu0 0.0
      %2357 = vmatmul.mubr.f32.gmra.mrb[0].mxu0 %v2281
      %v2358 = vpop.f32.mrb[0].mxu0
      %v2359 = vadd.f32 0.0, %v2358
      %v2360 = vpop.f32.mrb[0].mxu0
      %2361 = vmatprep.mubr.f32.mxu0 0.0
      %2362 = vmatmul.mubr.f32.gmra.mrb[0].mxu0 %v2284
      %v2363 = vpop.f32.mrb[0].mxu0
      %v2364 = vadd.f32 0.0, %v2363
      %v2365 = vpop.f32.mrb[0].mxu0
      %2366 = vdwg.mxu0
      %v2368 = vsel %vm553, %v2057, 0
      %v2371 = vsel %vm553, %v2058, 0
      %v2374 = vsel %vm553, %v2080, 0
      %v2377 = vsel %vm553, %v2081, 0
      %2379 = vmatprep.subr.mxu0 0.0
      %2380 = vmatpush1.xpose.msra.mxu0 %v2374
      %2381 = vmatprep.subr.mxu0 0.0
      %2382 = vmatpush1.xpose.msra.mxu0 %v2377
      %2383 = vmatprep.subr.mxu0 0.0
      %2384 = vmatpush1.xpose.msra.mxu0 0.0
      %2385 = vmatprep.subr.mxu0 0.0
      %2386 = vmatpush1.xpose.msra.mxu0 0.0
      %2387 = vmatprep.subr.mxu0 0.0
      %2388 = vmatpush1.xpose.msra.mxu0 0.0
      %2389 = vmatprep.subr.mxu0 0.0
      %2390 = vmatpush1.xpose.msra.mxu0 0.0
      %2391 = vmatprep.subr.mxu0 0.0
      %2392 = vmatpush1.xpose.msra.mxu0 0.0
      %2393 = vmatprep.subr.mxu0 0.0
      %2394 = vmatpush1.xpose.msra.mxu0 0.0
      %2395 = vmatprep.subr.mxu0 0.0
      %2396 = vmatpush1.xpose.msra.mxu0 0.0
      %2397 = vmatprep.subr.mxu0 0.0
      %2398 = vmatpush1.xpose.msra.mxu0 0.0
      %2399 = vmatprep.subr.mxu0 0.0
      %2400 = vmatpush1.xpose.msra.mxu0 0.0
      %2401 = vmatprep.subr.mxu0 0.0
      %2402 = vmatpush1.xpose.msra.mxu0 0.0
      %2403 = vmatprep.subr.mxu0 0.0
      %2404 = vmatpush1.xpose.msra.mxu0 0.0
      %2405 = vmatprep.subr.mxu0 0.0
      %2406 = vmatpush1.xpose.msra.mxu0 0.0
      %2407 = vmatprep.subr.mxu0 0.0
      %2408 = vmatpush1.xpose.msra.mxu0 0.0
      %2409 = vmatprep.subr.mxu0 0.0
      %2410 = vmatpush1.xpose.msra.mxu0 0.0
      %2411 = vmatprep.subr.mxu0 0.0
      %2412 = vmatpush1.xpose.msra.mxu0 0.0
      %2413 = vmatprep.subr.mxu0 0.0
      %2414 = vmatpush1.xpose.msra.mxu0 0.0
      %2415 = vmatprep.subr.mxu0 0.0
      %2416 = vmatpush1.xpose.msra.mxu0 0.0
      %2417 = vmatprep.subr.mxu0 0.0
      %2418 = vmatpush1.xpose.msra.mxu0 0.0
      %2419 = vmatprep.subr.mxu0 0.0
      %2420 = vmatpush1.xpose.msra.mxu0 0.0
      %2421 = vmatprep.subr.mxu0 0.0
      %2422 = vmatpush1.xpose.msra.mxu0 0.0
      %2423 = vmatprep.subr.mxu0 0.0
      %2424 = vmatpush1.xpose.msra.mxu0 0.0
      %2425 = vmatprep.subr.mxu0 0.0
      %2426 = vmatpush1.xpose.msra.mxu0 0.0
      %2427 = vmatprep.subr.mxu0 0.0
      %2428 = vmatpush1.xpose.msra.mxu0 0.0
      %2429 = vmatprep.subr.mxu0 0.0
      %2430 = vmatpush1.xpose.msra.mxu0 0.0
      %2431 = vmatprep.subr.mxu0 0.0
      %2432 = vmatpush1.xpose.msra.mxu0 0.0
      %2433 = vmatprep.subr.mxu0 0.0
      %2434 = vmatpush1.xpose.msra.mxu0 0.0
      %2435 = vmatprep.subr.mxu0 0.0
      %2436 = vmatpush1.xpose.msra.mxu0 0.0
      %2437 = vmatprep.subr.mxu0 0.0
      %2438 = vmatpush1.xpose.msra.mxu0 0.0
      %2439 = vmatprep.subr.mxu0 0.0
      %2440 = vmatpush1.xpose.msra.mxu0 0.0
      %2441 = vmatprep.subr.mxu0 0.0
      %2442 = vmatpush1.xpose.msra.mxu0 0.0
      %2443 = vmatprep.mubr.f32.mxu0 0.0
      %2444 = vmatmul.mubr.f32.gmra.mrb[0].mxu0 %v2368
      %v2445 = vpop.f32.mrb[0].mxu0
      %v2446 = vadd.f32 0.0, %v2445
      %v2447 = vpop.f32.mrb[0].mxu0
      %2448 = vmatprep.mubr.f32.mxu0 0.0
      %2449 = vmatmul.mubr.f32.gmra.mrb[0].mxu0 %v2371
      %v2450 = vpop.f32.mrb[0].mxu0
      %v2451 = vadd.f32 0.0, %v2450
      %v2452 = vpop.f32.mrb[0].mxu0
      %2453 = vdwg.mxu0
      %v2455 = vsel %vm553, %v2059, 0
      %v2458 = vsel %vm553, %v2060, 0
      %v2461 = vsel %vm553, %v2082, 0
      %v2464 = vsel %vm553, %v2083, 0
      %2466 = vmatprep.subr.mxu0 0.0
      %2467 = vmatpush1.xpose.msra.mxu0 %v2461
      %2468 = vmatprep.subr.mxu0 0.0
      %2469 = vmatpush1.xpose.msra.mxu0 %v2464
      %2470 = vmatprep.subr.mxu0 0.0
      %2471 = vmatpush1.xpose.msra.mxu0 0.0
      %2472 = vmatprep.subr.mxu0 0.0
      %2473 = vmatpush1.xpose.msra.mxu0 0.0
      %2474 = vmatprep.subr.mxu0 0.0
      %2475 = vmatpush1.xpose.msra.mxu0 0.0
      %2476 = vmatprep.subr.mxu0 0.0
      %2477 = vmatpush1.xpose.msra.mxu0 0.0
      %2478 = vmatprep.subr.mxu0 0.0
      %2479 = vmatpush1.xpose.msra.mxu0 0.0
      %2480 = vmatprep.subr.mxu0 0.0
      %2481 = vmatpush1.xpose.msra.mxu0 0.0
      %2482 = vmatprep.subr.mxu0 0.0
      %2483 = vmatpush1.xpose.msra.mxu0 0.0
      %2484 = vmatprep.subr.mxu0 0.0
      %2485 = vmatpush1.xpose.msra.mxu0 0.0
      %2486 = vmatprep.subr.mxu0 0.0
      %2487 = vmatpush1.xpose.msra.mxu0 0.0
      %2488 = vmatprep.subr.mxu0 0.0
      %2489 = vmatpush1.xpose.msra.mxu0 0.0
      %2490 = vmatprep.subr.mxu0 0.0
      %2491 = vmatpush1.xpose.msra.mxu0 0.0
      %2492 = vmatprep.subr.mxu0 0.0
      %2493 = vmatpush1.xpose.msra.mxu0 0.0
      %2494 = vmatprep.subr.mxu0 0.0
      %2495 = vmatpush1.xpose.msra.mxu0 0.0
      %2496 = vmatprep.subr.mxu0 0.0
      %2497 = vmatpush1.xpose.msra.mxu0 0.0
      %2498 = vmatprep.subr.mxu0 0.0
      %2499 = vmatpush1.xpose.msra.mxu0 0.0
      %2500 = vmatprep.subr.mxu0 0.0
      %2501 = vmatpush1.xpose.msra.mxu0 0.0
      %2502 = vmatprep.subr.mxu0 0.0
      %2503 = vmatpush1.xpose.msra.mxu0 0.0
      %2504 = vmatprep.subr.mxu0 0.0
      %2505 = vmatpush1.xpose.msra.mxu0 0.0
      %2506 = vmatprep.subr.mxu0 0.0
      %2507 = vmatpush1.xpose.msra.mxu0 0.0
      %2508 = vmatprep.subr.mxu0 0.0
      %2509 = vmatpush1.xpose.msra.mxu0 0.0
      %2510 = vmatprep.subr.mxu0 0.0
      %2511 = vmatpush1.xpose.msra.mxu0 0.0
      %2512 = vmatprep.subr.mxu0 0.0
      %2513 = vmatpush1.xpose.msra.mxu0 0.0
      %2514 = vmatprep.subr.mxu0 0.0
      %2515 = vmatpush1.xpose.msra.mxu0 0.0
      %2516 = vmatprep.subr.mxu0 0.0
      %2517 = vmatpush1.xpose.msra.mxu0 0.0
      %2518 = vmatprep.subr.mxu0 0.0
      %2519 = vmatpush1.xpose.msra.mxu0 0.0
      %2520 = vmatprep.subr.mxu0 0.0
      %2521 = vmatpush1.xpose.msra.mxu0 0.0
      %2522 = vmatprep.subr.mxu0 0.0
      %2523 = vmatpush1.xpose.msra.mxu0 0.0
      %2524 = vmatprep.subr.mxu0 0.0
      %2525 = vmatpush1.xpose.msra.mxu0 0.0
      %2526 = vmatprep.subr.mxu0 0.0
      %2527 = vmatpush1.xpose.msra.mxu0 0.0
      %2528 = vmatprep.subr.mxu0 0.0
      %2529 = vmatpush1.xpose.msra.mxu0 0.0
      %2530 = vmatprep.mubr.f32.mxu0 0.0
      %2531 = vmatmul.mubr.f32.gmra.mrb[0].mxu0 %v2455
      %v2532 = vpop.f32.mrb[0].mxu0
      %v2533 = vadd.f32 0.0, %v2532
      %v2534 = vpop.f32.mrb[0].mxu0
      %2535 = vmatprep.mubr.f32.mxu0 0.0
      %2536 = vmatmul.mubr.f32.gmra.mrb[0].mxu0 %v2458
      %v2537 = vpop.f32.mrb[0].mxu0
      %v2538 = vadd.f32 0.0, %v2537
      %v2539 = vpop.f32.mrb[0].mxu0
      %2540 = vdwg.mxu0
      %v2542 = vsel %vm553, %v2061, 0
      %v2545 = vsel %vm553, %v2062, 0
      %v2548 = vsel %vm553, %v2084, 0
      %v2551 = vsel %vm553, %v2085, 0
      %2553 = vmatprep.subr.mxu0 0.0
      %2554 = vmatpush1.xpose.msra.mxu0 %v2548
      %2555 = vmatprep.subr.mxu0 0.0
      %2556 = vmatpush1.xpose.msra.mxu0 %v2551
      %2557 = vmatprep.subr.mxu0 0.0
      %2558 = vmatpush1.xpose.msra.mxu0 0.0
      %2559 = vmatprep.subr.mxu0 0.0
      %2560 = vmatpush1.xpose.msra.mxu0 0.0
      %2561 = vmatprep.subr.mxu0 0.0
      %2562 = vmatpush1.xpose.msra.mxu0 0.0
      %2563 = vmatprep.subr.mxu0 0.0
      %2564 = vmatpush1.xpose.msra.mxu0 0.0
      %2565 = vmatprep.subr.mxu0 0.0
      %2566 = vmatpush1.xpose.msra.mxu0 0.0
      %2567 = vmatprep.subr.mxu0 0.0
      %2568 = vmatpush1.xpose.msra.mxu0 0.0
      %2569 = vmatprep.subr.mxu0 0.0
      %2570 = vmatpush1.xpose.msra.mxu0 0.0
      %2571 = vmatprep.subr.mxu0 0.0
      %2572 = vmatpush1.xpose.msra.mxu0 0.0
      %2573 = vmatprep.subr.mxu0 0.0
      %2574 = vmatpush1.xpose.msra.mxu0 0.0
      %2575 = vmatprep.subr.mxu0 0.0
      %2576 = vmatpush1.xpose.msra.mxu0 0.0
      %2577 = vmatprep.subr.mxu0 0.0
      %2578 = vmatpush1.xpose.msra.mxu0 0.0
      %2579 = vmatprep.subr.mxu0 0.0
      %2580 = vmatpush1.xpose.msra.mxu0 0.0
      %2581 = vmatprep.subr.mxu0 0.0
      %2582 = vmatpush1.xpose.msra.mxu0 0.0
      %2583 = vmatprep.subr.mxu0 0.0
      %2584 = vmatpush1.xpose.msra.mxu0 0.0
      %2585 = vmatprep.subr.mxu0 0.0
      %2586 = vmatpush1.xpose.msra.mxu0 0.0
      %2587 = vmatprep.subr.mxu0 0.0
      %2588 = vmatpush1.xpose.msra.mxu0 0.0
      %2589 = vmatprep.subr.mxu0 0.0
      %2590 = vmatpush1.xpose.msra.mxu0 0.0
      %2591 = vmatprep.subr.mxu0 0.0
      %2592 = vmatpush1.xpose.msra.mxu0 0.0
      %2593 = vmatprep.subr.mxu0 0.0
      %2594 = vmatpush1.xpose.msra.mxu0 0.0
      %2595 = vmatprep.subr.mxu0 0.0
      %2596 = vmatpush1.xpose.msra.mxu0 0.0
      %2597 = vmatprep.subr.mxu0 0.0
      %2598 = vmatpush1.xpose.msra.mxu0 0.0
      %2599 = vmatprep.subr.mxu0 0.0
      %2600 = vmatpush1.xpose.msra.mxu0 0.0
      %2601 = vmatprep.subr.mxu0 0.0
      %2602 = vmatpush1.xpose.msra.mxu0 0.0
      %2603 = vmatprep.subr.mxu0 0.0
      %2604 = vmatpush1.xpose.msra.mxu0 0.0
      %2605 = vmatprep.subr.mxu0 0.0
      %2606 = vmatpush1.xpose.msra.mxu0 0.0
      %2607 = vmatprep.subr.mxu0 0.0
      %2608 = vmatpush1.xpose.msra.mxu0 0.0
      %2609 = vmatprep.subr.mxu0 0.0
      %2610 = vmatpush1.xpose.msra.mxu0 0.0
      %2611 = vmatprep.subr.mxu0 0.0
      %2612 = vmatpush1.xpose.msra.mxu0 0.0
      %2613 = vmatprep.subr.mxu0 0.0
      %2614 = vmatpush1.xpose.msra.mxu0 0.0
      %2615 = vmatprep.subr.mxu0 0.0
      %2616 = vmatpush1.xpose.msra.mxu0 0.0
      %2617 = vmatprep.mubr.f32.mxu0 0.0
      %2618 = vmatmul.mubr.f32.gmra.mrb[0].mxu0 %v2542
      %v2619 = vpop.f32.mrb[0].mxu0
      %v2620 = vadd.f32 0.0, %v2619
      %v2621 = vpop.f32.mrb[0].mxu0
      %2622 = vmatprep.mubr.f32.mxu0 0.0
      %2623 = vmatmul.mubr.f32.gmra.mrb[0].mxu0 %v2545
      %v2624 = vpop.f32.mrb[0].mxu0
      %v2625 = vadd.f32 0.0, %v2624
      %v2626 = vpop.f32.mrb[0].mxu0
      %2627 = vdwg.mxu0
      %v2629 = vsel %vm553, %v2063, 0
      %v2632 = vsel %vm553, %v2064, 0
      %v2635 = vsel %vm553, %v2086, 0
      %v2638 = vsel %vm553, %v2087, 0
      %2640 = vmatprep.subr.mxu0 0.0
      %2641 = vmatpush1.xpose.msra.mxu0 %v2635
      %2642 = vmatprep.subr.mxu0 0.0
      %2643 = vmatpush1.xpose.msra.mxu0 %v2638
      %2644 = vmatprep.subr.mxu0 0.0
      %2645 = vmatpush1.xpose.msra.mxu0 0.0
      %2646 = vmatprep.subr.mxu0 0.0
      %2647 = vmatpush1.xpose.msra.mxu0 0.0
      %2648 = vmatprep.subr.mxu0 0.0
      %2649 = vmatpush1.xpose.msra.mxu0 0.0
      %2650 = vmatprep.subr.mxu0 0.0
      %2651 = vmatpush1.xpose.msra.mxu0 0.0
      %2652 = vmatprep.subr.mxu0 0.0
      %2653 = vmatpush1.xpose.msra.mxu0 0.0
      %2654 = vmatprep.subr.mxu0 0.0
      %2655 = vmatpush1.xpose.msra.mxu0 0.0
      %2656 = vmatprep.subr.mxu0 0.0
      %2657 = vmatpush1.xpose.msra.mxu0 0.0
      %2658 = vmatprep.subr.mxu0 0.0
      %2659 = vmatpush1.xpose.msra.mxu0 0.0
      %2660 = vmatprep.subr.mxu0 0.0
      %2661 = vmatpush1.xpose.msra.mxu0 0.0
      %2662 = vmatprep.subr.mxu0 0.0
      %2663 = vmatpush1.xpose.msra.mxu0 0.0
      %2664 = vmatprep.subr.mxu0 0.0
      %2665 = vmatpush1.xpose.msra.mxu0 0.0
      %2666 = vmatprep.subr.mxu0 0.0
      %2667 = vmatpush1.xpose.msra.mxu0 0.0
      %2668 = vmatprep.subr.mxu0 0.0
      %2669 = vmatpush1.xpose.msra.mxu0 0.0
      %2670 = vmatprep.subr.mxu0 0.0
      %2671 = vmatpush1.xpose.msra.mxu0 0.0
      %2672 = vmatprep.subr.mxu0 0.0
      %2673 = vmatpush1.xpose.msra.mxu0 0.0
      %2674 = vmatprep.subr.mxu0 0.0
      %2675 = vmatpush1.xpose.msra.mxu0 0.0
      %2676 = vmatprep.subr.mxu0 0.0
      %2677 = vmatpush1.xpose.msra.mxu0 0.0
      %2678 = vmatprep.subr.mxu0 0.0
      %2679 = vmatpush1.xpose.msra.mxu0 0.0
      %2680 = vmatprep.subr.mxu0 0.0
      %2681 = vmatpush1.xpose.msra.mxu0 0.0
      %2682 = vmatprep.subr.mxu0 0.0
      %2683 = vmatpush1.xpose.msra.mxu0 0.0
      %2684 = vmatprep.subr.mxu0 0.0
      %2685 = vmatpush1.xpose.msra.mxu0 0.0
      %2686 = vmatprep.subr.mxu0 0.0
      %2687 = vmatpush1.xpose.msra.mxu0 0.0
      %2688 = vmatprep.subr.mxu0 0.0
      %2689 = vmatpush1.xpose.msra.mxu0 0.0
      %2690 = vmatprep.subr.mxu0 0.0
      %2691 = vmatpush1.xpose.msra.mxu0 0.0
      %2692 = vmatprep.subr.mxu0 0.0
      %2693 = vmatpush1.xpose.msra.mxu0 0.0
      %2694 = vmatprep.subr.mxu0 0.0
      %2695 = vmatpush1.xpose.msra.mxu0 0.0
      %2696 = vmatprep.subr.mxu0 0.0
      %2697 = vmatpush1.xpose.msra.mxu0 0.0
      %2698 = vmatprep.subr.mxu0 0.0
      %2699 = vmatpush1.xpose.msra.mxu0 0.0
      %2700 = vmatprep.subr.mxu0 0.0
      %2701 = vmatpush1.xpose.msra.mxu0 0.0
      %2702 = vmatprep.subr.mxu0 0.0
      %2703 = vmatpush1.xpose.msra.mxu0 0.0
      %2704 = vmatprep.mubr.f32.mxu0 0.0
      %2705 = vmatmul.mubr.f32.gmra.mrb[0].mxu0 %v2629
      %v2706 = vpop.f32.mrb[0].mxu0
      %v2707 = vadd.f32 0.0, %v2706
      %v2708 = vpop.f32.mrb[0].mxu0
      %2709 = vmatprep.mubr.f32.mxu0 0.0
      %2710 = vmatmul.mubr.f32.gmra.mrb[0].mxu0 %v2632
      %v2711 = vpop.f32.mrb[0].mxu0
      %v2712 = vadd.f32 0.0, %v2711
      %v2713 = vpop.f32.mrb[0].mxu0
      %2714 = vdwg.mxu0
      %v2716 = vsel %vm553, %v2065, 0
      %v2719 = vsel %vm553, %v2066, 0
      %v2722 = vsel %vm553, %v2088, 0
      %v2725 = vsel %vm553, %v2089, 0
      %2727 = vmatprep.subr.mxu0 0.0
      %2728 = vmatpush1.xpose.msra.mxu0 %v2722
      %2729 = vmatprep.subr.mxu0 0.0
      %2730 = vmatpush1.xpose.msra.mxu0 %v2725
      %2731 = vmatprep.subr.mxu0 0.0
      %2732 = vmatpush1.xpose.msra.mxu0 0.0
      %2733 = vmatprep.subr.mxu0 0.0
      %2734 = vmatpush1.xpose.msra.mxu0 0.0
      %2735 = vmatprep.subr.mxu0 0.0
      %2736 = vmatpush1.xpose.msra.mxu0 0.0
      %2737 = vmatprep.subr.mxu0 0.0
      %2738 = vmatpush1.xpose.msra.mxu0 0.0
      %2739 = vmatprep.subr.mxu0 0.0
      %2740 = vmatpush1.xpose.msra.mxu0 0.0
      %2741 = vmatprep.subr.mxu0 0.0
      %2742 = vmatpush1.xpose.msra.mxu0 0.0
      %2743 = vmatprep.subr.mxu0 0.0
      %2744 = vmatpush1.xpose.msra.mxu0 0.0
      %2745 = vmatprep.subr.mxu0 0.0
      %2746 = vmatpush1.xpose.msra.mxu0 0.0
      %2747 = vmatprep.subr.mxu0 0.0
      %2748 = vmatpush1.xpose.msra.mxu0 0.0
      %2749 = vmatprep.subr.mxu0 0.0
      %2750 = vmatpush1.xpose.msra.mxu0 0.0
      %2751 = vmatprep.subr.mxu0 0.0
      %2752 = vmatpush1.xpose.msra.mxu0 0.0
      %2753 = vmatprep.subr.mxu0 0.0
      %2754 = vmatpush1.xpose.msra.mxu0 0.0
      %2755 = vmatprep.subr.mxu0 0.0
      %2756 = vmatpush1.xpose.msra.mxu0 0.0
      %2757 = vmatprep.subr.mxu0 0.0
      %2758 = vmatpush1.xpose.msra.mxu0 0.0
      %2759 = vmatprep.subr.mxu0 0.0
      %2760 = vmatpush1.xpose.msra.mxu0 0.0
      %2761 = vmatprep.subr.mxu0 0.0
      %2762 = vmatpush1.xpose.msra.mxu0 0.0
      %2763 = vmatprep.subr.mxu0 0.0
      %2764 = vmatpush1.xpose.msra.mxu0 0.0
      %2765 = vmatprep.subr.mxu0 0.0
      %2766 = vmatpush1.xpose.msra.mxu0 0.0
      %2767 = vmatprep.subr.mxu0 0.0
      %2768 = vmatpush1.xpose.msra.mxu0 0.0
      %2769 = vmatprep.subr.mxu0 0.0
      %2770 = vmatpush1.xpose.msra.mxu0 0.0
      %2771 = vmatprep.subr.mxu0 0.0
      %2772 = vmatpush1.xpose.msra.mxu0 0.0
      %2773 = vmatprep.subr.mxu0 0.0
      %2774 = vmatpush1.xpose.msra.mxu0 0.0
      %2775 = vmatprep.subr.mxu0 0.0
      %2776 = vmatpush1.xpose.msra.mxu0 0.0
      %2777 = vmatprep.subr.mxu0 0.0
      %2778 = vmatpush1.xpose.msra.mxu0 0.0
      %2779 = vmatprep.subr.mxu0 0.0
      %2780 = vmatpush1.xpose.msra.mxu0 0.0
      %2781 = vmatprep.subr.mxu0 0.0
      %2782 = vmatpush1.xpose.msra.mxu0 0.0
      %2783 = vmatprep.subr.mxu0 0.0
      %2784 = vmatpush1.xpose.msra.mxu0 0.0
      %2785 = vmatprep.subr.mxu0 0.0
      %2786 = vmatpush1.xpose.msra.mxu0 0.0
      %2787 = vmatprep.subr.mxu0 0.0
      %2788 = vmatpush1.xpose.msra.mxu0 0.0
      %2789 = vmatprep.subr.mxu0 0.0
      %2790 = vmatpush1.xpose.msra.mxu0 0.0
      %2791 = vmatprep.mubr.f32.mxu0 0.0
      %2792 = vmatmul.mubr.f32.gmra.mrb[0].mxu0 %v2716
      %v2793 = vpop.f32.mrb[0].mxu0
      %v2794 = vadd.f32 0.0, %v2793
      %v2795 = vpop.f32.mrb[0].mxu0
      %2796 = vmatprep.mubr.f32.mxu0 0.0
      %2797 = vmatmul.mubr.f32.gmra.mrb[0].mxu0 %v2719
      %v2798 = vpop.f32.mrb[0].mxu0
      %v2799 = vadd.f32 0.0, %v2798
      %v2800 = vpop.f32.mrb[0].mxu0
      %2801 = vdwg.mxu0
      %vm2802 = vcmask 130048
      %v2803 = vsel %vm2802, %v2185, -inf
      %v2804 = vsel %vm2802, %v2190, -inf
      %v2805 = vmax.f32 %v2803, %v2804
      %v2806 = vrot.slane %v2805, 4
      %v2807 = vmax.f32 %v2805, %v2806
      %v2808 = vrot.slane %v2807, 2
      %v2809 = vmax.f32 %v2807, %v2808
      %v2810 = vrot.slane %v2809, 1
      %v2811 = vmax.f32 %v2809, %v2810
      %v2812 = vsel %vm2802, %v2272, -inf
      %v2813 = vsel %vm2802, %v2277, -inf
      %v2814 = vmax.f32 %v2812, %v2813
      %v2815 = vrot.slane %v2814, 4
      %v2816 = vmax.f32 %v2814, %v2815
      %v2817 = vrot.slane %v2816, 2
      %v2818 = vmax.f32 %v2816, %v2817
      %v2819 = vrot.slane %v2818, 1
      %v2820 = vmax.f32 %v2818, %v2819
      %v2821 = vsel %vm2802, %v2359, -inf
      %v2822 = vsel %vm2802, %v2364, -inf
      %v2823 = vmax.f32 %v2821, %v2822
      %v2824 = vrot.slane %v2823, 4
      %v2825 = vmax.f32 %v2823, %v2824
      %v2826 = vrot.slane %v2825, 2
      %v2827 = vmax.f32 %v2825, %v2826
      %v2828 = vrot.slane %v2827, 1
      %v2829 = vmax.f32 %v2827, %v2828
      %v2830 = vsel %vm2802, %v2446, -inf
      %v2831 = vsel %vm2802, %v2451, -inf
      %v2832 = vmax.f32 %v2830, %v2831
      %v2833 = vrot.slane %v2832, 4
      %v2834 = vmax.f32 %v2832, %v2833
      %v2835 = vrot.slane %v2834, 2
      %v2836 = vmax.f32 %v2834, %v2835
      %v2837 = vrot.slane %v2836, 1
      %v2838 = vmax.f32 %v2836, %v2837
      %v2839 = vsel %vm2802, %v2533, -inf
      %v2840 = vsel %vm2802, %v2538, -inf
      %v2841 = vmax.f32 %v2839, %v2840
      %v2842 = vrot.slane %v2841, 4
      %v2843 = vmax.f32 %v2841, %v2842
      %v2844 = vrot.slane %v2843, 2
      %v2845 = vmax.f32 %v2843, %v2844
      %v2846 = vrot.slane %v2845, 1
      %v2847 = vmax.f32 %v2845, %v2846
      %v2848 = vsel %vm2802, %v2620, -inf
      %v2849 = vsel %vm2802, %v2625, -inf
      %v2850 = vmax.f32 %v2848, %v2849
      %v2851 = vrot.slane %v2850, 4
      %v2852 = vmax.f32 %v2850, %v2851
      %v2853 = vrot.slane %v2852, 2
      %v2854 = vmax.f32 %v2852, %v2853
      %v2855 = vrot.slane %v2854, 1
      %v2856 = vmax.f32 %v2854, %v2855
      %v2857 = vsel %vm2802, %v2707, -inf
      %v2858 = vsel %vm2802, %v2712, -inf
      %v2859 = vmax.f32 %v2857, %v2858
      %v2860 = vrot.slane %v2859, 4
      %v2861 = vmax.f32 %v2859, %v2860
      %v2862 = vrot.slane %v2861, 2
      %v2863 = vmax.f32 %v2861, %v2862
      %v2864 = vrot.slane %v2863, 1
      %v2865 = vmax.f32 %v2863, %v2864
      %v2866 = vsel %vm2802, %v2794, -inf
      %v2867 = vsel %vm2802, %v2799, -inf
      %v2868 = vmax.f32 %v2866, %v2867
      %v2869 = vrot.slane %v2868, 4
      %v2870 = vmax.f32 %v2868, %v2869
      %v2871 = vrot.slane %v2870, 2
      %v2872 = vmax.f32 %v2870, %v2871
      %v2873 = vrot.slane %v2872, 1
      %v2874 = vmax.f32 %v2872, %v2873
      %v2875 = vsub.f32 %v2185, %v2811
      %v2876 = vsub.f32 %v2190, %v2811
      %v2877 = vsub.f32 %v2272, %v2820
      %v2878 = vsub.f32 %v2277, %v2820
      %v2879 = vsub.f32 %v2359, %v2829
      %v2880 = vsub.f32 %v2364, %v2829
      %v2881 = vsub.f32 %v2446, %v2838
      %v2882 = vsub.f32 %v2451, %v2838
      %v2883 = vsub.f32 %v2533, %v2847
      %v2884 = vsub.f32 %v2538, %v2847
      %v2885 = vsub.f32 %v2620, %v2856
      %v2886 = vsub.f32 %v2625, %v2856
      %v2887 = vsub.f32 %v2707, %v2865
      %v2888 = vsub.f32 %v2712, %v2865
      %v2889 = vsub.f32 %v2794, %v2874
      %v2890 = vsub.f32 %v2799, %v2874
      %v2891 = vmul.f32 %v2875, 1.442695
      %v2892 = vpow.pop %v2891
      %v2893 = vmul.f32 %v2876, 1.442695
      %v2894 = vpow.pop %v2893
      %v2895 = vmul.f32 %v2877, 1.442695
      %v2896 = vpow.pop %v2895
      %v2897 = vmul.f32 %v2878, 1.442695
      %v2898 = vpow.pop %v2897
      %v2899 = vmul.f32 %v2879, 1.442695
      %v2900 = vpow.pop %v2899
      %v2901 = vmul.f32 %v2880, 1.442695
      %v2902 = vpow.pop %v2901
      %v2903 = vmul.f32 %v2881, 1.442695
      %v2904 = vpow.pop %v2903
      %v2905 = vmul.f32 %v2882, 1.442695
      %v2906 = vpow.pop %v2905
      %v2907 = vmul.f32 %v2883, 1.442695
      %v2908 = vpow.pop %v2907
      %v2909 = vmul.f32 %v2884, 1.442695
      %v2910 = vpow.pop %v2909
      %v2911 = vmul.f32 %v2885, 1.442695
      %v2912 = vpow.pop %v2911
      %v2913 = vmul.f32 %v2886, 1.442695
      %v2914 = vpow.pop %v2913
      %v2915 = vmul.f32 %v2887, 1.442695
      %v2916 = vpow.pop %v2915
      %v2917 = vmul.f32 %v2888, 1.442695
      %v2918 = vpow.pop %v2917
      %v2919 = vmul.f32 %v2889, 1.442695
      %v2920 = vpow.pop %v2919
      %v2921 = vmul.f32 %v2890, 1.442695
      %v2922 = vpow.pop %v2921
      %v2923 = vsel %vm2802, %v2892, 0.0
      %v2924 = vsel %vm2802, %v2894, 0.0
      %v2925 = vadd.f32 %v2923, %v2924
      %v2926 = vrot.slane %v2925, 4
      %v2927 = vadd.f32 %v2925, %v2926
      %v2928 = vrot.slane %v2927, 2
      %v2929 = vadd.f32 %v2927, %v2928
      %v2930 = vrot.slane %v2929, 1
      %v2931 = vadd.f32 %v2929, %v2930
      %v2932 = vsel %vm2802, %v2896, 0.0
      %v2933 = vsel %vm2802, %v2898, 0.0
      %v2934 = vadd.f32 %v2932, %v2933
      %v2935 = vrot.slane %v2934, 4
      %v2936 = vadd.f32 %v2934, %v2935
      %v2937 = vrot.slane %v2936, 2
      %v2938 = vadd.f32 %v2936, %v2937
      %v2939 = vrot.slane %v2938, 1
      %v2940 = vadd.f32 %v2938, %v2939
      %v2941 = vsel %vm2802, %v2900, 0.0
      %v2942 = vsel %vm2802, %v2902, 0.0
      %v2943 = vadd.f32 %v2941, %v2942
      %v2944 = vrot.slane %v2943, 4
      %v2945 = vadd.f32 %v2943, %v2944
      %v2946 = vrot.slane %v2945, 2
      %v2947 = vadd.f32 %v2945, %v2946
      %v2948 = vrot.slane %v2947, 1
      %v2949 = vadd.f32 %v2947, %v2948
      %v2950 = vsel %vm2802, %v2904, 0.0
      %v2951 = vsel %vm2802, %v2906, 0.0
      %v2952 = vadd.f32 %v2950, %v2951
      %v2953 = vrot.slane %v2952, 4
      %v2954 = vadd.f32 %v2952, %v2953
      %v2955 = vrot.slane %v2954, 2
      %v2956 = vadd.f32 %v2954, %v2955
      %v2957 = vrot.slane %v2956, 1
      %v2958 = vadd.f32 %v2956, %v2957
      %v2959 = vsel %vm2802, %v2908, 0.0
      %v2960 = vsel %vm2802, %v2910, 0.0
      %v2961 = vadd.f32 %v2959, %v2960
      %v2962 = vrot.slane %v2961, 4
      %v2963 = vadd.f32 %v2961, %v2962
      %v2964 = vrot.slane %v2963, 2
      %v2965 = vadd.f32 %v2963, %v2964
      %v2966 = vrot.slane %v2965, 1
      %v2967 = vadd.f32 %v2965, %v2966
      %v2968 = vsel %vm2802, %v2912, 0.0
      %v2969 = vsel %vm2802, %v2914, 0.0
      %v2970 = vadd.f32 %v2968, %v2969
      %v2971 = vrot.slane %v2970, 4
      %v2972 = vadd.f32 %v2970, %v2971
      %v2973 = vrot.slane %v2972, 2
      %v2974 = vadd.f32 %v2972, %v2973
      %v2975 = vrot.slane %v2974, 1
      %v2976 = vadd.f32 %v2974, %v2975
      %v2977 = vsel %vm2802, %v2916, 0.0
      %v2978 = vsel %vm2802, %v2918, 0.0
      %v2979 = vadd.f32 %v2977, %v2978
      %v2980 = vrot.slane %v2979, 4
      %v2981 = vadd.f32 %v2979, %v2980
      %v2982 = vrot.slane %v2981, 2
      %v2983 = vadd.f32 %v2981, %v2982
      %v2984 = vrot.slane %v2983, 1
      %v2985 = vadd.f32 %v2983, %v2984
      %v2986 = vsel %vm2802, %v2920, 0.0
      %v2987 = vsel %vm2802, %v2922, 0.0
      %v2988 = vadd.f32 %v2986, %v2987
      %v2989 = vrot.slane %v2988, 4
      %v2990 = vadd.f32 %v2988, %v2989
      %v2991 = vrot.slane %v2990, 2
      %v2992 = vadd.f32 %v2990, %v2991
      %v2993 = vrot.slane %v2992, 1
      %v2994 = vadd.f32 %v2992, %v2993
      %v2995 = vrcp.pop %v2931
      %v2996 = vrcp.pop %v2940
      %v2997 = vrcp.pop %v2949
      %v2998 = vrcp.pop %v2958
      %v2999 = vrcp.pop %v2967
      %v3000 = vrcp.pop %v2976
      %v3001 = vrcp.pop %v2985
      %v3002 = vrcp.pop %v2994
      %v3003 = vmul.f32 %v2892, %v2995
      %v3004 = vmul.f32 %v2894, %v2995
      %v3005 = vmul.f32 %v2896, %v2996
      %v3006 = vmul.f32 %v2898, %v2996
      %v3007 = vmul.f32 %v2900, %v2997
      %v3008 = vmul.f32 %v2902, %v2997
      %v3009 = vmul.f32 %v2904, %v2998
      %v3010 = vmul.f32 %v2906, %v2998
      %v3011 = vmul.f32 %v2908, %v2999
      %v3012 = vmul.f32 %v2910, %v2999
      %v3013 = vmul.f32 %v2912, %v3000
      %v3014 = vmul.f32 %v2914, %v3000
      %v3015 = vmul.f32 %v2916, %v3001
      %v3016 = vmul.f32 %v2918, %v3001
      %v3017 = vmul.f32 %v2920, %v3002
      %v3018 = vmul.f32 %v2922, %v3002
      %vm3019 = vcmp.ge.s32.totalorder %v2068, 8
      %vm3020 = vcmp.lt.s32.totalorder %v2068, 16
      %vm3021 = vmand %vm3019, %vm3020
      %v3022 = vsel %vm3021, 1, 0
      %vm3023 = vcmp.eq.s32.totalorder %v3022, 1
      %v3024 = vsel %vm3023, %v1823, 0.0
      %v3025 = vsel %vm3023, %v1828, 0.0
      %v3026 = vsel %vm3023, %v1833, 0.0
      %v3027 = vsel %vm3023, %v1838, 0.0
      %v3028 = vsel %vm3023, %v1843, 0.0
      %v3029 = vsel %vm3023, %v1848, 0.0
      %v3030 = vsel %vm3023, %v1853, 0.0
      %v3031 = vsel %vm3023, %v1858, 0.0
      %v3032 = vsel %vm3023, %v1863, 0.0
      %v3033 = vsel %vm3023, %v1868, 0.0
      %v3034 = vsel %vm3023, %v1873, 0.0
      %v3035 = vsel %vm3023, %v1878, 0.0
      %v3036 = vsel %vm3023, %v1883, 0.0
      %v3037 = vsel %vm3023, %v1888, 0.0
      %v3038 = vsel %vm3023, %v1893, 0.0
      %v3039 = vsel %vm3023, %v1898, 0.0
      %v3040 = vsel %vm3023, %v1973, 0.0
      %v3041 = vsel %vm3023, %v1978, 0.0
      %v3042 = vsel %vm3023, %v1983, 0.0
      %v3043 = vsel %vm3023, %v1988, 0.0
      %v3044 = vsel %vm3023, %v1993, 0.0
      %v3045 = vsel %vm3023, %v1998, 0.0
      %v3046 = vsel %vm3023, %v2003, 0.0
      %v3047 = vsel %vm3023, %v2008, 0.0
      %v3048 = vsel %vm3023, %v2013, 0.0
      %v3049 = vsel %vm3023, %v2018, 0.0
      %v3050 = vsel %vm3023, %v2023, 0.0
      %v3051 = vsel %vm3023, %v2028, 0.0
      %v3052 = vsel %vm3023, %v2033, 0.0
      %v3053 = vsel %vm3023, %v2038, 0.0
      %v3054 = vsel %vm3023, %v2043, 0.0
      %v3055 = vsel %vm3023, %v2048, 0.0
      %v3057 = vsel %vm553, %v3024, 0
      %v3060 = vsel %vm553, %v3025, 0
      %3062 = vmatprep.subr.mxu0 0.0
      %3063 = vmatpush1.xpose.msra.mxu0 %v3057
      %3064 = vmatprep.subr.mxu0 0.0
      %3065 = vmatpush1.xpose.msra.mxu0 %v3060
      %3066 = vmatprep.subr.mxu0 0.0
      %3067 = vmatpush1.xpose.msra.mxu0 0.0
      %3068 = vmatprep.subr.mxu0 0.0
      %3069 = vmatpush1.xpose.msra.mxu0 0.0
      %3070 = vmatprep.subr.mxu0 0.0
      %3071 = vmatpush1.xpose.msra.mxu0 0.0
      %3072 = vmatprep.subr.mxu0 0.0
      %3073 = vmatpush1.xpose.msra.mxu0 0.0
      %3074 = vmatprep.subr.mxu0 0.0
      %3075 = vmatpush1.xpose.msra.mxu0 0.0
      %3076 = vmatprep.subr.mxu0 0.0
      %3077 = vmatpush1.xpose.msra.mxu0 0.0
      %3078 = vmatprep.subr.mxu0 0.0
      %3079 = vmatpush1.xpose.msra.mxu0 0.0
      %3080 = vmatprep.subr.mxu0 0.0
      %3081 = vmatpush1.xpose.msra.mxu0 0.0
      %3082 = vmatprep.subr.mxu0 0.0
      %3083 = vmatpush1.xpose.msra.mxu0 0.0
      %3084 = vmatprep.subr.mxu0 0.0
      %3085 = vmatpush1.xpose.msra.mxu0 0.0
      %3086 = vmatprep.subr.mxu0 0.0
      %3087 = vmatpush1.xpose.msra.mxu0 0.0
      %3088 = vmatprep.subr.mxu0 0.0
      %3089 = vmatpush1.xpose.msra.mxu0 0.0
      %3090 = vmatprep.subr.mxu0 0.0
      %3091 = vmatpush1.xpose.msra.mxu0 0.0
      %3092 = vmatprep.subr.mxu0 0.0
      %3093 = vmatpush1.xpose.msra.mxu0 0.0
      %3094 = vmatprep.subr.mxu0 0.0
      %3095 = vmatpush1.xpose.msra.mxu0 0.0
      %3096 = vmatprep.subr.mxu0 0.0
      %3097 = vmatpush1.xpose.msra.mxu0 0.0
      %3098 = vmatprep.subr.mxu0 0.0
      %3099 = vmatpush1.xpose.msra.mxu0 0.0
      %3100 = vmatprep.subr.mxu0 0.0
      %3101 = vmatpush1.xpose.msra.mxu0 0.0
      %3102 = vmatprep.subr.mxu0 0.0
      %3103 = vmatpush1.xpose.msra.mxu0 0.0
      %3104 = vmatprep.subr.mxu0 0.0
      %3105 = vmatpush1.xpose.msra.mxu0 0.0
      %3106 = vmatprep.subr.mxu0 0.0
      %3107 = vmatpush1.xpose.msra.mxu0 0.0
      %3108 = vmatprep.subr.mxu0 0.0
      %3109 = vmatpush1.xpose.msra.mxu0 0.0
      %3110 = vmatprep.subr.mxu0 0.0
      %3111 = vmatpush1.xpose.msra.mxu0 0.0
      %3112 = vmatprep.subr.mxu0 0.0
      %3113 = vmatpush1.xpose.msra.mxu0 0.0
      %3114 = vmatprep.subr.mxu0 0.0
      %3115 = vmatpush1.xpose.msra.mxu0 0.0
      %3116 = vmatprep.subr.mxu0 0.0
      %3117 = vmatpush1.xpose.msra.mxu0 0.0
      %3118 = vmatprep.subr.mxu0 0.0
      %3119 = vmatpush1.xpose.msra.mxu0 0.0
      %3120 = vmatprep.subr.mxu0 0.0
      %3121 = vmatpush1.xpose.msra.mxu0 0.0
      %3122 = vmatprep.subr.mxu0 0.0
      %3123 = vmatpush1.xpose.msra.mxu0 0.0
      %3124 = vmatprep.subr.mxu0 0.0
      %3125 = vmatpush1.xpose.msra.mxu0 0.0
      %3126 = vmatprep.mubr.f32.mxu0 0.0
      %3127 = vmatmul.mubr.f32.gmra.mrb[0].mxu0 %v2107
      %v3128 = vpop.f32.mrb[0].mxu0
      %v3129 = vadd.f32 0.0, %v3128
      %v3130 = vpop.f32.mrb[0].mxu0
      %3131 = vmatprep.mubr.f32.mxu0 0.0
      %3132 = vmatmul.mubr.f32.gmra.mrb[0].mxu0 %v2110
      %v3133 = vpop.f32.mrb[0].mxu0
      %v3134 = vadd.f32 0.0, %v3133
      %v3135 = vpop.f32.mrb[0].mxu0
      %3136 = vdwg.mxu0
      %v3138 = vsel %vm553, %v3026, 0
      %v3141 = vsel %vm553, %v3027, 0
      %3143 = vmatprep.subr.mxu0 0.0
      %3144 = vmatpush1.xpose.msra.mxu0 %v3138
      %3145 = vmatprep.subr.mxu0 0.0
      %3146 = vmatpush1.xpose.msra.mxu0 %v3141
      %3147 = vmatprep.subr.mxu0 0.0
      %3148 = vmatpush1.xpose.msra.mxu0 0.0
      %3149 = vmatprep.subr.mxu0 0.0
      %3150 = vmatpush1.xpose.msra.mxu0 0.0
      %3151 = vmatprep.subr.mxu0 0.0
      %3152 = vmatpush1.xpose.msra.mxu0 0.0
      %3153 = vmatprep.subr.mxu0 0.0
      %3154 = vmatpush1.xpose.msra.mxu0 0.0
      %3155 = vmatprep.subr.mxu0 0.0
      %3156 = vmatpush1.xpose.msra.mxu0 0.0
      %3157 = vmatprep.subr.mxu0 0.0
      %3158 = vmatpush1.xpose.msra.mxu0 0.0
      %3159 = vmatprep.subr.mxu0 0.0
      %3160 = vmatpush1.xpose.msra.mxu0 0.0
      %3161 = vmatprep.subr.mxu0 0.0
      %3162 = vmatpush1.xpose.msra.mxu0 0.0
      %3163 = vmatprep.subr.mxu0 0.0
      %3164 = vmatpush1.xpose.msra.mxu0 0.0
      %3165 = vmatprep.subr.mxu0 0.0
      %3166 = vmatpush1.xpose.msra.mxu0 0.0
      %3167 = vmatprep.subr.mxu0 0.0
      %3168 = vmatpush1.xpose.msra.mxu0 0.0
      %3169 = vmatprep.subr.mxu0 0.0
      %3170 = vmatpush1.xpose.msra.mxu0 0.0
      %3171 = vmatprep.subr.mxu0 0.0
      %3172 = vmatpush1.xpose.msra.mxu0 0.0
      %3173 = vmatprep.subr.mxu0 0.0
      %3174 = vmatpush1.xpose.msra.mxu0 0.0
      %3175 = vmatprep.subr.mxu0 0.0
      %3176 = vmatpush1.xpose.msra.mxu0 0.0
      %3177 = vmatprep.subr.mxu0 0.0
      %3178 = vmatpush1.xpose.msra.mxu0 0.0
      %3179 = vmatprep.subr.mxu0 0.0
      %3180 = vmatpush1.xpose.msra.mxu0 0.0
      %3181 = vmatprep.subr.mxu0 0.0
      %3182 = vmatpush1.xpose.msra.mxu0 0.0
      %3183 = vmatprep.subr.mxu0 0.0
      %3184 = vmatpush1.xpose.msra.mxu0 0.0
      %3185 = vmatprep.subr.mxu0 0.0
      %3186 = vmatpush1.xpose.msra.mxu0 0.0
      %3187 = vmatprep.subr.mxu0 0.0
      %3188 = vmatpush1.xpose.msra.mxu0 0.0
      %3189 = vmatprep.subr.mxu0 0.0
      %3190 = vmatpush1.xpose.msra.mxu0 0.0
      %3191 = vmatprep.subr.mxu0 0.0
      %3192 = vmatpush1.xpose.msra.mxu0 0.0
      %3193 = vmatprep.subr.mxu0 0.0
      %3194 = vmatpush1.xpose.msra.mxu0 0.0
      %3195 = vmatprep.subr.mxu0 0.0
      %3196 = vmatpush1.xpose.msra.mxu0 0.0
      %3197 = vmatprep.subr.mxu0 0.0
      %3198 = vmatpush1.xpose.msra.mxu0 0.0
      %3199 = vmatprep.subr.mxu0 0.0
      %3200 = vmatpush1.xpose.msra.mxu0 0.0
      %3201 = vmatprep.subr.mxu0 0.0
      %3202 = vmatpush1.xpose.msra.mxu0 0.0
      %3203 = vmatprep.subr.mxu0 0.0
      %3204 = vmatpush1.xpose.msra.mxu0 0.0
      %3205 = vmatprep.subr.mxu0 0.0
      %3206 = vmatpush1.xpose.msra.mxu0 0.0
      %3207 = vmatprep.mubr.f32.mxu0 0.0
      %3208 = vmatmul.mubr.f32.gmra.mrb[0].mxu0 %v2194
      %v3209 = vpop.f32.mrb[0].mxu0
      %v3210 = vadd.f32 0.0, %v3209
      %v3211 = vpop.f32.mrb[0].mxu0
      %3212 = vmatprep.mubr.f32.mxu0 0.0
      %3213 = vmatmul.mubr.f32.gmra.mrb[0].mxu0 %v2197
      %v3214 = vpop.f32.mrb[0].mxu0
      %v3215 = vadd.f32 0.0, %v3214
      %v3216 = vpop.f32.mrb[0].mxu0
      %3217 = vdwg.mxu0
      %v3219 = vsel %vm553, %v3028, 0
      %v3222 = vsel %vm553, %v3029, 0
      %3224 = vmatprep.subr.mxu0 0.0
      %3225 = vmatpush1.xpose.msra.mxu0 %v3219
      %3226 = vmatprep.subr.mxu0 0.0
      %3227 = vmatpush1.xpose.msra.mxu0 %v3222
      %3228 = vmatprep.subr.mxu0 0.0
      %3229 = vmatpush1.xpose.msra.mxu0 0.0
      %3230 = vmatprep.subr.mxu0 0.0
      %3231 = vmatpush1.xpose.msra.mxu0 0.0
      %3232 = vmatprep.subr.mxu0 0.0
      %3233 = vmatpush1.xpose.msra.mxu0 0.0
      %3234 = vmatprep.subr.mxu0 0.0
      %3235 = vmatpush1.xpose.msra.mxu0 0.0
      %3236 = vmatprep.subr.mxu0 0.0
      %3237 = vmatpush1.xpose.msra.mxu0 0.0
      %3238 = vmatprep.subr.mxu0 0.0
      %3239 = vmatpush1.xpose.msra.mxu0 0.0
      %3240 = vmatprep.subr.mxu0 0.0
      %3241 = vmatpush1.xpose.msra.mxu0 0.0
      %3242 = vmatprep.subr.mxu0 0.0
      %3243 = vmatpush1.xpose.msra.mxu0 0.0
      %3244 = vmatprep.subr.mxu0 0.0
      %3245 = vmatpush1.xpose.msra.mxu0 0.0
      %3246 = vmatprep.subr.mxu0 0.0
      %3247 = vmatpush1.xpose.msra.mxu0 0.0
      %3248 = vmatprep.subr.mxu0 0.0
      %3249 = vmatpush1.xpose.msra.mxu0 0.0
      %3250 = vmatprep.subr.mxu0 0.0
      %3251 = vmatpush1.xpose.msra.mxu0 0.0
      %3252 = vmatprep.subr.mxu0 0.0
      %3253 = vmatpush1.xpose.msra.mxu0 0.0
      %3254 = vmatprep.subr.mxu0 0.0
      %3255 = vmatpush1.xpose.msra.mxu0 0.0
      %3256 = vmatprep.subr.mxu0 0.0
      %3257 = vmatpush1.xpose.msra.mxu0 0.0
      %3258 = vmatprep.subr.mxu0 0.0
      %3259 = vmatpush1.xpose.msra.mxu0 0.0
      %3260 = vmatprep.subr.mxu0 0.0
      %3261 = vmatpush1.xpose.msra.mxu0 0.0
      %3262 = vmatprep.subr.mxu0 0.0
      %3263 = vmatpush1.xpose.msra.mxu0 0.0
      %3264 = vmatprep.subr.mxu0 0.0
      %3265 = vmatpush1.xpose.msra.mxu0 0.0
      %3266 = vmatprep.subr.mxu0 0.0
      %3267 = vmatpush1.xpose.msra.mxu0 0.0
      %3268 = vmatprep.subr.mxu0 0.0
      %3269 = vmatpush1.xpose.msra.mxu0 0.0
      %3270 = vmatprep.subr.mxu0 0.0
      %3271 = vmatpush1.xpose.msra.mxu0 0.0
      %3272 = vmatprep.subr.mxu0 0.0
      %3273 = vmatpush1.xpose.msra.mxu0 0.0
      %3274 = vmatprep.subr.mxu0 0.0
      %3275 = vmatpush1.xpose.msra.mxu0 0.0
      %3276 = vmatprep.subr.mxu0 0.0
      %3277 = vmatpush1.xpose.msra.mxu0 0.0
      %3278 = vmatprep.subr.mxu0 0.0
      %3279 = vmatpush1.xpose.msra.mxu0 0.0
      %3280 = vmatprep.subr.mxu0 0.0
      %3281 = vmatpush1.xpose.msra.mxu0 0.0
      %3282 = vmatprep.subr.mxu0 0.0
      %3283 = vmatpush1.xpose.msra.mxu0 0.0
      %3284 = vmatprep.subr.mxu0 0.0
      %3285 = vmatpush1.xpose.msra.mxu0 0.0
      %3286 = vmatprep.subr.mxu0 0.0
      %3287 = vmatpush1.xpose.msra.mxu0 0.0
      %3288 = vmatprep.mubr.f32.mxu0 0.0
      %3289 = vmatmul.mubr.f32.gmra.mrb[0].mxu0 %v2281
      %v3290 = vpop.f32.mrb[0].mxu0
      %v3291 = vadd.f32 0.0, %v3290
      %v3292 = vpop.f32.mrb[0].mxu0
      %3293 = vmatprep.mubr.f32.mxu0 0.0
      %3294 = vmatmul.mubr.f32.gmra.mrb[0].mxu0 %v2284
      %v3295 = vpop.f32.mrb[0].mxu0
      %v3296 = vadd.f32 0.0, %v3295
      %v3297 = vpop.f32.mrb[0].mxu0
      %3298 = vdwg.mxu0
      %v3300 = vsel %vm553, %v3030, 0
      %v3303 = vsel %vm553, %v3031, 0
      %3305 = vmatprep.subr.mxu0 0.0
      %3306 = vmatpush1.xpose.msra.mxu0 %v3300
      %3307 = vmatprep.subr.mxu0 0.0
      %3308 = vmatpush1.xpose.msra.mxu0 %v3303
      %3309 = vmatprep.subr.mxu0 0.0
      %3310 = vmatpush1.xpose.msra.mxu0 0.0
      %3311 = vmatprep.subr.mxu0 0.0
      %3312 = vmatpush1.xpose.msra.mxu0 0.0
      %3313 = vmatprep.subr.mxu0 0.0
      %3314 = vmatpush1.xpose.msra.mxu0 0.0
      %3315 = vmatprep.subr.mxu0 0.0
      %3316 = vmatpush1.xpose.msra.mxu0 0.0
      %3317 = vmatprep.subr.mxu0 0.0
      %3318 = vmatpush1.xpose.msra.mxu0 0.0
      %3319 = vmatprep.subr.mxu0 0.0
      %3320 = vmatpush1.xpose.msra.mxu0 0.0
      %3321 = vmatprep.subr.mxu0 0.0
      %3322 = vmatpush1.xpose.msra.mxu0 0.0
      %3323 = vmatprep.subr.mxu0 0.0
      %3324 = vmatpush1.xpose.msra.mxu0 0.0
      %3325 = vmatprep.subr.mxu0 0.0
      %3326 = vmatpush1.xpose.msra.mxu0 0.0
      %3327 = vmatprep.subr.mxu0 0.0
      %3328 = vmatpush1.xpose.msra.mxu0 0.0
      %3329 = vmatprep.subr.mxu0 0.0
      %3330 = vmatpush1.xpose.msra.mxu0 0.0
      %3331 = vmatprep.subr.mxu0 0.0
      %3332 = vmatpush1.xpose.msra.mxu0 0.0
      %3333 = vmatprep.subr.mxu0 0.0
      %3334 = vmatpush1.xpose.msra.mxu0 0.0
      %3335 = vmatprep.subr.mxu0 0.0
      %3336 = vmatpush1.xpose.msra.mxu0 0.0
      %3337 = vmatprep.subr.mxu0 0.0
      %3338 = vmatpush1.xpose.msra.mxu0 0.0
      %3339 = vmatprep.subr.mxu0 0.0
      %3340 = vmatpush1.xpose.msra.mxu0 0.0
      %3341 = vmatprep.subr.mxu0 0.0
      %3342 = vmatpush1.xpose.msra.mxu0 0.0
      %3343 = vmatprep.subr.mxu0 0.0
      %3344 = vmatpush1.xpose.msra.mxu0 0.0
      %3345 = vmatprep.subr.mxu0 0.0
      %3346 = vmatpush1.xpose.msra.mxu0 0.0
      %3347 = vmatprep.subr.mxu0 0.0
      %3348 = vmatpush1.xpose.msra.mxu0 0.0
      %3349 = vmatprep.subr.mxu0 0.0
      %3350 = vmatpush1.xpose.msra.mxu0 0.0
      %3351 = vmatprep.subr.mxu0 0.0
      %3352 = vmatpush1.xpose.msra.mxu0 0.0
      %3353 = vmatprep.subr.mxu0 0.0
      %3354 = vmatpush1.xpose.msra.mxu0 0.0
      %3355 = vmatprep.subr.mxu0 0.0
      %3356 = vmatpush1.xpose.msra.mxu0 0.0
      %3357 = vmatprep.subr.mxu0 0.0
      %3358 = vmatpush1.xpose.msra.mxu0 0.0
      %3359 = vmatprep.subr.mxu0 0.0
      %3360 = vmatpush1.xpose.msra.mxu0 0.0
      %3361 = vmatprep.subr.mxu0 0.0
      %3362 = vmatpush1.xpose.msra.mxu0 0.0
      %3363 = vmatprep.subr.mxu0 0.0
      %3364 = vmatpush1.xpose.msra.mxu0 0.0
      %3365 = vmatprep.subr.mxu0 0.0
      %3366 = vmatpush1.xpose.msra.mxu0 0.0
      %3367 = vmatprep.subr.mxu0 0.0
      %3368 = vmatpush1.xpose.msra.mxu0 0.0
      %3369 = vmatprep.mubr.f32.mxu0 0.0
      %3370 = vmatmul.mubr.f32.gmra.mrb[0].mxu0 %v2368
      %v3371 = vpop.f32.mrb[0].mxu0
      %v3372 = vadd.f32 0.0, %v3371
      %v3373 = vpop.f32.mrb[0].mxu0
      %3374 = vmatprep.mubr.f32.mxu0 0.0
      %3375 = vmatmul.mubr.f32.gmra.mrb[0].mxu0 %v2371
      %v3376 = vpop.f32.mrb[0].mxu0
      %v3377 = vadd.f32 0.0, %v3376
      %v3378 = vpop.f32.mrb[0].mxu0
      %3379 = vdwg.mxu0
      %v3381 = vsel %vm553, %v3032, 0
      %v3384 = vsel %vm553, %v3033, 0
      %3386 = vmatprep.subr.mxu0 0.0
      %3387 = vmatpush1.xpose.msra.mxu0 %v3381
      %3388 = vmatprep.subr.mxu0 0.0
      %3389 = vmatpush1.xpose.msra.mxu0 %v3384
      %3390 = vmatprep.subr.mxu0 0.0
      %3391 = vmatpush1.xpose.msra.mxu0 0.0
      %3392 = vmatprep.subr.mxu0 0.0
      %3393 = vmatpush1.xpose.msra.mxu0 0.0
      %3394 = vmatprep.subr.mxu0 0.0
      %3395 = vmatpush1.xpose.msra.mxu0 0.0
      %3396 = vmatprep.subr.mxu0 0.0
      %3397 = vmatpush1.xpose.msra.mxu0 0.0
      %3398 = vmatprep.subr.mxu0 0.0
      %3399 = vmatpush1.xpose.msra.mxu0 0.0
      %3400 = vmatprep.subr.mxu0 0.0
      %3401 = vmatpush1.xpose.msra.mxu0 0.0
      %3402 = vmatprep.subr.mxu0 0.0
      %3403 = vmatpush1.xpose.msra.mxu0 0.0
      %3404 = vmatprep.subr.mxu0 0.0
      %3405 = vmatpush1.xpose.msra.mxu0 0.0
      %3406 = vmatprep.subr.mxu0 0.0
      %3407 = vmatpush1.xpose.msra.mxu0 0.0
      %3408 = vmatprep.subr.mxu0 0.0
      %3409 = vmatpush1.xpose.msra.mxu0 0.0
      %3410 = vmatprep.subr.mxu0 0.0
      %3411 = vmatpush1.xpose.msra.mxu0 0.0
      %3412 = vmatprep.subr.mxu0 0.0
      %3413 = vmatpush1.xpose.msra.mxu0 0.0
      %3414 = vmatprep.subr.mxu0 0.0
      %3415 = vmatpush1.xpose.msra.mxu0 0.0
      %3416 = vmatprep.subr.mxu0 0.0
      %3417 = vmatpush1.xpose.msra.mxu0 0.0
      %3418 = vmatprep.subr.mxu0 0.0
      %3419 = vmatpush1.xpose.msra.mxu0 0.0
      %3420 = vmatprep.subr.mxu0 0.0
      %3421 = vmatpush1.xpose.msra.mxu0 0.0
      %3422 = vmatprep.subr.mxu0 0.0
      %3423 = vmatpush1.xpose.msra.mxu0 0.0
      %3424 = vmatprep.subr.mxu0 0.0
      %3425 = vmatpush1.xpose.msra.mxu0 0.0
      %3426 = vmatprep.subr.mxu0 0.0
      %3427 = vmatpush1.xpose.msra.mxu0 0.0
      %3428 = vmatprep.subr.mxu0 0.0
      %3429 = vmatpush1.xpose.msra.mxu0 0.0
      %3430 = vmatprep.subr.mxu0 0.0
      %3431 = vmatpush1.xpose.msra.mxu0 0.0
      %3432 = vmatprep.subr.mxu0 0.0
      %3433 = vmatpush1.xpose.msra.mxu0 0.0
      %3434 = vmatprep.subr.mxu0 0.0
      %3435 = vmatpush1.xpose.msra.mxu0 0.0
      %3436 = vmatprep.subr.mxu0 0.0
      %3437 = vmatpush1.xpose.msra.mxu0 0.0
      %3438 = vmatprep.subr.mxu0 0.0
      %3439 = vmatpush1.xpose.msra.mxu0 0.0
      %3440 = vmatprep.subr.mxu0 0.0
      %3441 = vmatpush1.xpose.msra.mxu0 0.0
      %3442 = vmatprep.subr.mxu0 0.0
      %3443 = vmatpush1.xpose.msra.mxu0 0.0
      %3444 = vmatprep.subr.mxu0 0.0
      %3445 = vmatpush1.xpose.msra.mxu0 0.0
      %3446 = vmatprep.subr.mxu0 0.0
      %3447 = vmatpush1.xpose.msra.mxu0 0.0
      %3448 = vmatprep.subr.mxu0 0.0
      %3449 = vmatpush1.xpose.msra.mxu0 0.0
      %3450 = vmatprep.mubr.f32.mxu0 0.0
      %3451 = vmatmul.mubr.f32.gmra.mrb[0].mxu0 %v2455
      %v3452 = vpop.f32.mrb[0].mxu0
      %v3453 = vadd.f32 0.0, %v3452
      %v3454 = vpop.f32.mrb[0].mxu0
      %3455 = vmatprep.mubr.f32.mxu0 0.0
      %3456 = vmatmul.mubr.f32.gmra.mrb[0].mxu0 %v2458
      %v3457 = vpop.f32.mrb[0].mxu0
      %v3458 = vadd.f32 0.0, %v3457
      %v3459 = vpop.f32.mrb[0].mxu0
      %3460 = vdwg.mxu0
      %v3462 = vsel %vm553, %v3034, 0
      %v3465 = vsel %vm553, %v3035, 0
      %3467 = vmatprep.subr.mxu0 0.0
      %3468 = vmatpush1.xpose.msra.mxu0 %v3462
      %3469 = vmatprep.subr.mxu0 0.0
      %3470 = vmatpush1.xpose.msra.mxu0 %v3465
      %3471 = vmatprep.subr.mxu0 0.0
      %3472 = vmatpush1.xpose.msra.mxu0 0.0
      %3473 = vmatprep.subr.mxu0 0.0
      %3474 = vmatpush1.xpose.msra.mxu0 0.0
      %3475 = vmatprep.subr.mxu0 0.0
      %3476 = vmatpush1.xpose.msra.mxu0 0.0
      %3477 = vmatprep.subr.mxu0 0.0
      %3478 = vmatpush1.xpose.msra.mxu0 0.0
      %3479 = vmatprep.subr.mxu0 0.0
      %3480 = vmatpush1.xpose.msra.mxu0 0.0
      %3481 = vmatprep.subr.mxu0 0.0
      %3482 = vmatpush1.xpose.msra.mxu0 0.0
      %3483 = vmatprep.subr.mxu0 0.0
      %3484 = vmatpush1.xpose.msra.mxu0 0.0
      %3485 = vmatprep.subr.mxu0 0.0
      %3486 = vmatpush1.xpose.msra.mxu0 0.0
      %3487 = vmatprep.subr.mxu0 0.0
      %3488 = vmatpush1.xpose.msra.mxu0 0.0
      %3489 = vmatprep.subr.mxu0 0.0
      %3490 = vmatpush1.xpose.msra.mxu0 0.0
      %3491 = vmatprep.subr.mxu0 0.0
      %3492 = vmatpush1.xpose.msra.mxu0 0.0
      %3493 = vmatprep.subr.mxu0 0.0
      %3494 = vmatpush1.xpose.msra.mxu0 0.0
      %3495 = vmatprep.subr.mxu0 0.0
      %3496 = vmatpush1.xpose.msra.mxu0 0.0
      %3497 = vmatprep.subr.mxu0 0.0
      %3498 = vmatpush1.xpose.msra.mxu0 0.0
      %3499 = vmatprep.subr.mxu0 0.0
      %3500 = vmatpush1.xpose.msra.mxu0 0.0
      %3501 = vmatprep.subr.mxu0 0.0
      %3502 = vmatpush1.xpose.msra.mxu0 0.0
      %3503 = vmatprep.subr.mxu0 0.0
      %3504 = vmatpush1.xpose.msra.mxu0 0.0
      %3505 = vmatprep.subr.mxu0 0.0
      %3506 = vmatpush1.xpose.msra.mxu0 0.0
      %3507 = vmatprep.subr.mxu0 0.0
      %3508 = vmatpush1.xpose.msra.mxu0 0.0
      %3509 = vmatprep.subr.mxu0 0.0
      %3510 = vmatpush1.xpose.msra.mxu0 0.0
      %3511 = vmatprep.subr.mxu0 0.0
      %3512 = vmatpush1.xpose.msra.mxu0 0.0
      %3513 = vmatprep.subr.mxu0 0.0
      %3514 = vmatpush1.xpose.msra.mxu0 0.0
      %3515 = vmatprep.subr.mxu0 0.0
      %3516 = vmatpush1.xpose.msra.mxu0 0.0
      %3517 = vmatprep.subr.mxu0 0.0
      %3518 = vmatpush1.xpose.msra.mxu0 0.0
      %3519 = vmatprep.subr.mxu0 0.0
      %3520 = vmatpush1.xpose.msra.mxu0 0.0
      %3521 = vmatprep.subr.mxu0 0.0
      %3522 = vmatpush1.xpose.msra.mxu0 0.0
      %3523 = vmatprep.subr.mxu0 0.0
      %3524 = vmatpush1.xpose.msra.mxu0 0.0
      %3525 = vmatprep.subr.mxu0 0.0
      %3526 = vmatpush1.xpose.msra.mxu0 0.0
      %3527 = vmatprep.subr.mxu0 0.0
      %3528 = vmatpush1.xpose.msra.mxu0 0.0
      %3529 = vmatprep.subr.mxu0 0.0
      %3530 = vmatpush1.xpose.msra.mxu0 0.0
      %3531 = vmatprep.mubr.f32.mxu0 0.0
      %3532 = vmatmul.mubr.f32.gmra.mrb[0].mxu0 %v2542
      %v3533 = vpop.f32.mrb[0].mxu0
      %v3534 = vadd.f32 0.0, %v3533
      %v3535 = vpop.f32.mrb[0].mxu0
      %3536 = vmatprep.mubr.f32.mxu0 0.0
      %3537 = vmatmul.mubr.f32.gmra.mrb[0].mxu0 %v2545
      %v3538 = vpop.f32.mrb[0].mxu0
      %v3539 = vadd.f32 0.0, %v3538
      %v3540 = vpop.f32.mrb[0].mxu0
      %3541 = vdwg.mxu0
      %v3543 = vsel %vm553, %v3036, 0
      %v3546 = vsel %vm553, %v3037, 0
      %3548 = vmatprep.subr.mxu0 0.0
      %3549 = vmatpush1.xpose.msra.mxu0 %v3543
      %3550 = vmatprep.subr.mxu0 0.0
      %3551 = vmatpush1.xpose.msra.mxu0 %v3546
      %3552 = vmatprep.subr.mxu0 0.0
      %3553 = vmatpush1.xpose.msra.mxu0 0.0
      %3554 = vmatprep.subr.mxu0 0.0
      %3555 = vmatpush1.xpose.msra.mxu0 0.0
      %3556 = vmatprep.subr.mxu0 0.0
      %3557 = vmatpush1.xpose.msra.mxu0 0.0
      %3558 = vmatprep.subr.mxu0 0.0
      %3559 = vmatpush1.xpose.msra.mxu0 0.0
      %3560 = vmatprep.subr.mxu0 0.0
      %3561 = vmatpush1.xpose.msra.mxu0 0.0
      %3562 = vmatprep.subr.mxu0 0.0
      %3563 = vmatpush1.xpose.msra.mxu0 0.0
      %3564 = vmatprep.subr.mxu0 0.0
      %3565 = vmatpush1.xpose.msra.mxu0 0.0
      %3566 = vmatprep.subr.mxu0 0.0
      %3567 = vmatpush1.xpose.msra.mxu0 0.0
      %3568 = vmatprep.subr.mxu0 0.0
      %3569 = vmatpush1.xpose.msra.mxu0 0.0
      %3570 = vmatprep.subr.mxu0 0.0
      %3571 = vmatpush1.xpose.msra.mxu0 0.0
      %3572 = vmatprep.subr.mxu0 0.0
      %3573 = vmatpush1.xpose.msra.mxu0 0.0
      %3574 = vmatprep.subr.mxu0 0.0
      %3575 = vmatpush1.xpose.msra.mxu0 0.0
      %3576 = vmatprep.subr.mxu0 0.0
      %3577 = vmatpush1.xpose.msra.mxu0 0.0
      %3578 = vmatprep.subr.mxu0 0.0
      %3579 = vmatpush1.xpose.msra.mxu0 0.0
      %3580 = vmatprep.subr.mxu0 0.0
      %3581 = vmatpush1.xpose.msra.mxu0 0.0
      %3582 = vmatprep.subr.mxu0 0.0
      %3583 = vmatpush1.xpose.msra.mxu0 0.0
      %3584 = vmatprep.subr.mxu0 0.0
      %3585 = vmatpush1.xpose.msra.mxu0 0.0
      %3586 = vmatprep.subr.mxu0 0.0
      %3587 = vmatpush1.xpose.msra.mxu0 0.0
      %3588 = vmatprep.subr.mxu0 0.0
      %3589 = vmatpush1.xpose.msra.mxu0 0.0
      %3590 = vmatprep.subr.mxu0 0.0
      %3591 = vmatpush1.xpose.msra.mxu0 0.0
      %3592 = vmatprep.subr.mxu0 0.0
      %3593 = vmatpush1.xpose.msra.mxu0 0.0
      %3594 = vmatprep.subr.mxu0 0.0
      %3595 = vmatpush1.xpose.msra.mxu0 0.0
      %3596 = vmatprep.subr.mxu0 0.0
      %3597 = vmatpush1.xpose.msra.mxu0 0.0
      %3598 = vmatprep.subr.mxu0 0.0
      %3599 = vmatpush1.xpose.msra.mxu0 0.0
      %3600 = vmatprep.subr.mxu0 0.0
      %3601 = vmatpush1.xpose.msra.mxu0 0.0
      %3602 = vmatprep.subr.mxu0 0.0
      %3603 = vmatpush1.xpose.msra.mxu0 0.0
      %3604 = vmatprep.subr.mxu0 0.0
      %3605 = vmatpush1.xpose.msra.mxu0 0.0
      %3606 = vmatprep.subr.mxu0 0.0
      %3607 = vmatpush1.xpose.msra.mxu0 0.0
      %3608 = vmatprep.subr.mxu0 0.0
      %3609 = vmatpush1.xpose.msra.mxu0 0.0
      %3610 = vmatprep.subr.mxu0 0.0
      %3611 = vmatpush1.xpose.msra.mxu0 0.0
      %3612 = vmatprep.mubr.f32.mxu0 0.0
      %3613 = vmatmul.mubr.f32.gmra.mrb[0].mxu0 %v2629
      %v3614 = vpop.f32.mrb[0].mxu0
      %v3615 = vadd.f32 0.0, %v3614
      %v3616 = vpop.f32.mrb[0].mxu0
      %3617 = vmatprep.mubr.f32.mxu0 0.0
      %3618 = vmatmul.mubr.f32.gmra.mrb[0].mxu0 %v2632
      %v3619 = vpop.f32.mrb[0].mxu0
      %v3620 = vadd.f32 0.0, %v3619
      %v3621 = vpop.f32.mrb[0].mxu0
      %3622 = vdwg.mxu0
      %v3624 = vsel %vm553, %v3038, 0
      %v3627 = vsel %vm553, %v3039, 0
      %3629 = vmatprep.subr.mxu0 0.0
      %3630 = vmatpush1.xpose.msra.mxu0 %v3624
      %3631 = vmatprep.subr.mxu0 0.0
      %3632 = vmatpush1.xpose.msra.mxu0 %v3627
      %3633 = vmatprep.subr.mxu0 0.0
      %3634 = vmatpush1.xpose.msra.mxu0 0.0
      %3635 = vmatprep.subr.mxu0 0.0
      %3636 = vmatpush1.xpose.msra.mxu0 0.0
      %3637 = vmatprep.subr.mxu0 0.0
      %3638 = vmatpush1.xpose.msra.mxu0 0.0
      %3639 = vmatprep.subr.mxu0 0.0
      %3640 = vmatpush1.xpose.msra.mxu0 0.0
      %3641 = vmatprep.subr.mxu0 0.0
      %3642 = vmatpush1.xpose.msra.mxu0 0.0
      %3643 = vmatprep.subr.mxu0 0.0
      %3644 = vmatpush1.xpose.msra.mxu0 0.0
      %3645 = vmatprep.subr.mxu0 0.0
      %3646 = vmatpush1.xpose.msra.mxu0 0.0
      %3647 = vmatprep.subr.mxu0 0.0
      %3648 = vmatpush1.xpose.msra.mxu0 0.0
      %3649 = vmatprep.subr.mxu0 0.0
      %3650 = vmatpush1.xpose.msra.mxu0 0.0
      %3651 = vmatprep.subr.mxu0 0.0
      %3652 = vmatpush1.xpose.msra.mxu0 0.0
      %3653 = vmatprep.subr.mxu0 0.0
      %3654 = vmatpush1.xpose.msra.mxu0 0.0
      %3655 = vmatprep.subr.mxu0 0.0
      %3656 = vmatpush1.xpose.msra.mxu0 0.0
      %3657 = vmatprep.subr.mxu0 0.0
      %3658 = vmatpush1.xpose.msra.mxu0 0.0
      %3659 = vmatprep.subr.mxu0 0.0
      %3660 = vmatpush1.xpose.msra.mxu0 0.0
      %3661 = vmatprep.subr.mxu0 0.0
      %3662 = vmatpush1.xpose.msra.mxu0 0.0
      %3663 = vmatprep.subr.mxu0 0.0
      %3664 = vmatpush1.xpose.msra.mxu0 0.0
      %3665 = vmatprep.subr.mxu0 0.0
      %3666 = vmatpush1.xpose.msra.mxu0 0.0
      %3667 = vmatprep.subr.mxu0 0.0
      %3668 = vmatpush1.xpose.msra.mxu0 0.0
      %3669 = vmatprep.subr.mxu0 0.0
      %3670 = vmatpush1.xpose.msra.mxu0 0.0
      %3671 = vmatprep.subr.mxu0 0.0
      %3672 = vmatpush1.xpose.msra.mxu0 0.0
      %3673 = vmatprep.subr.mxu0 0.0
      %3674 = vmatpush1.xpose.msra.mxu0 0.0
      %3675 = vmatprep.subr.mxu0 0.0
      %3676 = vmatpush1.xpose.msra.mxu0 0.0
      %3677 = vmatprep.subr.mxu0 0.0
      %3678 = vmatpush1.xpose.msra.mxu0 0.0
      %3679 = vmatprep.subr.mxu0 0.0
      %3680 = vmatpush1.xpose.msra.mxu0 0.0
      %3681 = vmatprep.subr.mxu0 0.0
      %3682 = vmatpush1.xpose.msra.mxu0 0.0
      %3683 = vmatprep.subr.mxu0 0.0
      %3684 = vmatpush1.xpose.msra.mxu0 0.0
      %3685 = vmatprep.subr.mxu0 0.0
      %3686 = vmatpush1.xpose.msra.mxu0 0.0
      %3687 = vmatprep.subr.mxu0 0.0
      %3688 = vmatpush1.xpose.msra.mxu0 0.0
      %3689 = vmatprep.subr.mxu0 0.0
      %3690 = vmatpush1.xpose.msra.mxu0 0.0
      %3691 = vmatprep.subr.mxu0 0.0
      %3692 = vmatpush1.xpose.msra.mxu0 0.0
      %3693 = vmatprep.mubr.f32.mxu0 0.0
      %3694 = vmatmul.mubr.f32.gmra.mrb[0].mxu0 %v2716
      %v3695 = vpop.f32.mrb[0].mxu0
      %v3696 = vadd.f32 0.0, %v3695
      %v3697 = vpop.f32.mrb[0].mxu0
      %3698 = vmatprep.mubr.f32.mxu0 0.0
      %3699 = vmatmul.mubr.f32.gmra.mrb[0].mxu0 %v2719
      %v3700 = vpop.f32.mrb[0].mxu0
      %v3701 = vadd.f32 0.0, %v3700
      %v3702 = vpop.f32.mrb[0].mxu0
      %3703 = vdwg.mxu0
      %v3704 = vsel %vm2802, %v3129, -inf
      %v3705 = vsel %vm2802, %v3134, -inf
      %v3706 = vmax.f32 %v3704, %v3705
      %v3707 = vrot.slane %v3706, 4
      %v3708 = vmax.f32 %v3706, %v3707
      %v3709 = vrot.slane %v3708, 2
      %v3710 = vmax.f32 %v3708, %v3709
      %v3711 = vrot.slane %v3710, 1
      %v3712 = vmax.f32 %v3710, %v3711
      %v3713 = vsel %vm2802, %v3210, -inf
      %v3714 = vsel %vm2802, %v3215, -inf
      %v3715 = vmax.f32 %v3713, %v3714
      %v3716 = vrot.slane %v3715, 4
      %v3717 = vmax.f32 %v3715, %v3716
      %v3718 = vrot.slane %v3717, 2
      %v3719 = vmax.f32 %v3717, %v3718
      %v3720 = vrot.slane %v3719, 1
      %v3721 = vmax.f32 %v3719, %v3720
      %v3722 = vsel %vm2802, %v3291, -inf
      %v3723 = vsel %vm2802, %v3296, -inf
      %v3724 = vmax.f32 %v3722, %v3723
      %v3725 = vrot.slane %v3724, 4
      %v3726 = vmax.f32 %v3724, %v3725
      %v3727 = vrot.slane %v3726, 2
      %v3728 = vmax.f32 %v3726, %v3727
      %v3729 = vrot.slane %v3728, 1
      %v3730 = vmax.f32 %v3728, %v3729
      %v3731 = vsel %vm2802, %v3372, -inf
      %v3732 = vsel %vm2802, %v3377, -inf
      %v3733 = vmax.f32 %v3731, %v3732
      %v3734 = vrot.slane %v3733, 4
      %v3735 = vmax.f32 %v3733, %v3734
      %v3736 = vrot.slane %v3735, 2
      %v3737 = vmax.f32 %v3735, %v3736
      %v3738 = vrot.slane %v3737, 1
      %v3739 = vmax.f32 %v3737, %v3738
      %v3740 = vsel %vm2802, %v3453, -inf
      %v3741 = vsel %vm2802, %v3458, -inf
      %v3742 = vmax.f32 %v3740, %v3741
      %v3743 = vrot.slane %v3742, 4
      %v3744 = vmax.f32 %v3742, %v3743
      %v3745 = vrot.slane %v3744, 2
      %v3746 = vmax.f32 %v3744, %v3745
      %v3747 = vrot.slane %v3746, 1
      %v3748 = vmax.f32 %v3746, %v3747
      %v3749 = vsel %vm2802, %v3534, -inf
      %v3750 = vsel %vm2802, %v3539, -inf
      %v3751 = vmax.f32 %v3749, %v3750
      %v3752 = vrot.slane %v3751, 4
      %v3753 = vmax.f32 %v3751, %v3752
      %v3754 = vrot.slane %v3753, 2
      %v3755 = vmax.f32 %v3753, %v3754
      %v3756 = vrot.slane %v3755, 1
      %v3757 = vmax.f32 %v3755, %v3756
      %v3758 = vsel %vm2802, %v3615, -inf
      %v3759 = vsel %vm2802, %v3620, -inf
      %v3760 = vmax.f32 %v3758, %v3759
      %v3761 = vrot.slane %v3760, 4
      %v3762 = vmax.f32 %v3760, %v3761
      %v3763 = vrot.slane %v3762, 2
      %v3764 = vmax.f32 %v3762, %v3763
      %v3765 = vrot.slane %v3764, 1
      %v3766 = vmax.f32 %v3764, %v3765
      %v3767 = vsel %vm2802, %v3696, -inf
      %v3768 = vsel %vm2802, %v3701, -inf
      %v3769 = vmax.f32 %v3767, %v3768
      %v3770 = vrot.slane %v3769, 4
      %v3771 = vmax.f32 %v3769, %v3770
      %v3772 = vrot.slane %v3771, 2
      %v3773 = vmax.f32 %v3771, %v3772
      %v3774 = vrot.slane %v3773, 1
      %v3775 = vmax.f32 %v3773, %v3774
      %v3776 = vsub.f32 %v3129, %v3712
      %v3777 = vsub.f32 %v3134, %v3712
      %v3778 = vsub.f32 %v3210, %v3721
      %v3779 = vsub.f32 %v3215, %v3721
      %v3780 = vsub.f32 %v3291, %v3730
      %v3781 = vsub.f32 %v3296, %v3730
      %v3782 = vsub.f32 %v3372, %v3739
      %v3783 = vsub.f32 %v3377, %v3739
      %v3784 = vsub.f32 %v3453, %v3748
      %v3785 = vsub.f32 %v3458, %v3748
      %v3786 = vsub.f32 %v3534, %v3757
      %v3787 = vsub.f32 %v3539, %v3757
      %v3788 = vsub.f32 %v3615, %v3766
      %v3789 = vsub.f32 %v3620, %v3766
      %v3790 = vsub.f32 %v3696, %v3775
      %v3791 = vsub.f32 %v3701, %v3775
      %v3792 = vmul.f32 %v3776, 1.442695
      %v3793 = vpow.pop %v3792
      %v3794 = vmul.f32 %v3777, 1.442695
      %v3795 = vpow.pop %v3794
      %v3796 = vmul.f32 %v3778, 1.442695
      %v3797 = vpow.pop %v3796
      %v3798 = vmul.f32 %v3779, 1.442695
      %v3799 = vpow.pop %v3798
      %v3800 = vmul.f32 %v3780, 1.442695
      %v3801 = vpow.pop %v3800
      %v3802 = vmul.f32 %v3781, 1.442695
      %v3803 = vpow.pop %v3802
      %v3804 = vmul.f32 %v3782, 1.442695
      %v3805 = vpow.pop %v3804
      %v3806 = vmul.f32 %v3783, 1.442695
      %v3807 = vpow.pop %v3806
      %v3808 = vmul.f32 %v3784, 1.442695
      %v3809 = vpow.pop %v3808
      %v3810 = vmul.f32 %v3785, 1.442695
      %v3811 = vpow.pop %v3810
      %v3812 = vmul.f32 %v3786, 1.442695
      %v3813 = vpow.pop %v3812
      %v3814 = vmul.f32 %v3787, 1.442695
      %v3815 = vpow.pop %v3814
      %v3816 = vmul.f32 %v3788, 1.442695
      %v3817 = vpow.pop %v3816
      %v3818 = vmul.f32 %v3789, 1.442695
      %v3819 = vpow.pop %v3818
      %v3820 = vmul.f32 %v3790, 1.442695
      %v3821 = vpow.pop %v3820
      %v3822 = vmul.f32 %v3791, 1.442695
      %v3823 = vpow.pop %v3822
      %v3824 = vsel %vm2802, %v3793, 0.0
      %v3825 = vsel %vm2802, %v3795, 0.0
      %v3826 = vadd.f32 %v3824, %v3825
      %v3827 = vrot.slane %v3826, 4
      %v3828 = vadd.f32 %v3826, %v3827
      %v3829 = vrot.slane %v3828, 2
      %v3830 = vadd.f32 %v3828, %v3829
      %v3831 = vrot.slane %v3830, 1
      %v3832 = vadd.f32 %v3830, %v3831
      %v3833 = vsel %vm2802, %v3797, 0.0
      %v3834 = vsel %vm2802, %v3799, 0.0
      %v3835 = vadd.f32 %v3833, %v3834
      %v3836 = vrot.slane %v3835, 4
      %v3837 = vadd.f32 %v3835, %v3836
      %v3838 = vrot.slane %v3837, 2
      %v3839 = vadd.f32 %v3837, %v3838
      %v3840 = vrot.slane %v3839, 1
      %v3841 = vadd.f32 %v3839, %v3840
      %v3842 = vsel %vm2802, %v3801, 0.0
      %v3843 = vsel %vm2802, %v3803, 0.0
      %v3844 = vadd.f32 %v3842, %v3843
      %v3845 = vrot.slane %v3844, 4
      %v3846 = vadd.f32 %v3844, %v3845
      %v3847 = vrot.slane %v3846, 2
      %v3848 = vadd.f32 %v3846, %v3847
      %v3849 = vrot.slane %v3848, 1
      %v3850 = vadd.f32 %v3848, %v3849
      %v3851 = vsel %vm2802, %v3805, 0.0
      %v3852 = vsel %vm2802, %v3807, 0.0
      %v3853 = vadd.f32 %v3851, %v3852
      %v3854 = vrot.slane %v3853, 4
      %v3855 = vadd.f32 %v3853, %v3854
      %v3856 = vrot.slane %v3855, 2
      %v3857 = vadd.f32 %v3855, %v3856
      %v3858 = vrot.slane %v3857, 1
      %v3859 = vadd.f32 %v3857, %v3858
      %v3860 = vsel %vm2802, %v3809, 0.0
      %v3861 = vsel %vm2802, %v3811, 0.0
      %v3862 = vadd.f32 %v3860, %v3861
      %v3863 = vrot.slane %v3862, 4
      %v3864 = vadd.f32 %v3862, %v3863
      %v3865 = vrot.slane %v3864, 2
      %v3866 = vadd.f32 %v3864, %v3865
      %v3867 = vrot.slane %v3866, 1
      %v3868 = vadd.f32 %v3866, %v3867
      %v3869 = vsel %vm2802, %v3813, 0.0
      %v3870 = vsel %vm2802, %v3815, 0.0
      %v3871 = vadd.f32 %v3869, %v3870
      %v3872 = vrot.slane %v3871, 4
      %v3873 = vadd.f32 %v3871, %v3872
      %v3874 = vrot.slane %v3873, 2
      %v3875 = vadd.f32 %v3873, %v3874
      %v3876 = vrot.slane %v3875, 1
      %v3877 = vadd.f32 %v3875, %v3876
      %v3878 = vsel %vm2802, %v3817, 0.0
      %v3879 = vsel %vm2802, %v3819, 0.0
      %v3880 = vadd.f32 %v3878, %v3879
      %v3881 = vrot.slane %v3880, 4
      %v3882 = vadd.f32 %v3880, %v3881
      %v3883 = vrot.slane %v3882, 2
      %v3884 = vadd.f32 %v3882, %v3883
      %v3885 = vrot.slane %v3884, 1
      %v3886 = vadd.f32 %v3884, %v3885
      %v3887 = vsel %vm2802, %v3821, 0.0
      %v3888 = vsel %vm2802, %v3823, 0.0
      %v3889 = vadd.f32 %v3887, %v3888
      %v3890 = vrot.slane %v3889, 4
      %v3891 = vadd.f32 %v3889, %v3890
      %v3892 = vrot.slane %v3891, 2
      %v3893 = vadd.f32 %v3891, %v3892
      %v3894 = vrot.slane %v3893, 1
      %v3895 = vadd.f32 %v3893, %v3894
      %v3896 = vrcp.pop %v3832
      %v3897 = vrcp.pop %v3841
      %v3898 = vrcp.pop %v3850
      %v3899 = vrcp.pop %v3859
      %v3900 = vrcp.pop %v3868
      %v3901 = vrcp.pop %v3877
      %v3902 = vrcp.pop %v3886
      %v3903 = vrcp.pop %v3895
      %v3904 = vmul.f32 %v3793, %v3896
      %v3905 = vmul.f32 %v3795, %v3896
      %v3906 = vmul.f32 %v3797, %v3897
      %v3907 = vmul.f32 %v3799, %v3897
      %v3908 = vmul.f32 %v3801, %v3898
      %v3909 = vmul.f32 %v3803, %v3898
      %v3910 = vmul.f32 %v3805, %v3899
      %v3911 = vmul.f32 %v3807, %v3899
      %v3912 = vmul.f32 %v3809, %v3900
      %v3913 = vmul.f32 %v3811, %v3900
      %v3914 = vmul.f32 %v3813, %v3901
      %v3915 = vmul.f32 %v3815, %v3901
      %v3916 = vmul.f32 %v3817, %v3902
      %v3917 = vmul.f32 %v3819, %v3902
      %v3918 = vmul.f32 %v3821, %v3903
      %v3919 = vmul.f32 %v3823, %v3903
      %v3921 = vsel %vm2802, %v3904, 0
      %v3924 = vsel %vm2802, %v3905, 0
      %3926 = vmatprep.subr.mxu0 0.0
      %3927 = vmatpush1.msra.mxu0 %v3040
      %3928 = vmatprep.subr.mxu0 0.0
      %3929 = vmatpush1.msra.mxu0 %v3041
      %3930 = vmatprep.subr.mxu0 0.0
      %3931 = vmatpush1.msra.mxu0 0.0
      %3932 = vmatprep.subr.mxu0 0.0
      %3933 = vmatpush1.msra.mxu0 0.0
      %3934 = vmatprep.subr.mxu0 0.0
      %3935 = vmatpush1.msra.mxu0 0.0
      %3936 = vmatprep.subr.mxu0 0.0
      %3937 = vmatpush1.msra.mxu0 0.0
      %3938 = vmatprep.subr.mxu0 0.0
      %3939 = vmatpush1.msra.mxu0 0.0
      %3940 = vmatprep.subr.mxu0 0.0
      %3941 = vmatpush1.msra.mxu0 0.0
      %3942 = vmatprep.subr.mxu0 0.0
      %3943 = vmatpush1.msra.mxu0 0.0
      %3944 = vmatprep.subr.mxu0 0.0
      %3945 = vmatpush1.msra.mxu0 0.0
      %3946 = vmatprep.subr.mxu0 0.0
      %3947 = vmatpush1.msra.mxu0 0.0
      %3948 = vmatprep.subr.mxu0 0.0
      %3949 = vmatpush1.msra.mxu0 0.0
      %3950 = vmatprep.subr.mxu0 0.0
      %3951 = vmatpush1.msra.mxu0 0.0
      %3952 = vmatprep.subr.mxu0 0.0
      %3953 = vmatpush1.msra.mxu0 0.0
      %3954 = vmatprep.subr.mxu0 0.0
      %3955 = vmatpush1.msra.mxu0 0.0
      %3956 = vmatprep.subr.mxu0 0.0
      %3957 = vmatpush1.msra.mxu0 0.0
      %3958 = vmatprep.subr.mxu0 0.0
      %3959 = vmatpush1.msra.mxu0 0.0
      %3960 = vmatprep.subr.mxu0 0.0
      %3961 = vmatpush1.msra.mxu0 0.0
      %3962 = vmatprep.subr.mxu0 0.0
      %3963 = vmatpush1.msra.mxu0 0.0
      %3964 = vmatprep.subr.mxu0 0.0
      %3965 = vmatpush1.msra.mxu0 0.0
      %3966 = vmatprep.subr.mxu0 0.0
      %3967 = vmatpush1.msra.mxu0 0.0
      %3968 = vmatprep.subr.mxu0 0.0
      %3969 = vmatpush1.msra.mxu0 0.0
      %3970 = vmatprep.subr.mxu0 0.0
      %3971 = vmatpush1.msra.mxu0 0.0
      %3972 = vmatprep.subr.mxu0 0.0
      %3973 = vmatpush1.msra.mxu0 0.0
      %3974 = vmatprep.subr.mxu0 0.0
      %3975 = vmatpush1.msra.mxu0 0.0
      %3976 = vmatprep.subr.mxu0 0.0
      %3977 = vmatpush1.msra.mxu0 0.0
      %3978 = vmatprep.subr.mxu0 0.0
      %3979 = vmatpush1.msra.mxu0 0.0
      %3980 = vmatprep.subr.mxu0 0.0
      %3981 = vmatpush1.msra.mxu0 0.0
      %3982 = vmatprep.subr.mxu0 0.0
      %3983 = vmatpush1.msra.mxu0 0.0
      %3984 = vmatprep.subr.mxu0 0.0
      %3985 = vmatpush1.msra.mxu0 0.0
      %3986 = vmatprep.subr.mxu0 0.0
      %3987 = vmatpush1.msra.mxu0 0.0
      %3988 = vmatprep.subr.mxu0 0.0
      %3989 = vmatpush1.msra.mxu0 0.0
      %3990 = vmatprep.mubr.f32.mxu0 0.0
      %3991 = vmatmul.mubr.f32.gmra.mrb[0].mxu0 %v3921
      %v3992 = vpop.f32.mrb[0].mxu0
      %v3993 = vadd.f32 0.0, %v3992
      %v3994 = vpop.f32.mrb[0].mxu0
      %3995 = vmatprep.mubr.f32.mxu0 0.0
      %3996 = vmatmul.mubr.f32.gmra.mrb[0].mxu0 %v3924
      %v3997 = vpop.f32.mrb[0].mxu0
      %v3998 = vadd.f32 0.0, %v3997
      %v3999 = vpop.f32.mrb[0].mxu0
      %4000 = vdwg.mxu0
      %v4002 = vsel %vm2802, %v3906, 0
      %v4005 = vsel %vm2802, %v3907, 0
      %4007 = vmatprep.subr.mxu0 0.0
      %4008 = vmatpush1.msra.mxu0 %v3042
      %4009 = vmatprep.subr.mxu0 0.0
      %4010 = vmatpush1.msra.mxu0 %v3043
      %4011 = vmatprep.subr.mxu0 0.0
      %4012 = vmatpush1.msra.mxu0 0.0
      %4013 = vmatprep.subr.mxu0 0.0
      %4014 = vmatpush1.msra.mxu0 0.0
      %4015 = vmatprep.subr.mxu0 0.0
      %4016 = vmatpush1.msra.mxu0 0.0
      %4017 = vmatprep.subr.mxu0 0.0
      %4018 = vmatpush1.msra.mxu0 0.0
      %4019 = vmatprep.subr.mxu0 0.0
      %4020 = vmatpush1.msra.mxu0 0.0
      %4021 = vmatprep.subr.mxu0 0.0
      %4022 = vmatpush1.msra.mxu0 0.0
      %4023 = vmatprep.subr.mxu0 0.0
      %4024 = vmatpush1.msra.mxu0 0.0
      %4025 = vmatprep.subr.mxu0 0.0
      %4026 = vmatpush1.msra.mxu0 0.0
      %4027 = vmatprep.subr.mxu0 0.0
      %4028 = vmatpush1.msra.mxu0 0.0
      %4029 = vmatprep.subr.mxu0 0.0
      %4030 = vmatpush1.msra.mxu0 0.0
      %4031 = vmatprep.subr.mxu0 0.0
      %4032 = vmatpush1.msra.mxu0 0.0
      %4033 = vmatprep.subr.mxu0 0.0
      %4034 = vmatpush1.msra.mxu0 0.0
      %4035 = vmatprep.subr.mxu0 0.0
      %4036 = vmatpush1.msra.mxu0 0.0
      %4037 = vmatprep.subr.mxu0 0.0
      %4038 = vmatpush1.msra.mxu0 0.0
      %4039 = vmatprep.subr.mxu0 0.0
      %4040 = vmatpush1.msra.mxu0 0.0
      %4041 = vmatprep.subr.mxu0 0.0
      %4042 = vmatpush1.msra.mxu0 0.0
      %4043 = vmatprep.subr.mxu0 0.0
      %4044 = vmatpush1.msra.mxu0 0.0
      %4045 = vmatprep.subr.mxu0 0.0
      %4046 = vmatpush1.msra.mxu0 0.0
      %4047 = vmatprep.subr.mxu0 0.0
      %4048 = vmatpush1.msra.mxu0 0.0
      %4049 = vmatprep.subr.mxu0 0.0
      %4050 = vmatpush1.msra.mxu0 0.0
      %4051 = vmatprep.subr.mxu0 0.0
      %4052 = vmatpush1.msra.mxu0 0.0
      %4053 = vmatprep.subr.mxu0 0.0
      %4054 = vmatpush1.msra.mxu0 0.0
      %4055 = vmatprep.subr.mxu0 0.0
      %4056 = vmatpush1.msra.mxu0 0.0
      %4057 = vmatprep.subr.mxu0 0.0
      %4058 = vmatpush1.msra.mxu0 0.0
      %4059 = vmatprep.subr.mxu0 0.0
      %4060 = vmatpush1.msra.mxu0 0.0
      %4061 = vmatprep.subr.mxu0 0.0
      %4062 = vmatpush1.msra.mxu0 0.0
      %4063 = vmatprep.subr.mxu0 0.0
      %4064 = vmatpush1.msra.mxu0 0.0
      %4065 = vmatprep.subr.mxu0 0.0
      %4066 = vmatpush1.msra.mxu0 0.0
      %4067 = vmatprep.subr.mxu0 0.0
      %4068 = vmatpush1.msra.mxu0 0.0
      %4069 = vmatprep.subr.mxu0 0.0
      %4070 = vmatpush1.msra.mxu0 0.0
      %4071 = vmatprep.mubr.f32.mxu0 0.0
      %4072 = vmatmul.mubr.f32.gmra.mrb[0].mxu0 %v4002
      %v4073 = vpop.f32.mrb[0].mxu0
      %v4074 = vadd.f32 0.0, %v4073
      %v4075 = vpop.f32.mrb[0].mxu0
      %4076 = vmatprep.mubr.f32.mxu0 0.0
      %4077 = vmatmul.mubr.f32.gmra.mrb[0].mxu0 %v4005
      %v4078 = vpop.f32.mrb[0].mxu0
      %v4079 = vadd.f32 0.0, %v4078
      %v4080 = vpop.f32.mrb[0].mxu0
      %4081 = vdwg.mxu0
      %v4083 = vsel %vm2802, %v3908, 0
      %v4086 = vsel %vm2802, %v3909, 0
      %4088 = vmatprep.subr.mxu0 0.0
      %4089 = vmatpush1.msra.mxu0 %v3044
      %4090 = vmatprep.subr.mxu0 0.0
      %4091 = vmatpush1.msra.mxu0 %v3045
      %4092 = vmatprep.subr.mxu0 0.0
      %4093 = vmatpush1.msra.mxu0 0.0
      %4094 = vmatprep.subr.mxu0 0.0
      %4095 = vmatpush1.msra.mxu0 0.0
      %4096 = vmatprep.subr.mxu0 0.0
      %4097 = vmatpush1.msra.mxu0 0.0
      %4098 = vmatprep.subr.mxu0 0.0
      %4099 = vmatpush1.msra.mxu0 0.0
      %4100 = vmatprep.subr.mxu0 0.0
      %4101 = vmatpush1.msra.mxu0 0.0
      %4102 = vmatprep.subr.mxu0 0.0
      %4103 = vmatpush1.msra.mxu0 0.0
      %4104 = vmatprep.subr.mxu0 0.0
      %4105 = vmatpush1.msra.mxu0 0.0
      %4106 = vmatprep.subr.mxu0 0.0
      %4107 = vmatpush1.msra.mxu0 0.0
      %4108 = vmatprep.subr.mxu0 0.0
      %4109 = vmatpush1.msra.mxu0 0.0
      %4110 = vmatprep.subr.mxu0 0.0
      %4111 = vmatpush1.msra.mxu0 0.0
      %4112 = vmatprep.subr.mxu0 0.0
      %4113 = vmatpush1.msra.mxu0 0.0
      %4114 = vmatprep.subr.mxu0 0.0
      %4115 = vmatpush1.msra.mxu0 0.0
      %4116 = vmatprep.subr.mxu0 0.0
      %4117 = vmatpush1.msra.mxu0 0.0
      %4118 = vmatprep.subr.mxu0 0.0
      %4119 = vmatpush1.msra.mxu0 0.0
      %4120 = vmatprep.subr.mxu0 0.0
      %4121 = vmatpush1.msra.mxu0 0.0
      %4122 = vmatprep.subr.mxu0 0.0
      %4123 = vmatpush1.msra.mxu0 0.0
      %4124 = vmatprep.subr.mxu0 0.0
      %4125 = vmatpush1.msra.mxu0 0.0
      %4126 = vmatprep.subr.mxu0 0.0
      %4127 = vmatpush1.msra.mxu0 0.0
      %4128 = vmatprep.subr.mxu0 0.0
      %4129 = vmatpush1.msra.mxu0 0.0
      %4130 = vmatprep.subr.mxu0 0.0
      %4131 = vmatpush1.msra.mxu0 0.0
      %4132 = vmatprep.subr.mxu0 0.0
      %4133 = vmatpush1.msra.mxu0 0.0
      %4134 = vmatprep.subr.mxu0 0.0
      %4135 = vmatpush1.msra.mxu0 0.0
      %4136 = vmatprep.subr.mxu0 0.0
      %4137 = vmatpush1.msra.mxu0 0.0
      %4138 = vmatprep.subr.mxu0 0.0
      %4139 = vmatpush1.msra.mxu0 0.0
      %4140 = vmatprep.subr.mxu0 0.0
      %4141 = vmatpush1.msra.mxu0 0.0
      %4142 = vmatprep.subr.mxu0 0.0
      %4143 = vmatpush1.msra.mxu0 0.0
      %4144 = vmatprep.subr.mxu0 0.0
      %4145 = vmatpush1.msra.mxu0 0.0
      %4146 = vmatprep.subr.mxu0 0.0
      %4147 = vmatpush1.msra.mxu0 0.0
      %4148 = vmatprep.subr.mxu0 0.0
      %4149 = vmatpush1.msra.mxu0 0.0
      %4150 = vmatprep.subr.mxu0 0.0
      %4151 = vmatpush1.msra.mxu0 0.0
      %4152 = vmatprep.mubr.f32.mxu0 0.0
      %4153 = vmatmul.mubr.f32.gmra.mrb[0].mxu0 %v4083
      %v4154 = vpop.f32.mrb[0].mxu0
      %v4155 = vadd.f32 0.0, %v4154
      %v4156 = vpop.f32.mrb[0].mxu0
      %4157 = vmatprep.mubr.f32.mxu0 0.0
      %4158 = vmatmul.mubr.f32.gmra.mrb[0].mxu0 %v4086
      %v4159 = vpop.f32.mrb[0].mxu0
      %v4160 = vadd.f32 0.0, %v4159
      %v4161 = vpop.f32.mrb[0].mxu0
      %4162 = vdwg.mxu0
      %v4164 = vsel %vm2802, %v3910, 0
      %v4167 = vsel %vm2802, %v3911, 0
      %4169 = vmatprep.subr.mxu0 0.0
      %4170 = vmatpush1.msra.mxu0 %v3046
      %4171 = vmatprep.subr.mxu0 0.0
      %4172 = vmatpush1.msra.mxu0 %v3047
      %4173 = vmatprep.subr.mxu0 0.0
      %4174 = vmatpush1.msra.mxu0 0.0
      %4175 = vmatprep.subr.mxu0 0.0
      %4176 = vmatpush1.msra.mxu0 0.0
      %4177 = vmatprep.subr.mxu0 0.0
      %4178 = vmatpush1.msra.mxu0 0.0
      %4179 = vmatprep.subr.mxu0 0.0
      %4180 = vmatpush1.msra.mxu0 0.0
      %4181 = vmatprep.subr.mxu0 0.0
      %4182 = vmatpush1.msra.mxu0 0.0
      %4183 = vmatprep.subr.mxu0 0.0
      %4184 = vmatpush1.msra.mxu0 0.0
      %4185 = vmatprep.subr.mxu0 0.0
      %4186 = vmatpush1.msra.mxu0 0.0
      %4187 = vmatprep.subr.mxu0 0.0
      %4188 = vmatpush1.msra.mxu0 0.0
      %4189 = vmatprep.subr.mxu0 0.0
      %4190 = vmatpush1.msra.mxu0 0.0
      %4191 = vmatprep.subr.mxu0 0.0
      %4192 = vmatpush1.msra.mxu0 0.0
      %4193 = vmatprep.subr.mxu0 0.0
      %4194 = vmatpush1.msra.mxu0 0.0
      %4195 = vmatprep.subr.mxu0 0.0
      %4196 = vmatpush1.msra.mxu0 0.0
      %4197 = vmatprep.subr.mxu0 0.0
      %4198 = vmatpush1.msra.mxu0 0.0
      %4199 = vmatprep.subr.mxu0 0.0
      %4200 = vmatpush1.msra.mxu0 0.0
      %4201 = vmatprep.subr.mxu0 0.0
      %4202 = vmatpush1.msra.mxu0 0.0
      %4203 = vmatprep.subr.mxu0 0.0
      %4204 = vmatpush1.msra.mxu0 0.0
      %4205 = vmatprep.subr.mxu0 0.0
      %4206 = vmatpush1.msra.mxu0 0.0
      %4207 = vmatprep.subr.mxu0 0.0
      %4208 = vmatpush1.msra.mxu0 0.0
      %4209 = vmatprep.subr.mxu0 0.0
      %4210 = vmatpush1.msra.mxu0 0.0
      %4211 = vmatprep.subr.mxu0 0.0
      %4212 = vmatpush1.msra.mxu0 0.0
      %4213 = vmatprep.subr.mxu0 0.0
      %4214 = vmatpush1.msra.mxu0 0.0
      %4215 = vmatprep.subr.mxu0 0.0
      %4216 = vmatpush1.msra.mxu0 0.0
      %4217 = vmatprep.subr.mxu0 0.0
      %4218 = vmatpush1.msra.mxu0 0.0
      %4219 = vmatprep.subr.mxu0 0.0
      %4220 = vmatpush1.msra.mxu0 0.0
      %4221 = vmatprep.subr.mxu0 0.0
      %4222 = vmatpush1.msra.mxu0 0.0
      %4223 = vmatprep.subr.mxu0 0.0
      %4224 = vmatpush1.msra.mxu0 0.0
      %4225 = vmatprep.subr.mxu0 0.0
      %4226 = vmatpush1.msra.mxu0 0.0
      %4227 = vmatprep.subr.mxu0 0.0
      %4228 = vmatpush1.msra.mxu0 0.0
      %4229 = vmatprep.subr.mxu0 0.0
      %4230 = vmatpush1.msra.mxu0 0.0
      %4231 = vmatprep.subr.mxu0 0.0
      %4232 = vmatpush1.msra.mxu0 0.0
      %4233 = vmatprep.mubr.f32.mxu0 0.0
      %4234 = vmatmul.mubr.f32.gmra.mrb[0].mxu0 %v4164
      %v4235 = vpop.f32.mrb[0].mxu0
      %v4236 = vadd.f32 0.0, %v4235
      %v4237 = vpop.f32.mrb[0].mxu0
      %4238 = vmatprep.mubr.f32.mxu0 0.0
      %4239 = vmatmul.mubr.f32.gmra.mrb[0].mxu0 %v4167
      %v4240 = vpop.f32.mrb[0].mxu0
      %v4241 = vadd.f32 0.0, %v4240
      %v4242 = vpop.f32.mrb[0].mxu0
      %4243 = vdwg.mxu0
      %v4245 = vsel %vm2802, %v3912, 0
      %v4248 = vsel %vm2802, %v3913, 0
      %4250 = vmatprep.subr.mxu0 0.0
      %4251 = vmatpush1.msra.mxu0 %v3048
      %4252 = vmatprep.subr.mxu0 0.0
      %4253 = vmatpush1.msra.mxu0 %v3049
      %4254 = vmatprep.subr.mxu0 0.0
      %4255 = vmatpush1.msra.mxu0 0.0
      %4256 = vmatprep.subr.mxu0 0.0
      %4257 = vmatpush1.msra.mxu0 0.0
      %4258 = vmatprep.subr.mxu0 0.0
      %4259 = vmatpush1.msra.mxu0 0.0
      %4260 = vmatprep.subr.mxu0 0.0
      %4261 = vmatpush1.msra.mxu0 0.0
      %4262 = vmatprep.subr.mxu0 0.0
      %4263 = vmatpush1.msra.mxu0 0.0
      %4264 = vmatprep.subr.mxu0 0.0
      %4265 = vmatpush1.msra.mxu0 0.0
      %4266 = vmatprep.subr.mxu0 0.0
      %4267 = vmatpush1.msra.mxu0 0.0
      %4268 = vmatprep.subr.mxu0 0.0
      %4269 = vmatpush1.msra.mxu0 0.0
      %4270 = vmatprep.subr.mxu0 0.0
      %4271 = vmatpush1.msra.mxu0 0.0
      %4272 = vmatprep.subr.mxu0 0.0
      %4273 = vmatpush1.msra.mxu0 0.0
      %4274 = vmatprep.subr.mxu0 0.0
      %4275 = vmatpush1.msra.mxu0 0.0
      %4276 = vmatprep.subr.mxu0 0.0
      %4277 = vmatpush1.msra.mxu0 0.0
      %4278 = vmatprep.subr.mxu0 0.0
      %4279 = vmatpush1.msra.mxu0 0.0
      %4280 = vmatprep.subr.mxu0 0.0
      %4281 = vmatpush1.msra.mxu0 0.0
      %4282 = vmatprep.subr.mxu0 0.0
      %4283 = vmatpush1.msra.mxu0 0.0
      %4284 = vmatprep.subr.mxu0 0.0
      %4285 = vmatpush1.msra.mxu0 0.0
      %4286 = vmatprep.subr.mxu0 0.0
      %4287 = vmatpush1.msra.mxu0 0.0
      %4288 = vmatprep.subr.mxu0 0.0
      %4289 = vmatpush1.msra.mxu0 0.0
      %4290 = vmatprep.subr.mxu0 0.0
      %4291 = vmatpush1.msra.mxu0 0.0
      %4292 = vmatprep.subr.mxu0 0.0
      %4293 = vmatpush1.msra.mxu0 0.0
      %4294 = vmatprep.subr.mxu0 0.0
      %4295 = vmatpush1.msra.mxu0 0.0
      %4296 = vmatprep.subr.mxu0 0.0
      %4297 = vmatpush1.msra.mxu0 0.0
      %4298 = vmatprep.subr.mxu0 0.0
      %4299 = vmatpush1.msra.mxu0 0.0
      %4300 = vmatprep.subr.mxu0 0.0
      %4301 = vmatpush1.msra.mxu0 0.0
      %4302 = vmatprep.subr.mxu0 0.0
      %4303 = vmatpush1.msra.mxu0 0.0
      %4304 = vmatprep.subr.mxu0 0.0
      %4305 = vmatpush1.msra.mxu0 0.0
      %4306 = vmatprep.subr.mxu0 0.0
      %4307 = vmatpush1.msra.mxu0 0.0
      %4308 = vmatprep.subr.mxu0 0.0
      %4309 = vmatpush1.msra.mxu0 0.0
      %4310 = vmatprep.subr.mxu0 0.0
      %4311 = vmatpush1.msra.mxu0 0.0
      %4312 = vmatprep.subr.mxu0 0.0
      %4313 = vmatpush1.msra.mxu0 0.0
      %4314 = vmatprep.mubr.f32.mxu0 0.0
      %4315 = vmatmul.mubr.f32.gmra.mrb[0].mxu0 %v4245
      %v4316 = vpop.f32.mrb[0].mxu0
      %v4317 = vadd.f32 0.0, %v4316
      %v4318 = vpop.f32.mrb[0].mxu0
      %4319 = vmatprep.mubr.f32.mxu0 0.0
      %4320 = vmatmul.mubr.f32.gmra.mrb[0].mxu0 %v4248
      %v4321 = vpop.f32.mrb[0].mxu0
      %v4322 = vadd.f32 0.0, %v4321
      %v4323 = vpop.f32.mrb[0].mxu0
      %4324 = vdwg.mxu0
      %v4326 = vsel %vm2802, %v3914, 0
      %v4329 = vsel %vm2802, %v3915, 0
      %4331 = vmatprep.subr.mxu0 0.0
      %4332 = vmatpush1.msra.mxu0 %v3050
      %4333 = vmatprep.subr.mxu0 0.0
      %4334 = vmatpush1.msra.mxu0 %v3051
      %4335 = vmatprep.subr.mxu0 0.0
      %4336 = vmatpush1.msra.mxu0 0.0
      %4337 = vmatprep.subr.mxu0 0.0
      %4338 = vmatpush1.msra.mxu0 0.0
      %4339 = vmatprep.subr.mxu0 0.0
      %4340 = vmatpush1.msra.mxu0 0.0
      %4341 = vmatprep.subr.mxu0 0.0
      %4342 = vmatpush1.msra.mxu0 0.0
      %4343 = vmatprep.subr.mxu0 0.0
      %4344 = vmatpush1.msra.mxu0 0.0
      %4345 = vmatprep.subr.mxu0 0.0
      %4346 = vmatpush1.msra.mxu0 0.0
      %4347 = vmatprep.subr.mxu0 0.0
      %4348 = vmatpush1.msra.mxu0 0.0
      %4349 = vmatprep.subr.mxu0 0.0
      %4350 = vmatpush1.msra.mxu0 0.0
      %4351 = vmatprep.subr.mxu0 0.0
      %4352 = vmatpush1.msra.mxu0 0.0
      %4353 = vmatprep.subr.mxu0 0.0
      %4354 = vmatpush1.msra.mxu0 0.0
      %4355 = vmatprep.subr.mxu0 0.0
      %4356 = vmatpush1.msra.mxu0 0.0
      %4357 = vmatprep.subr.mxu0 0.0
      %4358 = vmatpush1.msra.mxu0 0.0
      %4359 = vmatprep.subr.mxu0 0.0
      %4360 = vmatpush1.msra.mxu0 0.0
      %4361 = vmatprep.subr.mxu0 0.0
      %4362 = vmatpush1.msra.mxu0 0.0
      %4363 = vmatprep.subr.mxu0 0.0
      %4364 = vmatpush1.msra.mxu0 0.0
      %4365 = vmatprep.subr.mxu0 0.0
      %4366 = vmatpush1.msra.mxu0 0.0
      %4367 = vmatprep.subr.mxu0 0.0
      %4368 = vmatpush1.msra.mxu0 0.0
      %4369 = vmatprep.subr.mxu0 0.0
      %4370 = vmatpush1.msra.mxu0 0.0
      %4371 = vmatprep.subr.mxu0 0.0
      %4372 = vmatpush1.msra.mxu0 0.0
      %4373 = vmatprep.subr.mxu0 0.0
      %4374 = vmatpush1.msra.mxu0 0.0
      %4375 = vmatprep.subr.mxu0 0.0
      %4376 = vmatpush1.msra.mxu0 0.0
      %4377 = vmatprep.subr.mxu0 0.0
      %4378 = vmatpush1.msra.mxu0 0.0
      %4379 = vmatprep.subr.mxu0 0.0
      %4380 = vmatpush1.msra.mxu0 0.0
      %4381 = vmatprep.subr.mxu0 0.0
      %4382 = vmatpush1.msra.mxu0 0.0
      %4383 = vmatprep.subr.mxu0 0.0
      %4384 = vmatpush1.msra.mxu0 0.0
      %4385 = vmatprep.subr.mxu0 0.0
      %4386 = vmatpush1.msra.mxu0 0.0
      %4387 = vmatprep.subr.mxu0 0.0
      %4388 = vmatpush1.msra.mxu0 0.0
      %4389 = vmatprep.subr.mxu0 0.0
      %4390 = vmatpush1.msra.mxu0 0.0
      %4391 = vmatprep.subr.mxu0 0.0
      %4392 = vmatpush1.msra.mxu0 0.0
      %4393 = vmatprep.subr.mxu0 0.0
      %4394 = vmatpush1.msra.mxu0 0.0
      %4395 = vmatprep.mubr.f32.mxu0 0.0
      %4396 = vmatmul.mubr.f32.gmra.mrb[0].mxu0 %v4326
      %v4397 = vpop.f32.mrb[0].mxu0
      %v4398 = vadd.f32 0.0, %v4397
      %v4399 = vpop.f32.mrb[0].mxu0
      %4400 = vmatprep.mubr.f32.mxu0 0.0
      %4401 = vmatmul.mubr.f32.gmra.mrb[0].mxu0 %v4329
      %v4402 = vpop.f32.mrb[0].mxu0
      %v4403 = vadd.f32 0.0, %v4402
      %v4404 = vpop.f32.mrb[0].mxu0
      %4405 = vdwg.mxu0
      %v4407 = vsel %vm2802, %v3916, 0
      %v4410 = vsel %vm2802, %v3917, 0
      %4412 = vmatprep.subr.mxu0 0.0
      %4413 = vmatpush1.msra.mxu0 %v3052
      %4414 = vmatprep.subr.mxu0 0.0
      %4415 = vmatpush1.msra.mxu0 %v3053
      %4416 = vmatprep.subr.mxu0 0.0
      %4417 = vmatpush1.msra.mxu0 0.0
      %4418 = vmatprep.subr.mxu0 0.0
      %4419 = vmatpush1.msra.mxu0 0.0
      %4420 = vmatprep.subr.mxu0 0.0
      %4421 = vmatpush1.msra.mxu0 0.0
      %4422 = vmatprep.subr.mxu0 0.0
      %4423 = vmatpush1.msra.mxu0 0.0
      %4424 = vmatprep.subr.mxu0 0.0
      %4425 = vmatpush1.msra.mxu0 0.0
      %4426 = vmatprep.subr.mxu0 0.0
      %4427 = vmatpush1.msra.mxu0 0.0
      %4428 = vmatprep.subr.mxu0 0.0
      %4429 = vmatpush1.msra.mxu0 0.0
      %4430 = vmatprep.subr.mxu0 0.0
      %4431 = vmatpush1.msra.mxu0 0.0
      %4432 = vmatprep.subr.mxu0 0.0
      %4433 = vmatpush1.msra.mxu0 0.0
      %4434 = vmatprep.subr.mxu0 0.0
      %4435 = vmatpush1.msra.mxu0 0.0
      %4436 = vmatprep.subr.mxu0 0.0
      %4437 = vmatpush1.msra.mxu0 0.0
      %4438 = vmatprep.subr.mxu0 0.0
      %4439 = vmatpush1.msra.mxu0 0.0
      %4440 = vmatprep.subr.mxu0 0.0
      %4441 = vmatpush1.msra.mxu0 0.0
      %4442 = vmatprep.subr.mxu0 0.0
      %4443 = vmatpush1.msra.mxu0 0.0
      %4444 = vmatprep.subr.mxu0 0.0
      %4445 = vmatpush1.msra.mxu0 0.0
      %4446 = vmatprep.subr.mxu0 0.0
      %4447 = vmatpush1.msra.mxu0 0.0
      %4448 = vmatprep.subr.mxu0 0.0
      %4449 = vmatpush1.msra.mxu0 0.0
      %4450 = vmatprep.subr.mxu0 0.0
      %4451 = vmatpush1.msra.mxu0 0.0
      %4452 = vmatprep.subr.mxu0 0.0
      %4453 = vmatpush1.msra.mxu0 0.0
      %4454 = vmatprep.subr.mxu0 0.0
      %4455 = vmatpush1.msra.mxu0 0.0
      %4456 = vmatprep.subr.mxu0 0.0
      %4457 = vmatpush1.msra.mxu0 0.0
      %4458 = vmatprep.subr.mxu0 0.0
      %4459 = vmatpush1.msra.mxu0 0.0
      %4460 = vmatprep.subr.mxu0 0.0
      %4461 = vmatpush1.msra.mxu0 0.0
      %4462 = vmatprep.subr.mxu0 0.0
      %4463 = vmatpush1.msra.mxu0 0.0
      %4464 = vmatprep.subr.mxu0 0.0
      %4465 = vmatpush1.msra.mxu0 0.0
      %4466 = vmatprep.subr.mxu0 0.0
      %4467 = vmatpush1.msra.mxu0 0.0
      %4468 = vmatprep.subr.mxu0 0.0
      %4469 = vmatpush1.msra.mxu0 0.0
      %4470 = vmatprep.subr.mxu0 0.0
      %4471 = vmatpush1.msra.mxu0 0.0
      %4472 = vmatprep.subr.mxu0 0.0
      %4473 = vmatpush1.msra.mxu0 0.0
      %4474 = vmatprep.subr.mxu0 0.0
      %4475 = vmatpush1.msra.mxu0 0.0
      %4476 = vmatprep.mubr.f32.mxu0 0.0
      %4477 = vmatmul.mubr.f32.gmra.mrb[0].mxu0 %v4407
      %v4478 = vpop.f32.mrb[0].mxu0
      %v4479 = vadd.f32 0.0, %v4478
      %v4480 = vpop.f32.mrb[0].mxu0
      %4481 = vmatprep.mubr.f32.mxu0 0.0
      %4482 = vmatmul.mubr.f32.gmra.mrb[0].mxu0 %v4410
      %v4483 = vpop.f32.mrb[0].mxu0
      %v4484 = vadd.f32 0.0, %v4483
      %v4485 = vpop.f32.mrb[0].mxu0
      %4486 = vdwg.mxu0
      %v4488 = vsel %vm2802, %v3918, 0
      %v4491 = vsel %vm2802, %v3919, 0
      %4493 = vmatprep.subr.mxu0 0.0
      %4494 = vmatpush1.msra.mxu0 %v3054
      %4495 = vmatprep.subr.mxu0 0.0
      %4496 = vmatpush1.msra.mxu0 %v3055
      %4497 = vmatprep.subr.mxu0 0.0
      %4498 = vmatpush1.msra.mxu0 0.0
      %4499 = vmatprep.subr.mxu0 0.0
      %4500 = vmatpush1.msra.mxu0 0.0
      %4501 = vmatprep.subr.mxu0 0.0
      %4502 = vmatpush1.msra.mxu0 0.0
      %4503 = vmatprep.subr.mxu0 0.0
      %4504 = vmatpush1.msra.mxu0 0.0
      %4505 = vmatprep.subr.mxu0 0.0
      %4506 = vmatpush1.msra.mxu0 0.0
      %4507 = vmatprep.subr.mxu0 0.0
      %4508 = vmatpush1.msra.mxu0 0.0
      %4509 = vmatprep.subr.mxu0 0.0
      %4510 = vmatpush1.msra.mxu0 0.0
      %4511 = vmatprep.subr.mxu0 0.0
      %4512 = vmatpush1.msra.mxu0 0.0
      %4513 = vmatprep.subr.mxu0 0.0
      %4514 = vmatpush1.msra.mxu0 0.0
      %4515 = vmatprep.subr.mxu0 0.0
      %4516 = vmatpush1.msra.mxu0 0.0
      %4517 = vmatprep.subr.mxu0 0.0
      %4518 = vmatpush1.msra.mxu0 0.0
      %4519 = vmatprep.subr.mxu0 0.0
      %4520 = vmatpush1.msra.mxu0 0.0
      %4521 = vmatprep.subr.mxu0 0.0
      %4522 = vmatpush1.msra.mxu0 0.0
      %4523 = vmatprep.subr.mxu0 0.0
      %4524 = vmatpush1.msra.mxu0 0.0
      %4525 = vmatprep.subr.mxu0 0.0
      %4526 = vmatpush1.msra.mxu0 0.0
      %4527 = vmatprep.subr.mxu0 0.0
      %4528 = vmatpush1.msra.mxu0 0.0
      %4529 = vmatprep.subr.mxu0 0.0
      %4530 = vmatpush1.msra.mxu0 0.0
      %4531 = vmatprep.subr.mxu0 0.0
      %4532 = vmatpush1.msra.mxu0 0.0
      %4533 = vmatprep.subr.mxu0 0.0
      %4534 = vmatpush1.msra.mxu0 0.0
      %4535 = vmatprep.subr.mxu0 0.0
      %4536 = vmatpush1.msra.mxu0 0.0
      %4537 = vmatprep.subr.mxu0 0.0
      %4538 = vmatpush1.msra.mxu0 0.0
      %4539 = vmatprep.subr.mxu0 0.0
      %4540 = vmatpush1.msra.mxu0 0.0
      %4541 = vmatprep.subr.mxu0 0.0
      %4542 = vmatpush1.msra.mxu0 0.0
      %4543 = vmatprep.subr.mxu0 0.0
      %4544 = vmatpush1.msra.mxu0 0.0
      %4545 = vmatprep.subr.mxu0 0.0
      %4546 = vmatpush1.msra.mxu0 0.0
      %4547 = vmatprep.subr.mxu0 0.0
      %4548 = vmatpush1.msra.mxu0 0.0
      %4549 = vmatprep.subr.mxu0 0.0
      %4550 = vmatpush1.msra.mxu0 0.0
      %4551 = vmatprep.subr.mxu0 0.0
      %4552 = vmatpush1.msra.mxu0 0.0
      %4553 = vmatprep.subr.mxu0 0.0
      %4554 = vmatpush1.msra.mxu0 0.0
      %4555 = vmatprep.subr.mxu0 0.0
      %4556 = vmatpush1.msra.mxu0 0.0
      %4557 = vmatprep.mubr.f32.mxu0 0.0
      %4558 = vmatmul.mubr.f32.gmra.mrb[0].mxu0 %v4488
      %v4559 = vpop.f32.mrb[0].mxu0
      %v4560 = vadd.f32 0.0, %v4559
      %v4561 = vpop.f32.mrb[0].mxu0
      %4562 = vmatprep.mubr.f32.mxu0 0.0
      %4563 = vmatmul.mubr.f32.gmra.mrb[0].mxu0 %v4491
      %v4564 = vpop.f32.mrb[0].mxu0
      %v4565 = vadd.f32 0.0, %v4564
      %v4566 = vpop.f32.mrb[0].mxu0
      %4567 = vdwg.mxu0
      %v4569 = vsel %vm2802, %v3003, 0
      %v4572 = vsel %vm2802, %v3004, 0
      %4574 = vmatprep.subr.mxu0 0.0
      %4575 = vmatpush1.msra.mxu0 %v2090
      %4576 = vmatprep.subr.mxu0 0.0
      %4577 = vmatpush1.msra.mxu0 %v2091
      %4578 = vmatprep.subr.mxu0 0.0
      %4579 = vmatpush1.msra.mxu0 0.0
      %4580 = vmatprep.subr.mxu0 0.0
      %4581 = vmatpush1.msra.mxu0 0.0
      %4582 = vmatprep.subr.mxu0 0.0
      %4583 = vmatpush1.msra.mxu0 0.0
      %4584 = vmatprep.subr.mxu0 0.0
      %4585 = vmatpush1.msra.mxu0 0.0
      %4586 = vmatprep.subr.mxu0 0.0
      %4587 = vmatpush1.msra.mxu0 0.0
      %4588 = vmatprep.subr.mxu0 0.0
      %4589 = vmatpush1.msra.mxu0 0.0
      %4590 = vmatprep.subr.mxu0 0.0
      %4591 = vmatpush1.msra.mxu0 0.0
      %4592 = vmatprep.subr.mxu0 0.0
      %4593 = vmatpush1.msra.mxu0 0.0
      %4594 = vmatprep.subr.mxu0 0.0
      %4595 = vmatpush1.msra.mxu0 0.0
      %4596 = vmatprep.subr.mxu0 0.0
      %4597 = vmatpush1.msra.mxu0 0.0
      %4598 = vmatprep.subr.mxu0 0.0
      %4599 = vmatpush1.msra.mxu0 0.0
      %4600 = vmatprep.subr.mxu0 0.0
      %4601 = vmatpush1.msra.mxu0 0.0
      %4602 = vmatprep.subr.mxu0 0.0
      %4603 = vmatpush1.msra.mxu0 0.0
      %4604 = vmatprep.subr.mxu0 0.0
      %4605 = vmatpush1.msra.mxu0 0.0
      %4606 = vmatprep.subr.mxu0 0.0
      %4607 = vmatpush1.msra.mxu0 0.0
      %4608 = vmatprep.subr.mxu0 0.0
      %4609 = vmatpush1.msra.mxu0 0.0
      %4610 = vmatprep.subr.mxu0 0.0
      %4611 = vmatpush1.msra.mxu0 0.0
      %4612 = vmatprep.subr.mxu0 0.0
      %4613 = vmatpush1.msra.mxu0 0.0
      %4614 = vmatprep.subr.mxu0 0.0
      %4615 = vmatpush1.msra.mxu0 0.0
      %4616 = vmatprep.subr.mxu0 0.0
      %4617 = vmatpush1.msra.mxu0 0.0
      %4618 = vmatprep.subr.mxu0 0.0
      %4619 = vmatpush1.msra.mxu0 0.0
      %4620 = vmatprep.subr.mxu0 0.0
      %4621 = vmatpush1.msra.mxu0 0.0
      %4622 = vmatprep.subr.mxu0 0.0
      %4623 = vmatpush1.msra.mxu0 0.0
      %4624 = vmatprep.subr.mxu0 0.0
      %4625 = vmatpush1.msra.mxu0 0.0
      %4626 = vmatprep.subr.mxu0 0.0
      %4627 = vmatpush1.msra.mxu0 0.0
      %4628 = vmatprep.subr.mxu0 0.0
      %4629 = vmatpush1.msra.mxu0 0.0
      %4630 = vmatprep.subr.mxu0 0.0
      %4631 = vmatpush1.msra.mxu0 0.0
      %4632 = vmatprep.subr.mxu0 0.0
      %4633 = vmatpush1.msra.mxu0 0.0
      %4634 = vmatprep.subr.mxu0 0.0
      %4635 = vmatpush1.msra.mxu0 0.0
      %4636 = vmatprep.subr.mxu0 0.0
      %4637 = vmatpush1.msra.mxu0 0.0
      %4638 = vmatprep.mubr.f32.mxu0 0.0
      %4639 = vmatmul.mubr.f32.gmra.mrb[0].mxu0 %v4569
      %v4640 = vpop.f32.mrb[0].mxu0
      %v4641 = vadd.f32 %v3993, %v4640
      %v4642 = vpop.f32.mrb[0].mxu0
      %4643 = vmatprep.mubr.f32.mxu0 0.0
      %4644 = vmatmul.mubr.f32.gmra.mrb[0].mxu0 %v4572
      %v4645 = vpop.f32.mrb[0].mxu0
      %v4646 = vadd.f32 %v3998, %v4645
      %v4647 = vpop.f32.mrb[0].mxu0
      %4648 = vdwg.mxu0
      %v4650 = vsel %vm2802, %v3005, 0
      %v4653 = vsel %vm2802, %v3006, 0
      %4655 = vmatprep.subr.mxu0 0.0
      %4656 = vmatpush1.msra.mxu0 %v2092
      %4657 = vmatprep.subr.mxu0 0.0
      %4658 = vmatpush1.msra.mxu0 %v2093
      %4659 = vmatprep.subr.mxu0 0.0
      %4660 = vmatpush1.msra.mxu0 0.0
      %4661 = vmatprep.subr.mxu0 0.0
      %4662 = vmatpush1.msra.mxu0 0.0
      %4663 = vmatprep.subr.mxu0 0.0
      %4664 = vmatpush1.msra.mxu0 0.0
      %4665 = vmatprep.subr.mxu0 0.0
      %4666 = vmatpush1.msra.mxu0 0.0
      %4667 = vmatprep.subr.mxu0 0.0
      %4668 = vmatpush1.msra.mxu0 0.0
      %4669 = vmatprep.subr.mxu0 0.0
      %4670 = vmatpush1.msra.mxu0 0.0
      %4671 = vmatprep.subr.mxu0 0.0
      %4672 = vmatpush1.msra.mxu0 0.0
      %4673 = vmatprep.subr.mxu0 0.0
      %4674 = vmatpush1.msra.mxu0 0.0
      %4675 = vmatprep.subr.mxu0 0.0
      %4676 = vmatpush1.msra.mxu0 0.0
      %4677 = vmatprep.subr.mxu0 0.0
      %4678 = vmatpush1.msra.mxu0 0.0
      %4679 = vmatprep.subr.mxu0 0.0
      %4680 = vmatpush1.msra.mxu0 0.0
      %4681 = vmatprep.subr.mxu0 0.0
      %4682 = vmatpush1.msra.mxu0 0.0
      %4683 = vmatprep.subr.mxu0 0.0
      %4684 = vmatpush1.msra.mxu0 0.0
      %4685 = vmatprep.subr.mxu0 0.0
      %4686 = vmatpush1.msra.mxu0 0.0
      %4687 = vmatprep.subr.mxu0 0.0
      %4688 = vmatpush1.msra.mxu0 0.0
      %4689 = vmatprep.subr.mxu0 0.0
      %4690 = vmatpush1.msra.mxu0 0.0
      %4691 = vmatprep.subr.mxu0 0.0
      %4692 = vmatpush1.msra.mxu0 0.0
      %4693 = vmatprep.subr.mxu0 0.0
      %4694 = vmatpush1.msra.mxu0 0.0
      %4695 = vmatprep.subr.mxu0 0.0
      %4696 = vmatpush1.msra.mxu0 0.0
      %4697 = vmatprep.subr.mxu0 0.0
      %4698 = vmatpush1.msra.mxu0 0.0
      %4699 = vmatprep.subr.mxu0 0.0
      %4700 = vmatpush1.msra.mxu0 0.0
      %4701 = vmatprep.subr.mxu0 0.0
      %4702 = vmatpush1.msra.mxu0 0.0
      %4703 = vmatprep.subr.mxu0 0.0
      %4704 = vmatpush1.msra.mxu0 0.0
      %4705 = vmatprep.subr.mxu0 0.0
      %4706 = vmatpush1.msra.mxu0 0.0
      %4707 = vmatprep.subr.mxu0 0.0
      %4708 = vmatpush1.msra.mxu0 0.0
      %4709 = vmatprep.subr.mxu0 0.0
      %4710 = vmatpush1.msra.mxu0 0.0
      %4711 = vmatprep.subr.mxu0 0.0
      %4712 = vmatpush1.msra.mxu0 0.0
      %4713 = vmatprep.subr.mxu0 0.0
      %4714 = vmatpush1.msra.mxu0 0.0
      %4715 = vmatprep.subr.mxu0 0.0
      %4716 = vmatpush1.msra.mxu0 0.0
      %4717 = vmatprep.subr.mxu0 0.0
      %4718 = vmatpush1.msra.mxu0 0.0
      %4719 = vmatprep.mubr.f32.mxu0 0.0
      %4720 = vmatmul.mubr.f32.gmra.mrb[0].mxu0 %v4650
      %v4721 = vpop.f32.mrb[0].mxu0
      %v4722 = vadd.f32 %v4074, %v4721
      %v4723 = vpop.f32.mrb[0].mxu0
      %4724 = vmatprep.mubr.f32.mxu0 0.0
      %4725 = vmatmul.mubr.f32.gmra.mrb[0].mxu0 %v4653
      %v4726 = vpop.f32.mrb[0].mxu0
      %v4727 = vadd.f32 %v4079, %v4726
      %v4728 = vpop.f32.mrb[0].mxu0
      %4729 = vdwg.mxu0
      %v4731 = vsel %vm2802, %v3007, 0
      %v4734 = vsel %vm2802, %v3008, 0
      %4736 = vmatprep.subr.mxu0 0.0
      %4737 = vmatpush1.msra.mxu0 %v2094
      %4738 = vmatprep.subr.mxu0 0.0
      %4739 = vmatpush1.msra.mxu0 %v2095
      %4740 = vmatprep.subr.mxu0 0.0
      %4741 = vmatpush1.msra.mxu0 0.0
      %4742 = vmatprep.subr.mxu0 0.0
      %4743 = vmatpush1.msra.mxu0 0.0
      %4744 = vmatprep.subr.mxu0 0.0
      %4745 = vmatpush1.msra.mxu0 0.0
      %4746 = vmatprep.subr.mxu0 0.0
      %4747 = vmatpush1.msra.mxu0 0.0
      %4748 = vmatprep.subr.mxu0 0.0
      %4749 = vmatpush1.msra.mxu0 0.0
      %4750 = vmatprep.subr.mxu0 0.0
      %4751 = vmatpush1.msra.mxu0 0.0
      %4752 = vmatprep.subr.mxu0 0.0
      %4753 = vmatpush1.msra.mxu0 0.0
      %4754 = vmatprep.subr.mxu0 0.0
      %4755 = vmatpush1.msra.mxu0 0.0
      %4756 = vmatprep.subr.mxu0 0.0
      %4757 = vmatpush1.msra.mxu0 0.0
      %4758 = vmatprep.subr.mxu0 0.0
      %4759 = vmatpush1.msra.mxu0 0.0
      %4760 = vmatprep.subr.mxu0 0.0
      %4761 = vmatpush1.msra.mxu0 0.0
      %4762 = vmatprep.subr.mxu0 0.0
      %4763 = vmatpush1.msra.mxu0 0.0
      %4764 = vmatprep.subr.mxu0 0.0
      %4765 = vmatpush1.msra.mxu0 0.0
      %4766 = vmatprep.subr.mxu0 0.0
      %4767 = vmatpush1.msra.mxu0 0.0
      %4768 = vmatprep.subr.mxu0 0.0
      %4769 = vmatpush1.msra.mxu0 0.0
      %4770 = vmatprep.subr.mxu0 0.0
      %4771 = vmatpush1.msra.mxu0 0.0
      %4772 = vmatprep.subr.mxu0 0.0
      %4773 = vmatpush1.msra.mxu0 0.0
      %4774 = vmatprep.subr.mxu0 0.0
      %4775 = vmatpush1.msra.mxu0 0.0
      %4776 = vmatprep.subr.mxu0 0.0
      %4777 = vmatpush1.msra.mxu0 0.0
      %4778 = vmatprep.subr.mxu0 0.0
      %4779 = vmatpush1.msra.mxu0 0.0
      %4780 = vmatprep.subr.mxu0 0.0
      %4781 = vmatpush1.msra.mxu0 0.0
      %4782 = vmatprep.subr.mxu0 0.0
      %4783 = vmatpush1.msra.mxu0 0.0
      %4784 = vmatprep.subr.mxu0 0.0
      %4785 = vmatpush1.msra.mxu0 0.0
      %4786 = vmatprep.subr.mxu0 0.0
      %4787 = vmatpush1.msra.mxu0 0.0
      %4788 = vmatprep.subr.mxu0 0.0
      %4789 = vmatpush1.msra.mxu0 0.0
      %4790 = vmatprep.subr.mxu0 0.0
      %4791 = vmatpush1.msra.mxu0 0.0
      %4792 = vmatprep.subr.mxu0 0.0
      %4793 = vmatpush1.msra.mxu0 0.0
      %4794 = vmatprep.subr.mxu0 0.0
      %4795 = vmatpush1.msra.mxu0 0.0
      %4796 = vmatprep.subr.mxu0 0.0
      %4797 = vmatpush1.msra.mxu0 0.0
      %4798 = vmatprep.subr.mxu0 0.0
      %4799 = vmatpush1.msra.mxu0 0.0
      %4800 = vmatprep.mubr.f32.mxu0 0.0
      %4801 = vmatmul.mubr.f32.gmra.mrb[0].mxu0 %v4731
      %v4802 = vpop.f32.mrb[0].mxu0
      %v4803 = vadd.f32 %v4155, %v4802
      %v4804 = vpop.f32.mrb[0].mxu0
      %4805 = vmatprep.mubr.f32.mxu0 0.0
      %4806 = vmatmul.mubr.f32.gmra.mrb[0].mxu0 %v4734
      %v4807 = vpop.f32.mrb[0].mxu0
      %v4808 = vadd.f32 %v4160, %v4807
      %v4809 = vpop.f32.mrb[0].mxu0
      %4810 = vdwg.mxu0
      %v4812 = vsel %vm2802, %v3009, 0
      %v4815 = vsel %vm2802, %v3010, 0
      %4817 = vmatprep.subr.mxu0 0.0
      %4818 = vmatpush1.msra.mxu0 %v2096
      %4819 = vmatprep.subr.mxu0 0.0
      %4820 = vmatpush1.msra.mxu0 %v2097
      %4821 = vmatprep.subr.mxu0 0.0
      %4822 = vmatpush1.msra.mxu0 0.0
      %4823 = vmatprep.subr.mxu0 0.0
      %4824 = vmatpush1.msra.mxu0 0.0
      %4825 = vmatprep.subr.mxu0 0.0
      %4826 = vmatpush1.msra.mxu0 0.0
      %4827 = vmatprep.subr.mxu0 0.0
      %4828 = vmatpush1.msra.mxu0 0.0
      %4829 = vmatprep.subr.mxu0 0.0
      %4830 = vmatpush1.msra.mxu0 0.0
      %4831 = vmatprep.subr.mxu0 0.0
      %4832 = vmatpush1.msra.mxu0 0.0
      %4833 = vmatprep.subr.mxu0 0.0
      %4834 = vmatpush1.msra.mxu0 0.0
      %4835 = vmatprep.subr.mxu0 0.0
      %4836 = vmatpush1.msra.mxu0 0.0
      %4837 = vmatprep.subr.mxu0 0.0
      %4838 = vmatpush1.msra.mxu0 0.0
      %4839 = vmatprep.subr.mxu0 0.0
      %4840 = vmatpush1.msra.mxu0 0.0
      %4841 = vmatprep.subr.mxu0 0.0
      %4842 = vmatpush1.msra.mxu0 0.0
      %4843 = vmatprep.subr.mxu0 0.0
      %4844 = vmatpush1.msra.mxu0 0.0
      %4845 = vmatprep.subr.mxu0 0.0
      %4846 = vmatpush1.msra.mxu0 0.0
      %4847 = vmatprep.subr.mxu0 0.0
      %4848 = vmatpush1.msra.mxu0 0.0
      %4849 = vmatprep.subr.mxu0 0.0
      %4850 = vmatpush1.msra.mxu0 0.0
      %4851 = vmatprep.subr.mxu0 0.0
      %4852 = vmatpush1.msra.mxu0 0.0
      %4853 = vmatprep.subr.mxu0 0.0
      %4854 = vmatpush1.msra.mxu0 0.0
      %4855 = vmatprep.subr.mxu0 0.0
      %4856 = vmatpush1.msra.mxu0 0.0
      %4857 = vmatprep.subr.mxu0 0.0
      %4858 = vmatpush1.msra.mxu0 0.0
      %4859 = vmatprep.subr.mxu0 0.0
      %4860 = vmatpush1.msra.mxu0 0.0
      %4861 = vmatprep.subr.mxu0 0.0
      %4862 = vmatpush1.msra.mxu0 0.0
      %4863 = vmatprep.subr.mxu0 0.0
      %4864 = vmatpush1.msra.mxu0 0.0
      %4865 = vmatprep.subr.mxu0 0.0
      %4866 = vmatpush1.msra.mxu0 0.0
      %4867 = vmatprep.subr.mxu0 0.0
      %4868 = vmatpush1.msra.mxu0 0.0
      %4869 = vmatprep.subr.mxu0 0.0
      %4870 = vmatpush1.msra.mxu0 0.0
      %4871 = vmatprep.subr.mxu0 0.0
      %4872 = vmatpush1.msra.mxu0 0.0
      %4873 = vmatprep.subr.mxu0 0.0
      %4874 = vmatpush1.msra.mxu0 0.0
      %4875 = vmatprep.subr.mxu0 0.0
      %4876 = vmatpush1.msra.mxu0 0.0
      %4877 = vmatprep.subr.mxu0 0.0
      %4878 = vmatpush1.msra.mxu0 0.0
      %4879 = vmatprep.subr.mxu0 0.0
      %4880 = vmatpush1.msra.mxu0 0.0
      %4881 = vmatprep.mubr.f32.mxu0 0.0
      %4882 = vmatmul.mubr.f32.gmra.mrb[0].mxu0 %v4812
      %v4883 = vpop.f32.mrb[0].mxu0
      %v4884 = vadd.f32 %v4236, %v4883
      %v4885 = vpop.f32.mrb[0].mxu0
      %4886 = vmatprep.mubr.f32.mxu0 0.0
      %4887 = vmatmul.mubr.f32.gmra.mrb[0].mxu0 %v4815
      %v4888 = vpop.f32.mrb[0].mxu0
      %v4889 = vadd.f32 %v4241, %v4888
      %v4890 = vpop.f32.mrb[0].mxu0
      %4891 = vdwg.mxu0
      %v4893 = vsel %vm2802, %v3011, 0
      %v4896 = vsel %vm2802, %v3012, 0
      %4898 = vmatprep.subr.mxu0 0.0
      %4899 = vmatpush1.msra.mxu0 %v2098
      %4900 = vmatprep.subr.mxu0 0.0
      %4901 = vmatpush1.msra.mxu0 %v2099
      %4902 = vmatprep.subr.mxu0 0.0
      %4903 = vmatpush1.msra.mxu0 0.0
      %4904 = vmatprep.subr.mxu0 0.0
      %4905 = vmatpush1.msra.mxu0 0.0
      %4906 = vmatprep.subr.mxu0 0.0
      %4907 = vmatpush1.msra.mxu0 0.0
      %4908 = vmatprep.subr.mxu0 0.0
      %4909 = vmatpush1.msra.mxu0 0.0
      %4910 = vmatprep.subr.mxu0 0.0
      %4911 = vmatpush1.msra.mxu0 0.0
      %4912 = vmatprep.subr.mxu0 0.0
      %4913 = vmatpush1.msra.mxu0 0.0
      %4914 = vmatprep.subr.mxu0 0.0
      %4915 = vmatpush1.msra.mxu0 0.0
      %4916 = vmatprep.subr.mxu0 0.0
      %4917 = vmatpush1.msra.mxu0 0.0
      %4918 = vmatprep.subr.mxu0 0.0
      %4919 = vmatpush1.msra.mxu0 0.0
      %4920 = vmatprep.subr.mxu0 0.0
      %4921 = vmatpush1.msra.mxu0 0.0
      %4922 = vmatprep.subr.mxu0 0.0
      %4923 = vmatpush1.msra.mxu0 0.0
      %4924 = vmatprep.subr.mxu0 0.0
      %4925 = vmatpush1.msra.mxu0 0.0
      %4926 = vmatprep.subr.mxu0 0.0
      %4927 = vmatpush1.msra.mxu0 0.0
      %4928 = vmatprep.subr.mxu0 0.0
      %4929 = vmatpush1.msra.mxu0 0.0
      %4930 = vmatprep.subr.mxu0 0.0
      %4931 = vmatpush1.msra.mxu0 0.0
      %4932 = vmatprep.subr.mxu0 0.0
      %4933 = vmatpush1.msra.mxu0 0.0
      %4934 = vmatprep.subr.mxu0 0.0
      %4935 = vmatpush1.msra.mxu0 0.0
      %4936 = vmatprep.subr.mxu0 0.0
      %4937 = vmatpush1.msra.mxu0 0.0
      %4938 = vmatprep.subr.mxu0 0.0
      %4939 = vmatpush1.msra.mxu0 0.0
      %4940 = vmatprep.subr.mxu0 0.0
      %4941 = vmatpush1.msra.mxu0 0.0
      %4942 = vmatprep.subr.mxu0 0.0
      %4943 = vmatpush1.msra.mxu0 0.0
      %4944 = vmatprep.subr.mxu0 0.0
      %4945 = vmatpush1.msra.mxu0 0.0
      %4946 = vmatprep.subr.mxu0 0.0
      %4947 = vmatpush1.msra.mxu0 0.0
      %4948 = vmatprep.subr.mxu0 0.0
      %4949 = vmatpush1.msra.mxu0 0.0
      %4950 = vmatprep.subr.mxu0 0.0
      %4951 = vmatpush1.msra.mxu0 0.0
      %4952 = vmatprep.subr.mxu0 0.0
      %4953 = vmatpush1.msra.mxu0 0.0
      %4954 = vmatprep.subr.mxu0 0.0
      %4955 = vmatpush1.msra.mxu0 0.0
      %4956 = vmatprep.subr.mxu0 0.0
      %4957 = vmatpush1.msra.mxu0 0.0
      %4958 = vmatprep.subr.mxu0 0.0
      %4959 = vmatpush1.msra.mxu0 0.0
      %4960 = vmatprep.subr.mxu0 0.0
      %4961 = vmatpush1.msra.mxu0 0.0
      %4962 = vmatprep.mubr.f32.mxu0 0.0
      %4963 = vmatmul.mubr.f32.gmra.mrb[0].mxu0 %v4893
      %v4964 = vpop.f32.mrb[0].mxu0
      %v4965 = vadd.f32 %v4317, %v4964
      %v4966 = vpop.f32.mrb[0].mxu0
      %4967 = vmatprep.mubr.f32.mxu0 0.0
      %4968 = vmatmul.mubr.f32.gmra.mrb[0].mxu0 %v4896
      %v4969 = vpop.f32.mrb[0].mxu0
      %v4970 = vadd.f32 %v4322, %v4969
      %v4971 = vpop.f32.mrb[0].mxu0
      %4972 = vdwg.mxu0
      %v4974 = vsel %vm2802, %v3013, 0
      %v4977 = vsel %vm2802, %v3014, 0
      %4979 = vmatprep.subr.mxu0 0.0
      %4980 = vmatpush1.msra.mxu0 %v2100
      %4981 = vmatprep.subr.mxu0 0.0
      %4982 = vmatpush1.msra.mxu0 %v2101
      %4983 = vmatprep.subr.mxu0 0.0
      %4984 = vmatpush1.msra.mxu0 0.0
      %4985 = vmatprep.subr.mxu0 0.0
      %4986 = vmatpush1.msra.mxu0 0.0
      %4987 = vmatprep.subr.mxu0 0.0
      %4988 = vmatpush1.msra.mxu0 0.0
      %4989 = vmatprep.subr.mxu0 0.0
      %4990 = vmatpush1.msra.mxu0 0.0
      %4991 = vmatprep.subr.mxu0 0.0
      %4992 = vmatpush1.msra.mxu0 0.0
      %4993 = vmatprep.subr.mxu0 0.0
      %4994 = vmatpush1.msra.mxu0 0.0
      %4995 = vmatprep.subr.mxu0 0.0
      %4996 = vmatpush1.msra.mxu0 0.0
      %4997 = vmatprep.subr.mxu0 0.0
      %4998 = vmatpush1.msra.mxu0 0.0
      %4999 = vmatprep.subr.mxu0 0.0
      %5000 = vmatpush1.msra.mxu0 0.0
      %5001 = vmatprep.subr.mxu0 0.0
      %5002 = vmatpush1.msra.mxu0 0.0
      %5003 = vmatprep.subr.mxu0 0.0
      %5004 = vmatpush1.msra.mxu0 0.0
      %5005 = vmatprep.subr.mxu0 0.0
      %5006 = vmatpush1.msra.mxu0 0.0
      %5007 = vmatprep.subr.mxu0 0.0
      %5008 = vmatpush1.msra.mxu0 0.0
      %5009 = vmatprep.subr.mxu0 0.0
      %5010 = vmatpush1.msra.mxu0 0.0
      %5011 = vmatprep.subr.mxu0 0.0
      %5012 = vmatpush1.msra.mxu0 0.0
      %5013 = vmatprep.subr.mxu0 0.0
      %5014 = vmatpush1.msra.mxu0 0.0
      %5015 = vmatprep.subr.mxu0 0.0
      %5016 = vmatpush1.msra.mxu0 0.0
      %5017 = vmatprep.subr.mxu0 0.0
      %5018 = vmatpush1.msra.mxu0 0.0
      %5019 = vmatprep.subr.mxu0 0.0
      %5020 = vmatpush1.msra.mxu0 0.0
      %5021 = vmatprep.subr.mxu0 0.0
      %5022 = vmatpush1.msra.mxu0 0.0
      %5023 = vmatprep.subr.mxu0 0.0
      %5024 = vmatpush1.msra.mxu0 0.0
      %5025 = vmatprep.subr.mxu0 0.0
      %5026 = vmatpush1.msra.mxu0 0.0
      %5027 = vmatprep.subr.mxu0 0.0
      %5028 = vmatpush1.msra.mxu0 0.0
      %5029 = vmatprep.subr.mxu0 0.0
      %5030 = vmatpush1.msra.mxu0 0.0
      %5031 = vmatprep.subr.mxu0 0.0
      %5032 = vmatpush1.msra.mxu0 0.0
      %5033 = vmatprep.subr.mxu0 0.0
      %5034 = vmatpush1.msra.mxu0 0.0
      %5035 = vmatprep.subr.mxu0 0.0
      %5036 = vmatpush1.msra.mxu0 0.0
      %5037 = vmatprep.subr.mxu0 0.0
      %5038 = vmatpush1.msra.mxu0 0.0
      %5039 = vmatprep.subr.mxu0 0.0
      %5040 = vmatpush1.msra.mxu0 0.0
      %5041 = vmatprep.subr.mxu0 0.0
      %5042 = vmatpush1.msra.mxu0 0.0
      %5043 = vmatprep.mubr.f32.mxu0 0.0
      %5044 = vmatmul.mubr.f32.gmra.mrb[0].mxu0 %v4974
      %v5045 = vpop.f32.mrb[0].mxu0
      %v5046 = vadd.f32 %v4398, %v5045
      %v5047 = vpop.f32.mrb[0].mxu0
      %5048 = vmatprep.mubr.f32.mxu0 0.0
      %5049 = vmatmul.mubr.f32.gmra.mrb[0].mxu0 %v4977
      %v5050 = vpop.f32.mrb[0].mxu0
      %v5051 = vadd.f32 %v4403, %v5050
      %v5052 = vpop.f32.mrb[0].mxu0
      %5053 = vdwg.mxu0
      %v5055 = vsel %vm2802, %v3015, 0
      %v5058 = vsel %vm2802, %v3016, 0
      %5060 = vmatprep.subr.mxu0 0.0
      %5061 = vmatpush1.msra.mxu0 %v2102
      %5062 = vmatprep.subr.mxu0 0.0
      %5063 = vmatpush1.msra.mxu0 %v2103
      %5064 = vmatprep.subr.mxu0 0.0
      %5065 = vmatpush1.msra.mxu0 0.0
      %5066 = vmatprep.subr.mxu0 0.0
      %5067 = vmatpush1.msra.mxu0 0.0
      %5068 = vmatprep.subr.mxu0 0.0
      %5069 = vmatpush1.msra.mxu0 0.0
      %5070 = vmatprep.subr.mxu0 0.0
      %5071 = vmatpush1.msra.mxu0 0.0
      %5072 = vmatprep.subr.mxu0 0.0
      %5073 = vmatpush1.msra.mxu0 0.0
      %5074 = vmatprep.subr.mxu0 0.0
      %5075 = vmatpush1.msra.mxu0 0.0
      %5076 = vmatprep.subr.mxu0 0.0
      %5077 = vmatpush1.msra.mxu0 0.0
      %5078 = vmatprep.subr.mxu0 0.0
      %5079 = vmatpush1.msra.mxu0 0.0
      %5080 = vmatprep.subr.mxu0 0.0
      %5081 = vmatpush1.msra.mxu0 0.0
      %5082 = vmatprep.subr.mxu0 0.0
      %5083 = vmatpush1.msra.mxu0 0.0
      %5084 = vmatprep.subr.mxu0 0.0
      %5085 = vmatpush1.msra.mxu0 0.0
      %5086 = vmatprep.subr.mxu0 0.0
      %5087 = vmatpush1.msra.mxu0 0.0
      %5088 = vmatprep.subr.mxu0 0.0
      %5089 = vmatpush1.msra.mxu0 0.0
      %5090 = vmatprep.subr.mxu0 0.0
      %5091 = vmatpush1.msra.mxu0 0.0
      %5092 = vmatprep.subr.mxu0 0.0
      %5093 = vmatpush1.msra.mxu0 0.0
      %5094 = vmatprep.subr.mxu0 0.0
      %5095 = vmatpush1.msra.mxu0 0.0
      %5096 = vmatprep.subr.mxu0 0.0
      %5097 = vmatpush1.msra.mxu0 0.0
      %5098 = vmatprep.subr.mxu0 0.0
      %5099 = vmatpush1.msra.mxu0 0.0
      %5100 = vmatprep.subr.mxu0 0.0
      %5101 = vmatpush1.msra.mxu0 0.0
      %5102 = vmatprep.subr.mxu0 0.0
      %5103 = vmatpush1.msra.mxu0 0.0
      %5104 = vmatprep.subr.mxu0 0.0
      %5105 = vmatpush1.msra.mxu0 0.0
      %5106 = vmatprep.subr.mxu0 0.0
      %5107 = vmatpush1.msra.mxu0 0.0
      %5108 = vmatprep.subr.mxu0 0.0
      %5109 = vmatpush1.msra.mxu0 0.0
      %5110 = vmatprep.subr.mxu0 0.0
      %5111 = vmatpush1.msra.mxu0 0.0
      %5112 = vmatprep.subr.mxu0 0.0
      %5113 = vmatpush1.msra.mxu0 0.0
      %5114 = vmatprep.subr.mxu0 0.0
      %5115 = vmatpush1.msra.mxu0 0.0
      %5116 = vmatprep.subr.mxu0 0.0
      %5117 = vmatpush1.msra.mxu0 0.0
      %5118 = vmatprep.subr.mxu0 0.0
      %5119 = vmatpush1.msra.mxu0 0.0
      %5120 = vmatprep.subr.mxu0 0.0
      %5121 = vmatpush1.msra.mxu0 0.0
      %5122 = vmatprep.subr.mxu0 0.0
      %5123 = vmatpush1.msra.mxu0 0.0
      %5124 = vmatprep.mubr.f32.mxu0 0.0
      %5125 = vmatmul.mubr.f32.gmra.mrb[0].mxu0 %v5055
      %v5126 = vpop.f32.mrb[0].mxu0
      %v5127 = vadd.f32 %v4479, %v5126
      %v5128 = vpop.f32.mrb[0].mxu0
      %5129 = vmatprep.mubr.f32.mxu0 0.0
      %5130 = vmatmul.mubr.f32.gmra.mrb[0].mxu0 %v5058
      %v5131 = vpop.f32.mrb[0].mxu0
      %v5132 = vadd.f32 %v4484, %v5131
      %v5133 = vpop.f32.mrb[0].mxu0
      %5134 = vdwg.mxu0
      %v5136 = vsel %vm2802, %v3017, 0
      %v5139 = vsel %vm2802, %v3018, 0
      %5141 = vmatprep.subr.mxu0 0.0
      %5142 = vmatpush1.msra.mxu0 %v2104
      %5143 = vmatprep.subr.mxu0 0.0
      %5144 = vmatpush1.msra.mxu0 %v2105
      %5145 = vmatprep.subr.mxu0 0.0
      %5146 = vmatpush1.msra.mxu0 0.0
      %5147 = vmatprep.subr.mxu0 0.0
      %5148 = vmatpush1.msra.mxu0 0.0
      %5149 = vmatprep.subr.mxu0 0.0
      %5150 = vmatpush1.msra.mxu0 0.0
      %5151 = vmatprep.subr.mxu0 0.0
      %5152 = vmatpush1.msra.mxu0 0.0
      %5153 = vmatprep.subr.mxu0 0.0
      %5154 = vmatpush1.msra.mxu0 0.0
      %5155 = vmatprep.subr.mxu0 0.0
      %5156 = vmatpush1.msra.mxu0 0.0
      %5157 = vmatprep.subr.mxu0 0.0
      %5158 = vmatpush1.msra.mxu0 0.0
      %5159 = vmatprep.subr.mxu0 0.0
      %5160 = vmatpush1.msra.mxu0 0.0
      %5161 = vmatprep.subr.mxu0 0.0
      %5162 = vmatpush1.msra.mxu0 0.0
      %5163 = vmatprep.subr.mxu0 0.0
      %5164 = vmatpush1.msra.mxu0 0.0
      %5165 = vmatprep.subr.mxu0 0.0
      %5166 = vmatpush1.msra.mxu0 0.0
      %5167 = vmatprep.subr.mxu0 0.0
      %5168 = vmatpush1.msra.mxu0 0.0
      %5169 = vmatprep.subr.mxu0 0.0
      %5170 = vmatpush1.msra.mxu0 0.0
      %5171 = vmatprep.subr.mxu0 0.0
      %5172 = vmatpush1.msra.mxu0 0.0
      %5173 = vmatprep.subr.mxu0 0.0
      %5174 = vmatpush1.msra.mxu0 0.0
      %5175 = vmatprep.subr.mxu0 0.0
      %5176 = vmatpush1.msra.mxu0 0.0
      %5177 = vmatprep.subr.mxu0 0.0
      %5178 = vmatpush1.msra.mxu0 0.0
      %5179 = vmatprep.subr.mxu0 0.0
      %5180 = vmatpush1.msra.mxu0 0.0
      %5181 = vmatprep.subr.mxu0 0.0
      %5182 = vmatpush1.msra.mxu0 0.0
      %5183 = vmatprep.subr.mxu0 0.0
      %5184 = vmatpush1.msra.mxu0 0.0
      %5185 = vmatprep.subr.mxu0 0.0
      %5186 = vmatpush1.msra.mxu0 0.0
      %5187 = vmatprep.subr.mxu0 0.0
      %5188 = vmatpush1.msra.mxu0 0.0
      %5189 = vmatprep.subr.mxu0 0.0
      %5190 = vmatpush1.msra.mxu0 0.0
      %5191 = vmatprep.subr.mxu0 0.0
      %5192 = vmatpush1.msra.mxu0 0.0
      %5193 = vmatprep.subr.mxu0 0.0
      %5194 = vmatpush1.msra.mxu0 0.0
      %5195 = vmatprep.subr.mxu0 0.0
      %5196 = vmatpush1.msra.mxu0 0.0
      %5197 = vmatprep.subr.mxu0 0.0
      %5198 = vmatpush1.msra.mxu0 0.0
      %5199 = vmatprep.subr.mxu0 0.0
      %5200 = vmatpush1.msra.mxu0 0.0
      %5201 = vmatprep.subr.mxu0 0.0
      %5202 = vmatpush1.msra.mxu0 0.0
      %5203 = vmatprep.subr.mxu0 0.0
      %5204 = vmatpush1.msra.mxu0 0.0
      %5205 = vmatprep.mubr.f32.mxu0 0.0
      %5206 = vmatmul.mubr.f32.gmra.mrb[0].mxu0 %v5136
      %v5207 = vpop.f32.mrb[0].mxu0
      %v5208 = vadd.f32 %v4560, %v5207
      %v5209 = vpop.f32.mrb[0].mxu0
      %5210 = vmatprep.mubr.f32.mxu0 0.0
      %5211 = vmatmul.mubr.f32.gmra.mrb[0].mxu0 %v5139
      %v5212 = vpop.f32.mrb[0].mxu0
      %v5213 = vadd.f32 %v4565, %v5212
      %v5214 = vpop.f32.mrb[0].mxu0
      %5215 = vdwg.mxu0
      %vm5216 = vcmp.ge.s32.totalorder %v2068, 16
      %vm5217 = vcmp.lt.s32.totalorder %v2068, 24
      %vm5218 = vmand %vm5216, %vm5217
      %v5219 = vsel %vm5218, 1, 0
      %vm5220 = vcmp.eq.s32.totalorder %v5219, 1
      %v5221 = vsel %vm5220, %v1823, 0.0
      %v5222 = vsel %vm5220, %v1828, 0.0
      %v5223 = vsel %vm5220, %v1833, 0.0
      %v5224 = vsel %vm5220, %v1838, 0.0
      %v5225 = vsel %vm5220, %v1843, 0.0
      %v5226 = vsel %vm5220, %v1848, 0.0
      %v5227 = vsel %vm5220, %v1853, 0.0
      %v5228 = vsel %vm5220, %v1858, 0.0
      %v5229 = vsel %vm5220, %v1863, 0.0
      %v5230 = vsel %vm5220, %v1868, 0.0
      %v5231 = vsel %vm5220, %v1873, 0.0
      %v5232 = vsel %vm5220, %v1878, 0.0
      %v5233 = vsel %vm5220, %v1883, 0.0
      %v5234 = vsel %vm5220, %v1888, 0.0
      %v5235 = vsel %vm5220, %v1893, 0.0
      %v5236 = vsel %vm5220, %v1898, 0.0
      %v5237 = vsel %vm5220, %v1973, 0.0
      %v5238 = vsel %vm5220, %v1978, 0.0
      %v5239 = vsel %vm5220, %v1983, 0.0
      %v5240 = vsel %vm5220, %v1988, 0.0
      %v5241 = vsel %vm5220, %v1993, 0.0
      %v5242 = vsel %vm5220, %v1998, 0.0
      %v5243 = vsel %vm5220, %v2003, 0.0
      %v5244 = vsel %vm5220, %v2008, 0.0
      %v5245 = vsel %vm5220, %v2013, 0.0
      %v5246 = vsel %vm5220, %v2018, 0.0
      %v5247 = vsel %vm5220, %v2023, 0.0
      %v5248 = vsel %vm5220, %v2028, 0.0
      %v5249 = vsel %vm5220, %v2033, 0.0
      %v5250 = vsel %vm5220, %v2038, 0.0
      %v5251 = vsel %vm5220, %v2043, 0.0
      %v5252 = vsel %vm5220, %v2048, 0.0
      %v5254 = vsel %vm553, %v5221, 0
      %v5257 = vsel %vm553, %v5222, 0
      %5259 = vmatprep.subr.mxu0 0.0
      %5260 = vmatpush1.xpose.msra.mxu0 %v5254
      %5261 = vmatprep.subr.mxu0 0.0
      %5262 = vmatpush1.xpose.msra.mxu0 %v5257
      %5263 = vmatprep.subr.mxu0 0.0
      %5264 = vmatpush1.xpose.msra.mxu0 0.0
      %5265 = vmatprep.subr.mxu0 0.0
      %5266 = vmatpush1.xpose.msra.mxu0 0.0
      %5267 = vmatprep.subr.mxu0 0.0
      %5268 = vmatpush1.xpose.msra.mxu0 0.0
      %5269 = vmatprep.subr.mxu0 0.0
      %5270 = vmatpush1.xpose.msra.mxu0 0.0
      %5271 = vmatprep.subr.mxu0 0.0
      %5272 = vmatpush1.xpose.msra.mxu0 0.0
      %5273 = vmatprep.subr.mxu0 0.0
      %5274 = vmatpush1.xpose.msra.mxu0 0.0
      %5275 = vmatprep.subr.mxu0 0.0
      %5276 = vmatpush1.xpose.msra.mxu0 0.0
      %5277 = vmatprep.subr.mxu0 0.0
      %5278 = vmatpush1.xpose.msra.mxu0 0.0
      %5279 = vmatprep.subr.mxu0 0.0
      %5280 = vmatpush1.xpose.msra.mxu0 0.0
      %5281 = vmatprep.subr.mxu0 0.0
      %5282 = vmatpush1.xpose.msra.mxu0 0.0
      %5283 = vmatprep.subr.mxu0 0.0
      %5284 = vmatpush1.xpose.msra.mxu0 0.0
      %5285 = vmatprep.subr.mxu0 0.0
      %5286 = vmatpush1.xpose.msra.mxu0 0.0
      %5287 = vmatprep.subr.mxu0 0.0
      %5288 = vmatpush1.xpose.msra.mxu0 0.0
      %5289 = vmatprep.subr.mxu0 0.0
      %5290 = vmatpush1.xpose.msra.mxu0 0.0
      %5291 = vmatprep.subr.mxu0 0.0
      %5292 = vmatpush1.xpose.msra.mxu0 0.0
      %5293 = vmatprep.subr.mxu0 0.0
      %5294 = vmatpush1.xpose.msra.mxu0 0.0
      %5295 = vmatprep.subr.mxu0 0.0
      %5296 = vmatpush1.xpose.msra.mxu0 0.0
      %5297 = vmatprep.subr.mxu0 0.0
      %5298 = vmatpush1.xpose.msra.mxu0 0.0
      %5299 = vmatprep.subr.mxu0 0.0
      %5300 = vmatpush1.xpose.msra.mxu0 0.0
      %5301 = vmatprep.subr.mxu0 0.0
      %5302 = vmatpush1.xpose.msra.mxu0 0.0
      %5303 = vmatprep.subr.mxu0 0.0
      %5304 = vmatpush1.xpose.msra.mxu0 0.0
      %5305 = vmatprep.subr.mxu0 0.0
      %5306 = vmatpush1.xpose.msra.mxu0 0.0
      %5307 = vmatprep.subr.mxu0 0.0
      %5308 = vmatpush1.xpose.msra.mxu0 0.0
      %5309 = vmatprep.subr.mxu0 0.0
      %5310 = vmatpush1.xpose.msra.mxu0 0.0
      %5311 = vmatprep.subr.mxu0 0.0
      %5312 = vmatpush1.xpose.msra.mxu0 0.0
      %5313 = vmatprep.subr.mxu0 0.0
      %5314 = vmatpush1.xpose.msra.mxu0 0.0
      %5315 = vmatprep.subr.mxu0 0.0
      %5316 = vmatpush1.xpose.msra.mxu0 0.0
      %5317 = vmatprep.subr.mxu0 0.0
      %5318 = vmatpush1.xpose.msra.mxu0 0.0
      %5319 = vmatprep.subr.mxu0 0.0
      %5320 = vmatpush1.xpose.msra.mxu0 0.0
      %5321 = vmatprep.subr.mxu0 0.0
      %5322 = vmatpush1.xpose.msra.mxu0 0.0
      %5323 = vmatprep.mubr.f32.mxu0 0.0
      %5324 = vmatmul.mubr.f32.gmra.mrb[0].mxu0 %v2107
      %v5325 = vpop.f32.mrb[0].mxu0
      %v5326 = vadd.f32 0.0, %v5325
      %v5327 = vpop.f32.mrb[0].mxu0
      %5328 = vmatprep.mubr.f32.mxu0 0.0
      %5329 = vmatmul.mubr.f32.gmra.mrb[0].mxu0 %v2110
      %v5330 = vpop.f32.mrb[0].mxu0
      %v5331 = vadd.f32 0.0, %v5330
      %v5332 = vpop.f32.mrb[0].mxu0
      %5333 = vdwg.mxu0
      %v5335 = vsel %vm553, %v5223, 0
      %v5338 = vsel %vm553, %v5224, 0
      %5340 = vmatprep.subr.mxu0 0.0
      %5341 = vmatpush1.xpose.msra.mxu0 %v5335
      %5342 = vmatprep.subr.mxu0 0.0
      %5343 = vmatpush1.xpose.msra.mxu0 %v5338
      %5344 = vmatprep.subr.mxu0 0.0
      %5345 = vmatpush1.xpose.msra.mxu0 0.0
      %5346 = vmatprep.subr.mxu0 0.0
      %5347 = vmatpush1.xpose.msra.mxu0 0.0
      %5348 = vmatprep.subr.mxu0 0.0
      %5349 = vmatpush1.xpose.msra.mxu0 0.0
      %5350 = vmatprep.subr.mxu0 0.0
      %5351 = vmatpush1.xpose.msra.mxu0 0.0
      %5352 = vmatprep.subr.mxu0 0.0
      %5353 = vmatpush1.xpose.msra.mxu0 0.0
      %5354 = vmatprep.subr.mxu0 0.0
      %5355 = vmatpush1.xpose.msra.mxu0 0.0
      %5356 = vmatprep.subr.mxu0 0.0
      %5357 = vmatpush1.xpose.msra.mxu0 0.0
      %5358 = vmatprep.subr.mxu0 0.0
      %5359 = vmatpush1.xpose.msra.mxu0 0.0
      %5360 = vmatprep.subr.mxu0 0.0
      %5361 = vmatpush1.xpose.msra.mxu0 0.0
      %5362 = vmatprep.subr.mxu0 0.0
      %5363 = vmatpush1.xpose.msra.mxu0 0.0
      %5364 = vmatprep.subr.mxu0 0.0
      %5365 = vmatpush1.xpose.msra.mxu0 0.0
      %5366 = vmatprep.subr.mxu0 0.0
      %5367 = vmatpush1.xpose.msra.mxu0 0.0
      %5368 = vmatprep.subr.mxu0 0.0
      %5369 = vmatpush1.xpose.msra.mxu0 0.0
      %5370 = vmatprep.subr.mxu0 0.0
      %5371 = vmatpush1.xpose.msra.mxu0 0.0
      %5372 = vmatprep.subr.mxu0 0.0
      %5373 = vmatpush1.xpose.msra.mxu0 0.0
      %5374 = vmatprep.subr.mxu0 0.0
      %5375 = vmatpush1.xpose.msra.mxu0 0.0
      %5376 = vmatprep.subr.mxu0 0.0
      %5377 = vmatpush1.xpose.msra.mxu0 0.0
      %5378 = vmatprep.subr.mxu0 0.0
      %5379 = vmatpush1.xpose.msra.mxu0 0.0
      %5380 = vmatprep.subr.mxu0 0.0
      %5381 = vmatpush1.xpose.msra.mxu0 0.0
      %5382 = vmatprep.subr.mxu0 0.0
      %5383 = vmatpush1.xpose.msra.mxu0 0.0
      %5384 = vmatprep.subr.mxu0 0.0
      %5385 = vmatpush1.xpose.msra.mxu0 0.0
      %5386 = vmatprep.subr.mxu0 0.0
      %5387 = vmatpush1.xpose.msra.mxu0 0.0
      %5388 = vmatprep.subr.mxu0 0.0
      %5389 = vmatpush1.xpose.msra.mxu0 0.0
      %5390 = vmatprep.subr.mxu0 0.0
      %5391 = vmatpush1.xpose.msra.mxu0 0.0
      %5392 = vmatprep.subr.mxu0 0.0
      %5393 = vmatpush1.xpose.msra.mxu0 0.0
      %5394 = vmatprep.subr.mxu0 0.0
      %5395 = vmatpush1.xpose.msra.mxu0 0.0
      %5396 = vmatprep.subr.mxu0 0.0
      %5397 = vmatpush1.xpose.msra.mxu0 0.0
      %5398 = vmatprep.subr.mxu0 0.0
      %5399 = vmatpush1.xpose.msra.mxu0 0.0
      %5400 = vmatprep.subr.mxu0 0.0
      %5401 = vmatpush1.xpose.msra.mxu0 0.0
      %5402 = vmatprep.subr.mxu0 0.0
      %5403 = vmatpush1.xpose.msra.mxu0 0.0
      %5404 = vmatprep.mubr.f32.mxu0 0.0
      %5405 = vmatmul.mubr.f32.gmra.mrb[0].mxu0 %v2194
      %v5406 = vpop.f32.mrb[0].mxu0
      %v5407 = vadd.f32 0.0, %v5406
      %v5408 = vpop.f32.mrb[0].mxu0
      %5409 = vmatprep.mubr.f32.mxu0 0.0
      %5410 = vmatmul.mubr.f32.gmra.mrb[0].mxu0 %v2197
      %v5411 = vpop.f32.mrb[0].mxu0
      %v5412 = vadd.f32 0.0, %v5411
      %v5413 = vpop.f32.mrb[0].mxu0
      %5414 = vdwg.mxu0
      %v5416 = vsel %vm553, %v5225, 0
      %v5419 = vsel %vm553, %v5226, 0
      %5421 = vmatprep.subr.mxu0 0.0
      %5422 = vmatpush1.xpose.msra.mxu0 %v5416
      %5423 = vmatprep.subr.mxu0 0.0
      %5424 = vmatpush1.xpose.msra.mxu0 %v5419
      %5425 = vmatprep.subr.mxu0 0.0
      %5426 = vmatpush1.xpose.msra.mxu0 0.0
      %5427 = vmatprep.subr.mxu0 0.0
      %5428 = vmatpush1.xpose.msra.mxu0 0.0
      %5429 = vmatprep.subr.mxu0 0.0
      %5430 = vmatpush1.xpose.msra.mxu0 0.0
      %5431 = vmatprep.subr.mxu0 0.0
      %5432 = vmatpush1.xpose.msra.mxu0 0.0
      %5433 = vmatprep.subr.mxu0 0.0
      %5434 = vmatpush1.xpose.msra.mxu0 0.0
      %5435 = vmatprep.subr.mxu0 0.0
      %5436 = vmatpush1.xpose.msra.mxu0 0.0
      %5437 = vmatprep.subr.mxu0 0.0
      %5438 = vmatpush1.xpose.msra.mxu0 0.0
      %5439 = vmatprep.subr.mxu0 0.0
      %5440 = vmatpush1.xpose.msra.mxu0 0.0
      %5441 = vmatprep.subr.mxu0 0.0
      %5442 = vmatpush1.xpose.msra.mxu0 0.0
      %5443 = vmatprep.subr.mxu0 0.0
      %5444 = vmatpush1.xpose.msra.mxu0 0.0
      %5445 = vmatprep.subr.mxu0 0.0
      %5446 = vmatpush1.xpose.msra.mxu0 0.0
      %5447 = vmatprep.subr.mxu0 0.0
      %5448 = vmatpush1.xpose.msra.mxu0 0.0
      %5449 = vmatprep.subr.mxu0 0.0
      %5450 = vmatpush1.xpose.msra.mxu0 0.0
      %5451 = vmatprep.subr.mxu0 0.0
      %5452 = vmatpush1.xpose.msra.mxu0 0.0
      %5453 = vmatprep.subr.mxu0 0.0
      %5454 = vmatpush1.xpose.msra.mxu0 0.0
      %5455 = vmatprep.subr.mxu0 0.0
      %5456 = vmatpush1.xpose.msra.mxu0 0.0
      %5457 = vmatprep.subr.mxu0 0.0
      %5458 = vmatpush1.xpose.msra.mxu0 0.0
      %5459 = vmatprep.subr.mxu0 0.0
      %5460 = vmatpush1.xpose.msra.mxu0 0.0
      %5461 = vmatprep.subr.mxu0 0.0
      %5462 = vmatpush1.xpose.msra.mxu0 0.0
      %5463 = vmatprep.subr.mxu0 0.0
      %5464 = vmatpush1.xpose.msra.mxu0 0.0
      %5465 = vmatprep.subr.mxu0 0.0
      %5466 = vmatpush1.xpose.msra.mxu0 0.0
      %5467 = vmatprep.subr.mxu0 0.0
      %5468 = vmatpush1.xpose.msra.mxu0 0.0
      %5469 = vmatprep.subr.mxu0 0.0
      %5470 = vmatpush1.xpose.msra.mxu0 0.0
      %5471 = vmatprep.subr.mxu0 0.0
      %5472 = vmatpush1.xpose.msra.mxu0 0.0
      %5473 = vmatprep.subr.mxu0 0.0
      %5474 = vmatpush1.xpose.msra.mxu0 0.0
      %5475 = vmatprep.subr.mxu0 0.0
      %5476 = vmatpush1.xpose.msra.mxu0 0.0
      %5477 = vmatprep.subr.mxu0 0.0
      %5478 = vmatpush1.xpose.msra.mxu0 0.0
      %5479 = vmatprep.subr.mxu0 0.0
      %5480 = vmatpush1.xpose.msra.mxu0 0.0
      %5481 = vmatprep.subr.mxu0 0.0
      %5482 = vmatpush1.xpose.msra.mxu0 0.0
      %5483 = vmatprep.subr.mxu0 0.0
      %5484 = vmatpush1.xpose.msra.mxu0 0.0
      %5485 = vmatprep.mubr.f32.mxu0 0.0
      %5486 = vmatmul.mubr.f32.gmra.mrb[0].mxu0 %v2281
      %v5487 = vpop.f32.mrb[0].mxu0
      %v5488 = vadd.f32 0.0, %v5487
      %v5489 = vpop.f32.mrb[0].mxu0
      %5490 = vmatprep.mubr.f32.mxu0 0.0
      %5491 = vmatmul.mubr.f32.gmra.mrb[0].mxu0 %v2284
      %v5492 = vpop.f32.mrb[0].mxu0
      %v5493 = vadd.f32 0.0, %v5492
      %v5494 = vpop.f32.mrb[0].mxu0
      %5495 = vdwg.mxu0
      %v5497 = vsel %vm553, %v5227, 0
      %v5500 = vsel %vm553, %v5228, 0
      %5502 = vmatprep.subr.mxu0 0.0
      %5503 = vmatpush1.xpose.msra.mxu0 %v5497
      %5504 = vmatprep.subr.mxu0 0.0
      %5505 = vmatpush1.xpose.msra.mxu0 %v5500
      %5506 = vmatprep.subr.mxu0 0.0
      %5507 = vmatpush1.xpose.msra.mxu0 0.0
      %5508 = vmatprep.subr.mxu0 0.0
      %5509 = vmatpush1.xpose.msra.mxu0 0.0
      %5510 = vmatprep.subr.mxu0 0.0
      %5511 = vmatpush1.xpose.msra.mxu0 0.0
      %5512 = vmatprep.subr.mxu0 0.0
      %5513 = vmatpush1.xpose.msra.mxu0 0.0
      %5514 = vmatprep.subr.mxu0 0.0
      %5515 = vmatpush1.xpose.msra.mxu0 0.0
      %5516 = vmatprep.subr.mxu0 0.0
      %5517 = vmatpush1.xpose.msra.mxu0 0.0
      %5518 = vmatprep.subr.mxu0 0.0
      %5519 = vmatpush1.xpose.msra.mxu0 0.0
      %5520 = vmatprep.subr.mxu0 0.0
      %5521 = vmatpush1.xpose.msra.mxu0 0.0
      %5522 = vmatprep.subr.mxu0 0.0
      %5523 = vmatpush1.xpose.msra.mxu0 0.0
      %5524 = vmatprep.subr.mxu0 0.0
      %5525 = vmatpush1.xpose.msra.mxu0 0.0
      %5526 = vmatprep.subr.mxu0 0.0
      %5527 = vmatpush1.xpose.msra.mxu0 0.0
      %5528 = vmatprep.subr.mxu0 0.0
      %5529 = vmatpush1.xpose.msra.mxu0 0.0
      %5530 = vmatprep.subr.mxu0 0.0
      %5531 = vmatpush1.xpose.msra.mxu0 0.0
      %5532 = vmatprep.subr.mxu0 0.0
      %5533 = vmatpush1.xpose.msra.mxu0 0.0
      %5534 = vmatprep.subr.mxu0 0.0
      %5535 = vmatpush1.xpose.msra.mxu0 0.0
      %5536 = vmatprep.subr.mxu0 0.0
      %5537 = vmatpush1.xpose.msra.mxu0 0.0
      %5538 = vmatprep.subr.mxu0 0.0
      %5539 = vmatpush1.xpose.msra.mxu0 0.0
      %5540 = vmatprep.subr.mxu0 0.0
      %5541 = vmatpush1.xpose.msra.mxu0 0.0
      %5542 = vmatprep.subr.mxu0 0.0
      %5543 = vmatpush1.xpose.msra.mxu0 0.0
      %5544 = vmatprep.subr.mxu0 0.0
      %5545 = vmatpush1.xpose.msra.mxu0 0.0
      %5546 = vmatprep.subr.mxu0 0.0
      %5547 = vmatpush1.xpose.msra.mxu0 0.0
      %5548 = vmatprep.subr.mxu0 0.0
      %5549 = vmatpush1.xpose.msra.mxu0 0.0
      %5550 = vmatprep.subr.mxu0 0.0
      %5551 = vmatpush1.xpose.msra.mxu0 0.0
      %5552 = vmatprep.subr.mxu0 0.0
      %5553 = vmatpush1.xpose.msra.mxu0 0.0
      %5554 = vmatprep.subr.mxu0 0.0
      %5555 = vmatpush1.xpose.msra.mxu0 0.0
      %5556 = vmatprep.subr.mxu0 0.0
      %5557 = vmatpush1.xpose.msra.mxu0 0.0
      %5558 = vmatprep.subr.mxu0 0.0
      %5559 = vmatpush1.xpose.msra.mxu0 0.0
      %5560 = vmatprep.subr.mxu0 0.0
      %5561 = vmatpush1.xpose.msra.mxu0 0.0
      %5562 = vmatprep.subr.mxu0 0.0
      %5563 = vmatpush1.xpose.msra.mxu0 0.0
      %5564 = vmatprep.subr.mxu0 0.0
      %5565 = vmatpush1.xpose.msra.mxu0 0.0
      %5566 = vmatprep.mubr.f32.mxu0 0.0
      %5567 = vmatmul.mubr.f32.gmra.mrb[0].mxu0 %v2368
      %v5568 = vpop.f32.mrb[0].mxu0
      %v5569 = vadd.f32 0.0, %v5568
      %v5570 = vpop.f32.mrb[0].mxu0
      %5571 = vmatprep.mubr.f32.mxu0 0.0
      %5572 = vmatmul.mubr.f32.gmra.mrb[0].mxu0 %v2371
      %v5573 = vpop.f32.mrb[0].mxu0
      %v5574 = vadd.f32 0.0, %v5573
      %v5575 = vpop.f32.mrb[0].mxu0
      %5576 = vdwg.mxu0
      %v5578 = vsel %vm553, %v5229, 0
      %v5581 = vsel %vm553, %v5230, 0
      %5583 = vmatprep.subr.mxu0 0.0
      %5584 = vmatpush1.xpose.msra.mxu0 %v5578
      %5585 = vmatprep.subr.mxu0 0.0
      %5586 = vmatpush1.xpose.msra.mxu0 %v5581
      %5587 = vmatprep.subr.mxu0 0.0
      %5588 = vmatpush1.xpose.msra.mxu0 0.0
      %5589 = vmatprep.subr.mxu0 0.0
      %5590 = vmatpush1.xpose.msra.mxu0 0.0
      %5591 = vmatprep.subr.mxu0 0.0
      %5592 = vmatpush1.xpose.msra.mxu0 0.0
      %5593 = vmatprep.subr.mxu0 0.0
      %5594 = vmatpush1.xpose.msra.mxu0 0.0
      %5595 = vmatprep.subr.mxu0 0.0
      %5596 = vmatpush1.xpose.msra.mxu0 0.0
      %5597 = vmatprep.subr.mxu0 0.0
      %5598 = vmatpush1.xpose.msra.mxu0 0.0
      %5599 = vmatprep.subr.mxu0 0.0
      %5600 = vmatpush1.xpose.msra.mxu0 0.0
      %5601 = vmatprep.subr.mxu0 0.0
      %5602 = vmatpush1.xpose.msra.mxu0 0.0
      %5603 = vmatprep.subr.mxu0 0.0
      %5604 = vmatpush1.xpose.msra.mxu0 0.0
      %5605 = vmatprep.subr.mxu0 0.0
      %5606 = vmatpush1.xpose.msra.mxu0 0.0
      %5607 = vmatprep.subr.mxu0 0.0
      %5608 = vmatpush1.xpose.msra.mxu0 0.0
      %5609 = vmatprep.subr.mxu0 0.0
      %5610 = vmatpush1.xpose.msra.mxu0 0.0
      %5611 = vmatprep.subr.mxu0 0.0
      %5612 = vmatpush1.xpose.msra.mxu0 0.0
      %5613 = vmatprep.subr.mxu0 0.0
      %5614 = vmatpush1.xpose.msra.mxu0 0.0
      %5615 = vmatprep.subr.mxu0 0.0
      %5616 = vmatpush1.xpose.msra.mxu0 0.0
      %5617 = vmatprep.subr.mxu0 0.0
      %5618 = vmatpush1.xpose.msra.mxu0 0.0
      %5619 = vmatprep.subr.mxu0 0.0
      %5620 = vmatpush1.xpose.msra.mxu0 0.0
      %5621 = vmatprep.subr.mxu0 0.0
      %5622 = vmatpush1.xpose.msra.mxu0 0.0
      %5623 = vmatprep.subr.mxu0 0.0
      %5624 = vmatpush1.xpose.msra.mxu0 0.0
      %5625 = vmatprep.subr.mxu0 0.0
      %5626 = vmatpush1.xpose.msra.mxu0 0.0
      %5627 = vmatprep.subr.mxu0 0.0
      %5628 = vmatpush1.xpose.msra.mxu0 0.0
      %5629 = vmatprep.subr.mxu0 0.0
      %5630 = vmatpush1.xpose.msra.mxu0 0.0
      %5631 = vmatprep.subr.mxu0 0.0
      %5632 = vmatpush1.xpose.msra.mxu0 0.0
      %5633 = vmatprep.subr.mxu0 0.0
      %5634 = vmatpush1.xpose.msra.mxu0 0.0
      %5635 = vmatprep.subr.mxu0 0.0
      %5636 = vmatpush1.xpose.msra.mxu0 0.0
      %5637 = vmatprep.subr.mxu0 0.0
      %5638 = vmatpush1.xpose.msra.mxu0 0.0
      %5639 = vmatprep.subr.mxu0 0.0
      %5640 = vmatpush1.xpose.msra.mxu0 0.0
      %5641 = vmatprep.subr.mxu0 0.0
      %5642 = vmatpush1.xpose.msra.mxu0 0.0
      %5643 = vmatprep.subr.mxu0 0.0
      %5644 = vmatpush1.xpose.msra.mxu0 0.0
      %5645 = vmatprep.subr.mxu0 0.0
      %5646 = vmatpush1.xpose.msra.mxu0 0.0
      %5647 = vmatprep.mubr.f32.mxu0 0.0
      %5648 = vmatmul.mubr.f32.gmra.mrb[0].mxu0 %v2455
      %v5649 = vpop.f32.mrb[0].mxu0
      %v5650 = vadd.f32 0.0, %v5649
      %v5651 = vpop.f32.mrb[0].mxu0
      %5652 = vmatprep.mubr.f32.mxu0 0.0
      %5653 = vmatmul.mubr.f32.gmra.mrb[0].mxu0 %v2458
      %v5654 = vpop.f32.mrb[0].mxu0
      %v5655 = vadd.f32 0.0, %v5654
      %v5656 = vpop.f32.mrb[0].mxu0
      %5657 = vdwg.mxu0
      %v5659 = vsel %vm553, %v5231, 0
      %v5662 = vsel %vm553, %v5232, 0
      %5664 = vmatprep.subr.mxu0 0.0
      %5665 = vmatpush1.xpose.msra.mxu0 %v5659
      %5666 = vmatprep.subr.mxu0 0.0
      %5667 = vmatpush1.xpose.msra.mxu0 %v5662
      %5668 = vmatprep.subr.mxu0 0.0
      %5669 = vmatpush1.xpose.msra.mxu0 0.0
      %5670 = vmatprep.subr.mxu0 0.0
      %5671 = vmatpush1.xpose.msra.mxu0 0.0
      %5672 = vmatprep.subr.mxu0 0.0
      %5673 = vmatpush1.xpose.msra.mxu0 0.0
      %5674 = vmatprep.subr.mxu0 0.0
      %5675 = vmatpush1.xpose.msra.mxu0 0.0
      %5676 = vmatprep.subr.mxu0 0.0
      %5677 = vmatpush1.xpose.msra.mxu0 0.0
      %5678 = vmatprep.subr.mxu0 0.0
      %5679 = vmatpush1.xpose.msra.mxu0 0.0
      %5680 = vmatprep.subr.mxu0 0.0
      %5681 = vmatpush1.xpose.msra.mxu0 0.0
      %5682 = vmatprep.subr.mxu0 0.0
      %5683 = vmatpush1.xpose.msra.mxu0 0.0
      %5684 = vmatprep.subr.mxu0 0.0
      %5685 = vmatpush1.xpose.msra.mxu0 0.0
      %5686 = vmatprep.subr.mxu0 0.0
      %5687 = vmatpush1.xpose.msra.mxu0 0.0
      %5688 = vmatprep.subr.mxu0 0.0
      %5689 = vmatpush1.xpose.msra.mxu0 0.0
      %5690 = vmatprep.subr.mxu0 0.0
      %5691 = vmatpush1.xpose.msra.mxu0 0.0
      %5692 = vmatprep.subr.mxu0 0.0
      %5693 = vmatpush1.xpose.msra.mxu0 0.0
      %5694 = vmatprep.subr.mxu0 0.0
      %5695 = vmatpush1.xpose.msra.mxu0 0.0
      %5696 = vmatprep.subr.mxu0 0.0
      %5697 = vmatpush1.xpose.msra.mxu0 0.0
      %5698 = vmatprep.subr.mxu0 0.0
      %5699 = vmatpush1.xpose.msra.mxu0 0.0
      %5700 = vmatprep.subr.mxu0 0.0
      %5701 = vmatpush1.xpose.msra.mxu0 0.0
      %5702 = vmatprep.subr.mxu0 0.0
      %5703 = vmatpush1.xpose.msra.mxu0 0.0
      %5704 = vmatprep.subr.mxu0 0.0
      %5705 = vmatpush1.xpose.msra.mxu0 0.0
      %5706 = vmatprep.subr.mxu0 0.0
      %5707 = vmatpush1.xpose.msra.mxu0 0.0
      %5708 = vmatprep.subr.mxu0 0.0
      %5709 = vmatpush1.xpose.msra.mxu0 0.0
      %5710 = vmatprep.subr.mxu0 0.0
      %5711 = vmatpush1.xpose.msra.mxu0 0.0
      %5712 = vmatprep.subr.mxu0 0.0
      %5713 = vmatpush1.xpose.msra.mxu0 0.0
      %5714 = vmatprep.subr.mxu0 0.0
      %5715 = vmatpush1.xpose.msra.mxu0 0.0
      %5716 = vmatprep.subr.mxu0 0.0
      %5717 = vmatpush1.xpose.msra.mxu0 0.0
      %5718 = vmatprep.subr.mxu0 0.0
      %5719 = vmatpush1.xpose.msra.mxu0 0.0
      %5720 = vmatprep.subr.mxu0 0.0
      %5721 = vmatpush1.xpose.msra.mxu0 0.0
      %5722 = vmatprep.subr.mxu0 0.0
      %5723 = vmatpush1.xpose.msra.mxu0 0.0
      %5724 = vmatprep.subr.mxu0 0.0
      %5725 = vmatpush1.xpose.msra.mxu0 0.0
      %5726 = vmatprep.subr.mxu0 0.0
      %5727 = vmatpush1.xpose.msra.mxu0 0.0
      %5728 = vmatprep.mubr.f32.mxu0 0.0
      %5729 = vmatmul.mubr.f32.gmra.mrb[0].mxu0 %v2542
      %v5730 = vpop.f32.mrb[0].mxu0
      %v5731 = vadd.f32 0.0, %v5730
      %v5732 = vpop.f32.mrb[0].mxu0
      %5733 = vmatprep.mubr.f32.mxu0 0.0
      %5734 = vmatmul.mubr.f32.gmra.mrb[0].mxu0 %v2545
      %v5735 = vpop.f32.mrb[0].mxu0
      %v5736 = vadd.f32 0.0, %v5735
      %v5737 = vpop.f32.mrb[0].mxu0
      %5738 = vdwg.mxu0
      %v5740 = vsel %vm553, %v5233, 0
      %v5743 = vsel %vm553, %v5234, 0
      %5745 = vmatprep.subr.mxu0 0.0
      %5746 = vmatpush1.xpose.msra.mxu0 %v5740
      %5747 = vmatprep.subr.mxu0 0.0
      %5748 = vmatpush1.xpose.msra.mxu0 %v5743
      %5749 = vmatprep.subr.mxu0 0.0
      %5750 = vmatpush1.xpose.msra.mxu0 0.0
      %5751 = vmatprep.subr.mxu0 0.0
      %5752 = vmatpush1.xpose.msra.mxu0 0.0
      %5753 = vmatprep.subr.mxu0 0.0
      %5754 = vmatpush1.xpose.msra.mxu0 0.0
      %5755 = vmatprep.subr.mxu0 0.0
      %5756 = vmatpush1.xpose.msra.mxu0 0.0
      %5757 = vmatprep.subr.mxu0 0.0
      %5758 = vmatpush1.xpose.msra.mxu0 0.0
      %5759 = vmatprep.subr.mxu0 0.0
      %5760 = vmatpush1.xpose.msra.mxu0 0.0
      %5761 = vmatprep.subr.mxu0 0.0
      %5762 = vmatpush1.xpose.msra.mxu0 0.0
      %5763 = vmatprep.subr.mxu0 0.0
      %5764 = vmatpush1.xpose.msra.mxu0 0.0
      %5765 = vmatprep.subr.mxu0 0.0
      %5766 = vmatpush1.xpose.msra.mxu0 0.0
      %5767 = vmatprep.subr.mxu0 0.0
      %5768 = vmatpush1.xpose.msra.mxu0 0.0
      %5769 = vmatprep.subr.mxu0 0.0
      %5770 = vmatpush1.xpose.msra.mxu0 0.0
      %5771 = vmatprep.subr.mxu0 0.0
      %5772 = vmatpush1.xpose.msra.mxu0 0.0
      %5773 = vmatprep.subr.mxu0 0.0
      %5774 = vmatpush1.xpose.msra.mxu0 0.0
      %5775 = vmatprep.subr.mxu0 0.0
      %5776 = vmatpush1.xpose.msra.mxu0 0.0
      %5777 = vmatprep.subr.mxu0 0.0
      %5778 = vmatpush1.xpose.msra.mxu0 0.0
      %5779 = vmatprep.subr.mxu0 0.0
      %5780 = vmatpush1.xpose.msra.mxu0 0.0
      %5781 = vmatprep.subr.mxu0 0.0
      %5782 = vmatpush1.xpose.msra.mxu0 0.0
      %5783 = vmatprep.subr.mxu0 0.0
      %5784 = vmatpush1.xpose.msra.mxu0 0.0
      %5785 = vmatprep.subr.mxu0 0.0
      %5786 = vmatpush1.xpose.msra.mxu0 0.0
      %5787 = vmatprep.subr.mxu0 0.0
      %5788 = vmatpush1.xpose.msra.mxu0 0.0
      %5789 = vmatprep.subr.mxu0 0.0
      %5790 = vmatpush1.xpose.msra.mxu0 0.0
      %5791 = vmatprep.subr.mxu0 0.0
      %5792 = vmatpush1.xpose.msra.mxu0 0.0
      %5793 = vmatprep.subr.mxu0 0.0
      %5794 = vmatpush1.xpose.msra.mxu0 0.0
      %5795 = vmatprep.subr.mxu0 0.0
      %5796 = vmatpush1.xpose.msra.mxu0 0.0
      %5797 = vmatprep.subr.mxu0 0.0
      %5798 = vmatpush1.xpose.msra.mxu0 0.0
      %5799 = vmatprep.subr.mxu0 0.0
      %5800 = vmatpush1.xpose.msra.mxu0 0.0
      %5801 = vmatprep.subr.mxu0 0.0
      %5802 = vmatpush1.xpose.msra.mxu0 0.0
      %5803 = vmatprep.subr.mxu0 0.0
      %5804 = vmatpush1.xpose.msra.mxu0 0.0
      %5805 = vmatprep.subr.mxu0 0.0
      %5806 = vmatpush1.xpose.msra.mxu0 0.0
      %5807 = vmatprep.subr.mxu0 0.0
      %5808 = vmatpush1.xpose.msra.mxu0 0.0
      %5809 = vmatprep.mubr.f32.mxu0 0.0
      %5810 = vmatmul.mubr.f32.gmra.mrb[0].mxu0 %v2629
      %v5811 = vpop.f32.mrb[0].mxu0
      %v5812 = vadd.f32 0.0, %v5811
      %v5813 = vpop.f32.mrb[0].mxu0
      %5814 = vmatprep.mubr.f32.mxu0 0.0
      %5815 = vmatmul.mubr.f32.gmra.mrb[0].mxu0 %v2632
      %v5816 = vpop.f32.mrb[0].mxu0
      %v5817 = vadd.f32 0.0, %v5816
      %v5818 = vpop.f32.mrb[0].mxu0
      %5819 = vdwg.mxu0
      %v5821 = vsel %vm553, %v5235, 0
      %v5824 = vsel %vm553, %v5236, 0
      %5826 = vmatprep.subr.mxu0 0.0
      %5827 = vmatpush1.xpose.msra.mxu0 %v5821
      %5828 = vmatprep.subr.mxu0 0.0
      %5829 = vmatpush1.xpose.msra.mxu0 %v5824
      %5830 = vmatprep.subr.mxu0 0.0
      %5831 = vmatpush1.xpose.msra.mxu0 0.0
      %5832 = vmatprep.subr.mxu0 0.0
      %5833 = vmatpush1.xpose.msra.mxu0 0.0
      %5834 = vmatprep.subr.mxu0 0.0
      %5835 = vmatpush1.xpose.msra.mxu0 0.0
      %5836 = vmatprep.subr.mxu0 0.0
      %5837 = vmatpush1.xpose.msra.mxu0 0.0
      %5838 = vmatprep.subr.mxu0 0.0
      %5839 = vmatpush1.xpose.msra.mxu0 0.0
      %5840 = vmatprep.subr.mxu0 0.0
      %5841 = vmatpush1.xpose.msra.mxu0 0.0
      %5842 = vmatprep.subr.mxu0 0.0
      %5843 = vmatpush1.xpose.msra.mxu0 0.0
      %5844 = vmatprep.subr.mxu0 0.0
      %5845 = vmatpush1.xpose.msra.mxu0 0.0
      %5846 = vmatprep.subr.mxu0 0.0
      %5847 = vmatpush1.xpose.msra.mxu0 0.0
      %5848 = vmatprep.subr.mxu0 0.0
      %5849 = vmatpush1.xpose.msra.mxu0 0.0
      %5850 = vmatprep.subr.mxu0 0.0
      %5851 = vmatpush1.xpose.msra.mxu0 0.0
      %5852 = vmatprep.subr.mxu0 0.0
      %5853 = vmatpush1.xpose.msra.mxu0 0.0
      %5854 = vmatprep.subr.mxu0 0.0
      %5855 = vmatpush1.xpose.msra.mxu0 0.0
      %5856 = vmatprep.subr.mxu0 0.0
      %5857 = vmatpush1.xpose.msra.mxu0 0.0
      %5858 = vmatprep.subr.mxu0 0.0
      %5859 = vmatpush1.xpose.msra.mxu0 0.0
      %5860 = vmatprep.subr.mxu0 0.0
      %5861 = vmatpush1.xpose.msra.mxu0 0.0
      %5862 = vmatprep.subr.mxu0 0.0
      %5863 = vmatpush1.xpose.msra.mxu0 0.0
      %5864 = vmatprep.subr.mxu0 0.0
      %5865 = vmatpush1.xpose.msra.mxu0 0.0
      %5866 = vmatprep.subr.mxu0 0.0
      %5867 = vmatpush1.xpose.msra.mxu0 0.0
      %5868 = vmatprep.subr.mxu0 0.0
      %5869 = vmatpush1.xpose.msra.mxu0 0.0
      %5870 = vmatprep.subr.mxu0 0.0
      %5871 = vmatpush1.xpose.msra.mxu0 0.0
      %5872 = vmatprep.subr.mxu0 0.0
      %5873 = vmatpush1.xpose.msra.mxu0 0.0
      %5874 = vmatprep.subr.mxu0 0.0
      %5875 = vmatpush1.xpose.msra.mxu0 0.0
      %5876 = vmatprep.subr.mxu0 0.0
      %5877 = vmatpush1.xpose.msra.mxu0 0.0
      %5878 = vmatprep.subr.mxu0 0.0
      %5879 = vmatpush1.xpose.msra.mxu0 0.0
      %5880 = vmatprep.subr.mxu0 0.0
      %5881 = vmatpush1.xpose.msra.mxu0 0.0
      %5882 = vmatprep.subr.mxu0 0.0
      %5883 = vmatpush1.xpose.msra.mxu0 0.0
      %5884 = vmatprep.subr.mxu0 0.0
      %5885 = vmatpush1.xpose.msra.mxu0 0.0
      %5886 = vmatprep.subr.mxu0 0.0
      %5887 = vmatpush1.xpose.msra.mxu0 0.0
      %5888 = vmatprep.subr.mxu0 0.0
      %5889 = vmatpush1.xpose.msra.mxu0 0.0
      %5890 = vmatprep.mubr.f32.mxu0 0.0
      %5891 = vmatmul.mubr.f32.gmra.mrb[0].mxu0 %v2716
      %v5892 = vpop.f32.mrb[0].mxu0
      %v5893 = vadd.f32 0.0, %v5892
      %v5894 = vpop.f32.mrb[0].mxu0
      %5895 = vmatprep.mubr.f32.mxu0 0.0
      %5896 = vmatmul.mubr.f32.gmra.mrb[0].mxu0 %v2719
      %v5897 = vpop.f32.mrb[0].mxu0
      %v5898 = vadd.f32 0.0, %v5897
      %v5899 = vpop.f32.mrb[0].mxu0
      %5900 = vdwg.mxu0
      %v5901 = vsel %vm2802, %v5326, -inf
      %v5902 = vsel %vm2802, %v5331, -inf
      %v5903 = vmax.f32 %v5901, %v5902
      %v5904 = vrot.slane %v5903, 4
      %v5905 = vmax.f32 %v5903, %v5904
      %v5906 = vrot.slane %v5905, 2
      %v5907 = vmax.f32 %v5905, %v5906
      %v5908 = vrot.slane %v5907, 1
      %v5909 = vmax.f32 %v5907, %v5908
      %v5910 = vsel %vm2802, %v5407, -inf
      %v5911 = vsel %vm2802, %v5412, -inf
      %v5912 = vmax.f32 %v5910, %v5911
      %v5913 = vrot.slane %v5912, 4
      %v5914 = vmax.f32 %v5912, %v5913
      %v5915 = vrot.slane %v5914, 2
      %v5916 = vmax.f32 %v5914, %v5915
      %v5917 = vrot.slane %v5916, 1
      %v5918 = vmax.f32 %v5916, %v5917
      %v5919 = vsel %vm2802, %v5488, -inf
      %v5920 = vsel %vm2802, %v5493, -inf
      %v5921 = vmax.f32 %v5919, %v5920
      %v5922 = vrot.slane %v5921, 4
      %v5923 = vmax.f32 %v5921, %v5922
      %v5924 = vrot.slane %v5923, 2
      %v5925 = vmax.f32 %v5923, %v5924
      %v5926 = vrot.slane %v5925, 1
      %v5927 = vmax.f32 %v5925, %v5926
      %v5928 = vsel %vm2802, %v5569, -inf
      %v5929 = vsel %vm2802, %v5574, -inf
      %v5930 = vmax.f32 %v5928, %v5929
      %v5931 = vrot.slane %v5930, 4
      %v5932 = vmax.f32 %v5930, %v5931
      %v5933 = vrot.slane %v5932, 2
      %v5934 = vmax.f32 %v5932, %v5933
      %v5935 = vrot.slane %v5934, 1
      %v5936 = vmax.f32 %v5934, %v5935
      %v5937 = vsel %vm2802, %v5650, -inf
      %v5938 = vsel %vm2802, %v5655, -inf
      %v5939 = vmax.f32 %v5937, %v5938
      %v5940 = vrot.slane %v5939, 4
      %v5941 = vmax.f32 %v5939, %v5940
      %v5942 = vrot.slane %v5941, 2
      %v5943 = vmax.f32 %v5941, %v5942
      %v5944 = vrot.slane %v5943, 1
      %v5945 = vmax.f32 %v5943, %v5944
      %v5946 = vsel %vm2802, %v5731, -inf
      %v5947 = vsel %vm2802, %v5736, -inf
      %v5948 = vmax.f32 %v5946, %v5947
      %v5949 = vrot.slane %v5948, 4
      %v5950 = vmax.f32 %v5948, %v5949
      %v5951 = vrot.slane %v5950, 2
      %v5952 = vmax.f32 %v5950, %v5951
      %v5953 = vrot.slane %v5952, 1
      %v5954 = vmax.f32 %v5952, %v5953
      %v5955 = vsel %vm2802, %v5812, -inf
      %v5956 = vsel %vm2802, %v5817, -inf
      %v5957 = vmax.f32 %v5955, %v5956
      %v5958 = vrot.slane %v5957, 4
      %v5959 = vmax.f32 %v5957, %v5958
      %v5960 = vrot.slane %v5959, 2
      %v5961 = vmax.f32 %v5959, %v5960
      %v5962 = vrot.slane %v5961, 1
      %v5963 = vmax.f32 %v5961, %v5962
      %v5964 = vsel %vm2802, %v5893, -inf
      %v5965 = vsel %vm2802, %v5898, -inf
      %v5966 = vmax.f32 %v5964, %v5965
      %v5967 = vrot.slane %v5966, 4
      %v5968 = vmax.f32 %v5966, %v5967
      %v5969 = vrot.slane %v5968, 2
      %v5970 = vmax.f32 %v5968, %v5969
      %v5971 = vrot.slane %v5970, 1
      %v5972 = vmax.f32 %v5970, %v5971
      %v5973 = vsub.f32 %v5326, %v5909
      %v5974 = vsub.f32 %v5331, %v5909
      %v5975 = vsub.f32 %v5407, %v5918
      %v5976 = vsub.f32 %v5412, %v5918
      %v5977 = vsub.f32 %v5488, %v5927
      %v5978 = vsub.f32 %v5493, %v5927
      %v5979 = vsub.f32 %v5569, %v5936
      %v5980 = vsub.f32 %v5574, %v5936
      %v5981 = vsub.f32 %v5650, %v5945
      %v5982 = vsub.f32 %v5655, %v5945
      %v5983 = vsub.f32 %v5731, %v5954
      %v5984 = vsub.f32 %v5736, %v5954
      %v5985 = vsub.f32 %v5812, %v5963
      %v5986 = vsub.f32 %v5817, %v5963
      %v5987 = vsub.f32 %v5893, %v5972
      %v5988 = vsub.f32 %v5898, %v5972
      %v5989 = vmul.f32 %v5973, 1.442695
      %v5990 = vpow.pop %v5989
      %v5991 = vmul.f32 %v5974, 1.442695
      %v5992 = vpow.pop %v5991
      %v5993 = vmul.f32 %v5975, 1.442695
      %v5994 = vpow.pop %v5993
      %v5995 = vmul.f32 %v5976, 1.442695
      %v5996 = vpow.pop %v5995
      %v5997 = vmul.f32 %v5977, 1.442695
      %v5998 = vpow.pop %v5997
      %v5999 = vmul.f32 %v5978, 1.442695
      %v6000 = vpow.pop %v5999
      %v6001 = vmul.f32 %v5979, 1.442695
      %v6002 = vpow.pop %v6001
      %v6003 = vmul.f32 %v5980, 1.442695
      %v6004 = vpow.pop %v6003
      %v6005 = vmul.f32 %v5981, 1.442695
      %v6006 = vpow.pop %v6005
      %v6007 = vmul.f32 %v5982, 1.442695
      %v6008 = vpow.pop %v6007
      %v6009 = vmul.f32 %v5983, 1.442695
      %v6010 = vpow.pop %v6009
      %v6011 = vmul.f32 %v5984, 1.442695
      %v6012 = vpow.pop %v6011
      %v6013 = vmul.f32 %v5985, 1.442695
      %v6014 = vpow.pop %v6013
      %v6015 = vmul.f32 %v5986, 1.442695
      %v6016 = vpow.pop %v6015
      %v6017 = vmul.f32 %v5987, 1.442695
      %v6018 = vpow.pop %v6017
      %v6019 = vmul.f32 %v5988, 1.442695
      %v6020 = vpow.pop %v6019
      %v6021 = vsel %vm2802, %v5990, 0.0
      %v6022 = vsel %vm2802, %v5992, 0.0
      %v6023 = vadd.f32 %v6021, %v6022
      %v6024 = vrot.slane %v6023, 4
      %v6025 = vadd.f32 %v6023, %v6024
      %v6026 = vrot.slane %v6025, 2
      %v6027 = vadd.f32 %v6025, %v6026
      %v6028 = vrot.slane %v6027, 1
      %v6029 = vadd.f32 %v6027, %v6028
      %v6030 = vsel %vm2802, %v5994, 0.0
      %v6031 = vsel %vm2802, %v5996, 0.0
      %v6032 = vadd.f32 %v6030, %v6031
      %v6033 = vrot.slane %v6032, 4
      %v6034 = vadd.f32 %v6032, %v6033
      %v6035 = vrot.slane %v6034, 2
      %v6036 = vadd.f32 %v6034, %v6035
      %v6037 = vrot.slane %v6036, 1
      %v6038 = vadd.f32 %v6036, %v6037
      %v6039 = vsel %vm2802, %v5998, 0.0
      %v6040 = vsel %vm2802, %v6000, 0.0
      %v6041 = vadd.f32 %v6039, %v6040
      %v6042 = vrot.slane %v6041, 4
      %v6043 = vadd.f32 %v6041, %v6042
      %v6044 = vrot.slane %v6043, 2
      %v6045 = vadd.f32 %v6043, %v6044
      %v6046 = vrot.slane %v6045, 1
      %v6047 = vadd.f32 %v6045, %v6046
      %v6048 = vsel %vm2802, %v6002, 0.0
      %v6049 = vsel %vm2802, %v6004, 0.0
      %v6050 = vadd.f32 %v6048, %v6049
      %v6051 = vrot.slane %v6050, 4
      %v6052 = vadd.f32 %v6050, %v6051
      %v6053 = vrot.slane %v6052, 2
      %v6054 = vadd.f32 %v6052, %v6053
      %v6055 = vrot.slane %v6054, 1
      %v6056 = vadd.f32 %v6054, %v6055
      %v6057 = vsel %vm2802, %v6006, 0.0
      %v6058 = vsel %vm2802, %v6008, 0.0
      %v6059 = vadd.f32 %v6057, %v6058
      %v6060 = vrot.slane %v6059, 4
      %v6061 = vadd.f32 %v6059, %v6060
      %v6062 = vrot.slane %v6061, 2
      %v6063 = vadd.f32 %v6061, %v6062
      %v6064 = vrot.slane %v6063, 1
      %v6065 = vadd.f32 %v6063, %v6064
      %v6066 = vsel %vm2802, %v6010, 0.0
      %v6067 = vsel %vm2802, %v6012, 0.0
      %v6068 = vadd.f32 %v6066, %v6067
      %v6069 = vrot.slane %v6068, 4
      %v6070 = vadd.f32 %v6068, %v6069
      %v6071 = vrot.slane %v6070, 2
      %v6072 = vadd.f32 %v6070, %v6071
      %v6073 = vrot.slane %v6072, 1
      %v6074 = vadd.f32 %v6072, %v6073
      %v6075 = vsel %vm2802, %v6014, 0.0
      %v6076 = vsel %vm2802, %v6016, 0.0
      %v6077 = vadd.f32 %v6075, %v6076
      %v6078 = vrot.slane %v6077, 4
      %v6079 = vadd.f32 %v6077, %v6078
      %v6080 = vrot.slane %v6079, 2
      %v6081 = vadd.f32 %v6079, %v6080
      %v6082 = vrot.slane %v6081, 1
      %v6083 = vadd.f32 %v6081, %v6082
      %v6084 = vsel %vm2802, %v6018, 0.0
      %v6085 = vsel %vm2802, %v6020, 0.0
      %v6086 = vadd.f32 %v6084, %v6085
      %v6087 = vrot.slane %v6086, 4
      %v6088 = vadd.f32 %v6086, %v6087
      %v6089 = vrot.slane %v6088, 2
      %v6090 = vadd.f32 %v6088, %v6089
      %v6091 = vrot.slane %v6090, 1
      %v6092 = vadd.f32 %v6090, %v6091
      %v6093 = vrcp.pop %v6029
      %v6094 = vrcp.pop %v6038
      %v6095 = vrcp.pop %v6047
      %v6096 = vrcp.pop %v6056
      %v6097 = vrcp.pop %v6065
      %v6098 = vrcp.pop %v6074
      %v6099 = vrcp.pop %v6083
      %v6100 = vrcp.pop %v6092
      %v6101 = vmul.f32 %v5990, %v6093
      %v6102 = vmul.f32 %v5992, %v6093
      %v6103 = vmul.f32 %v5994, %v6094
      %v6104 = vmul.f32 %v5996, %v6094
      %v6105 = vmul.f32 %v5998, %v6095
      %v6106 = vmul.f32 %v6000, %v6095
      %v6107 = vmul.f32 %v6002, %v6096
      %v6108 = vmul.f32 %v6004, %v6096
      %v6109 = vmul.f32 %v6006, %v6097
      %v6110 = vmul.f32 %v6008, %v6097
      %v6111 = vmul.f32 %v6010, %v6098
      %v6112 = vmul.f32 %v6012, %v6098
      %v6113 = vmul.f32 %v6014, %v6099
      %v6114 = vmul.f32 %v6016, %v6099
      %v6115 = vmul.f32 %v6018, %v6100
      %v6116 = vmul.f32 %v6020, %v6100
      %v6118 = vsel %vm2802, %v6101, 0
      %v6121 = vsel %vm2802, %v6102, 0
      %6123 = vmatprep.subr.mxu0 0.0
      %6124 = vmatpush1.msra.mxu0 %v5237
      %6125 = vmatprep.subr.mxu0 0.0
      %6126 = vmatpush1.msra.mxu0 %v5238
      %6127 = vmatprep.subr.mxu0 0.0
      %6128 = vmatpush1.msra.mxu0 0.0
      %6129 = vmatprep.subr.mxu0 0.0
      %6130 = vmatpush1.msra.mxu0 0.0
      %6131 = vmatprep.subr.mxu0 0.0
      %6132 = vmatpush1.msra.mxu0 0.0
      %6133 = vmatprep.subr.mxu0 0.0
      %6134 = vmatpush1.msra.mxu0 0.0
      %6135 = vmatprep.subr.mxu0 0.0
      %6136 = vmatpush1.msra.mxu0 0.0
      %6137 = vmatprep.subr.mxu0 0.0
      %6138 = vmatpush1.msra.mxu0 0.0
      %6139 = vmatprep.subr.mxu0 0.0
      %6140 = vmatpush1.msra.mxu0 0.0
      %6141 = vmatprep.subr.mxu0 0.0
      %6142 = vmatpush1.msra.mxu0 0.0
      %6143 = vmatprep.subr.mxu0 0.0
      %6144 = vmatpush1.msra.mxu0 0.0
      %6145 = vmatprep.subr.mxu0 0.0
      %6146 = vmatpush1.msra.mxu0 0.0
      %6147 = vmatprep.subr.mxu0 0.0
      %6148 = vmatpush1.msra.mxu0 0.0
      %6149 = vmatprep.subr.mxu0 0.0
      %6150 = vmatpush1.msra.mxu0 0.0
      %6151 = vmatprep.subr.mxu0 0.0
      %6152 = vmatpush1.msra.mxu0 0.0
      %6153 = vmatprep.subr.mxu0 0.0
      %6154 = vmatpush1.msra.mxu0 0.0
      %6155 = vmatprep.subr.mxu0 0.0
      %6156 = vmatpush1.msra.mxu0 0.0
      %6157 = vmatprep.subr.mxu0 0.0
      %6158 = vmatpush1.msra.mxu0 0.0
      %6159 = vmatprep.subr.mxu0 0.0
      %6160 = vmatpush1.msra.mxu0 0.0
      %6161 = vmatprep.subr.mxu0 0.0
      %6162 = vmatpush1.msra.mxu0 0.0
      %6163 = vmatprep.subr.mxu0 0.0
      %6164 = vmatpush1.msra.mxu0 0.0
      %6165 = vmatprep.subr.mxu0 0.0
      %6166 = vmatpush1.msra.mxu0 0.0
      %6167 = vmatprep.subr.mxu0 0.0
      %6168 = vmatpush1.msra.mxu0 0.0
      %6169 = vmatprep.subr.mxu0 0.0
      %6170 = vmatpush1.msra.mxu0 0.0
      %6171 = vmatprep.subr.mxu0 0.0
      %6172 = vmatpush1.msra.mxu0 0.0
      %6173 = vmatprep.subr.mxu0 0.0
      %6174 = vmatpush1.msra.mxu0 0.0
      %6175 = vmatprep.subr.mxu0 0.0
      %6176 = vmatpush1.msra.mxu0 0.0
      %6177 = vmatprep.subr.mxu0 0.0
      %6178 = vmatpush1.msra.mxu0 0.0
      %6179 = vmatprep.subr.mxu0 0.0
      %6180 = vmatpush1.msra.mxu0 0.0
      %6181 = vmatprep.subr.mxu0 0.0
      %6182 = vmatpush1.msra.mxu0 0.0
      %6183 = vmatprep.subr.mxu0 0.0
      %6184 = vmatpush1.msra.mxu0 0.0
      %6185 = vmatprep.subr.mxu0 0.0
      %6186 = vmatpush1.msra.mxu0 0.0
      %6187 = vmatprep.mubr.f32.mxu0 0.0
      %6188 = vmatmul.mubr.f32.gmra.mrb[0].mxu0 %v6118
      %v6189 = vpop.f32.mrb[0].mxu0
      %v6190 = vadd.f32 0.0, %v6189
      %v6191 = vpop.f32.mrb[0].mxu0
      %6192 = vmatprep.mubr.f32.mxu0 0.0
      %6193 = vmatmul.mubr.f32.gmra.mrb[0].mxu0 %v6121
      %v6194 = vpop.f32.mrb[0].mxu0
      %v6195 = vadd.f32 0.0, %v6194
      %v6196 = vpop.f32.mrb[0].mxu0
      %6197 = vdwg.mxu0
      %v6199 = vsel %vm2802, %v6103, 0
      %v6202 = vsel %vm2802, %v6104, 0
      %6204 = vmatprep.subr.mxu0 0.0
      %6205 = vmatpush1.msra.mxu0 %v5239
      %6206 = vmatprep.subr.mxu0 0.0
      %6207 = vmatpush1.msra.mxu0 %v5240
      %6208 = vmatprep.subr.mxu0 0.0
      %6209 = vmatpush1.msra.mxu0 0.0
      %6210 = vmatprep.subr.mxu0 0.0
      %6211 = vmatpush1.msra.mxu0 0.0
      %6212 = vmatprep.subr.mxu0 0.0
      %6213 = vmatpush1.msra.mxu0 0.0
      %6214 = vmatprep.subr.mxu0 0.0
      %6215 = vmatpush1.msra.mxu0 0.0
      %6216 = vmatprep.subr.mxu0 0.0
      %6217 = vmatpush1.msra.mxu0 0.0
      %6218 = vmatprep.subr.mxu0 0.0
      %6219 = vmatpush1.msra.mxu0 0.0
      %6220 = vmatprep.subr.mxu0 0.0
      %6221 = vmatpush1.msra.mxu0 0.0
      %6222 = vmatprep.subr.mxu0 0.0
      %6223 = vmatpush1.msra.mxu0 0.0
      %6224 = vmatprep.subr.mxu0 0.0
      %6225 = vmatpush1.msra.mxu0 0.0
      %6226 = vmatprep.subr.mxu0 0.0
      %6227 = vmatpush1.msra.mxu0 0.0
      %6228 = vmatprep.subr.mxu0 0.0
      %6229 = vmatpush1.msra.mxu0 0.0
      %6230 = vmatprep.subr.mxu0 0.0
      %6231 = vmatpush1.msra.mxu0 0.0
      %6232 = vmatprep.subr.mxu0 0.0
      %6233 = vmatpush1.msra.mxu0 0.0
      %6234 = vmatprep.subr.mxu0 0.0
      %6235 = vmatpush1.msra.mxu0 0.0
      %6236 = vmatprep.subr.mxu0 0.0
      %6237 = vmatpush1.msra.mxu0 0.0
      %6238 = vmatprep.subr.mxu0 0.0
      %6239 = vmatpush1.msra.mxu0 0.0
      %6240 = vmatprep.subr.mxu0 0.0
      %6241 = vmatpush1.msra.mxu0 0.0
      %6242 = vmatprep.subr.mxu0 0.0
      %6243 = vmatpush1.msra.mxu0 0.0
      %6244 = vmatprep.subr.mxu0 0.0
      %6245 = vmatpush1.msra.mxu0 0.0
      %6246 = vmatprep.subr.mxu0 0.0
      %6247 = vmatpush1.msra.mxu0 0.0
      %6248 = vmatprep.subr.mxu0 0.0
      %6249 = vmatpush1.msra.mxu0 0.0
      %6250 = vmatprep.subr.mxu0 0.0
      %6251 = vmatpush1.msra.mxu0 0.0
      %6252 = vmatprep.subr.mxu0 0.0
      %6253 = vmatpush1.msra.mxu0 0.0
      %6254 = vmatprep.subr.mxu0 0.0
      %6255 = vmatpush1.msra.mxu0 0.0
      %6256 = vmatprep.subr.mxu0 0.0
      %6257 = vmatpush1.msra.mxu0 0.0
      %6258 = vmatprep.subr.mxu0 0.0
      %6259 = vmatpush1.msra.mxu0 0.0
      %6260 = vmatprep.subr.mxu0 0.0
      %6261 = vmatpush1.msra.mxu0 0.0
      %6262 = vmatprep.subr.mxu0 0.0
      %6263 = vmatpush1.msra.mxu0 0.0
      %6264 = vmatprep.subr.mxu0 0.0
      %6265 = vmatpush1.msra.mxu0 0.0
      %6266 = vmatprep.subr.mxu0 0.0
      %6267 = vmatpush1.msra.mxu0 0.0
      %6268 = vmatprep.mubr.f32.mxu0 0.0
      %6269 = vmatmul.mubr.f32.gmra.mrb[0].mxu0 %v6199
      %v6270 = vpop.f32.mrb[0].mxu0
      %v6271 = vadd.f32 0.0, %v6270
      %v6272 = vpop.f32.mrb[0].mxu0
      %6273 = vmatprep.mubr.f32.mxu0 0.0
      %6274 = vmatmul.mubr.f32.gmra.mrb[0].mxu0 %v6202
      %v6275 = vpop.f32.mrb[0].mxu0
      %v6276 = vadd.f32 0.0, %v6275
      %v6277 = vpop.f32.mrb[0].mxu0
      %6278 = vdwg.mxu0
      %v6280 = vsel %vm2802, %v6105, 0
      %v6283 = vsel %vm2802, %v6106, 0
      %6285 = vmatprep.subr.mxu0 0.0
      %6286 = vmatpush1.msra.mxu0 %v5241
      %6287 = vmatprep.subr.mxu0 0.0
      %6288 = vmatpush1.msra.mxu0 %v5242
      %6289 = vmatprep.subr.mxu0 0.0
      %6290 = vmatpush1.msra.mxu0 0.0
      %6291 = vmatprep.subr.mxu0 0.0
      %6292 = vmatpush1.msra.mxu0 0.0
      %6293 = vmatprep.subr.mxu0 0.0
      %6294 = vmatpush1.msra.mxu0 0.0
      %6295 = vmatprep.subr.mxu0 0.0
      %6296 = vmatpush1.msra.mxu0 0.0
      %6297 = vmatprep.subr.mxu0 0.0
      %6298 = vmatpush1.msra.mxu0 0.0
      %6299 = vmatprep.subr.mxu0 0.0
      %6300 = vmatpush1.msra.mxu0 0.0
      %6301 = vmatprep.subr.mxu0 0.0
      %6302 = vmatpush1.msra.mxu0 0.0
      %6303 = vmatprep.subr.mxu0 0.0
      %6304 = vmatpush1.msra.mxu0 0.0
      %6305 = vmatprep.subr.mxu0 0.0
      %6306 = vmatpush1.msra.mxu0 0.0
      %6307 = vmatprep.subr.mxu0 0.0
      %6308 = vmatpush1.msra.mxu0 0.0
      %6309 = vmatprep.subr.mxu0 0.0
      %6310 = vmatpush1.msra.mxu0 0.0
      %6311 = vmatprep.subr.mxu0 0.0
      %6312 = vmatpush1.msra.mxu0 0.0
      %6313 = vmatprep.subr.mxu0 0.0
      %6314 = vmatpush1.msra.mxu0 0.0
      %6315 = vmatprep.subr.mxu0 0.0
      %6316 = vmatpush1.msra.mxu0 0.0
      %6317 = vmatprep.subr.mxu0 0.0
      %6318 = vmatpush1.msra.mxu0 0.0
      %6319 = vmatprep.subr.mxu0 0.0
      %6320 = vmatpush1.msra.mxu0 0.0
      %6321 = vmatprep.subr.mxu0 0.0
      %6322 = vmatpush1.msra.mxu0 0.0
      %6323 = vmatprep.subr.mxu0 0.0
      %6324 = vmatpush1.msra.mxu0 0.0
      %6325 = vmatprep.subr.mxu0 0.0
      %6326 = vmatpush1.msra.mxu0 0.0
      %6327 = vmatprep.subr.mxu0 0.0
      %6328 = vmatpush1.msra.mxu0 0.0
      %6329 = vmatprep.subr.mxu0 0.0
      %6330 = vmatpush1.msra.mxu0 0.0
      %6331 = vmatprep.subr.mxu0 0.0
      %6332 = vmatpush1.msra.mxu0 0.0
      %6333 = vmatprep.subr.mxu0 0.0
      %6334 = vmatpush1.msra.mxu0 0.0
      %6335 = vmatprep.subr.mxu0 0.0
      %6336 = vmatpush1.msra.mxu0 0.0
      %6337 = vmatprep.subr.mxu0 0.0
      %6338 = vmatpush1.msra.mxu0 0.0
      %6339 = vmatprep.subr.mxu0 0.0
      %6340 = vmatpush1.msra.mxu0 0.0
      %6341 = vmatprep.subr.mxu0 0.0
      %6342 = vmatpush1.msra.mxu0 0.0
      %6343 = vmatprep.subr.mxu0 0.0
      %6344 = vmatpush1.msra.mxu0 0.0
      %6345 = vmatprep.subr.mxu0 0.0
      %6346 = vmatpush1.msra.mxu0 0.0
      %6347 = vmatprep.subr.mxu0 0.0
      %6348 = vmatpush1.msra.mxu0 0.0
      %6349 = vmatprep.mubr.f32.mxu0 0.0
      %6350 = vmatmul.mubr.f32.gmra.mrb[0].mxu0 %v6280
      %v6351 = vpop.f32.mrb[0].mxu0
      %v6352 = vadd.f32 0.0, %v6351
      %v6353 = vpop.f32.mrb[0].mxu0
      %6354 = vmatprep.mubr.f32.mxu0 0.0
      %6355 = vmatmul.mubr.f32.gmra.mrb[0].mxu0 %v6283
      %v6356 = vpop.f32.mrb[0].mxu0
      %v6357 = vadd.f32 0.0, %v6356
      %v6358 = vpop.f32.mrb[0].mxu0
      %6359 = vdwg.mxu0
      %v6361 = vsel %vm2802, %v6107, 0
      %v6364 = vsel %vm2802, %v6108, 0
      %6366 = vmatprep.subr.mxu0 0.0
      %6367 = vmatpush1.msra.mxu0 %v5243
      %6368 = vmatprep.subr.mxu0 0.0
      %6369 = vmatpush1.msra.mxu0 %v5244
      %6370 = vmatprep.subr.mxu0 0.0
      %6371 = vmatpush1.msra.mxu0 0.0
      %6372 = vmatprep.subr.mxu0 0.0
      %6373 = vmatpush1.msra.mxu0 0.0
      %6374 = vmatprep.subr.mxu0 0.0
      %6375 = vmatpush1.msra.mxu0 0.0
      %6376 = vmatprep.subr.mxu0 0.0
      %6377 = vmatpush1.msra.mxu0 0.0
      %6378 = vmatprep.subr.mxu0 0.0
      %6379 = vmatpush1.msra.mxu0 0.0
      %6380 = vmatprep.subr.mxu0 0.0
      %6381 = vmatpush1.msra.mxu0 0.0
      %6382 = vmatprep.subr.mxu0 0.0
      %6383 = vmatpush1.msra.mxu0 0.0
      %6384 = vmatprep.subr.mxu0 0.0
      %6385 = vmatpush1.msra.mxu0 0.0
      %6386 = vmatprep.subr.mxu0 0.0
      %6387 = vmatpush1.msra.mxu0 0.0
      %6388 = vmatprep.subr.mxu0 0.0
      %6389 = vmatpush1.msra.mxu0 0.0
      %6390 = vmatprep.subr.mxu0 0.0
      %6391 = vmatpush1.msra.mxu0 0.0
      %6392 = vmatprep.subr.mxu0 0.0
      %6393 = vmatpush1.msra.mxu0 0.0
      %6394 = vmatprep.subr.mxu0 0.0
      %6395 = vmatpush1.msra.mxu0 0.0
      %6396 = vmatprep.subr.mxu0 0.0
      %6397 = vmatpush1.msra.mxu0 0.0
      %6398 = vmatprep.subr.mxu0 0.0
      %6399 = vmatpush1.msra.mxu0 0.0
      %6400 = vmatprep.subr.mxu0 0.0
      %6401 = vmatpush1.msra.mxu0 0.0
      %6402 = vmatprep.subr.mxu0 0.0
      %6403 = vmatpush1.msra.mxu0 0.0
      %6404 = vmatprep.subr.mxu0 0.0
      %6405 = vmatpush1.msra.mxu0 0.0
      %6406 = vmatprep.subr.mxu0 0.0
      %6407 = vmatpush1.msra.mxu0 0.0
      %6408 = vmatprep.subr.mxu0 0.0
      %6409 = vmatpush1.msra.mxu0 0.0
      %6410 = vmatprep.subr.mxu0 0.0
      %6411 = vmatpush1.msra.mxu0 0.0
      %6412 = vmatprep.subr.mxu0 0.0
      %6413 = vmatpush1.msra.mxu0 0.0
      %6414 = vmatprep.subr.mxu0 0.0
      %6415 = vmatpush1.msra.mxu0 0.0
      %6416 = vmatprep.subr.mxu0 0.0
      %6417 = vmatpush1.msra.mxu0 0.0
      %6418 = vmatprep.subr.mxu0 0.0
      %6419 = vmatpush1.msra.mxu0 0.0
      %6420 = vmatprep.subr.mxu0 0.0
      %6421 = vmatpush1.msra.mxu0 0.0
      %6422 = vmatprep.subr.mxu0 0.0
      %6423 = vmatpush1.msra.mxu0 0.0
      %6424 = vmatprep.subr.mxu0 0.0
      %6425 = vmatpush1.msra.mxu0 0.0
      %6426 = vmatprep.subr.mxu0 0.0
      %6427 = vmatpush1.msra.mxu0 0.0
      %6428 = vmatprep.subr.mxu0 0.0
      %6429 = vmatpush1.msra.mxu0 0.0
      %6430 = vmatprep.mubr.f32.mxu0 0.0
      %6431 = vmatmul.mubr.f32.gmra.mrb[0].mxu0 %v6361
      %v6432 = vpop.f32.mrb[0].mxu0
      %v6433 = vadd.f32 0.0, %v6432
      %v6434 = vpop.f32.mrb[0].mxu0
      %6435 = vmatprep.mubr.f32.mxu0 0.0
      %6436 = vmatmul.mubr.f32.gmra.mrb[0].mxu0 %v6364
      %v6437 = vpop.f32.mrb[0].mxu0
      %v6438 = vadd.f32 0.0, %v6437
      %v6439 = vpop.f32.mrb[0].mxu0
      %6440 = vdwg.mxu0
      %v6442 = vsel %vm2802, %v6109, 0
      %v6445 = vsel %vm2802, %v6110, 0
      %6447 = vmatprep.subr.mxu0 0.0
      %6448 = vmatpush1.msra.mxu0 %v5245
      %6449 = vmatprep.subr.mxu0 0.0
      %6450 = vmatpush1.msra.mxu0 %v5246
      %6451 = vmatprep.subr.mxu0 0.0
      %6452 = vmatpush1.msra.mxu0 0.0
      %6453 = vmatprep.subr.mxu0 0.0
      %6454 = vmatpush1.msra.mxu0 0.0
      %6455 = vmatprep.subr.mxu0 0.0
      %6456 = vmatpush1.msra.mxu0 0.0
      %6457 = vmatprep.subr.mxu0 0.0
      %6458 = vmatpush1.msra.mxu0 0.0
      %6459 = vmatprep.subr.mxu0 0.0
      %6460 = vmatpush1.msra.mxu0 0.0
      %6461 = vmatprep.subr.mxu0 0.0
      %6462 = vmatpush1.msra.mxu0 0.0
      %6463 = vmatprep.subr.mxu0 0.0
      %6464 = vmatpush1.msra.mxu0 0.0
      %6465 = vmatprep.subr.mxu0 0.0
      %6466 = vmatpush1.msra.mxu0 0.0
      %6467 = vmatprep.subr.mxu0 0.0
      %6468 = vmatpush1.msra.mxu0 0.0
      %6469 = vmatprep.subr.mxu0 0.0
      %6470 = vmatpush1.msra.mxu0 0.0
      %6471 = vmatprep.subr.mxu0 0.0
      %6472 = vmatpush1.msra.mxu0 0.0
      %6473 = vmatprep.subr.mxu0 0.0
      %6474 = vmatpush1.msra.mxu0 0.0
      %6475 = vmatprep.subr.mxu0 0.0
      %6476 = vmatpush1.msra.mxu0 0.0
      %6477 = vmatprep.subr.mxu0 0.0
      %6478 = vmatpush1.msra.mxu0 0.0
      %6479 = vmatprep.subr.mxu0 0.0
      %6480 = vmatpush1.msra.mxu0 0.0
      %6481 = vmatprep.subr.mxu0 0.0
      %6482 = vmatpush1.msra.mxu0 0.0
      %6483 = vmatprep.subr.mxu0 0.0
      %6484 = vmatpush1.msra.mxu0 0.0
      %6485 = vmatprep.subr.mxu0 0.0
      %6486 = vmatpush1.msra.mxu0 0.0
      %6487 = vmatprep.subr.mxu0 0.0
      %6488 = vmatpush1.msra.mxu0 0.0
      %6489 = vmatprep.subr.mxu0 0.0
      %6490 = vmatpush1.msra.mxu0 0.0
      %6491 = vmatprep.subr.mxu0 0.0
      %6492 = vmatpush1.msra.mxu0 0.0
      %6493 = vmatprep.subr.mxu0 0.0
      %6494 = vmatpush1.msra.mxu0 0.0
      %6495 = vmatprep.subr.mxu0 0.0
      %6496 = vmatpush1.msra.mxu0 0.0
      %6497 = vmatprep.subr.mxu0 0.0
      %6498 = vmatpush1.msra.mxu0 0.0
      %6499 = vmatprep.subr.mxu0 0.0
      %6500 = vmatpush1.msra.mxu0 0.0
      %6501 = vmatprep.subr.mxu0 0.0
      %6502 = vmatpush1.msra.mxu0 0.0
      %6503 = vmatprep.subr.mxu0 0.0
      %6504 = vmatpush1.msra.mxu0 0.0
      %6505 = vmatprep.subr.mxu0 0.0
      %6506 = vmatpush1.msra.mxu0 0.0
      %6507 = vmatprep.subr.mxu0 0.0
      %6508 = vmatpush1.msra.mxu0 0.0
      %6509 = vmatprep.subr.mxu0 0.0
      %6510 = vmatpush1.msra.mxu0 0.0
      %6511 = vmatprep.mubr.f32.mxu0 0.0
      %6512 = vmatmul.mubr.f32.gmra.mrb[0].mxu0 %v6442
      %v6513 = vpop.f32.mrb[0].mxu0
      %v6514 = vadd.f32 0.0, %v6513
      %v6515 = vpop.f32.mrb[0].mxu0
      %6516 = vmatprep.mubr.f32.mxu0 0.0
      %6517 = vmatmul.mubr.f32.gmra.mrb[0].mxu0 %v6445
      %v6518 = vpop.f32.mrb[0].mxu0
      %v6519 = vadd.f32 0.0, %v6518
      %v6520 = vpop.f32.mrb[0].mxu0
      %6521 = vdwg.mxu0
      %v6523 = vsel %vm2802, %v6111, 0
      %v6526 = vsel %vm2802, %v6112, 0
      %6528 = vmatprep.subr.mxu0 0.0
      %6529 = vmatpush1.msra.mxu0 %v5247
      %6530 = vmatprep.subr.mxu0 0.0
      %6531 = vmatpush1.msra.mxu0 %v5248
      %6532 = vmatprep.subr.mxu0 0.0
      %6533 = vmatpush1.msra.mxu0 0.0
      %6534 = vmatprep.subr.mxu0 0.0
      %6535 = vmatpush1.msra.mxu0 0.0
      %6536 = vmatprep.subr.mxu0 0.0
      %6537 = vmatpush1.msra.mxu0 0.0
      %6538 = vmatprep.subr.mxu0 0.0
      %6539 = vmatpush1.msra.mxu0 0.0
      %6540 = vmatprep.subr.mxu0 0.0
      %6541 = vmatpush1.msra.mxu0 0.0
      %6542 = vmatprep.subr.mxu0 0.0
      %6543 = vmatpush1.msra.mxu0 0.0
      %6544 = vmatprep.subr.mxu0 0.0
      %6545 = vmatpush1.msra.mxu0 0.0
      %6546 = vmatprep.subr.mxu0 0.0
      %6547 = vmatpush1.msra.mxu0 0.0
      %6548 = vmatprep.subr.mxu0 0.0
      %6549 = vmatpush1.msra.mxu0 0.0
      %6550 = vmatprep.subr.mxu0 0.0
      %6551 = vmatpush1.msra.mxu0 0.0
      %6552 = vmatprep.subr.mxu0 0.0
      %6553 = vmatpush1.msra.mxu0 0.0
      %6554 = vmatprep.subr.mxu0 0.0
      %6555 = vmatpush1.msra.mxu0 0.0
      %6556 = vmatprep.subr.mxu0 0.0
      %6557 = vmatpush1.msra.mxu0 0.0
      %6558 = vmatprep.subr.mxu0 0.0
      %6559 = vmatpush1.msra.mxu0 0.0
      %6560 = vmatprep.subr.mxu0 0.0
      %6561 = vmatpush1.msra.mxu0 0.0
      %6562 = vmatprep.subr.mxu0 0.0
      %6563 = vmatpush1.msra.mxu0 0.0
      %6564 = vmatprep.subr.mxu0 0.0
      %6565 = vmatpush1.msra.mxu0 0.0
      %6566 = vmatprep.subr.mxu0 0.0
      %6567 = vmatpush1.msra.mxu0 0.0
      %6568 = vmatprep.subr.mxu0 0.0
      %6569 = vmatpush1.msra.mxu0 0.0
      %6570 = vmatprep.subr.mxu0 0.0
      %6571 = vmatpush1.msra.mxu0 0.0
      %6572 = vmatprep.subr.mxu0 0.0
      %6573 = vmatpush1.msra.mxu0 0.0
      %6574 = vmatprep.subr.mxu0 0.0
      %6575 = vmatpush1.msra.mxu0 0.0
      %6576 = vmatprep.subr.mxu0 0.0
      %6577 = vmatpush1.msra.mxu0 0.0
      %6578 = vmatprep.subr.mxu0 0.0
      %6579 = vmatpush1.msra.mxu0 0.0
      %6580 = vmatprep.subr.mxu0 0.0
      %6581 = vmatpush1.msra.mxu0 0.0
      %6582 = vmatprep.subr.mxu0 0.0
      %6583 = vmatpush1.msra.mxu0 0.0
      %6584 = vmatprep.subr.mxu0 0.0
      %6585 = vmatpush1.msra.mxu0 0.0
      %6586 = vmatprep.subr.mxu0 0.0
      %6587 = vmatpush1.msra.mxu0 0.0
      %6588 = vmatprep.subr.mxu0 0.0
      %6589 = vmatpush1.msra.mxu0 0.0
      %6590 = vmatprep.subr.mxu0 0.0
      %6591 = vmatpush1.msra.mxu0 0.0
      %6592 = vmatprep.mubr.f32.mxu0 0.0
      %6593 = vmatmul.mubr.f32.gmra.mrb[0].mxu0 %v6523
      %v6594 = vpop.f32.mrb[0].mxu0
      %v6595 = vadd.f32 0.0, %v6594
      %v6596 = vpop.f32.mrb[0].mxu0
      %6597 = vmatprep.mubr.f32.mxu0 0.0
      %6598 = vmatmul.mubr.f32.gmra.mrb[0].mxu0 %v6526
      %v6599 = vpop.f32.mrb[0].mxu0
      %v6600 = vadd.f32 0.0, %v6599
      %v6601 = vpop.f32.mrb[0].mxu0
      %6602 = vdwg.mxu0
      %v6604 = vsel %vm2802, %v6113, 0
      %v6607 = vsel %vm2802, %v6114, 0
      %6609 = vmatprep.subr.mxu0 0.0
      %6610 = vmatpush1.msra.mxu0 %v5249
      %6611 = vmatprep.subr.mxu0 0.0
      %6612 = vmatpush1.msra.mxu0 %v5250
      %6613 = vmatprep.subr.mxu0 0.0
      %6614 = vmatpush1.msra.mxu0 0.0
      %6615 = vmatprep.subr.mxu0 0.0
      %6616 = vmatpush1.msra.mxu0 0.0
      %6617 = vmatprep.subr.mxu0 0.0
      %6618 = vmatpush1.msra.mxu0 0.0
      %6619 = vmatprep.subr.mxu0 0.0
      %6620 = vmatpush1.msra.mxu0 0.0
      %6621 = vmatprep.subr.mxu0 0.0
      %6622 = vmatpush1.msra.mxu0 0.0
      %6623 = vmatprep.subr.mxu0 0.0
      %6624 = vmatpush1.msra.mxu0 0.0
      %6625 = vmatprep.subr.mxu0 0.0
      %6626 = vmatpush1.msra.mxu0 0.0
      %6627 = vmatprep.subr.mxu0 0.0
      %6628 = vmatpush1.msra.mxu0 0.0
      %6629 = vmatprep.subr.mxu0 0.0
      %6630 = vmatpush1.msra.mxu0 0.0
      %6631 = vmatprep.subr.mxu0 0.0
      %6632 = vmatpush1.msra.mxu0 0.0
      %6633 = vmatprep.subr.mxu0 0.0
      %6634 = vmatpush1.msra.mxu0 0.0
      %6635 = vmatprep.subr.mxu0 0.0
      %6636 = vmatpush1.msra.mxu0 0.0
      %6637 = vmatprep.subr.mxu0 0.0
      %6638 = vmatpush1.msra.mxu0 0.0
      %6639 = vmatprep.subr.mxu0 0.0
      %6640 = vmatpush1.msra.mxu0 0.0
      %6641 = vmatprep.subr.mxu0 0.0
      %6642 = vmatpush1.msra.mxu0 0.0
      %6643 = vmatprep.subr.mxu0 0.0
      %6644 = vmatpush1.msra.mxu0 0.0
      %6645 = vmatprep.subr.mxu0 0.0
      %6646 = vmatpush1.msra.mxu0 0.0
      %6647 = vmatprep.subr.mxu0 0.0
      %6648 = vmatpush1.msra.mxu0 0.0
      %6649 = vmatprep.subr.mxu0 0.0
      %6650 = vmatpush1.msra.mxu0 0.0
      %6651 = vmatprep.subr.mxu0 0.0
      %6652 = vmatpush1.msra.mxu0 0.0
      %6653 = vmatprep.subr.mxu0 0.0
      %6654 = vmatpush1.msra.mxu0 0.0
      %6655 = vmatprep.subr.mxu0 0.0
      %6656 = vmatpush1.msra.mxu0 0.0
      %6657 = vmatprep.subr.mxu0 0.0
      %6658 = vmatpush1.msra.mxu0 0.0
      %6659 = vmatprep.subr.mxu0 0.0
      %6660 = vmatpush1.msra.mxu0 0.0
      %6661 = vmatprep.subr.mxu0 0.0
      %6662 = vmatpush1.msra.mxu0 0.0
      %6663 = vmatprep.subr.mxu0 0.0
      %6664 = vmatpush1.msra.mxu0 0.0
      %6665 = vmatprep.subr.mxu0 0.0
      %6666 = vmatpush1.msra.mxu0 0.0
      %6667 = vmatprep.subr.mxu0 0.0
      %6668 = vmatpush1.msra.mxu0 0.0
      %6669 = vmatprep.subr.mxu0 0.0
      %6670 = vmatpush1.msra.mxu0 0.0
      %6671 = vmatprep.subr.mxu0 0.0
      %6672 = vmatpush1.msra.mxu0 0.0
      %6673 = vmatprep.mubr.f32.mxu0 0.0
      %6674 = vmatmul.mubr.f32.gmra.mrb[0].mxu0 %v6604
      %v6675 = vpop.f32.mrb[0].mxu0
      %v6676 = vadd.f32 0.0, %v6675
      %v6677 = vpop.f32.mrb[0].mxu0
      %6678 = vmatprep.mubr.f32.mxu0 0.0
      %6679 = vmatmul.mubr.f32.gmra.mrb[0].mxu0 %v6607
      %v6680 = vpop.f32.mrb[0].mxu0
      %v6681 = vadd.f32 0.0, %v6680
      %v6682 = vpop.f32.mrb[0].mxu0
      %6683 = vdwg.mxu0
      %v6685 = vsel %vm2802, %v6115, 0
      %v6688 = vsel %vm2802, %v6116, 0
      %6690 = vmatprep.subr.mxu0 0.0
      %6691 = vmatpush1.msra.mxu0 %v5251
      %6692 = vmatprep.subr.mxu0 0.0
      %6693 = vmatpush1.msra.mxu0 %v5252
      %6694 = vmatprep.subr.mxu0 0.0
      %6695 = vmatpush1.msra.mxu0 0.0
      %6696 = vmatprep.subr.mxu0 0.0
      %6697 = vmatpush1.msra.mxu0 0.0
      %6698 = vmatprep.subr.mxu0 0.0
      %6699 = vmatpush1.msra.mxu0 0.0
      %6700 = vmatprep.subr.mxu0 0.0
      %6701 = vmatpush1.msra.mxu0 0.0
      %6702 = vmatprep.subr.mxu0 0.0
      %6703 = vmatpush1.msra.mxu0 0.0
      %6704 = vmatprep.subr.mxu0 0.0
      %6705 = vmatpush1.msra.mxu0 0.0
      %6706 = vmatprep.subr.mxu0 0.0
      %6707 = vmatpush1.msra.mxu0 0.0
      %6708 = vmatprep.subr.mxu0 0.0
      %6709 = vmatpush1.msra.mxu0 0.0
      %6710 = vmatprep.subr.mxu0 0.0
      %6711 = vmatpush1.msra.mxu0 0.0
      %6712 = vmatprep.subr.mxu0 0.0
      %6713 = vmatpush1.msra.mxu0 0.0
      %6714 = vmatprep.subr.mxu0 0.0
      %6715 = vmatpush1.msra.mxu0 0.0
      %6716 = vmatprep.subr.mxu0 0.0
      %6717 = vmatpush1.msra.mxu0 0.0
      %6718 = vmatprep.subr.mxu0 0.0
      %6719 = vmatpush1.msra.mxu0 0.0
      %6720 = vmatprep.subr.mxu0 0.0
      %6721 = vmatpush1.msra.mxu0 0.0
      %6722 = vmatprep.subr.mxu0 0.0
      %6723 = vmatpush1.msra.mxu0 0.0
      %6724 = vmatprep.subr.mxu0 0.0
      %6725 = vmatpush1.msra.mxu0 0.0
      %6726 = vmatprep.subr.mxu0 0.0
      %6727 = vmatpush1.msra.mxu0 0.0
      %6728 = vmatprep.subr.mxu0 0.0
      %6729 = vmatpush1.msra.mxu0 0.0
      %6730 = vmatprep.subr.mxu0 0.0
      %6731 = vmatpush1.msra.mxu0 0.0
      %6732 = vmatprep.subr.mxu0 0.0
      %6733 = vmatpush1.msra.mxu0 0.0
      %6734 = vmatprep.subr.mxu0 0.0
      %6735 = vmatpush1.msra.mxu0 0.0
      %6736 = vmatprep.subr.mxu0 0.0
      %6737 = vmatpush1.msra.mxu0 0.0
      %6738 = vmatprep.subr.mxu0 0.0
      %6739 = vmatpush1.msra.mxu0 0.0
      %6740 = vmatprep.subr.mxu0 0.0
      %6741 = vmatpush1.msra.mxu0 0.0
      %6742 = vmatprep.subr.mxu0 0.0
      %6743 = vmatpush1.msra.mxu0 0.0
      %6744 = vmatprep.subr.mxu0 0.0
      %6745 = vmatpush1.msra.mxu0 0.0
      %6746 = vmatprep.subr.mxu0 0.0
      %6747 = vmatpush1.msra.mxu0 0.0
      %6748 = vmatprep.subr.mxu0 0.0
      %6749 = vmatpush1.msra.mxu0 0.0
      %6750 = vmatprep.subr.mxu0 0.0
      %6751 = vmatpush1.msra.mxu0 0.0
      %6752 = vmatprep.subr.mxu0 0.0
      %6753 = vmatpush1.msra.mxu0 0.0
      %6754 = vmatprep.mubr.f32.mxu0 0.0
      %6755 = vmatmul.mubr.f32.gmra.mrb[0].mxu0 %v6685
      %v6756 = vpop.f32.mrb[0].mxu0
      %v6757 = vadd.f32 0.0, %v6756
      %v6758 = vpop.f32.mrb[0].mxu0
      %6759 = vmatprep.mubr.f32.mxu0 0.0
      %6760 = vmatmul.mubr.f32.gmra.mrb[0].mxu0 %v6688
      %v6761 = vpop.f32.mrb[0].mxu0
      %v6762 = vadd.f32 0.0, %v6761
      %v6763 = vpop.f32.mrb[0].mxu0
      %6764 = vdwg.mxu0
      %v6765 = vadd.f32 %v4641, %v6190
      %v6766 = vadd.f32 %v4646, %v6195
      %v6767 = vadd.f32 %v4722, %v6271
      %v6768 = vadd.f32 %v4727, %v6276
      %v6769 = vadd.f32 %v4803, %v6352
      %v6770 = vadd.f32 %v4808, %v6357
      %v6771 = vadd.f32 %v4884, %v6433
      %v6772 = vadd.f32 %v4889, %v6438
      %v6773 = vadd.f32 %v4965, %v6514
      %v6774 = vadd.f32 %v4970, %v6519
      %v6775 = vadd.f32 %v5046, %v6595
      %v6776 = vadd.f32 %v5051, %v6600
      %v6777 = vadd.f32 %v5127, %v6676
      %v6778 = vadd.f32 %v5132, %v6681
      %v6779 = vadd.f32 %v5208, %v6757
      %v6780 = vadd.f32 %v5213, %v6762
      %vm6781 = vcmp.ge.s32.totalorder %v2068, 24
      %vm6782 = vcmp.lt.s32.totalorder %v2068, 32
      %vm6783 = vmand %vm6781, %vm6782
      %v6784 = vsel %vm6783, 1, 0
      %vm6785 = vcmp.eq.s32.totalorder %v6784, 1
      %v6786 = vsel %vm6785, %v1823, 0.0
      %v6787 = vsel %vm6785, %v1828, 0.0
      %v6788 = vsel %vm6785, %v1833, 0.0
      %v6789 = vsel %vm6785, %v1838, 0.0
      %v6790 = vsel %vm6785, %v1843, 0.0
      %v6791 = vsel %vm6785, %v1848, 0.0
      %v6792 = vsel %vm6785, %v1853, 0.0
      %v6793 = vsel %vm6785, %v1858, 0.0
      %v6794 = vsel %vm6785, %v1863, 0.0
      %v6795 = vsel %vm6785, %v1868, 0.0
      %v6796 = vsel %vm6785, %v1873, 0.0
      %v6797 = vsel %vm6785, %v1878, 0.0
      %v6798 = vsel %vm6785, %v1883, 0.0
      %v6799 = vsel %vm6785, %v1888, 0.0
      %v6800 = vsel %vm6785, %v1893, 0.0
      %v6801 = vsel %vm6785, %v1898, 0.0
      %v6802 = vsel %vm6785, %v1973, 0.0
      %v6803 = vsel %vm6785, %v1978, 0.0
      %v6804 = vsel %vm6785, %v1983, 0.0
      %v6805 = vsel %vm6785, %v1988, 0.0
      %v6806 = vsel %vm6785, %v1993, 0.0
      %v6807 = vsel %vm6785, %v1998, 0.0
      %v6808 = vsel %vm6785, %v2003, 0.0
      %v6809 = vsel %vm6785, %v2008, 0.0
      %v6810 = vsel %vm6785, %v2013, 0.0
      %v6811 = vsel %vm6785, %v2018, 0.0
      %v6812 = vsel %vm6785, %v2023, 0.0
      %v6813 = vsel %vm6785, %v2028, 0.0
      %v6814 = vsel %vm6785, %v2033, 0.0
      %v6815 = vsel %vm6785, %v2038, 0.0
      %v6816 = vsel %vm6785, %v2043, 0.0
      %v6817 = vsel %vm6785, %v2048, 0.0
      %v6819 = vsel %vm553, %v6786, 0
      %v6822 = vsel %vm553, %v6787, 0
      %6824 = vmatprep.subr.mxu0 0.0
      %6825 = vmatpush1.xpose.msra.mxu0 %v6819
      %6826 = vmatprep.subr.mxu0 0.0
      %6827 = vmatpush1.xpose.msra.mxu0 %v6822
      %6828 = vmatprep.subr.mxu0 0.0
      %6829 = vmatpush1.xpose.msra.mxu0 0.0
      %6830 = vmatprep.subr.mxu0 0.0
      %6831 = vmatpush1.xpose.msra.mxu0 0.0
      %6832 = vmatprep.subr.mxu0 0.0
      %6833 = vmatpush1.xpose.msra.mxu0 0.0
      %6834 = vmatprep.subr.mxu0 0.0
      %6835 = vmatpush1.xpose.msra.mxu0 0.0
      %6836 = vmatprep.subr.mxu0 0.0
      %6837 = vmatpush1.xpose.msra.mxu0 0.0
      %6838 = vmatprep.subr.mxu0 0.0
      %6839 = vmatpush1.xpose.msra.mxu0 0.0
      %6840 = vmatprep.subr.mxu0 0.0
      %6841 = vmatpush1.xpose.msra.mxu0 0.0
      %6842 = vmatprep.subr.mxu0 0.0
      %6843 = vmatpush1.xpose.msra.mxu0 0.0
      %6844 = vmatprep.subr.mxu0 0.0
      %6845 = vmatpush1.xpose.msra.mxu0 0.0
      %6846 = vmatprep.subr.mxu0 0.0
      %6847 = vmatpush1.xpose.msra.mxu0 0.0
      %6848 = vmatprep.subr.mxu0 0.0
      %6849 = vmatpush1.xpose.msra.mxu0 0.0
      %6850 = vmatprep.subr.mxu0 0.0
      %6851 = vmatpush1.xpose.msra.mxu0 0.0
      %6852 = vmatprep.subr.mxu0 0.0
      %6853 = vmatpush1.xpose.msra.mxu0 0.0
      %6854 = vmatprep.subr.mxu0 0.0
      %6855 = vmatpush1.xpose.msra.mxu0 0.0
      %6856 = vmatprep.subr.mxu0 0.0
      %6857 = vmatpush1.xpose.msra.mxu0 0.0
      %6858 = vmatprep.subr.mxu0 0.0
      %6859 = vmatpush1.xpose.msra.mxu0 0.0
      %6860 = vmatprep.subr.mxu0 0.0
      %6861 = vmatpush1.xpose.msra.mxu0 0.0
      %6862 = vmatprep.subr.mxu0 0.0
      %6863 = vmatpush1.xpose.msra.mxu0 0.0
      %6864 = vmatprep.subr.mxu0 0.0
      %6865 = vmatpush1.xpose.msra.mxu0 0.0
      %6866 = vmatprep.subr.mxu0 0.0
      %6867 = vmatpush1.xpose.msra.mxu0 0.0
      %6868 = vmatprep.subr.mxu0 0.0
      %6869 = vmatpush1.xpose.msra.mxu0 0.0
      %6870 = vmatprep.subr.mxu0 0.0
      %6871 = vmatpush1.xpose.msra.mxu0 0.0
      %6872 = vmatprep.subr.mxu0 0.0
      %6873 = vmatpush1.xpose.msra.mxu0 0.0
      %6874 = vmatprep.subr.mxu0 0.0
      %6875 = vmatpush1.xpose.msra.mxu0 0.0
      %6876 = vmatprep.subr.mxu0 0.0
      %6877 = vmatpush1.xpose.msra.mxu0 0.0
      %6878 = vmatprep.subr.mxu0 0.0
      %6879 = vmatpush1.xpose.msra.mxu0 0.0
      %6880 = vmatprep.subr.mxu0 0.0
      %6881 = vmatpush1.xpose.msra.mxu0 0.0
      %6882 = vmatprep.subr.mxu0 0.0
      %6883 = vmatpush1.xpose.msra.mxu0 0.0
      %6884 = vmatprep.subr.mxu0 0.0
      %6885 = vmatpush1.xpose.msra.mxu0 0.0
      %6886 = vmatprep.subr.mxu0 0.0
      %6887 = vmatpush1.xpose.msra.mxu0 0.0
      %6888 = vmatprep.mubr.f32.mxu0 0.0
      %6889 = vmatmul.mubr.f32.gmra.mrb[0].mxu0 %v2107
      %v6890 = vpop.f32.mrb[0].mxu0
      %v6891 = vadd.f32 0.0, %v6890
      %v6892 = vpop.f32.mrb[0].mxu0
      %6893 = vmatprep.mubr.f32.mxu0 0.0
      %6894 = vmatmul.mubr.f32.gmra.mrb[0].mxu0 %v2110
      %v6895 = vpop.f32.mrb[0].mxu0
      %v6896 = vadd.f32 0.0, %v6895
      %v6897 = vpop.f32.mrb[0].mxu0
      %6898 = vdwg.mxu0
      %v6900 = vsel %vm553, %v6788, 0
      %v6903 = vsel %vm553, %v6789, 0
      %6905 = vmatprep.subr.mxu0 0.0
      %6906 = vmatpush1.xpose.msra.mxu0 %v6900
      %6907 = vmatprep.subr.mxu0 0.0
      %6908 = vmatpush1.xpose.msra.mxu0 %v6903
      %6909 = vmatprep.subr.mxu0 0.0
      %6910 = vmatpush1.xpose.msra.mxu0 0.0
      %6911 = vmatprep.subr.mxu0 0.0
      %6912 = vmatpush1.xpose.msra.mxu0 0.0
      %6913 = vmatprep.subr.mxu0 0.0
      %6914 = vmatpush1.xpose.msra.mxu0 0.0
      %6915 = vmatprep.subr.mxu0 0.0
      %6916 = vmatpush1.xpose.msra.mxu0 0.0
      %6917 = vmatprep.subr.mxu0 0.0
      %6918 = vmatpush1.xpose.msra.mxu0 0.0
      %6919 = vmatprep.subr.mxu0 0.0
      %6920 = vmatpush1.xpose.msra.mxu0 0.0
      %6921 = vmatprep.subr.mxu0 0.0
      %6922 = vmatpush1.xpose.msra.mxu0 0.0
      %6923 = vmatprep.subr.mxu0 0.0
      %6924 = vmatpush1.xpose.msra.mxu0 0.0
      %6925 = vmatprep.subr.mxu0 0.0
      %6926 = vmatpush1.xpose.msra.mxu0 0.0
      %6927 = vmatprep.subr.mxu0 0.0
      %6928 = vmatpush1.xpose.msra.mxu0 0.0
      %6929 = vmatprep.subr.mxu0 0.0
      %6930 = vmatpush1.xpose.msra.mxu0 0.0
      %6931 = vmatprep.subr.mxu0 0.0
      %6932 = vmatpush1.xpose.msra.mxu0 0.0
      %6933 = vmatprep.subr.mxu0 0.0
      %6934 = vmatpush1.xpose.msra.mxu0 0.0
      %6935 = vmatprep.subr.mxu0 0.0
      %6936 = vmatpush1.xpose.msra.mxu0 0.0
      %6937 = vmatprep.subr.mxu0 0.0
      %6938 = vmatpush1.xpose.msra.mxu0 0.0
      %6939 = vmatprep.subr.mxu0 0.0
      %6940 = vmatpush1.xpose.msra.mxu0 0.0
      %6941 = vmatprep.subr.mxu0 0.0
      %6942 = vmatpush1.xpose.msra.mxu0 0.0
      %6943 = vmatprep.subr.mxu0 0.0
      %6944 = vmatpush1.xpose.msra.mxu0 0.0
      %6945 = vmatprep.subr.mxu0 0.0
      %6946 = vmatpush1.xpose.msra.mxu0 0.0
      %6947 = vmatprep.subr.mxu0 0.0
      %6948 = vmatpush1.xpose.msra.mxu0 0.0
      %6949 = vmatprep.subr.mxu0 0.0
      %6950 = vmatpush1.xpose.msra.mxu0 0.0
      %6951 = vmatprep.subr.mxu0 0.0
      %6952 = vmatpush1.xpose.msra.mxu0 0.0
      %6953 = vmatprep.subr.mxu0 0.0
      %6954 = vmatpush1.xpose.msra.mxu0 0.0
      %6955 = vmatprep.subr.mxu0 0.0
      %6956 = vmatpush1.xpose.msra.mxu0 0.0
      %6957 = vmatprep.subr.mxu0 0.0
      %6958 = vmatpush1.xpose.msra.mxu0 0.0
      %6959 = vmatprep.subr.mxu0 0.0
      %6960 = vmatpush1.xpose.msra.mxu0 0.0
      %6961 = vmatprep.subr.mxu0 0.0
      %6962 = vmatpush1.xpose.msra.mxu0 0.0
      %6963 = vmatprep.subr.mxu0 0.0
      %6964 = vmatpush1.xpose.msra.mxu0 0.0
      %6965 = vmatprep.subr.mxu0 0.0
      %6966 = vmatpush1.xpose.msra.mxu0 0.0
      %6967 = vmatprep.subr.mxu0 0.0
      %6968 = vmatpush1.xpose.msra.mxu0 0.0
      %6969 = vmatprep.mubr.f32.mxu0 0.0
      %6970 = vmatmul.mubr.f32.gmra.mrb[0].mxu0 %v2194
      %v6971 = vpop.f32.mrb[0].mxu0
      %v6972 = vadd.f32 0.0, %v6971
      %v6973 = vpop.f32.mrb[0].mxu0
      %6974 = vmatprep.mubr.f32.mxu0 0.0
      %6975 = vmatmul.mubr.f32.gmra.mrb[0].mxu0 %v2197
      %v6976 = vpop.f32.mrb[0].mxu0
      %v6977 = vadd.f32 0.0, %v6976
      %v6978 = vpop.f32.mrb[0].mxu0
      %6979 = vdwg.mxu0
      %v6981 = vsel %vm553, %v6790, 0
      %v6984 = vsel %vm553, %v6791, 0
      %6986 = vmatprep.subr.mxu0 0.0
      %6987 = vmatpush1.xpose.msra.mxu0 %v6981
      %6988 = vmatprep.subr.mxu0 0.0
      %6989 = vmatpush1.xpose.msra.mxu0 %v6984
      %6990 = vmatprep.subr.mxu0 0.0
      %6991 = vmatpush1.xpose.msra.mxu0 0.0
      %6992 = vmatprep.subr.mxu0 0.0
      %6993 = vmatpush1.xpose.msra.mxu0 0.0
      %6994 = vmatprep.subr.mxu0 0.0
      %6995 = vmatpush1.xpose.msra.mxu0 0.0
      %6996 = vmatprep.subr.mxu0 0.0
      %6997 = vmatpush1.xpose.msra.mxu0 0.0
      %6998 = vmatprep.subr.mxu0 0.0
      %6999 = vmatpush1.xpose.msra.mxu0 0.0
      %7000 = vmatprep.subr.mxu0 0.0
      %7001 = vmatpush1.xpose.msra.mxu0 0.0
      %7002 = vmatprep.subr.mxu0 0.0
      %7003 = vmatpush1.xpose.msra.mxu0 0.0
      %7004 = vmatprep.subr.mxu0 0.0
      %7005 = vmatpush1.xpose.msra.mxu0 0.0
      %7006 = vmatprep.subr.mxu0 0.0
      %7007 = vmatpush1.xpose.msra.mxu0 0.0
      %7008 = vmatprep.subr.mxu0 0.0
      %7009 = vmatpush1.xpose.msra.mxu0 0.0
      %7010 = vmatprep.subr.mxu0 0.0
      %7011 = vmatpush1.xpose.msra.mxu0 0.0
      %7012 = vmatprep.subr.mxu0 0.0
      %7013 = vmatpush1.xpose.msra.mxu0 0.0
      %7014 = vmatprep.subr.mxu0 0.0
      %7015 = vmatpush1.xpose.msra.mxu0 0.0
      %7016 = vmatprep.subr.mxu0 0.0
      %7017 = vmatpush1.xpose.msra.mxu0 0.0
      %7018 = vmatprep.subr.mxu0 0.0
      %7019 = vmatpush1.xpose.msra.mxu0 0.0
      %7020 = vmatprep.subr.mxu0 0.0
      %7021 = vmatpush1.xpose.msra.mxu0 0.0
      %7022 = vmatprep.subr.mxu0 0.0
      %7023 = vmatpush1.xpose.msra.mxu0 0.0
      %7024 = vmatprep.subr.mxu0 0.0
      %7025 = vmatpush1.xpose.msra.mxu0 0.0
      %7026 = vmatprep.subr.mxu0 0.0
      %7027 = vmatpush1.xpose.msra.mxu0 0.0
      %7028 = vmatprep.subr.mxu0 0.0
      %7029 = vmatpush1.xpose.msra.mxu0 0.0
      %7030 = vmatprep.subr.mxu0 0.0
      %7031 = vmatpush1.xpose.msra.mxu0 0.0
      %7032 = vmatprep.subr.mxu0 0.0
      %7033 = vmatpush1.xpose.msra.mxu0 0.0
      %7034 = vmatprep.subr.mxu0 0.0
      %7035 = vmatpush1.xpose.msra.mxu0 0.0
      %7036 = vmatprep.subr.mxu0 0.0
      %7037 = vmatpush1.xpose.msra.mxu0 0.0
      %7038 = vmatprep.subr.mxu0 0.0
      %7039 = vmatpush1.xpose.msra.mxu0 0.0
      %7040 = vmatprep.subr.mxu0 0.0
      %7041 = vmatpush1.xpose.msra.mxu0 0.0
      %7042 = vmatprep.subr.mxu0 0.0
      %7043 = vmatpush1.xpose.msra.mxu0 0.0
      %7044 = vmatprep.subr.mxu0 0.0
      %7045 = vmatpush1.xpose.msra.mxu0 0.0
      %7046 = vmatprep.subr.mxu0 0.0
      %7047 = vmatpush1.xpose.msra.mxu0 0.0
      %7048 = vmatprep.subr.mxu0 0.0
      %7049 = vmatpush1.xpose.msra.mxu0 0.0
      %7050 = vmatprep.mubr.f32.mxu0 0.0
      %7051 = vmatmul.mubr.f32.gmra.mrb[0].mxu0 %v2281
      %v7052 = vpop.f32.mrb[0].mxu0
      %v7053 = vadd.f32 0.0, %v7052
      %v7054 = vpop.f32.mrb[0].mxu0
      %7055 = vmatprep.mubr.f32.mxu0 0.0
      %7056 = vmatmul.mubr.f32.gmra.mrb[0].mxu0 %v2284
      %v7057 = vpop.f32.mrb[0].mxu0
      %v7058 = vadd.f32 0.0, %v7057
      %v7059 = vpop.f32.mrb[0].mxu0
      %7060 = vdwg.mxu0
      %v7062 = vsel %vm553, %v6792, 0
      %v7065 = vsel %vm553, %v6793, 0
      %7067 = vmatprep.subr.mxu0 0.0
      %7068 = vmatpush1.xpose.msra.mxu0 %v7062
      %7069 = vmatprep.subr.mxu0 0.0
      %7070 = vmatpush1.xpose.msra.mxu0 %v7065
      %7071 = vmatprep.subr.mxu0 0.0
      %7072 = vmatpush1.xpose.msra.mxu0 0.0
      %7073 = vmatprep.subr.mxu0 0.0
      %7074 = vmatpush1.xpose.msra.mxu0 0.0
      %7075 = vmatprep.subr.mxu0 0.0
      %7076 = vmatpush1.xpose.msra.mxu0 0.0
      %7077 = vmatprep.subr.mxu0 0.0
      %7078 = vmatpush1.xpose.msra.mxu0 0.0
      %7079 = vmatprep.subr.mxu0 0.0
      %7080 = vmatpush1.xpose.msra.mxu0 0.0
      %7081 = vmatprep.subr.mxu0 0.0
      %7082 = vmatpush1.xpose.msra.mxu0 0.0
      %7083 = vmatprep.subr.mxu0 0.0
      %7084 = vmatpush1.xpose.msra.mxu0 0.0
      %7085 = vmatprep.subr.mxu0 0.0
      %7086 = vmatpush1.xpose.msra.mxu0 0.0
      %7087 = vmatprep.subr.mxu0 0.0
      %7088 = vmatpush1.xpose.msra.mxu0 0.0
      %7089 = vmatprep.subr.mxu0 0.0
      %7090 = vmatpush1.xpose.msra.mxu0 0.0
      %7091 = vmatprep.subr.mxu0 0.0
      %7092 = vmatpush1.xpose.msra.mxu0 0.0
      %7093 = vmatprep.subr.mxu0 0.0
      %7094 = vmatpush1.xpose.msra.mxu0 0.0
      %7095 = vmatprep.subr.mxu0 0.0
      %7096 = vmatpush1.xpose.msra.mxu0 0.0
      %7097 = vmatprep.subr.mxu0 0.0
      %7098 = vmatpush1.xpose.msra.mxu0 0.0
      %7099 = vmatprep.subr.mxu0 0.0
      %7100 = vmatpush1.xpose.msra.mxu0 0.0
      %7101 = vmatprep.subr.mxu0 0.0
      %7102 = vmatpush1.xpose.msra.mxu0 0.0
      %7103 = vmatprep.subr.mxu0 0.0
      %7104 = vmatpush1.xpose.msra.mxu0 0.0
      %7105 = vmatprep.subr.mxu0 0.0
      %7106 = vmatpush1.xpose.msra.mxu0 0.0
      %7107 = vmatprep.subr.mxu0 0.0
      %7108 = vmatpush1.xpose.msra.mxu0 0.0
      %7109 = vmatprep.subr.mxu0 0.0
      %7110 = vmatpush1.xpose.msra.mxu0 0.0
      %7111 = vmatprep.subr.mxu0 0.0
      %7112 = vmatpush1.xpose.msra.mxu0 0.0
      %7113 = vmatprep.subr.mxu0 0.0
      %7114 = vmatpush1.xpose.msra.mxu0 0.0
      %7115 = vmatprep.subr.mxu0 0.0
      %7116 = vmatpush1.xpose.msra.mxu0 0.0
      %7117 = vmatprep.subr.mxu0 0.0
      %7118 = vmatpush1.xpose.msra.mxu0 0.0
      %7119 = vmatprep.subr.mxu0 0.0
      %7120 = vmatpush1.xpose.msra.mxu0 0.0
      %7121 = vmatprep.subr.mxu0 0.0
      %7122 = vmatpush1.xpose.msra.mxu0 0.0
      %7123 = vmatprep.subr.mxu0 0.0
      %7124 = vmatpush1.xpose.msra.mxu0 0.0
      %7125 = vmatprep.subr.mxu0 0.0
      %7126 = vmatpush1.xpose.msra.mxu0 0.0
      %7127 = vmatprep.subr.mxu0 0.0
      %7128 = vmatpush1.xpose.msra.mxu0 0.0
      %7129 = vmatprep.subr.mxu0 0.0
      %7130 = vmatpush1.xpose.msra.mxu0 0.0
      %7131 = vmatprep.mubr.f32.mxu0 0.0
      %7132 = vmatmul.mubr.f32.gmra.mrb[0].mxu0 %v2368
      %v7133 = vpop.f32.mrb[0].mxu0
      %v7134 = vadd.f32 0.0, %v7133
      %v7135 = vpop.f32.mrb[0].mxu0
      %7136 = vmatprep.mubr.f32.mxu0 0.0
      %7137 = vmatmul.mubr.f32.gmra.mrb[0].mxu0 %v2371
      %v7138 = vpop.f32.mrb[0].mxu0
      %v7139 = vadd.f32 0.0, %v7138
      %v7140 = vpop.f32.mrb[0].mxu0
      %7141 = vdwg.mxu0
      %v7143 = vsel %vm553, %v6794, 0
      %v7146 = vsel %vm553, %v6795, 0
      %7148 = vmatprep.subr.mxu0 0.0
      %7149 = vmatpush1.xpose.msra.mxu0 %v7143
      %7150 = vmatprep.subr.mxu0 0.0
      %7151 = vmatpush1.xpose.msra.mxu0 %v7146
      %7152 = vmatprep.subr.mxu0 0.0
      %7153 = vmatpush1.xpose.msra.mxu0 0.0
      %7154 = vmatprep.subr.mxu0 0.0
      %7155 = vmatpush1.xpose.msra.mxu0 0.0
      %7156 = vmatprep.subr.mxu0 0.0
      %7157 = vmatpush1.xpose.msra.mxu0 0.0
      %7158 = vmatprep.subr.mxu0 0.0
      %7159 = vmatpush1.xpose.msra.mxu0 0.0
      %7160 = vmatprep.subr.mxu0 0.0
      %7161 = vmatpush1.xpose.msra.mxu0 0.0
      %7162 = vmatprep.subr.mxu0 0.0
      %7163 = vmatpush1.xpose.msra.mxu0 0.0
      %7164 = vmatprep.subr.mxu0 0.0
      %7165 = vmatpush1.xpose.msra.mxu0 0.0
      %7166 = vmatprep.subr.mxu0 0.0
      %7167 = vmatpush1.xpose.msra.mxu0 0.0
      %7168 = vmatprep.subr.mxu0 0.0
      %7169 = vmatpush1.xpose.msra.mxu0 0.0
      %7170 = vmatprep.subr.mxu0 0.0
      %7171 = vmatpush1.xpose.msra.mxu0 0.0
      %7172 = vmatprep.subr.mxu0 0.0
      %7173 = vmatpush1.xpose.msra.mxu0 0.0
      %7174 = vmatprep.subr.mxu0 0.0
      %7175 = vmatpush1.xpose.msra.mxu0 0.0
      %7176 = vmatprep.subr.mxu0 0.0
      %7177 = vmatpush1.xpose.msra.mxu0 0.0
      %7178 = vmatprep.subr.mxu0 0.0
      %7179 = vmatpush1.xpose.msra.mxu0 0.0
      %7180 = vmatprep.subr.mxu0 0.0
      %7181 = vmatpush1.xpose.msra.mxu0 0.0
      %7182 = vmatprep.subr.mxu0 0.0
      %7183 = vmatpush1.xpose.msra.mxu0 0.0
      %7184 = vmatprep.subr.mxu0 0.0
      %7185 = vmatpush1.xpose.msra.mxu0 0.0
      %7186 = vmatprep.subr.mxu0 0.0
      %7187 = vmatpush1.xpose.msra.mxu0 0.0
      %7188 = vmatprep.subr.mxu0 0.0
      %7189 = vmatpush1.xpose.msra.mxu0 0.0
      %7190 = vmatprep.subr.mxu0 0.0
      %7191 = vmatpush1.xpose.msra.mxu0 0.0
      %7192 = vmatprep.subr.mxu0 0.0
      %7193 = vmatpush1.xpose.msra.mxu0 0.0
      %7194 = vmatprep.subr.mxu0 0.0
      %7195 = vmatpush1.xpose.msra.mxu0 0.0
      %7196 = vmatprep.subr.mxu0 0.0
      %7197 = vmatpush1.xpose.msra.mxu0 0.0
      %7198 = vmatprep.subr.mxu0 0.0
      %7199 = vmatpush1.xpose.msra.mxu0 0.0
      %7200 = vmatprep.subr.mxu0 0.0
      %7201 = vmatpush1.xpose.msra.mxu0 0.0
      %7202 = vmatprep.subr.mxu0 0.0
      %7203 = vmatpush1.xpose.msra.mxu0 0.0
      %7204 = vmatprep.subr.mxu0 0.0
      %7205 = vmatpush1.xpose.msra.mxu0 0.0
      %7206 = vmatprep.subr.mxu0 0.0
      %7207 = vmatpush1.xpose.msra.mxu0 0.0
      %7208 = vmatprep.subr.mxu0 0.0
      %7209 = vmatpush1.xpose.msra.mxu0 0.0
      %7210 = vmatprep.subr.mxu0 0.0
      %7211 = vmatpush1.xpose.msra.mxu0 0.0
      %7212 = vmatprep.mubr.f32.mxu0 0.0
      %7213 = vmatmul.mubr.f32.gmra.mrb[0].mxu0 %v2455
      %v7214 = vpop.f32.mrb[0].mxu0
      %v7215 = vadd.f32 0.0, %v7214
      %v7216 = vpop.f32.mrb[0].mxu0
      %7217 = vmatprep.mubr.f32.mxu0 0.0
      %7218 = vmatmul.mubr.f32.gmra.mrb[0].mxu0 %v2458
      %v7219 = vpop.f32.mrb[0].mxu0
      %v7220 = vadd.f32 0.0, %v7219
      %v7221 = vpop.f32.mrb[0].mxu0
      %7222 = vdwg.mxu0
      %v7224 = vsel %vm553, %v6796, 0
      %v7227 = vsel %vm553, %v6797, 0
      %7229 = vmatprep.subr.mxu0 0.0
      %7230 = vmatpush1.xpose.msra.mxu0 %v7224
      %7231 = vmatprep.subr.mxu0 0.0
      %7232 = vmatpush1.xpose.msra.mxu0 %v7227
      %7233 = vmatprep.subr.mxu0 0.0
      %7234 = vmatpush1.xpose.msra.mxu0 0.0
      %7235 = vmatprep.subr.mxu0 0.0
      %7236 = vmatpush1.xpose.msra.mxu0 0.0
      %7237 = vmatprep.subr.mxu0 0.0
      %7238 = vmatpush1.xpose.msra.mxu0 0.0
      %7239 = vmatprep.subr.mxu0 0.0
      %7240 = vmatpush1.xpose.msra.mxu0 0.0
      %7241 = vmatprep.subr.mxu0 0.0
      %7242 = vmatpush1.xpose.msra.mxu0 0.0
      %7243 = vmatprep.subr.mxu0 0.0
      %7244 = vmatpush1.xpose.msra.mxu0 0.0
      %7245 = vmatprep.subr.mxu0 0.0
      %7246 = vmatpush1.xpose.msra.mxu0 0.0
      %7247 = vmatprep.subr.mxu0 0.0
      %7248 = vmatpush1.xpose.msra.mxu0 0.0
      %7249 = vmatprep.subr.mxu0 0.0
      %7250 = vmatpush1.xpose.msra.mxu0 0.0
      %7251 = vmatprep.subr.mxu0 0.0
      %7252 = vmatpush1.xpose.msra.mxu0 0.0
      %7253 = vmatprep.subr.mxu0 0.0
      %7254 = vmatpush1.xpose.msra.mxu0 0.0
      %7255 = vmatprep.subr.mxu0 0.0
      %7256 = vmatpush1.xpose.msra.mxu0 0.0
      %7257 = vmatprep.subr.mxu0 0.0
      %7258 = vmatpush1.xpose.msra.mxu0 0.0
      %7259 = vmatprep.subr.mxu0 0.0
      %7260 = vmatpush1.xpose.msra.mxu0 0.0
      %7261 = vmatprep.subr.mxu0 0.0
      %7262 = vmatpush1.xpose.msra.mxu0 0.0
      %7263 = vmatprep.subr.mxu0 0.0
      %7264 = vmatpush1.xpose.msra.mxu0 0.0
      %7265 = vmatprep.subr.mxu0 0.0
      %7266 = vmatpush1.xpose.msra.mxu0 0.0
      %7267 = vmatprep.subr.mxu0 0.0
      %7268 = vmatpush1.xpose.msra.mxu0 0.0
      %7269 = vmatprep.subr.mxu0 0.0
      %7270 = vmatpush1.xpose.msra.mxu0 0.0
      %7271 = vmatprep.subr.mxu0 0.0
      %7272 = vmatpush1.xpose.msra.mxu0 0.0
      %7273 = vmatprep.subr.mxu0 0.0
      %7274 = vmatpush1.xpose.msra.mxu0 0.0
      %7275 = vmatprep.subr.mxu0 0.0
      %7276 = vmatpush1.xpose.msra.mxu0 0.0
      %7277 = vmatprep.subr.mxu0 0.0
      %7278 = vmatpush1.xpose.msra.mxu0 0.0
      %7279 = vmatprep.subr.mxu0 0.0
      %7280 = vmatpush1.xpose.msra.mxu0 0.0
      %7281 = vmatprep.subr.mxu0 0.0
      %7282 = vmatpush1.xpose.msra.mxu0 0.0
      %7283 = vmatprep.subr.mxu0 0.0
      %7284 = vmatpush1.xpose.msra.mxu0 0.0
      %7285 = vmatprep.subr.mxu0 0.0
      %7286 = vmatpush1.xpose.msra.mxu0 0.0
      %7287 = vmatprep.subr.mxu0 0.0
      %7288 = vmatpush1.xpose.msra.mxu0 0.0
      %7289 = vmatprep.subr.mxu0 0.0
      %7290 = vmatpush1.xpose.msra.mxu0 0.0
      %7291 = vmatprep.subr.mxu0 0.0
      %7292 = vmatpush1.xpose.msra.mxu0 0.0
      %7293 = vmatprep.mubr.f32.mxu0 0.0
      %7294 = vmatmul.mubr.f32.gmra.mrb[0].mxu0 %v2542
      %v7295 = vpop.f32.mrb[0].mxu0
      %v7296 = vadd.f32 0.0, %v7295
      %v7297 = vpop.f32.mrb[0].mxu0
      %7298 = vmatprep.mubr.f32.mxu0 0.0
      %7299 = vmatmul.mubr.f32.gmra.mrb[0].mxu0 %v2545
      %v7300 = vpop.f32.mrb[0].mxu0
      %v7301 = vadd.f32 0.0, %v7300
      %v7302 = vpop.f32.mrb[0].mxu0
      %7303 = vdwg.mxu0
      %v7305 = vsel %vm553, %v6798, 0
      %v7308 = vsel %vm553, %v6799, 0
      %7310 = vmatprep.subr.mxu0 0.0
      %7311 = vmatpush1.xpose.msra.mxu0 %v7305
      %7312 = vmatprep.subr.mxu0 0.0
      %7313 = vmatpush1.xpose.msra.mxu0 %v7308
      %7314 = vmatprep.subr.mxu0 0.0
      %7315 = vmatpush1.xpose.msra.mxu0 0.0
      %7316 = vmatprep.subr.mxu0 0.0
      %7317 = vmatpush1.xpose.msra.mxu0 0.0
      %7318 = vmatprep.subr.mxu0 0.0
      %7319 = vmatpush1.xpose.msra.mxu0 0.0
      %7320 = vmatprep.subr.mxu0 0.0
      %7321 = vmatpush1.xpose.msra.mxu0 0.0
      %7322 = vmatprep.subr.mxu0 0.0
      %7323 = vmatpush1.xpose.msra.mxu0 0.0
      %7324 = vmatprep.subr.mxu0 0.0
      %7325 = vmatpush1.xpose.msra.mxu0 0.0
      %7326 = vmatprep.subr.mxu0 0.0
      %7327 = vmatpush1.xpose.msra.mxu0 0.0
      %7328 = vmatprep.subr.mxu0 0.0
      %7329 = vmatpush1.xpose.msra.mxu0 0.0
      %7330 = vmatprep.subr.mxu0 0.0
      %7331 = vmatpush1.xpose.msra.mxu0 0.0
      %7332 = vmatprep.subr.mxu0 0.0
      %7333 = vmatpush1.xpose.msra.mxu0 0.0
      %7334 = vmatprep.subr.mxu0 0.0
      %7335 = vmatpush1.xpose.msra.mxu0 0.0
      %7336 = vmatprep.subr.mxu0 0.0
      %7337 = vmatpush1.xpose.msra.mxu0 0.0
      %7338 = vmatprep.subr.mxu0 0.0
      %7339 = vmatpush1.xpose.msra.mxu0 0.0
      %7340 = vmatprep.subr.mxu0 0.0
      %7341 = vmatpush1.xpose.msra.mxu0 0.0
      %7342 = vmatprep.subr.mxu0 0.0
      %7343 = vmatpush1.xpose.msra.mxu0 0.0
      %7344 = vmatprep.subr.mxu0 0.0
      %7345 = vmatpush1.xpose.msra.mxu0 0.0
      %7346 = vmatprep.subr.mxu0 0.0
      %7347 = vmatpush1.xpose.msra.mxu0 0.0
      %7348 = vmatprep.subr.mxu0 0.0
      %7349 = vmatpush1.xpose.msra.mxu0 0.0
      %7350 = vmatprep.subr.mxu0 0.0
      %7351 = vmatpush1.xpose.msra.mxu0 0.0
      %7352 = vmatprep.subr.mxu0 0.0
      %7353 = vmatpush1.xpose.msra.mxu0 0.0
      %7354 = vmatprep.subr.mxu0 0.0
      %7355 = vmatpush1.xpose.msra.mxu0 0.0
      %7356 = vmatprep.subr.mxu0 0.0
      %7357 = vmatpush1.xpose.msra.mxu0 0.0
      %7358 = vmatprep.subr.mxu0 0.0
      %7359 = vmatpush1.xpose.msra.mxu0 0.0
      %7360 = vmatprep.subr.mxu0 0.0
      %7361 = vmatpush1.xpose.msra.mxu0 0.0
      %7362 = vmatprep.subr.mxu0 0.0
      %7363 = vmatpush1.xpose.msra.mxu0 0.0
      %7364 = vmatprep.subr.mxu0 0.0
      %7365 = vmatpush1.xpose.msra.mxu0 0.0
      %7366 = vmatprep.subr.mxu0 0.0
      %7367 = vmatpush1.xpose.msra.mxu0 0.0
      %7368 = vmatprep.subr.mxu0 0.0
      %7369 = vmatpush1.xpose.msra.mxu0 0.0
      %7370 = vmatprep.subr.mxu0 0.0
      %7371 = vmatpush1.xpose.msra.mxu0 0.0
      %7372 = vmatprep.subr.mxu0 0.0
      %7373 = vmatpush1.xpose.msra.mxu0 0.0
      %7374 = vmatprep.mubr.f32.mxu0 0.0
      %7375 = vmatmul.mubr.f32.gmra.mrb[0].mxu0 %v2629
      %v7376 = vpop.f32.mrb[0].mxu0
      %v7377 = vadd.f32 0.0, %v7376
      %v7378 = vpop.f32.mrb[0].mxu0
      %7379 = vmatprep.mubr.f32.mxu0 0.0
      %7380 = vmatmul.mubr.f32.gmra.mrb[0].mxu0 %v2632
      %v7381 = vpop.f32.mrb[0].mxu0
      %v7382 = vadd.f32 0.0, %v7381
      %v7383 = vpop.f32.mrb[0].mxu0
      %7384 = vdwg.mxu0
      %v7386 = vsel %vm553, %v6800, 0
      %v7389 = vsel %vm553, %v6801, 0
      %7391 = vmatprep.subr.mxu0 0.0
      %7392 = vmatpush1.xpose.msra.mxu0 %v7386
      %7393 = vmatprep.subr.mxu0 0.0
      %7394 = vmatpush1.xpose.msra.mxu0 %v7389
      %7395 = vmatprep.subr.mxu0 0.0
      %7396 = vmatpush1.xpose.msra.mxu0 0.0
      %7397 = vmatprep.subr.mxu0 0.0
      %7398 = vmatpush1.xpose.msra.mxu0 0.0
      %7399 = vmatprep.subr.mxu0 0.0
      %7400 = vmatpush1.xpose.msra.mxu0 0.0
      %7401 = vmatprep.subr.mxu0 0.0
      %7402 = vmatpush1.xpose.msra.mxu0 0.0
      %7403 = vmatprep.subr.mxu0 0.0
      %7404 = vmatpush1.xpose.msra.mxu0 0.0
      %7405 = vmatprep.subr.mxu0 0.0
      %7406 = vmatpush1.xpose.msra.mxu0 0.0
      %7407 = vmatprep.subr.mxu0 0.0
      %7408 = vmatpush1.xpose.msra.mxu0 0.0
      %7409 = vmatprep.subr.mxu0 0.0
      %7410 = vmatpush1.xpose.msra.mxu0 0.0
      %7411 = vmatprep.subr.mxu0 0.0
      %7412 = vmatpush1.xpose.msra.mxu0 0.0
      %7413 = vmatprep.subr.mxu0 0.0
      %7414 = vmatpush1.xpose.msra.mxu0 0.0
      %7415 = vmatprep.subr.mxu0 0.0
      %7416 = vmatpush1.xpose.msra.mxu0 0.0
      %7417 = vmatprep.subr.mxu0 0.0
      %7418 = vmatpush1.xpose.msra.mxu0 0.0
      %7419 = vmatprep.subr.mxu0 0.0
      %7420 = vmatpush1.xpose.msra.mxu0 0.0
      %7421 = vmatprep.subr.mxu0 0.0
      %7422 = vmatpush1.xpose.msra.mxu0 0.0
      %7423 = vmatprep.subr.mxu0 0.0
      %7424 = vmatpush1.xpose.msra.mxu0 0.0
      %7425 = vmatprep.subr.mxu0 0.0
      %7426 = vmatpush1.xpose.msra.mxu0 0.0
      %7427 = vmatprep.subr.mxu0 0.0
      %7428 = vmatpush1.xpose.msra.mxu0 0.0
      %7429 = vmatprep.subr.mxu0 0.0
      %7430 = vmatpush1.xpose.msra.mxu0 0.0
      %7431 = vmatprep.subr.mxu0 0.0
      %7432 = vmatpush1.xpose.msra.mxu0 0.0
      %7433 = vmatprep.subr.mxu0 0.0
      %7434 = vmatpush1.xpose.msra.mxu0 0.0
      %7435 = vmatprep.subr.mxu0 0.0
      %7436 = vmatpush1.xpose.msra.mxu0 0.0
      %7437 = vmatprep.subr.mxu0 0.0
      %7438 = vmatpush1.xpose.msra.mxu0 0.0
      %7439 = vmatprep.subr.mxu0 0.0
      %7440 = vmatpush1.xpose.msra.mxu0 0.0
      %7441 = vmatprep.subr.mxu0 0.0
      %7442 = vmatpush1.xpose.msra.mxu0 0.0
      %7443 = vmatprep.subr.mxu0 0.0
      %7444 = vmatpush1.xpose.msra.mxu0 0.0
      %7445 = vmatprep.subr.mxu0 0.0
      %7446 = vmatpush1.xpose.msra.mxu0 0.0
      %7447 = vmatprep.subr.mxu0 0.0
      %7448 = vmatpush1.xpose.msra.mxu0 0.0
      %7449 = vmatprep.subr.mxu0 0.0
      %7450 = vmatpush1.xpose.msra.mxu0 0.0
      %7451 = vmatprep.subr.mxu0 0.0
      %7452 = vmatpush1.xpose.msra.mxu0 0.0
      %7453 = vmatprep.subr.mxu0 0.0
      %7454 = vmatpush1.xpose.msra.mxu0 0.0
      %7455 = vmatprep.mubr.f32.mxu0 0.0
      %7456 = vmatmul.mubr.f32.gmra.mrb[0].mxu0 %v2716
      %v7457 = vpop.f32.mrb[0].mxu0
      %v7458 = vadd.f32 0.0, %v7457
      %v7459 = vpop.f32.mrb[0].mxu0
      %7460 = vmatprep.mubr.f32.mxu0 0.0
      %7461 = vmatmul.mubr.f32.gmra.mrb[0].mxu0 %v2719
      %v7462 = vpop.f32.mrb[0].mxu0
      %v7463 = vadd.f32 0.0, %v7462
      %v7464 = vpop.f32.mrb[0].mxu0
      %7465 = vdwg.mxu0
      %v7466 = vsel %vm2802, %v6891, -inf
      %v7467 = vsel %vm2802, %v6896, -inf
      %v7468 = vmax.f32 %v7466, %v7467
      %v7469 = vrot.slane %v7468, 4
      %v7470 = vmax.f32 %v7468, %v7469
      %v7471 = vrot.slane %v7470, 2
      %v7472 = vmax.f32 %v7470, %v7471
      %v7473 = vrot.slane %v7472, 1
      %v7474 = vmax.f32 %v7472, %v7473
      %v7475 = vsel %vm2802, %v6972, -inf
      %v7476 = vsel %vm2802, %v6977, -inf
      %v7477 = vmax.f32 %v7475, %v7476
      %v7478 = vrot.slane %v7477, 4
      %v7479 = vmax.f32 %v7477, %v7478
      %v7480 = vrot.slane %v7479, 2
      %v7481 = vmax.f32 %v7479, %v7480
      %v7482 = vrot.slane %v7481, 1
      %v7483 = vmax.f32 %v7481, %v7482
      %v7484 = vsel %vm2802, %v7053, -inf
      %v7485 = vsel %vm2802, %v7058, -inf
      %v7486 = vmax.f32 %v7484, %v7485
      %v7487 = vrot.slane %v7486, 4
      %v7488 = vmax.f32 %v7486, %v7487
      %v7489 = vrot.slane %v7488, 2
      %v7490 = vmax.f32 %v7488, %v7489
      %v7491 = vrot.slane %v7490, 1
      %v7492 = vmax.f32 %v7490, %v7491
      %v7493 = vsel %vm2802, %v7134, -inf
      %v7494 = vsel %vm2802, %v7139, -inf
      %v7495 = vmax.f32 %v7493, %v7494
      %v7496 = vrot.slane %v7495, 4
      %v7497 = vmax.f32 %v7495, %v7496
      %v7498 = vrot.slane %v7497, 2
      %v7499 = vmax.f32 %v7497, %v7498
      %v7500 = vrot.slane %v7499, 1
      %v7501 = vmax.f32 %v7499, %v7500
      %v7502 = vsel %vm2802, %v7215, -inf
      %v7503 = vsel %vm2802, %v7220, -inf
      %v7504 = vmax.f32 %v7502, %v7503
      %v7505 = vrot.slane %v7504, 4
      %v7506 = vmax.f32 %v7504, %v7505
      %v7507 = vrot.slane %v7506, 2
      %v7508 = vmax.f32 %v7506, %v7507
      %v7509 = vrot.slane %v7508, 1
      %v7510 = vmax.f32 %v7508, %v7509
      %v7511 = vsel %vm2802, %v7296, -inf
      %v7512 = vsel %vm2802, %v7301, -inf
      %v7513 = vmax.f32 %v7511, %v7512
      %v7514 = vrot.slane %v7513, 4
      %v7515 = vmax.f32 %v7513, %v7514
      %v7516 = vrot.slane %v7515, 2
      %v7517 = vmax.f32 %v7515, %v7516
      %v7518 = vrot.slane %v7517, 1
      %v7519 = vmax.f32 %v7517, %v7518
      %v7520 = vsel %vm2802, %v7377, -inf
      %v7521 = vsel %vm2802, %v7382, -inf
      %v7522 = vmax.f32 %v7520, %v7521
      %v7523 = vrot.slane %v7522, 4
      %v7524 = vmax.f32 %v7522, %v7523
      %v7525 = vrot.slane %v7524, 2
      %v7526 = vmax.f32 %v7524, %v7525
      %v7527 = vrot.slane %v7526, 1
      %v7528 = vmax.f32 %v7526, %v7527
      %v7529 = vsel %vm2802, %v7458, -inf
      %v7530 = vsel %vm2802, %v7463, -inf
      %v7531 = vmax.f32 %v7529, %v7530
      %v7532 = vrot.slane %v7531, 4
      %v7533 = vmax.f32 %v7531, %v7532
      %v7534 = vrot.slane %v7533, 2
      %v7535 = vmax.f32 %v7533, %v7534
      %v7536 = vrot.slane %v7535, 1
      %v7537 = vmax.f32 %v7535, %v7536
      %v7538 = vsub.f32 %v6891, %v7474
      %v7539 = vsub.f32 %v6896, %v7474
      %v7540 = vsub.f32 %v6972, %v7483
      %v7541 = vsub.f32 %v6977, %v7483
      %v7542 = vsub.f32 %v7053, %v7492
      %v7543 = vsub.f32 %v7058, %v7492
      %v7544 = vsub.f32 %v7134, %v7501
      %v7545 = vsub.f32 %v7139, %v7501
      %v7546 = vsub.f32 %v7215, %v7510
      %v7547 = vsub.f32 %v7220, %v7510
      %v7548 = vsub.f32 %v7296, %v7519
      %v7549 = vsub.f32 %v7301, %v7519
      %v7550 = vsub.f32 %v7377, %v7528
      %v7551 = vsub.f32 %v7382, %v7528
      %v7552 = vsub.f32 %v7458, %v7537
      %v7553 = vsub.f32 %v7463, %v7537
      %v7554 = vmul.f32 %v7538, 1.442695
      %v7555 = vpow.pop %v7554
      %v7556 = vmul.f32 %v7539, 1.442695
      %v7557 = vpow.pop %v7556
      %v7558 = vmul.f32 %v7540, 1.442695
      %v7559 = vpow.pop %v7558
      %v7560 = vmul.f32 %v7541, 1.442695
      %v7561 = vpow.pop %v7560
      %v7562 = vmul.f32 %v7542, 1.442695
      %v7563 = vpow.pop %v7562
      %v7564 = vmul.f32 %v7543, 1.442695
      %v7565 = vpow.pop %v7564
      %v7566 = vmul.f32 %v7544, 1.442695
      %v7567 = vpow.pop %v7566
      %v7568 = vmul.f32 %v7545, 1.442695
      %v7569 = vpow.pop %v7568
      %v7570 = vmul.f32 %v7546, 1.442695
      %v7571 = vpow.pop %v7570
      %v7572 = vmul.f32 %v7547, 1.442695
      %v7573 = vpow.pop %v7572
      %v7574 = vmul.f32 %v7548, 1.442695
      %v7575 = vpow.pop %v7574
      %v7576 = vmul.f32 %v7549, 1.442695
      %v7577 = vpow.pop %v7576
      %v7578 = vmul.f32 %v7550, 1.442695
      %v7579 = vpow.pop %v7578
      %v7580 = vmul.f32 %v7551, 1.442695
      %v7581 = vpow.pop %v7580
      %v7582 = vmul.f32 %v7552, 1.442695
      %v7583 = vpow.pop %v7582
      %v7584 = vmul.f32 %v7553, 1.442695
      %v7585 = vpow.pop %v7584
      %v7586 = vsel %vm2802, %v7555, 0.0
      %v7587 = vsel %vm2802, %v7557, 0.0
      %v7588 = vadd.f32 %v7586, %v7587
      %v7589 = vrot.slane %v7588, 4
      %v7590 = vadd.f32 %v7588, %v7589
      %v7591 = vrot.slane %v7590, 2
      %v7592 = vadd.f32 %v7590, %v7591
      %v7593 = vrot.slane %v7592, 1
      %v7594 = vadd.f32 %v7592, %v7593
      %v7595 = vsel %vm2802, %v7559, 0.0
      %v7596 = vsel %vm2802, %v7561, 0.0
      %v7597 = vadd.f32 %v7595, %v7596
      %v7598 = vrot.slane %v7597, 4
      %v7599 = vadd.f32 %v7597, %v7598
      %v7600 = vrot.slane %v7599, 2
      %v7601 = vadd.f32 %v7599, %v7600
      %v7602 = vrot.slane %v7601, 1
      %v7603 = vadd.f32 %v7601, %v7602
      %v7604 = vsel %vm2802, %v7563, 0.0
      %v7605 = vsel %vm2802, %v7565, 0.0
      %v7606 = vadd.f32 %v7604, %v7605
      %v7607 = vrot.slane %v7606, 4
      %v7608 = vadd.f32 %v7606, %v7607
      %v7609 = vrot.slane %v7608, 2
      %v7610 = vadd.f32 %v7608, %v7609
      %v7611 = vrot.slane %v7610, 1
      %v7612 = vadd.f32 %v7610, %v7611
      %v7613 = vsel %vm2802, %v7567, 0.0
      %v7614 = vsel %vm2802, %v7569, 0.0
      %v7615 = vadd.f32 %v7613, %v7614
      %v7616 = vrot.slane %v7615, 4
      %v7617 = vadd.f32 %v7615, %v7616
      %v7618 = vrot.slane %v7617, 2
      %v7619 = vadd.f32 %v7617, %v7618
      %v7620 = vrot.slane %v7619, 1
      %v7621 = vadd.f32 %v7619, %v7620
      %v7622 = vsel %vm2802, %v7571, 0.0
      %v7623 = vsel %vm2802, %v7573, 0.0
      %v7624 = vadd.f32 %v7622, %v7623
      %v7625 = vrot.slane %v7624, 4
      %v7626 = vadd.f32 %v7624, %v7625
      %v7627 = vrot.slane %v7626, 2
      %v7628 = vadd.f32 %v7626, %v7627
      %v7629 = vrot.slane %v7628, 1
      %v7630 = vadd.f32 %v7628, %v7629
      %v7631 = vsel %vm2802, %v7575, 0.0
      %v7632 = vsel %vm2802, %v7577, 0.0
      %v7633 = vadd.f32 %v7631, %v7632
      %v7634 = vrot.slane %v7633, 4
      %v7635 = vadd.f32 %v7633, %v7634
      %v7636 = vrot.slane %v7635, 2
      %v7637 = vadd.f32 %v7635, %v7636
      %v7638 = vrot.slane %v7637, 1
      %v7639 = vadd.f32 %v7637, %v7638
      %v7640 = vsel %vm2802, %v7579, 0.0
      %v7641 = vsel %vm2802, %v7581, 0.0
      %v7642 = vadd.f32 %v7640, %v7641
      %v7643 = vrot.slane %v7642, 4
      %v7644 = vadd.f32 %v7642, %v7643
      %v7645 = vrot.slane %v7644, 2
      %v7646 = vadd.f32 %v7644, %v7645
      %v7647 = vrot.slane %v7646, 1
      %v7648 = vadd.f32 %v7646, %v7647
      %v7649 = vsel %vm2802, %v7583, 0.0
      %v7650 = vsel %vm2802, %v7585, 0.0
      %v7651 = vadd.f32 %v7649, %v7650
      %v7652 = vrot.slane %v7651, 4
      %v7653 = vadd.f32 %v7651, %v7652
      %v7654 = vrot.slane %v7653, 2
      %v7655 = vadd.f32 %v7653, %v7654
      %v7656 = vrot.slane %v7655, 1
      %v7657 = vadd.f32 %v7655, %v7656
      %v7658 = vrcp.pop %v7594
      %v7659 = vrcp.pop %v7603
      %v7660 = vrcp.pop %v7612
      %v7661 = vrcp.pop %v7621
      %v7662 = vrcp.pop %v7630
      %v7663 = vrcp.pop %v7639
      %v7664 = vrcp.pop %v7648
      %v7665 = vrcp.pop %v7657
      %v7666 = vmul.f32 %v7555, %v7658
      %v7667 = vmul.f32 %v7557, %v7658
      %v7668 = vmul.f32 %v7559, %v7659
      %v7669 = vmul.f32 %v7561, %v7659
      %v7670 = vmul.f32 %v7563, %v7660
      %v7671 = vmul.f32 %v7565, %v7660
      %v7672 = vmul.f32 %v7567, %v7661
      %v7673 = vmul.f32 %v7569, %v7661
      %v7674 = vmul.f32 %v7571, %v7662
      %v7675 = vmul.f32 %v7573, %v7662
      %v7676 = vmul.f32 %v7575, %v7663
      %v7677 = vmul.f32 %v7577, %v7663
      %v7678 = vmul.f32 %v7579, %v7664
      %v7679 = vmul.f32 %v7581, %v7664
      %v7680 = vmul.f32 %v7583, %v7665
      %v7681 = vmul.f32 %v7585, %v7665
      %v7683 = vsel %vm2802, %v7666, 0
      %v7686 = vsel %vm2802, %v7667, 0
      %7688 = vmatprep.subr.mxu0 0.0
      %7689 = vmatpush1.msra.mxu0 %v6802
      %7690 = vmatprep.subr.mxu0 0.0
      %7691 = vmatpush1.msra.mxu0 %v6803
      %7692 = vmatprep.subr.mxu0 0.0
      %7693 = vmatpush1.msra.mxu0 0.0
      %7694 = vmatprep.subr.mxu0 0.0
      %7695 = vmatpush1.msra.mxu0 0.0
      %7696 = vmatprep.subr.mxu0 0.0
      %7697 = vmatpush1.msra.mxu0 0.0
      %7698 = vmatprep.subr.mxu0 0.0
      %7699 = vmatpush1.msra.mxu0 0.0
      %7700 = vmatprep.subr.mxu0 0.0
      %7701 = vmatpush1.msra.mxu0 0.0
      %7702 = vmatprep.subr.mxu0 0.0
      %7703 = vmatpush1.msra.mxu0 0.0
      %7704 = vmatprep.subr.mxu0 0.0
      %7705 = vmatpush1.msra.mxu0 0.0
      %7706 = vmatprep.subr.mxu0 0.0
      %7707 = vmatpush1.msra.mxu0 0.0
      %7708 = vmatprep.subr.mxu0 0.0
      %7709 = vmatpush1.msra.mxu0 0.0
      %7710 = vmatprep.subr.mxu0 0.0
      %7711 = vmatpush1.msra.mxu0 0.0
      %7712 = vmatprep.subr.mxu0 0.0
      %7713 = vmatpush1.msra.mxu0 0.0
      %7714 = vmatprep.subr.mxu0 0.0
      %7715 = vmatpush1.msra.mxu0 0.0
      %7716 = vmatprep.subr.mxu0 0.0
      %7717 = vmatpush1.msra.mxu0 0.0
      %7718 = vmatprep.subr.mxu0 0.0
      %7719 = vmatpush1.msra.mxu0 0.0
      %7720 = vmatprep.subr.mxu0 0.0
      %7721 = vmatpush1.msra.mxu0 0.0
      %7722 = vmatprep.subr.mxu0 0.0
      %7723 = vmatpush1.msra.mxu0 0.0
      %7724 = vmatprep.subr.mxu0 0.0
      %7725 = vmatpush1.msra.mxu0 0.0
      %7726 = vmatprep.subr.mxu0 0.0
      %7727 = vmatpush1.msra.mxu0 0.0
      %7728 = vmatprep.subr.mxu0 0.0
      %7729 = vmatpush1.msra.mxu0 0.0
      %7730 = vmatprep.subr.mxu0 0.0
      %7731 = vmatpush1.msra.mxu0 0.0
      %7732 = vmatprep.subr.mxu0 0.0
      %7733 = vmatpush1.msra.mxu0 0.0
      %7734 = vmatprep.subr.mxu0 0.0
      %7735 = vmatpush1.msra.mxu0 0.0
      %7736 = vmatprep.subr.mxu0 0.0
      %7737 = vmatpush1.msra.mxu0 0.0
      %7738 = vmatprep.subr.mxu0 0.0
      %7739 = vmatpush1.msra.mxu0 0.0
      %7740 = vmatprep.subr.mxu0 0.0
      %7741 = vmatpush1.msra.mxu0 0.0
      %7742 = vmatprep.subr.mxu0 0.0
      %7743 = vmatpush1.msra.mxu0 0.0
      %7744 = vmatprep.subr.mxu0 0.0
      %7745 = vmatpush1.msra.mxu0 0.0
      %7746 = vmatprep.subr.mxu0 0.0
      %7747 = vmatpush1.msra.mxu0 0.0
      %7748 = vmatprep.subr.mxu0 0.0
      %7749 = vmatpush1.msra.mxu0 0.0
      %7750 = vmatprep.subr.mxu0 0.0
      %7751 = vmatpush1.msra.mxu0 0.0
      %7752 = vmatprep.mubr.f32.mxu0 0.0
      %7753 = vmatmul.mubr.f32.gmra.mrb[0].mxu0 %v7683
      %v7754 = vpop.f32.mrb[0].mxu0
      %v7755 = vadd.f32 0.0, %v7754
      %v7756 = vpop.f32.mrb[0].mxu0
      %7757 = vmatprep.mubr.f32.mxu0 0.0
      %7758 = vmatmul.mubr.f32.gmra.mrb[0].mxu0 %v7686
      %v7759 = vpop.f32.mrb[0].mxu0
      %v7760 = vadd.f32 0.0, %v7759
      %v7761 = vpop.f32.mrb[0].mxu0
      %7762 = vdwg.mxu0
      %v7764 = vsel %vm2802, %v7668, 0
      %v7767 = vsel %vm2802, %v7669, 0
      %7769 = vmatprep.subr.mxu0 0.0
      %7770 = vmatpush1.msra.mxu0 %v6804
      %7771 = vmatprep.subr.mxu0 0.0
      %7772 = vmatpush1.msra.mxu0 %v6805
      %7773 = vmatprep.subr.mxu0 0.0
      %7774 = vmatpush1.msra.mxu0 0.0
      %7775 = vmatprep.subr.mxu0 0.0
      %7776 = vmatpush1.msra.mxu0 0.0
      %7777 = vmatprep.subr.mxu0 0.0
      %7778 = vmatpush1.msra.mxu0 0.0
      %7779 = vmatprep.subr.mxu0 0.0
      %7780 = vmatpush1.msra.mxu0 0.0
      %7781 = vmatprep.subr.mxu0 0.0
      %7782 = vmatpush1.msra.mxu0 0.0
      %7783 = vmatprep.subr.mxu0 0.0
      %7784 = vmatpush1.msra.mxu0 0.0
      %7785 = vmatprep.subr.mxu0 0.0
      %7786 = vmatpush1.msra.mxu0 0.0
      %7787 = vmatprep.subr.mxu0 0.0
      %7788 = vmatpush1.msra.mxu0 0.0
      %7789 = vmatprep.subr.mxu0 0.0
      %7790 = vmatpush1.msra.mxu0 0.0
      %7791 = vmatprep.subr.mxu0 0.0
      %7792 = vmatpush1.msra.mxu0 0.0
      %7793 = vmatprep.subr.mxu0 0.0
      %7794 = vmatpush1.msra.mxu0 0.0
      %7795 = vmatprep.subr.mxu0 0.0
      %7796 = vmatpush1.msra.mxu0 0.0
      %7797 = vmatprep.subr.mxu0 0.0
      %7798 = vmatpush1.msra.mxu0 0.0
      %7799 = vmatprep.subr.mxu0 0.0
      %7800 = vmatpush1.msra.mxu0 0.0
      %7801 = vmatprep.subr.mxu0 0.0
      %7802 = vmatpush1.msra.mxu0 0.0
      %7803 = vmatprep.subr.mxu0 0.0
      %7804 = vmatpush1.msra.mxu0 0.0
      %7805 = vmatprep.subr.mxu0 0.0
      %7806 = vmatpush1.msra.mxu0 0.0
      %7807 = vmatprep.subr.mxu0 0.0
      %7808 = vmatpush1.msra.mxu0 0.0
      %7809 = vmatprep.subr.mxu0 0.0
      %7810 = vmatpush1.msra.mxu0 0.0
      %7811 = vmatprep.subr.mxu0 0.0
      %7812 = vmatpush1.msra.mxu0 0.0
      %7813 = vmatprep.subr.mxu0 0.0
      %7814 = vmatpush1.msra.mxu0 0.0
      %7815 = vmatprep.subr.mxu0 0.0
      %7816 = vmatpush1.msra.mxu0 0.0
      %7817 = vmatprep.subr.mxu0 0.0
      %7818 = vmatpush1.msra.mxu0 0.0
      %7819 = vmatprep.subr.mxu0 0.0
      %7820 = vmatpush1.msra.mxu0 0.0
      %7821 = vmatprep.subr.mxu0 0.0
      %7822 = vmatpush1.msra.mxu0 0.0
      %7823 = vmatprep.subr.mxu0 0.0
      %7824 = vmatpush1.msra.mxu0 0.0
      %7825 = vmatprep.subr.mxu0 0.0
      %7826 = vmatpush1.msra.mxu0 0.0
      %7827 = vmatprep.subr.mxu0 0.0
      %7828 = vmatpush1.msra.mxu0 0.0
      %7829 = vmatprep.subr.mxu0 0.0
      %7830 = vmatpush1.msra.mxu0 0.0
      %7831 = vmatprep.subr.mxu0 0.0
      %7832 = vmatpush1.msra.mxu0 0.0
      %7833 = vmatprep.mubr.f32.mxu0 0.0
      %7834 = vmatmul.mubr.f32.gmra.mrb[0].mxu0 %v7764
      %v7835 = vpop.f32.mrb[0].mxu0
      %v7836 = vadd.f32 0.0, %v7835
      %v7837 = vpop.f32.mrb[0].mxu0
      %7838 = vmatprep.mubr.f32.mxu0 0.0
      %7839 = vmatmul.mubr.f32.gmra.mrb[0].mxu0 %v7767
      %v7840 = vpop.f32.mrb[0].mxu0
      %v7841 = vadd.f32 0.0, %v7840
      %v7842 = vpop.f32.mrb[0].mxu0
      %7843 = vdwg.mxu0
      %v7845 = vsel %vm2802, %v7670, 0
      %v7848 = vsel %vm2802, %v7671, 0
      %7850 = vmatprep.subr.mxu0 0.0
      %7851 = vmatpush1.msra.mxu0 %v6806
      %7852 = vmatprep.subr.mxu0 0.0
      %7853 = vmatpush1.msra.mxu0 %v6807
      %7854 = vmatprep.subr.mxu0 0.0
      %7855 = vmatpush1.msra.mxu0 0.0
      %7856 = vmatprep.subr.mxu0 0.0
      %7857 = vmatpush1.msra.mxu0 0.0
      %7858 = vmatprep.subr.mxu0 0.0
      %7859 = vmatpush1.msra.mxu0 0.0
      %7860 = vmatprep.subr.mxu0 0.0
      %7861 = vmatpush1.msra.mxu0 0.0
      %7862 = vmatprep.subr.mxu0 0.0
      %7863 = vmatpush1.msra.mxu0 0.0
      %7864 = vmatprep.subr.mxu0 0.0
      %7865 = vmatpush1.msra.mxu0 0.0
      %7866 = vmatprep.subr.mxu0 0.0
      %7867 = vmatpush1.msra.mxu0 0.0
      %7868 = vmatprep.subr.mxu0 0.0
      %7869 = vmatpush1.msra.mxu0 0.0
      %7870 = vmatprep.subr.mxu0 0.0
      %7871 = vmatpush1.msra.mxu0 0.0
      %7872 = vmatprep.subr.mxu0 0.0
      %7873 = vmatpush1.msra.mxu0 0.0
      %7874 = vmatprep.subr.mxu0 0.0
      %7875 = vmatpush1.msra.mxu0 0.0
      %7876 = vmatprep.subr.mxu0 0.0
      %7877 = vmatpush1.msra.mxu0 0.0
      %7878 = vmatprep.subr.mxu0 0.0
      %7879 = vmatpush1.msra.mxu0 0.0
      %7880 = vmatprep.subr.mxu0 0.0
      %7881 = vmatpush1.msra.mxu0 0.0
      %7882 = vmatprep.subr.mxu0 0.0
      %7883 = vmatpush1.msra.mxu0 0.0
      %7884 = vmatprep.subr.mxu0 0.0
      %7885 = vmatpush1.msra.mxu0 0.0
      %7886 = vmatprep.subr.mxu0 0.0
      %7887 = vmatpush1.msra.mxu0 0.0
      %7888 = vmatprep.subr.mxu0 0.0
      %7889 = vmatpush1.msra.mxu0 0.0
      %7890 = vmatprep.subr.mxu0 0.0
      %7891 = vmatpush1.msra.mxu0 0.0
      %7892 = vmatprep.subr.mxu0 0.0
      %7893 = vmatpush1.msra.mxu0 0.0
      %7894 = vmatprep.subr.mxu0 0.0
      %7895 = vmatpush1.msra.mxu0 0.0
      %7896 = vmatprep.subr.mxu0 0.0
      %7897 = vmatpush1.msra.mxu0 0.0
      %7898 = vmatprep.subr.mxu0 0.0
      %7899 = vmatpush1.msra.mxu0 0.0
      %7900 = vmatprep.subr.mxu0 0.0
      %7901 = vmatpush1.msra.mxu0 0.0
      %7902 = vmatprep.subr.mxu0 0.0
      %7903 = vmatpush1.msra.mxu0 0.0
      %7904 = vmatprep.subr.mxu0 0.0
      %7905 = vmatpush1.msra.mxu0 0.0
      %7906 = vmatprep.subr.mxu0 0.0
      %7907 = vmatpush1.msra.mxu0 0.0
      %7908 = vmatprep.subr.mxu0 0.0
      %7909 = vmatpush1.msra.mxu0 0.0
      %7910 = vmatprep.subr.mxu0 0.0
      %7911 = vmatpush1.msra.mxu0 0.0
      %7912 = vmatprep.subr.mxu0 0.0
      %7913 = vmatpush1.msra.mxu0 0.0
      %7914 = vmatprep.mubr.f32.mxu0 0.0
      %7915 = vmatmul.mubr.f32.gmra.mrb[0].mxu0 %v7845
      %v7916 = vpop.f32.mrb[0].mxu0
      %v7917 = vadd.f32 0.0, %v7916
      %v7918 = vpop.f32.mrb[0].mxu0
      %7919 = vmatprep.mubr.f32.mxu0 0.0
      %7920 = vmatmul.mubr.f32.gmra.mrb[0].mxu0 %v7848
      %v7921 = vpop.f32.mrb[0].mxu0
      %v7922 = vadd.f32 0.0, %v7921
      %v7923 = vpop.f32.mrb[0].mxu0
      %7924 = vdwg.mxu0
      %v7926 = vsel %vm2802, %v7672, 0
      %v7929 = vsel %vm2802, %v7673, 0
      %7931 = vmatprep.subr.mxu0 0.0
      %7932 = vmatpush1.msra.mxu0 %v6808
      %7933 = vmatprep.subr.mxu0 0.0
      %7934 = vmatpush1.msra.mxu0 %v6809
      %7935 = vmatprep.subr.mxu0 0.0
      %7936 = vmatpush1.msra.mxu0 0.0
      %7937 = vmatprep.subr.mxu0 0.0
      %7938 = vmatpush1.msra.mxu0 0.0
      %7939 = vmatprep.subr.mxu0 0.0
      %7940 = vmatpush1.msra.mxu0 0.0
      %7941 = vmatprep.subr.mxu0 0.0
      %7942 = vmatpush1.msra.mxu0 0.0
      %7943 = vmatprep.subr.mxu0 0.0
      %7944 = vmatpush1.msra.mxu0 0.0
      %7945 = vmatprep.subr.mxu0 0.0
      %7946 = vmatpush1.msra.mxu0 0.0
      %7947 = vmatprep.subr.mxu0 0.0
      %7948 = vmatpush1.msra.mxu0 0.0
      %7949 = vmatprep.subr.mxu0 0.0
      %7950 = vmatpush1.msra.mxu0 0.0
      %7951 = vmatprep.subr.mxu0 0.0
      %7952 = vmatpush1.msra.mxu0 0.0
      %7953 = vmatprep.subr.mxu0 0.0
      %7954 = vmatpush1.msra.mxu0 0.0
      %7955 = vmatprep.subr.mxu0 0.0
      %7956 = vmatpush1.msra.mxu0 0.0
      %7957 = vmatprep.subr.mxu0 0.0
      %7958 = vmatpush1.msra.mxu0 0.0
      %7959 = vmatprep.subr.mxu0 0.0
      %7960 = vmatpush1.msra.mxu0 0.0
      %7961 = vmatprep.subr.mxu0 0.0
      %7962 = vmatpush1.msra.mxu0 0.0
      %7963 = vmatprep.subr.mxu0 0.0
      %7964 = vmatpush1.msra.mxu0 0.0
      %7965 = vmatprep.subr.mxu0 0.0
      %7966 = vmatpush1.msra.mxu0 0.0
      %7967 = vmatprep.subr.mxu0 0.0
      %7968 = vmatpush1.msra.mxu0 0.0
      %7969 = vmatprep.subr.mxu0 0.0
      %7970 = vmatpush1.msra.mxu0 0.0
      %7971 = vmatprep.subr.mxu0 0.0
      %7972 = vmatpush1.msra.mxu0 0.0
      %7973 = vmatprep.subr.mxu0 0.0
      %7974 = vmatpush1.msra.mxu0 0.0
      %7975 = vmatprep.subr.mxu0 0.0
      %7976 = vmatpush1.msra.mxu0 0.0
      %7977 = vmatprep.subr.mxu0 0.0
      %7978 = vmatpush1.msra.mxu0 0.0
      %7979 = vmatprep.subr.mxu0 0.0
      %7980 = vmatpush1.msra.mxu0 0.0
      %7981 = vmatprep.subr.mxu0 0.0
      %7982 = vmatpush1.msra.mxu0 0.0
      %7983 = vmatprep.subr.mxu0 0.0
      %7984 = vmatpush1.msra.mxu0 0.0
      %7985 = vmatprep.subr.mxu0 0.0
      %7986 = vmatpush1.msra.mxu0 0.0
      %7987 = vmatprep.subr.mxu0 0.0
      %7988 = vmatpush1.msra.mxu0 0.0
      %7989 = vmatprep.subr.mxu0 0.0
      %7990 = vmatpush1.msra.mxu0 0.0
      %7991 = vmatprep.subr.mxu0 0.0
      %7992 = vmatpush1.msra.mxu0 0.0
      %7993 = vmatprep.subr.mxu0 0.0
      %7994 = vmatpush1.msra.mxu0 0.0
      %7995 = vmatprep.mubr.f32.mxu0 0.0
      %7996 = vmatmul.mubr.f32.gmra.mrb[0].mxu0 %v7926
      %v7997 = vpop.f32.mrb[0].mxu0
      %v7998 = vadd.f32 0.0, %v7997
      %v7999 = vpop.f32.mrb[0].mxu0
      %8000 = vmatprep.mubr.f32.mxu0 0.0
      %8001 = vmatmul.mubr.f32.gmra.mrb[0].mxu0 %v7929
      %v8002 = vpop.f32.mrb[0].mxu0
      %v8003 = vadd.f32 0.0, %v8002
      %v8004 = vpop.f32.mrb[0].mxu0
      %8005 = vdwg.mxu0
      %v8007 = vsel %vm2802, %v7674, 0
      %v8010 = vsel %vm2802, %v7675, 0
      %8012 = vmatprep.subr.mxu0 0.0
      %8013 = vmatpush1.msra.mxu0 %v6810
      %8014 = vmatprep.subr.mxu0 0.0
      %8015 = vmatpush1.msra.mxu0 %v6811
      %8016 = vmatprep.subr.mxu0 0.0
      %8017 = vmatpush1.msra.mxu0 0.0
      %8018 = vmatprep.subr.mxu0 0.0
      %8019 = vmatpush1.msra.mxu0 0.0
      %8020 = vmatprep.subr.mxu0 0.0
      %8021 = vmatpush1.msra.mxu0 0.0
      %8022 = vmatprep.subr.mxu0 0.0
      %8023 = vmatpush1.msra.mxu0 0.0
      %8024 = vmatprep.subr.mxu0 0.0
      %8025 = vmatpush1.msra.mxu0 0.0
      %8026 = vmatprep.subr.mxu0 0.0
      %8027 = vmatpush1.msra.mxu0 0.0
      %8028 = vmatprep.subr.mxu0 0.0
      %8029 = vmatpush1.msra.mxu0 0.0
      %8030 = vmatprep.subr.mxu0 0.0
      %8031 = vmatpush1.msra.mxu0 0.0
      %8032 = vmatprep.subr.mxu0 0.0
      %8033 = vmatpush1.msra.mxu0 0.0
      %8034 = vmatprep.subr.mxu0 0.0
      %8035 = vmatpush1.msra.mxu0 0.0
      %8036 = vmatprep.subr.mxu0 0.0
      %8037 = vmatpush1.msra.mxu0 0.0
      %8038 = vmatprep.subr.mxu0 0.0
      %8039 = vmatpush1.msra.mxu0 0.0
      %8040 = vmatprep.subr.mxu0 0.0
      %8041 = vmatpush1.msra.mxu0 0.0
      %8042 = vmatprep.subr.mxu0 0.0
      %8043 = vmatpush1.msra.mxu0 0.0
      %8044 = vmatprep.subr.mxu0 0.0
      %8045 = vmatpush1.msra.mxu0 0.0
      %8046 = vmatprep.subr.mxu0 0.0
      %8047 = vmatpush1.msra.mxu0 0.0
      %8048 = vmatprep.subr.mxu0 0.0
      %8049 = vmatpush1.msra.mxu0 0.0
      %8050 = vmatprep.subr.mxu0 0.0
      %8051 = vmatpush1.msra.mxu0 0.0
      %8052 = vmatprep.subr.mxu0 0.0
      %8053 = vmatpush1.msra.mxu0 0.0
      %8054 = vmatprep.subr.mxu0 0.0
      %8055 = vmatpush1.msra.mxu0 0.0
      %8056 = vmatprep.subr.mxu0 0.0
      %8057 = vmatpush1.msra.mxu0 0.0
      %8058 = vmatprep.subr.mxu0 0.0
      %8059 = vmatpush1.msra.mxu0 0.0
      %8060 = vmatprep.subr.mxu0 0.0
      %8061 = vmatpush1.msra.mxu0 0.0
      %8062 = vmatprep.subr.mxu0 0.0
      %8063 = vmatpush1.msra.mxu0 0.0
      %8064 = vmatprep.subr.mxu0 0.0
      %8065 = vmatpush1.msra.mxu0 0.0
      %8066 = vmatprep.subr.mxu0 0.0
      %8067 = vmatpush1.msra.mxu0 0.0
      %8068 = vmatprep.subr.mxu0 0.0
      %8069 = vmatpush1.msra.mxu0 0.0
      %8070 = vmatprep.subr.mxu0 0.0
      %8071 = vmatpush1.msra.mxu0 0.0
      %8072 = vmatprep.subr.mxu0 0.0
      %8073 = vmatpush1.msra.mxu0 0.0
      %8074 = vmatprep.subr.mxu0 0.0
      %8075 = vmatpush1.msra.mxu0 0.0
      %8076 = vmatprep.mubr.f32.mxu0 0.0
      %8077 = vmatmul.mubr.f32.gmra.mrb[0].mxu0 %v8007
      %v8078 = vpop.f32.mrb[0].mxu0
      %v8079 = vadd.f32 0.0, %v8078
      %v8080 = vpop.f32.mrb[0].mxu0
      %8081 = vmatprep.mubr.f32.mxu0 0.0
      %8082 = vmatmul.mubr.f32.gmra.mrb[0].mxu0 %v8010
      %v8083 = vpop.f32.mrb[0].mxu0
      %v8084 = vadd.f32 0.0, %v8083
      %v8085 = vpop.f32.mrb[0].mxu0
      %8086 = vdwg.mxu0
      %v8088 = vsel %vm2802, %v7676, 0
      %v8091 = vsel %vm2802, %v7677, 0
      %8093 = vmatprep.subr.mxu0 0.0
      %8094 = vmatpush1.msra.mxu0 %v6812
      %8095 = vmatprep.subr.mxu0 0.0
      %8096 = vmatpush1.msra.mxu0 %v6813
      %8097 = vmatprep.subr.mxu0 0.0
      %8098 = vmatpush1.msra.mxu0 0.0
      %8099 = vmatprep.subr.mxu0 0.0
      %8100 = vmatpush1.msra.mxu0 0.0
      %8101 = vmatprep.subr.mxu0 0.0
      %8102 = vmatpush1.msra.mxu0 0.0
      %8103 = vmatprep.subr.mxu0 0.0
      %8104 = vmatpush1.msra.mxu0 0.0
      %8105 = vmatprep.subr.mxu0 0.0
      %8106 = vmatpush1.msra.mxu0 0.0
      %8107 = vmatprep.subr.mxu0 0.0
      %8108 = vmatpush1.msra.mxu0 0.0
      %8109 = vmatprep.subr.mxu0 0.0
      %8110 = vmatpush1.msra.mxu0 0.0
      %8111 = vmatprep.subr.mxu0 0.0
      %8112 = vmatpush1.msra.mxu0 0.0
      %8113 = vmatprep.subr.mxu0 0.0
      %8114 = vmatpush1.msra.mxu0 0.0
      %8115 = vmatprep.subr.mxu0 0.0
      %8116 = vmatpush1.msra.mxu0 0.0
      %8117 = vmatprep.subr.mxu0 0.0
      %8118 = vmatpush1.msra.mxu0 0.0
      %8119 = vmatprep.subr.mxu0 0.0
      %8120 = vmatpush1.msra.mxu0 0.0
      %8121 = vmatprep.subr.mxu0 0.0
      %8122 = vmatpush1.msra.mxu0 0.0
      %8123 = vmatprep.subr.mxu0 0.0
      %8124 = vmatpush1.msra.mxu0 0.0
      %8125 = vmatprep.subr.mxu0 0.0
      %8126 = vmatpush1.msra.mxu0 0.0
      %8127 = vmatprep.subr.mxu0 0.0
      %8128 = vmatpush1.msra.mxu0 0.0
      %8129 = vmatprep.subr.mxu0 0.0
      %8130 = vmatpush1.msra.mxu0 0.0
      %8131 = vmatprep.subr.mxu0 0.0
      %8132 = vmatpush1.msra.mxu0 0.0
      %8133 = vmatprep.subr.mxu0 0.0
      %8134 = vmatpush1.msra.mxu0 0.0
      %8135 = vmatprep.subr.mxu0 0.0
      %8136 = vmatpush1.msra.mxu0 0.0
      %8137 = vmatprep.subr.mxu0 0.0
      %8138 = vmatpush1.msra.mxu0 0.0
      %8139 = vmatprep.subr.mxu0 0.0
      %8140 = vmatpush1.msra.mxu0 0.0
      %8141 = vmatprep.subr.mxu0 0.0
      %8142 = vmatpush1.msra.mxu0 0.0
      %8143 = vmatprep.subr.mxu0 0.0
      %8144 = vmatpush1.msra.mxu0 0.0
      %8145 = vmatprep.subr.mxu0 0.0
      %8146 = vmatpush1.msra.mxu0 0.0
      %8147 = vmatprep.subr.mxu0 0.0
      %8148 = vmatpush1.msra.mxu0 0.0
      %8149 = vmatprep.subr.mxu0 0.0
      %8150 = vmatpush1.msra.mxu0 0.0
      %8151 = vmatprep.subr.mxu0 0.0
      %8152 = vmatpush1.msra.mxu0 0.0
      %8153 = vmatprep.subr.mxu0 0.0
      %8154 = vmatpush1.msra.mxu0 0.0
      %8155 = vmatprep.subr.mxu0 0.0
      %8156 = vmatpush1.msra.mxu0 0.0
      %8157 = vmatprep.mubr.f32.mxu0 0.0
      %8158 = vmatmul.mubr.f32.gmra.mrb[0].mxu0 %v8088
      %v8159 = vpop.f32.mrb[0].mxu0
      %v8160 = vadd.f32 0.0, %v8159
      %v8161 = vpop.f32.mrb[0].mxu0
      %8162 = vmatprep.mubr.f32.mxu0 0.0
      %8163 = vmatmul.mubr.f32.gmra.mrb[0].mxu0 %v8091
      %v8164 = vpop.f32.mrb[0].mxu0
      %v8165 = vadd.f32 0.0, %v8164
      %v8166 = vpop.f32.mrb[0].mxu0
      %8167 = vdwg.mxu0
      %v8169 = vsel %vm2802, %v7678, 0
      %v8172 = vsel %vm2802, %v7679, 0
      %8174 = vmatprep.subr.mxu0 0.0
      %8175 = vmatpush1.msra.mxu0 %v6814
      %8176 = vmatprep.subr.mxu0 0.0
      %8177 = vmatpush1.msra.mxu0 %v6815
      %8178 = vmatprep.subr.mxu0 0.0
      %8179 = vmatpush1.msra.mxu0 0.0
      %8180 = vmatprep.subr.mxu0 0.0
      %8181 = vmatpush1.msra.mxu0 0.0
      %8182 = vmatprep.subr.mxu0 0.0
      %8183 = vmatpush1.msra.mxu0 0.0
      %8184 = vmatprep.subr.mxu0 0.0
      %8185 = vmatpush1.msra.mxu0 0.0
      %8186 = vmatprep.subr.mxu0 0.0
      %8187 = vmatpush1.msra.mxu0 0.0
      %8188 = vmatprep.subr.mxu0 0.0
      %8189 = vmatpush1.msra.mxu0 0.0
      %8190 = vmatprep.subr.mxu0 0.0
      %8191 = vmatpush1.msra.mxu0 0.0
      %8192 = vmatprep.subr.mxu0 0.0
      %8193 = vmatpush1.msra.mxu0 0.0
      %8194 = vmatprep.subr.mxu0 0.0
      %8195 = vmatpush1.msra.mxu0 0.0
      %8196 = vmatprep.subr.mxu0 0.0
      %8197 = vmatpush1.msra.mxu0 0.0
      %8198 = vmatprep.subr.mxu0 0.0
      %8199 = vmatpush1.msra.mxu0 0.0
      %8200 = vmatprep.subr.mxu0 0.0
      %8201 = vmatpush1.msra.mxu0 0.0
      %8202 = vmatprep.subr.mxu0 0.0
      %8203 = vmatpush1.msra.mxu0 0.0
      %8204 = vmatprep.subr.mxu0 0.0
      %8205 = vmatpush1.msra.mxu0 0.0
      %8206 = vmatprep.subr.mxu0 0.0
      %8207 = vmatpush1.msra.mxu0 0.0
      %8208 = vmatprep.subr.mxu0 0.0
      %8209 = vmatpush1.msra.mxu0 0.0
      %8210 = vmatprep.subr.mxu0 0.0
      %8211 = vmatpush1.msra.mxu0 0.0
      %8212 = vmatprep.subr.mxu0 0.0
      %8213 = vmatpush1.msra.mxu0 0.0
      %8214 = vmatprep.subr.mxu0 0.0
      %8215 = vmatpush1.msra.mxu0 0.0
      %8216 = vmatprep.subr.mxu0 0.0
      %8217 = vmatpush1.msra.mxu0 0.0
      %8218 = vmatprep.subr.mxu0 0.0
      %8219 = vmatpush1.msra.mxu0 0.0
      %8220 = vmatprep.subr.mxu0 0.0
      %8221 = vmatpush1.msra.mxu0 0.0
      %8222 = vmatprep.subr.mxu0 0.0
      %8223 = vmatpush1.msra.mxu0 0.0
      %8224 = vmatprep.subr.mxu0 0.0
      %8225 = vmatpush1.msra.mxu0 0.0
      %8226 = vmatprep.subr.mxu0 0.0
      %8227 = vmatpush1.msra.mxu0 0.0
      %8228 = vmatprep.subr.mxu0 0.0
      %8229 = vmatpush1.msra.mxu0 0.0
      %8230 = vmatprep.subr.mxu0 0.0
      %8231 = vmatpush1.msra.mxu0 0.0
      %8232 = vmatprep.subr.mxu0 0.0
      %8233 = vmatpush1.msra.mxu0 0.0
      %8234 = vmatprep.subr.mxu0 0.0
      %8235 = vmatpush1.msra.mxu0 0.0
      %8236 = vmatprep.subr.mxu0 0.0
      %8237 = vmatpush1.msra.mxu0 0.0
      %8238 = vmatprep.mubr.f32.mxu0 0.0
      %8239 = vmatmul.mubr.f32.gmra.mrb[0].mxu0 %v8169
      %v8240 = vpop.f32.mrb[0].mxu0
      %v8241 = vadd.f32 0.0, %v8240
      %v8242 = vpop.f32.mrb[0].mxu0
      %8243 = vmatprep.mubr.f32.mxu0 0.0
      %8244 = vmatmul.mubr.f32.gmra.mrb[0].mxu0 %v8172
      %v8245 = vpop.f32.mrb[0].mxu0
      %v8246 = vadd.f32 0.0, %v8245
      %v8247 = vpop.f32.mrb[0].mxu0
      %8248 = vdwg.mxu0
      %v8250 = vsel %vm2802, %v7680, 0
      %v8253 = vsel %vm2802, %v7681, 0
      %8255 = vmatprep.subr.mxu0 0.0
      %8256 = vmatpush1.msra.mxu0 %v6816
      %8257 = vmatprep.subr.mxu0 0.0
      %8258 = vmatpush1.msra.mxu0 %v6817
      %8259 = vmatprep.subr.mxu0 0.0
      %8260 = vmatpush1.msra.mxu0 0.0
      %8261 = vmatprep.subr.mxu0 0.0
      %8262 = vmatpush1.msra.mxu0 0.0
      %8263 = vmatprep.subr.mxu0 0.0
      %8264 = vmatpush1.msra.mxu0 0.0
      %8265 = vmatprep.subr.mxu0 0.0
      %8266 = vmatpush1.msra.mxu0 0.0
      %8267 = vmatprep.subr.mxu0 0.0
      %8268 = vmatpush1.msra.mxu0 0.0
      %8269 = vmatprep.subr.mxu0 0.0
      %8270 = vmatpush1.msra.mxu0 0.0
      %8271 = vmatprep.subr.mxu0 0.0
      %8272 = vmatpush1.msra.mxu0 0.0
      %8273 = vmatprep.subr.mxu0 0.0
      %8274 = vmatpush1.msra.mxu0 0.0
      %8275 = vmatprep.subr.mxu0 0.0
      %8276 = vmatpush1.msra.mxu0 0.0
      %8277 = vmatprep.subr.mxu0 0.0
      %8278 = vmatpush1.msra.mxu0 0.0
      %8279 = vmatprep.subr.mxu0 0.0
      %8280 = vmatpush1.msra.mxu0 0.0
      %8281 = vmatprep.subr.mxu0 0.0
      %8282 = vmatpush1.msra.mxu0 0.0
      %8283 = vmatprep.subr.mxu0 0.0
      %8284 = vmatpush1.msra.mxu0 0.0
      %8285 = vmatprep.subr.mxu0 0.0
      %8286 = vmatpush1.msra.mxu0 0.0
      %8287 = vmatprep.subr.mxu0 0.0
      %8288 = vmatpush1.msra.mxu0 0.0
      %8289 = vmatprep.subr.mxu0 0.0
      %8290 = vmatpush1.msra.mxu0 0.0
      %8291 = vmatprep.subr.mxu0 0.0
      %8292 = vmatpush1.msra.mxu0 0.0
      %8293 = vmatprep.subr.mxu0 0.0
      %8294 = vmatpush1.msra.mxu0 0.0
      %8295 = vmatprep.subr.mxu0 0.0
      %8296 = vmatpush1.msra.mxu0 0.0
      %8297 = vmatprep.subr.mxu0 0.0
      %8298 = vmatpush1.msra.mxu0 0.0
      %8299 = vmatprep.subr.mxu0 0.0
      %8300 = vmatpush1.msra.mxu0 0.0
      %8301 = vmatprep.subr.mxu0 0.0
      %8302 = vmatpush1.msra.mxu0 0.0
      %8303 = vmatprep.subr.mxu0 0.0
      %8304 = vmatpush1.msra.mxu0 0.0
      %8305 = vmatprep.subr.mxu0 0.0
      %8306 = vmatpush1.msra.mxu0 0.0
      %8307 = vmatprep.subr.mxu0 0.0
      %8308 = vmatpush1.msra.mxu0 0.0
      %8309 = vmatprep.subr.mxu0 0.0
      %8310 = vmatpush1.msra.mxu0 0.0
      %8311 = vmatprep.subr.mxu0 0.0
      %8312 = vmatpush1.msra.mxu0 0.0
      %8313 = vmatprep.subr.mxu0 0.0
      %8314 = vmatpush1.msra.mxu0 0.0
      %8315 = vmatprep.subr.mxu0 0.0
      %8316 = vmatpush1.msra.mxu0 0.0
      %8317 = vmatprep.subr.mxu0 0.0
      %8318 = vmatpush1.msra.mxu0 0.0
      %8319 = vmatprep.mubr.f32.mxu0 0.0
      %8320 = vmatmul.mubr.f32.gmra.mrb[0].mxu0 %v8250
      %v8321 = vpop.f32.mrb[0].mxu0
      %v8322 = vadd.f32 0.0, %v8321
      %v8323 = vpop.f32.mrb[0].mxu0
      %8324 = vmatprep.mubr.f32.mxu0 0.0
      %8325 = vmatmul.mubr.f32.gmra.mrb[0].mxu0 %v8253
      %v8326 = vpop.f32.mrb[0].mxu0
      %v8327 = vadd.f32 0.0, %v8326
      %v8328 = vpop.f32.mrb[0].mxu0
      %8329 = vdwg.mxu0
      %v8330 = vadd.f32 %v6765, %v7755
      %v8331 = vadd.f32 %v6766, %v7760
      %v8332 = vadd.f32 %v6767, %v7836
      %v8333 = vadd.f32 %v6768, %v7841
      %v8334 = vadd.f32 %v6769, %v7917
      %v8335 = vadd.f32 %v6770, %v7922
      %v8336 = vadd.f32 %v6771, %v7998
      %v8337 = vadd.f32 %v6772, %v8003
      %v8338 = vadd.f32 %v6773, %v8079
      %v8339 = vadd.f32 %v6774, %v8084
      %v8340 = vadd.f32 %v6775, %v8160
      %v8341 = vadd.f32 %v6776, %v8165
      %v8342 = vadd.f32 %v6777, %v8241
      %v8343 = vadd.f32 %v6778, %v8246
      %v8344 = vadd.f32 %v6779, %v8322
      %v8345 = vadd.f32 %v6780, %v8327
      %s8346 = scalar_lea.vmem %s5, 96
      %v8347 = vld [vmem:[%s8346] sm:$0xff]
      %v8348 = vld [vmem:[%s8346 + $0x8] sm:$0xff]
      %v8349 = vld [vmem:[%s8346 + $0x10] sm:$0xff]
      %v8350 = vld [vmem:[%s8346 + $0x18] sm:$0xff]
      %v8351 = vlaneseq
      %v8352 = vshrl.u32 %v8351, 7
      %v8353 = vsub.s32 1, %v8352
      %v8354 = vrot.slane %v547, %v8353
      %v8356 = vsel %vm553, %v8330, 0
      %v8359 = vsel %vm553, %v8331, 0
      %v8362 = vsel %vm553, %v8332, 0
      %v8365 = vsel %vm553, %v8333, 0
      %v8368 = vsel %vm553, %v8334, 0
      %v8371 = vsel %vm553, %v8335, 0
      %v8374 = vsel %vm553, %v8336, 0
      %v8377 = vsel %vm553, %v8337, 0
      %v8380 = vsel %vm553, %v8338, 0
      %v8383 = vsel %vm553, %v8339, 0
      %v8386 = vsel %vm553, %v8340, 0
      %v8389 = vsel %vm553, %v8341, 0
      %v8392 = vsel %vm553, %v8342, 0
      %v8395 = vsel %vm553, %v8343, 0
      %v8398 = vsel %vm553, %v8344, 0
      %v8401 = vsel %vm553, %v8345, 0
      %8403 = vmatprep.subr.mxu0 0.0
      %8404 = vmatpush1.msra.mxu0 %v8347
      %8405 = vmatprep.subr.mxu0 0.0
      %8406 = vmatpush1.msra.mxu0 %v8348
      %8407 = vmatprep.subr.mxu0 0.0
      %8408 = vmatpush1.msra.mxu0 %v8349
      %8409 = vmatprep.subr.mxu0 0.0
      %8410 = vmatpush1.msra.mxu0 %v8350
      %8411 = vmatprep.subr.mxu0 0.0
      %8412 = vmatpush1.msra.mxu0 0.0
      %8413 = vmatprep.subr.mxu0 0.0
      %8414 = vmatpush1.msra.mxu0 0.0
      %8415 = vmatprep.subr.mxu0 0.0
      %8416 = vmatpush1.msra.mxu0 0.0
      %8417 = vmatprep.subr.mxu0 0.0
      %8418 = vmatpush1.msra.mxu0 0.0
      %8419 = vmatprep.subr.mxu0 0.0
      %8420 = vmatpush1.msra.mxu0 0.0
      %8421 = vmatprep.subr.mxu0 0.0
      %8422 = vmatpush1.msra.mxu0 0.0
      %8423 = vmatprep.subr.mxu0 0.0
      %8424 = vmatpush1.msra.mxu0 0.0
      %8425 = vmatprep.subr.mxu0 0.0
      %8426 = vmatpush1.msra.mxu0 0.0
      %8427 = vmatprep.subr.mxu0 0.0
      %8428 = vmatpush1.msra.mxu0 0.0
      %8429 = vmatprep.subr.mxu0 0.0
      %8430 = vmatpush1.msra.mxu0 0.0
      %8431 = vmatprep.subr.mxu0 0.0
      %8432 = vmatpush1.msra.mxu0 0.0
      %8433 = vmatprep.subr.mxu0 0.0
      %8434 = vmatpush1.msra.mxu0 0.0
      %8435 = vmatprep.subr.mxu0 0.0
      %8436 = vmatpush1.msra.mxu0 0.0
      %8437 = vmatprep.subr.mxu0 0.0
      %8438 = vmatpush1.msra.mxu0 0.0
      %8439 = vmatprep.subr.mxu0 0.0
      %8440 = vmatpush1.msra.mxu0 0.0
      %8441 = vmatprep.subr.mxu0 0.0
      %8442 = vmatpush1.msra.mxu0 0.0
      %8443 = vmatprep.subr.mxu0 0.0
      %8444 = vmatpush1.msra.mxu0 0.0
      %8445 = vmatprep.subr.mxu0 0.0
      %8446 = vmatpush1.msra.mxu0 0.0
      %8447 = vmatprep.subr.mxu0 0.0
      %8448 = vmatpush1.msra.mxu0 0.0
      %8449 = vmatprep.subr.mxu0 0.0
      %8450 = vmatpush1.msra.mxu0 0.0
      %8451 = vmatprep.subr.mxu0 0.0
      %8452 = vmatpush1.msra.mxu0 0.0
      %8453 = vmatprep.subr.mxu0 0.0
      %8454 = vmatpush1.msra.mxu0 0.0
      %8455 = vmatprep.subr.mxu0 0.0
      %8456 = vmatpush1.msra.mxu0 0.0
      %8457 = vmatprep.subr.mxu0 0.0
      %8458 = vmatpush1.msra.mxu0 0.0
      %8459 = vmatprep.subr.mxu0 0.0
      %8460 = vmatpush1.msra.mxu0 0.0
      %8461 = vmatprep.subr.mxu0 0.0
      %8462 = vmatpush1.msra.mxu0 0.0
      %8463 = vmatprep.subr.mxu0 0.0
      %8464 = vmatpush1.msra.mxu0 0.0
      %8465 = vmatprep.subr.mxu0 0.0
      %8466 = vmatpush1.msra.mxu0 0.0
      %8467 = vmatprep.mubr.f32.mxu0 0.0
      %8468 = vmatmul.mubr.f32.gmra.mrb[0].mxu0 %v8356
      %v8469 = vpop.f32.mrb[0].mxu0
      %v8470 = vadd.f32 %v8354, %v8469
      %v8471 = vpop.f32.mrb[0].mxu0
      %8472 = vmatprep.mubr.f32.mxu0 0.0
      %8473 = vmatmul.mubr.f32.gmra.mrb[0].mxu0 %v8359
      %v8474 = vpop.f32.mrb[0].mxu0
      %v8475 = vadd.f32 %v8354, %v8474
      %v8476 = vpop.f32.mrb[0].mxu0
      %8477 = vmatprep.mubr.f32.mxu0 0.0
      %8478 = vmatmul.mubr.f32.gmra.mrb[0].mxu0 %v8362
      %v8479 = vpop.f32.mrb[0].mxu0
      %v8480 = vadd.f32 %v8354, %v8479
      %v8481 = vpop.f32.mrb[0].mxu0
      %8482 = vmatprep.mubr.f32.mxu0 0.0
      %8483 = vmatmul.mubr.f32.gmra.mrb[0].mxu0 %v8365
      %v8484 = vpop.f32.mrb[0].mxu0
      %v8485 = vadd.f32 %v8354, %v8484
      %v8486 = vpop.f32.mrb[0].mxu0
      %8487 = vmatprep.mubr.f32.mxu0 0.0
      %8488 = vmatmul.mubr.f32.gmra.mrb[0].mxu0 %v8368
      %v8489 = vpop.f32.mrb[0].mxu0
      %v8490 = vadd.f32 %v8354, %v8489
      %v8491 = vpop.f32.mrb[0].mxu0
      %8492 = vmatprep.mubr.f32.mxu0 0.0
      %8493 = vmatmul.mubr.f32.gmra.mrb[0].mxu0 %v8371
      %v8494 = vpop.f32.mrb[0].mxu0
      %v8495 = vadd.f32 %v8354, %v8494
      %v8496 = vpop.f32.mrb[0].mxu0
      %8497 = vmatprep.mubr.f32.mxu0 0.0
      %8498 = vmatmul.mubr.f32.gmra.mrb[0].mxu0 %v8374
      %v8499 = vpop.f32.mrb[0].mxu0
      %v8500 = vadd.f32 %v8354, %v8499
      %v8501 = vpop.f32.mrb[0].mxu0
      %8502 = vmatprep.mubr.f32.mxu0 0.0
      %8503 = vmatmul.mubr.f32.gmra.mrb[0].mxu0 %v8377
      %v8504 = vpop.f32.mrb[0].mxu0
      %v8505 = vadd.f32 %v8354, %v8504
      %v8506 = vpop.f32.mrb[0].mxu0
      %8507 = vmatprep.mubr.f32.mxu0 0.0
      %8508 = vmatmul.mubr.f32.gmra.mrb[0].mxu0 %v8380
      %v8509 = vpop.f32.mrb[0].mxu0
      %v8510 = vadd.f32 %v8354, %v8509
      %v8511 = vpop.f32.mrb[0].mxu0
      %8512 = vmatprep.mubr.f32.mxu0 0.0
      %8513 = vmatmul.mubr.f32.gmra.mrb[0].mxu0 %v8383
      %v8514 = vpop.f32.mrb[0].mxu0
      %v8515 = vadd.f32 %v8354, %v8514
      %v8516 = vpop.f32.mrb[0].mxu0
      %8517 = vmatprep.mubr.f32.mxu0 0.0
      %8518 = vmatmul.mubr.f32.gmra.mrb[0].mxu0 %v8386
      %v8519 = vpop.f32.mrb[0].mxu0
      %v8520 = vadd.f32 %v8354, %v8519
      %v8521 = vpop.f32.mrb[0].mxu0
      %8522 = vmatprep.mubr.f32.mxu0 0.0
      %8523 = vmatmul.mubr.f32.gmra.mrb[0].mxu0 %v8389
      %v8524 = vpop.f32.mrb[0].mxu0
      %v8525 = vadd.f32 %v8354, %v8524
      %v8526 = vpop.f32.mrb[0].mxu0
      %8527 = vmatprep.mubr.f32.mxu0 0.0
      %8528 = vmatmul.mubr.f32.gmra.mrb[0].mxu0 %v8392
      %v8529 = vpop.f32.mrb[0].mxu0
      %v8530 = vadd.f32 %v8354, %v8529
      %v8531 = vpop.f32.mrb[0].mxu0
      %8532 = vmatprep.mubr.f32.mxu0 0.0
      %8533 = vmatmul.mubr.f32.gmra.mrb[0].mxu0 %v8395
      %v8534 = vpop.f32.mrb[0].mxu0
      %v8535 = vadd.f32 %v8354, %v8534
      %v8536 = vpop.f32.mrb[0].mxu0
      %8537 = vmatprep.mubr.f32.mxu0 0.0
      %8538 = vmatmul.mubr.f32.gmra.mrb[0].mxu0 %v8398
      %v8539 = vpop.f32.mrb[0].mxu0
      %v8540 = vadd.f32 %v8354, %v8539
      %v8541 = vpop.f32.mrb[0].mxu0
      %8542 = vmatprep.mubr.f32.mxu0 0.0
      %8543 = vmatmul.mubr.f32.gmra.mrb[0].mxu0 %v8401
      %v8544 = vpop.f32.mrb[0].mxu0
      %v8545 = vadd.f32 %v8354, %v8544
      %v8546 = vpop.f32.mrb[0].mxu0
      %8547 = vdwg.mxu0
      %v8548 = vadd.f32 %v8470, %v1458
      %v8549 = vadd.f32 %v8475, %v1459
      %v8550 = vadd.f32 %v8480, %v1460
      %v8551 = vadd.f32 %v8485, %v1461
      %v8552 = vadd.f32 %v8490, %v1462
      %v8553 = vadd.f32 %v8495, %v1463
      %v8554 = vadd.f32 %v8500, %v1464
      %v8555 = vadd.f32 %v8505, %v1465
      %v8556 = vadd.f32 %v8510, %v1466
      %v8557 = vadd.f32 %v8515, %v1467
      %v8558 = vadd.f32 %v8520, %v1468
      %v8559 = vadd.f32 %v8525, %v1469
      %v8560 = vadd.f32 %v8530, %v1470
      %v8561 = vadd.f32 %v8535, %v1471
      %v8562 = vadd.f32 %v8540, %v1472
      %v8563 = vadd.f32 %v8545, %v1473
      %v8564 = vsel %vm553, %v8548, 0.0
      %8565 = vadd.xlane.f32.xlu0 %v8564
      %v8566 = vpop.xlane.xlu0 %8565
      %v8567 = vsel %vm553, %v8549, 0.0
      %8568 = vadd.xlane.f32.xlu0 %v8567
      %v8569 = vpop.xlane.xlu0 %8568
      %v8570 = vsel %vm553, %v8550, 0.0
      %8571 = vadd.xlane.f32.xlu0 %v8570
      %v8572 = vpop.xlane.xlu0 %8571
      %v8573 = vsel %vm553, %v8551, 0.0
      %8574 = vadd.xlane.f32.xlu0 %v8573
      %v8575 = vpop.xlane.xlu0 %8574
      %v8576 = vsel %vm553, %v8552, 0.0
      %8577 = vadd.xlane.f32.xlu0 %v8576
      %v8578 = vpop.xlane.xlu0 %8577
      %v8579 = vsel %vm553, %v8553, 0.0
      %8580 = vadd.xlane.f32.xlu0 %v8579
      %v8581 = vpop.xlane.xlu0 %8580
      %v8582 = vsel %vm553, %v8554, 0.0
      %8583 = vadd.xlane.f32.xlu0 %v8582
      %v8584 = vpop.xlane.xlu0 %8583
      %v8585 = vsel %vm553, %v8555, 0.0
      %8586 = vadd.xlane.f32.xlu0 %v8585
      %v8587 = vpop.xlane.xlu0 %8586
      %v8588 = vsel %vm553, %v8556, 0.0
      %8589 = vadd.xlane.f32.xlu0 %v8588
      %v8590 = vpop.xlane.xlu0 %8589
      %v8591 = vsel %vm553, %v8557, 0.0
      %8592 = vadd.xlane.f32.xlu0 %v8591
      %v8593 = vpop.xlane.xlu0 %8592
      %v8594 = vsel %vm553, %v8558, 0.0
      %8595 = vadd.xlane.f32.xlu0 %v8594
      %v8596 = vpop.xlane.xlu0 %8595
      %v8597 = vsel %vm553, %v8559, 0.0
      %8598 = vadd.xlane.f32.xlu0 %v8597
      %v8599 = vpop.xlane.xlu0 %8598
      %v8600 = vsel %vm553, %v8560, 0.0
      %8601 = vadd.xlane.f32.xlu0 %v8600
      %v8602 = vpop.xlane.xlu0 %8601
      %v8603 = vsel %vm553, %v8561, 0.0
      %8604 = vadd.xlane.f32.xlu0 %v8603
      %v8605 = vpop.xlane.xlu0 %8604
      %v8606 = vsel %vm553, %v8562, 0.0
      %8607 = vadd.xlane.f32.xlu0 %v8606
      %v8608 = vpop.xlane.xlu0 %8607
      %v8609 = vsel %vm553, %v8563, 0.0
      %8610 = vadd.xlane.f32.xlu0 %v8609
      %v8611 = vpop.xlane.xlu0 %8610
      %v8612 = vrcp.pop 32.0
      %v8613 = vmul.f32 %v8566, %v8612
      %v8614 = vmul.f32 %v8569, %v8612
      %v8615 = vmul.f32 %v8572, %v8612
      %v8616 = vmul.f32 %v8575, %v8612
      %v8617 = vmul.f32 %v8578, %v8612
      %v8618 = vmul.f32 %v8581, %v8612
      %v8619 = vmul.f32 %v8584, %v8612
      %v8620 = vmul.f32 %v8587, %v8612
      %v8621 = vmul.f32 %v8590, %v8612
      %v8622 = vmul.f32 %v8593, %v8612
      %v8623 = vmul.f32 %v8596, %v8612
      %v8624 = vmul.f32 %v8599, %v8612
      %v8625 = vmul.f32 %v8602, %v8612
      %v8626 = vmul.f32 %v8605, %v8612
      %v8627 = vmul.f32 %v8608, %v8612
      %v8628 = vmul.f32 %v8611, %v8612
      %v8629 = vsub.f32 %v8548, %v8613
      %v8630 = vsub.f32 %v8549, %v8614
      %v8631 = vsub.f32 %v8550, %v8615
      %v8632 = vsub.f32 %v8551, %v8616
      %v8633 = vsub.f32 %v8552, %v8617
      %v8634 = vsub.f32 %v8553, %v8618
      %v8635 = vsub.f32 %v8554, %v8619
      %v8636 = vsub.f32 %v8555, %v8620
      %v8637 = vsub.f32 %v8556, %v8621
      %v8638 = vsub.f32 %v8557, %v8622
      %v8639 = vsub.f32 %v8558, %v8623
      %v8640 = vsub.f32 %v8559, %v8624
      %v8641 = vsub.f32 %v8560, %v8625
      %v8642 = vsub.f32 %v8561, %v8626
      %v8643 = vsub.f32 %v8562, %v8627
      %v8644 = vsub.f32 %v8563, %v8628
      %v8645 = vmul.f32 %v8629, %v8629
      %v8646 = vmul.f32 %v8630, %v8630
      %v8647 = vmul.f32 %v8631, %v8631
      %v8648 = vmul.f32 %v8632, %v8632
      %v8649 = vmul.f32 %v8633, %v8633
      %v8650 = vmul.f32 %v8634, %v8634
      %v8651 = vmul.f32 %v8635, %v8635
      %v8652 = vmul.f32 %v8636, %v8636
      %v8653 = vmul.f32 %v8637, %v8637
      %v8654 = vmul.f32 %v8638, %v8638
      %v8655 = vmul.f32 %v8639, %v8639
      %v8656 = vmul.f32 %v8640, %v8640
      %v8657 = vmul.f32 %v8641, %v8641
      %v8658 = vmul.f32 %v8642, %v8642
      %v8659 = vmul.f32 %v8643, %v8643
      %v8660 = vmul.f32 %v8644, %v8644
      %v8661 = vsel %vm553, %v8645, 0.0
      %8662 = vadd.xlane.f32.xlu0 %v8661
      %v8663 = vpop.xlane.xlu0 %8662
      %v8664 = vsel %vm553, %v8646, 0.0
      %8665 = vadd.xlane.f32.xlu0 %v8664
      %v8666 = vpop.xlane.xlu0 %8665
      %v8667 = vsel %vm553, %v8647, 0.0
      %8668 = vadd.xlane.f32.xlu0 %v8667
      %v8669 = vpop.xlane.xlu0 %8668
      %v8670 = vsel %vm553, %v8648, 0.0
      %8671 = vadd.xlane.f32.xlu0 %v8670
      %v8672 = vpop.xlane.xlu0 %8671
      %v8673 = vsel %vm553, %v8649, 0.0
      %8674 = vadd.xlane.f32.xlu0 %v8673
      %v8675 = vpop.xlane.xlu0 %8674
      %v8676 = vsel %vm553, %v8650, 0.0
      %8677 = vadd.xlane.f32.xlu0 %v8676
      %v8678 = vpop.xlane.xlu0 %8677
      %v8679 = vsel %vm553, %v8651, 0.0
      %8680 = vadd.xlane.f32.xlu0 %v8679
      %v8681 = vpop.xlane.xlu0 %8680
      %v8682 = vsel %vm553, %v8652, 0.0
      %8683 = vadd.xlane.f32.xlu0 %v8682
      %v8684 = vpop.xlane.xlu0 %8683
      %v8685 = vsel %vm553, %v8653, 0.0
      %8686 = vadd.xlane.f32.xlu0 %v8685
      %v8687 = vpop.xlane.xlu0 %8686
      %v8688 = vsel %vm553, %v8654, 0.0
      %8689 = vadd.xlane.f32.xlu0 %v8688
      %v8690 = vpop.xlane.xlu0 %8689
      %v8691 = vsel %vm553, %v8655, 0.0
      %8692 = vadd.xlane.f32.xlu0 %v8691
      %v8693 = vpop.xlane.xlu0 %8692
      %v8694 = vsel %vm553, %v8656, 0.0
      %8695 = vadd.xlane.f32.xlu0 %v8694
      %v8696 = vpop.xlane.xlu0 %8695
      %v8697 = vsel %vm553, %v8657, 0.0
      %8698 = vadd.xlane.f32.xlu0 %v8697
      %v8699 = vpop.xlane.xlu0 %8698
      %v8700 = vsel %vm553, %v8658, 0.0
      %8701 = vadd.xlane.f32.xlu0 %v8700
      %v8702 = vpop.xlane.xlu0 %8701
      %v8703 = vsel %vm553, %v8659, 0.0
      %8704 = vadd.xlane.f32.xlu0 %v8703
      %v8705 = vpop.xlane.xlu0 %8704
      %v8706 = vsel %vm553, %v8660, 0.0
      %8707 = vadd.xlane.f32.xlu0 %v8706
      %v8708 = vpop.xlane.xlu0 %8707
      %v8709 = vmul.f32 %v8663, %v8612
      %v8710 = vmul.f32 %v8666, %v8612
      %v8711 = vmul.f32 %v8669, %v8612
      %v8712 = vmul.f32 %v8672, %v8612
      %v8713 = vmul.f32 %v8675, %v8612
      %v8714 = vmul.f32 %v8678, %v8612
      %v8715 = vmul.f32 %v8681, %v8612
      %v8716 = vmul.f32 %v8684, %v8612
      %v8717 = vmul.f32 %v8687, %v8612
      %v8718 = vmul.f32 %v8690, %v8612
      %v8719 = vmul.f32 %v8693, %v8612
      %v8720 = vmul.f32 %v8696, %v8612
      %v8721 = vmul.f32 %v8699, %v8612
      %v8722 = vmul.f32 %v8702, %v8612
      %v8723 = vmul.f32 %v8705, %v8612
      %v8724 = vmul.f32 %v8708, %v8612
      %v8725 = vadd.f32 %v8709, 1e-05
      %v8726 = vadd.f32 %v8710, 1e-05
      %v8727 = vadd.f32 %v8711, 1e-05
      %v8728 = vadd.f32 %v8712, 1e-05
      %v8729 = vadd.f32 %v8713, 1e-05
      %v8730 = vadd.f32 %v8714, 1e-05
      %v8731 = vadd.f32 %v8715, 1e-05
      %v8732 = vadd.f32 %v8716, 1e-05
      %v8733 = vadd.f32 %v8717, 1e-05
      %v8734 = vadd.f32 %v8718, 1e-05
      %v8735 = vadd.f32 %v8719, 1e-05
      %v8736 = vadd.f32 %v8720, 1e-05
      %v8737 = vadd.f32 %v8721, 1e-05
      %v8738 = vadd.f32 %v8722, 1e-05
      %v8739 = vadd.f32 %v8723, 1e-05
      %v8740 = vadd.f32 %v8724, 1e-05
      %v8741 = vrsqrt.pop %v8725
      %v8742 = vrsqrt.pop %v8726
      %v8743 = vrsqrt.pop %v8727
      %v8744 = vrsqrt.pop %v8728
      %v8745 = vrsqrt.pop %v8729
      %v8746 = vrsqrt.pop %v8730
      %v8747 = vrsqrt.pop %v8731
      %v8748 = vrsqrt.pop %v8732
      %v8749 = vrsqrt.pop %v8733
      %v8750 = vrsqrt.pop %v8734
      %v8751 = vrsqrt.pop %v8735
      %v8752 = vrsqrt.pop %v8736
      %v8753 = vrsqrt.pop %v8737
      %v8754 = vrsqrt.pop %v8738
      %v8755 = vrsqrt.pop %v8739
      %v8756 = vrsqrt.pop %v8740
      %v8757 = vmul.f32 %v8629, %v8741
      %v8758 = vmul.f32 %v8630, %v8742
      %v8759 = vmul.f32 %v8631, %v8743
      %v8760 = vmul.f32 %v8632, %v8744
      %v8761 = vmul.f32 %v8633, %v8745
      %v8762 = vmul.f32 %v8634, %v8746
      %v8763 = vmul.f32 %v8635, %v8747
      %v8764 = vmul.f32 %v8636, %v8748
      %v8765 = vmul.f32 %v8637, %v8749
      %v8766 = vmul.f32 %v8638, %v8750
      %v8767 = vmul.f32 %v8639, %v8751
      %v8768 = vmul.f32 %v8640, %v8752
      %v8769 = vmul.f32 %v8641, %v8753
      %v8770 = vmul.f32 %v8642, %v8754
      %v8771 = vmul.f32 %v8643, %v8755
      %v8772 = vmul.f32 %v8644, %v8756
      %v8773 = vlaneseq
      %v8774 = vshrl.u32 %v8773, 7
      %v8775 = vsub.s32 2, %v8774
      %v8776 = vrot.slane %v547, %v8775
      %v8777 = vmul.f32 %v8757, %v8776
      %v8778 = vmul.f32 %v8758, %v8776
      %v8779 = vmul.f32 %v8759, %v8776
      %v8780 = vmul.f32 %v8760, %v8776
      %v8781 = vmul.f32 %v8761, %v8776
      %v8782 = vmul.f32 %v8762, %v8776
      %v8783 = vmul.f32 %v8763, %v8776
      %v8784 = vmul.f32 %v8764, %v8776
      %v8785 = vmul.f32 %v8765, %v8776
      %v8786 = vmul.f32 %v8766, %v8776
      %v8787 = vmul.f32 %v8767, %v8776
      %v8788 = vmul.f32 %v8768, %v8776
      %v8789 = vmul.f32 %v8769, %v8776
      %v8790 = vmul.f32 %v8770, %v8776
      %v8791 = vmul.f32 %v8771, %v8776
      %v8792 = vmul.f32 %v8772, %v8776
      %v8793 = vlaneseq
      %v8794 = vshrl.u32 %v8793, 7
      %v8795 = vsub.s32 3, %v8794
      %v8796 = vrot.slane %v547, %v8795
      %v8797 = vadd.f32 %v8777, %v8796
      %v8798 = vadd.f32 %v8778, %v8796
      %v8799 = vadd.f32 %v8779, %v8796
      %v8800 = vadd.f32 %v8780, %v8796
      %v8801 = vadd.f32 %v8781, %v8796
      %v8802 = vadd.f32 %v8782, %v8796
      %v8803 = vadd.f32 %v8783, %v8796
      %v8804 = vadd.f32 %v8784, %v8796
      %v8805 = vadd.f32 %v8785, %v8796
      %v8806 = vadd.f32 %v8786, %v8796
      %v8807 = vadd.f32 %v8787, %v8796
      %v8808 = vadd.f32 %v8788, %v8796
      %v8809 = vadd.f32 %v8789, %v8796
      %v8810 = vadd.f32 %v8790, %v8796
      %v8811 = vadd.f32 %v8791, %v8796
      %v8812 = vadd.f32 %v8792, %v8796
      %v8813 = vld [vmem:[%s8] sm:$0xff]
      %v8814 = vld [vmem:[%s8 + $0x8] sm:$0xff]
      %v8815 = vld [vmem:[%s8 + $0x10] sm:$0xff]
      %v8816 = vld [vmem:[%s8 + $0x18] sm:$0xff]
      %v8817 = vld [vmem:[%s12] sm:$0x1]
      %v8819 = vlaneseq
      %v8820 = vshrl.u32 %v8819, 7
      %v8821 = vsub.s32 0, %v8820
      %v8822 = vrot.slane %v8817, %v8821
      %v8825 = vsel %vm553, %v8797, 0
      %v8828 = vsel %vm553, %v8798, 0
      %v8831 = vsel %vm553, %v8799, 0
      %v8834 = vsel %vm553, %v8800, 0
      %v8837 = vsel %vm553, %v8801, 0
      %v8840 = vsel %vm553, %v8802, 0
      %v8843 = vsel %vm553, %v8803, 0
      %v8846 = vsel %vm553, %v8804, 0
      %v8849 = vsel %vm553, %v8805, 0
      %v8852 = vsel %vm553, %v8806, 0
      %v8855 = vsel %vm553, %v8807, 0
      %v8858 = vsel %vm553, %v8808, 0
      %v8861 = vsel %vm553, %v8809, 0
      %v8864 = vsel %vm553, %v8810, 0
      %v8867 = vsel %vm553, %v8811, 0
      %v8870 = vsel %vm553, %v8812, 0
      %8872 = vmatprep.subr.mxu0 0.0
      %8873 = vmatpush1.msra.mxu0 %v8813
      %8874 = vmatprep.subr.mxu0 0.0
      %8875 = vmatpush1.msra.mxu0 %v8814
      %8876 = vmatprep.subr.mxu0 0.0
      %8877 = vmatpush1.msra.mxu0 %v8815
      %8878 = vmatprep.subr.mxu0 0.0
      %8879 = vmatpush1.msra.mxu0 %v8816
      %8880 = vmatprep.subr.mxu0 0.0
      %8881 = vmatpush1.msra.mxu0 0.0
      %8882 = vmatprep.subr.mxu0 0.0
      %8883 = vmatpush1.msra.mxu0 0.0
      %8884 = vmatprep.subr.mxu0 0.0
      %8885 = vmatpush1.msra.mxu0 0.0
      %8886 = vmatprep.subr.mxu0 0.0
      %8887 = vmatpush1.msra.mxu0 0.0
      %8888 = vmatprep.subr.mxu0 0.0
      %8889 = vmatpush1.msra.mxu0 0.0
      %8890 = vmatprep.subr.mxu0 0.0
      %8891 = vmatpush1.msra.mxu0 0.0
      %8892 = vmatprep.subr.mxu0 0.0
      %8893 = vmatpush1.msra.mxu0 0.0
      %8894 = vmatprep.subr.mxu0 0.0
      %8895 = vmatpush1.msra.mxu0 0.0
      %8896 = vmatprep.subr.mxu0 0.0
      %8897 = vmatpush1.msra.mxu0 0.0
      %8898 = vmatprep.subr.mxu0 0.0
      %8899 = vmatpush1.msra.mxu0 0.0
      %8900 = vmatprep.subr.mxu0 0.0
      %8901 = vmatpush1.msra.mxu0 0.0
      %8902 = vmatprep.subr.mxu0 0.0
      %8903 = vmatpush1.msra.mxu0 0.0
      %8904 = vmatprep.subr.mxu0 0.0
      %8905 = vmatpush1.msra.mxu0 0.0
      %8906 = vmatprep.subr.mxu0 0.0
      %8907 = vmatpush1.msra.mxu0 0.0
      %8908 = vmatprep.subr.mxu0 0.0
      %8909 = vmatpush1.msra.mxu0 0.0
      %8910 = vmatprep.subr.mxu0 0.0
      %8911 = vmatpush1.msra.mxu0 0.0
      %8912 = vmatprep.subr.mxu0 0.0
      %8913 = vmatpush1.msra.mxu0 0.0
      %8914 = vmatprep.subr.mxu0 0.0
      %8915 = vmatpush1.msra.mxu0 0.0
      %8916 = vmatprep.subr.mxu0 0.0
      %8917 = vmatpush1.msra.mxu0 0.0
      %8918 = vmatprep.subr.mxu0 0.0
      %8919 = vmatpush1.msra.mxu0 0.0
      %8920 = vmatprep.subr.mxu0 0.0
      %8921 = vmatpush1.msra.mxu0 0.0
      %8922 = vmatprep.subr.mxu0 0.0
      %8923 = vmatpush1.msra.mxu0 0.0
      %8924 = vmatprep.subr.mxu0 0.0
      %8925 = vmatpush1.msra.mxu0 0.0
      %8926 = vmatprep.subr.mxu0 0.0
      %8927 = vmatpush1.msra.mxu0 0.0
      %8928 = vmatprep.subr.mxu0 0.0
      %8929 = vmatpush1.msra.mxu0 0.0
      %8930 = vmatprep.subr.mxu0 0.0
      %8931 = vmatpush1.msra.mxu0 0.0
      %8932 = vmatprep.subr.mxu0 0.0
      %8933 = vmatpush1.msra.mxu0 0.0
      %8934 = vmatprep.subr.mxu0 0.0
      %8935 = vmatpush1.msra.mxu0 0.0
      %8936 = vmatprep.mubr.f32.mxu0 0.0
      %8937 = vmatmul.mubr.f32.gmra.mrb[0].mxu0 %v8825
      %v8938 = vpop.f32.mrb[0].mxu0
      %v8939 = vadd.f32 %v8822, %v8938
      %v8940 = vpop.f32.mrb[0].mxu0
      %8941 = vmatprep.mubr.f32.mxu0 0.0
      %8942 = vmatmul.mubr.f32.gmra.mrb[0].mxu0 %v8828
      %v8943 = vpop.f32.mrb[0].mxu0
      %v8944 = vadd.f32 %v8822, %v8943
      %v8945 = vpop.f32.mrb[0].mxu0
      %8946 = vmatprep.mubr.f32.mxu0 0.0
      %8947 = vmatmul.mubr.f32.gmra.mrb[0].mxu0 %v8831
      %v8948 = vpop.f32.mrb[0].mxu0
      %v8949 = vadd.f32 %v8822, %v8948
      %v8950 = vpop.f32.mrb[0].mxu0
      %8951 = vmatprep.mubr.f32.mxu0 0.0
      %8952 = vmatmul.mubr.f32.gmra.mrb[0].mxu0 %v8834
      %v8953 = vpop.f32.mrb[0].mxu0
      %v8954 = vadd.f32 %v8822, %v8953
      %v8955 = vpop.f32.mrb[0].mxu0
      %8956 = vmatprep.mubr.f32.mxu0 0.0
      %8957 = vmatmul.mubr.f32.gmra.mrb[0].mxu0 %v8837
      %v8958 = vpop.f32.mrb[0].mxu0
      %v8959 = vadd.f32 %v8822, %v8958
      %v8960 = vpop.f32.mrb[0].mxu0
      %8961 = vmatprep.mubr.f32.mxu0 0.0
      %8962 = vmatmul.mubr.f32.gmra.mrb[0].mxu0 %v8840
      %v8963 = vpop.f32.mrb[0].mxu0
      %v8964 = vadd.f32 %v8822, %v8963
      %v8965 = vpop.f32.mrb[0].mxu0
      %8966 = vmatprep.mubr.f32.mxu0 0.0
      %8967 = vmatmul.mubr.f32.gmra.mrb[0].mxu0 %v8843
      %v8968 = vpop.f32.mrb[0].mxu0
      %v8969 = vadd.f32 %v8822, %v8968
      %v8970 = vpop.f32.mrb[0].mxu0
      %8971 = vmatprep.mubr.f32.mxu0 0.0
      %8972 = vmatmul.mubr.f32.gmra.mrb[0].mxu0 %v8846
      %v8973 = vpop.f32.mrb[0].mxu0
      %v8974 = vadd.f32 %v8822, %v8973
      %v8975 = vpop.f32.mrb[0].mxu0
      %8976 = vmatprep.mubr.f32.mxu0 0.0
      %8977 = vmatmul.mubr.f32.gmra.mrb[0].mxu0 %v8849
      %v8978 = vpop.f32.mrb[0].mxu0
      %v8979 = vadd.f32 %v8822, %v8978
      %v8980 = vpop.f32.mrb[0].mxu0
      %8981 = vmatprep.mubr.f32.mxu0 0.0
      %8982 = vmatmul.mubr.f32.gmra.mrb[0].mxu0 %v8852
      %v8983 = vpop.f32.mrb[0].mxu0
      %v8984 = vadd.f32 %v8822, %v8983
      %v8985 = vpop.f32.mrb[0].mxu0
      %8986 = vmatprep.mubr.f32.mxu0 0.0
      %8987 = vmatmul.mubr.f32.gmra.mrb[0].mxu0 %v8855
      %v8988 = vpop.f32.mrb[0].mxu0
      %v8989 = vadd.f32 %v8822, %v8988
      %v8990 = vpop.f32.mrb[0].mxu0
      %8991 = vmatprep.mubr.f32.mxu0 0.0
      %8992 = vmatmul.mubr.f32.gmra.mrb[0].mxu0 %v8858
      %v8993 = vpop.f32.mrb[0].mxu0
      %v8994 = vadd.f32 %v8822, %v8993
      %v8995 = vpop.f32.mrb[0].mxu0
      %8996 = vmatprep.mubr.f32.mxu0 0.0
      %8997 = vmatmul.mubr.f32.gmra.mrb[0].mxu0 %v8861
      %v8998 = vpop.f32.mrb[0].mxu0
      %v8999 = vadd.f32 %v8822, %v8998
      %v9000 = vpop.f32.mrb[0].mxu0
      %9001 = vmatprep.mubr.f32.mxu0 0.0
      %9002 = vmatmul.mubr.f32.gmra.mrb[0].mxu0 %v8864
      %v9003 = vpop.f32.mrb[0].mxu0
      %v9004 = vadd.f32 %v8822, %v9003
      %v9005 = vpop.f32.mrb[0].mxu0
      %9006 = vmatprep.mubr.f32.mxu0 0.0
      %9007 = vmatmul.mubr.f32.gmra.mrb[0].mxu0 %v8867
      %v9008 = vpop.f32.mrb[0].mxu0
      %v9009 = vadd.f32 %v8822, %v9008
      %v9010 = vpop.f32.mrb[0].mxu0
      %9011 = vmatprep.mubr.f32.mxu0 0.0
      %9012 = vmatmul.mubr.f32.gmra.mrb[0].mxu0 %v8870
      %v9013 = vpop.f32.mrb[0].mxu0
      %v9014 = vadd.f32 %v8822, %v9013
      %v9015 = vpop.f32.mrb[0].mxu0
      %9016 = vdwg.mxu0
      %v9017 = vmax.f32 %v8939, 0.0
      %v9018 = vmax.f32 %v8944, 0.0
      %v9019 = vmax.f32 %v8949, 0.0
      %v9020 = vmax.f32 %v8954, 0.0
      %v9021 = vmax.f32 %v8959, 0.0
      %v9022 = vmax.f32 %v8964, 0.0
      %v9023 = vmax.f32 %v8969, 0.0
      %v9024 = vmax.f32 %v8974, 0.0
      %v9025 = vmax.f32 %v8979, 0.0
      %v9026 = vmax.f32 %v8984, 0.0
      %v9027 = vmax.f32 %v8989, 0.0
      %v9028 = vmax.f32 %v8994, 0.0
      %v9029 = vmax.f32 %v8999, 0.0
      %v9030 = vmax.f32 %v9004, 0.0
      %v9031 = vmax.f32 %v9009, 0.0
      %v9032 = vmax.f32 %v9014, 0.0
      %v9033 = vld [vmem:[%s9] sm:$0xff]
      %v9034 = vld [vmem:[%s9 + $0x8] sm:$0xff]
      %v9035 = vld [vmem:[%s9 + $0x10] sm:$0xff]
      %v9036 = vld [vmem:[%s9 + $0x18] sm:$0xff]
      %v9037 = vld [vmem:[%s9 + $0x20] sm:$0xff]
      %v9038 = vld [vmem:[%s9 + $0x28] sm:$0xff]
      %v9039 = vld [vmem:[%s9 + $0x30] sm:$0xff]
      %v9040 = vld [vmem:[%s9 + $0x38] sm:$0xff]
      %v9041 = vlaneseq
      %v9042 = vshrl.u32 %v9041, 7
      %v9043 = vsub.s32 6, %v9042
      %v9044 = vrot.slane %v547, %v9043
      %v9046 = vsel %vm923, %v9017, 0
      %v9049 = vsel %vm923, %v9018, 0
      %v9052 = vsel %vm923, %v9019, 0
      %v9055 = vsel %vm923, %v9020, 0
      %v9058 = vsel %vm923, %v9021, 0
      %v9061 = vsel %vm923, %v9022, 0
      %v9064 = vsel %vm923, %v9023, 0
      %v9067 = vsel %vm923, %v9024, 0
      %v9070 = vsel %vm923, %v9025, 0
      %v9073 = vsel %vm923, %v9026, 0
      %v9076 = vsel %vm923, %v9027, 0
      %v9079 = vsel %vm923, %v9028, 0
      %v9082 = vsel %vm923, %v9029, 0
      %v9085 = vsel %vm923, %v9030, 0
      %v9088 = vsel %vm923, %v9031, 0
      %v9091 = vsel %vm923, %v9032, 0
      %9093 = vmatprep.subr.mxu0 0.0
      %9094 = vmatpush1.msra.mxu0 %v9033
      %9095 = vmatprep.subr.mxu0 0.0
      %9096 = vmatpush1.msra.mxu0 %v9034
      %9097 = vmatprep.subr.mxu0 0.0
      %9098 = vmatpush1.msra.mxu0 %v9035
      %9099 = vmatprep.subr.mxu0 0.0
      %9100 = vmatpush1.msra.mxu0 %v9036
      %9101 = vmatprep.subr.mxu0 0.0
      %9102 = vmatpush1.msra.mxu0 %v9037
      %9103 = vmatprep.subr.mxu0 0.0
      %9104 = vmatpush1.msra.mxu0 %v9038
      %9105 = vmatprep.subr.mxu0 0.0
      %9106 = vmatpush1.msra.mxu0 %v9039
      %9107 = vmatprep.subr.mxu0 0.0
      %9108 = vmatpush1.msra.mxu0 %v9040
      %9109 = vmatprep.subr.mxu0 0.0
      %9110 = vmatpush1.msra.mxu0 0.0
      %9111 = vmatprep.subr.mxu0 0.0
      %9112 = vmatpush1.msra.mxu0 0.0
      %9113 = vmatprep.subr.mxu0 0.0
      %9114 = vmatpush1.msra.mxu0 0.0
      %9115 = vmatprep.subr.mxu0 0.0
      %9116 = vmatpush1.msra.mxu0 0.0
      %9117 = vmatprep.subr.mxu0 0.0
      %9118 = vmatpush1.msra.mxu0 0.0
      %9119 = vmatprep.subr.mxu0 0.0
      %9120 = vmatpush1.msra.mxu0 0.0
      %9121 = vmatprep.subr.mxu0 0.0
      %9122 = vmatpush1.msra.mxu0 0.0
      %9123 = vmatprep.subr.mxu0 0.0
      %9124 = vmatpush1.msra.mxu0 0.0
      %9125 = vmatprep.subr.mxu0 0.0
      %9126 = vmatpush1.msra.mxu0 0.0
      %9127 = vmatprep.subr.mxu0 0.0
      %9128 = vmatpush1.msra.mxu0 0.0
      %9129 = vmatprep.subr.mxu0 0.0
      %9130 = vmatpush1.msra.mxu0 0.0
      %9131 = vmatprep.subr.mxu0 0.0
      %9132 = vmatpush1.msra.mxu0 0.0
      %9133 = vmatprep.subr.mxu0 0.0
      %9134 = vmatpush1.msra.mxu0 0.0
      %9135 = vmatprep.subr.mxu0 0.0
      %9136 = vmatpush1.msra.mxu0 0.0
      %9137 = vmatprep.subr.mxu0 0.0
      %9138 = vmatpush1.msra.mxu0 0.0
      %9139 = vmatprep.subr.mxu0 0.0
      %9140 = vmatpush1.msra.mxu0 0.0
      %9141 = vmatprep.subr.mxu0 0.0
      %9142 = vmatpush1.msra.mxu0 0.0
      %9143 = vmatprep.subr.mxu0 0.0
      %9144 = vmatpush1.msra.mxu0 0.0
      %9145 = vmatprep.subr.mxu0 0.0
      %9146 = vmatpush1.msra.mxu0 0.0
      %9147 = vmatprep.subr.mxu0 0.0
      %9148 = vmatpush1.msra.mxu0 0.0
      %9149 = vmatprep.subr.mxu0 0.0
      %9150 = vmatpush1.msra.mxu0 0.0
      %9151 = vmatprep.subr.mxu0 0.0
      %9152 = vmatpush1.msra.mxu0 0.0
      %9153 = vmatprep.subr.mxu0 0.0
      %9154 = vmatpush1.msra.mxu0 0.0
      %9155 = vmatprep.subr.mxu0 0.0
      %9156 = vmatpush1.msra.mxu0 0.0
      %9157 = vmatprep.mubr.f32.mxu0 0.0
      %9158 = vmatmul.mubr.f32.gmra.mrb[0].mxu0 %v9046
      %v9159 = vpop.f32.mrb[0].mxu0
      %v9160 = vadd.f32 %v9044, %v9159
      %v9161 = vpop.f32.mrb[0].mxu0
      %9162 = vmatprep.mubr.f32.mxu0 0.0
      %9163 = vmatmul.mubr.f32.gmra.mrb[0].mxu0 %v9049
      %v9164 = vpop.f32.mrb[0].mxu0
      %v9165 = vadd.f32 %v9044, %v9164
      %v9166 = vpop.f32.mrb[0].mxu0
      %9167 = vmatprep.mubr.f32.mxu0 0.0
      %9168 = vmatmul.mubr.f32.gmra.mrb[0].mxu0 %v9052
      %v9169 = vpop.f32.mrb[0].mxu0
      %v9170 = vadd.f32 %v9044, %v9169
      %v9171 = vpop.f32.mrb[0].mxu0
      %9172 = vmatprep.mubr.f32.mxu0 0.0
      %9173 = vmatmul.mubr.f32.gmra.mrb[0].mxu0 %v9055
      %v9174 = vpop.f32.mrb[0].mxu0
      %v9175 = vadd.f32 %v9044, %v9174
      %v9176 = vpop.f32.mrb[0].mxu0
      %9177 = vmatprep.mubr.f32.mxu0 0.0
      %9178 = vmatmul.mubr.f32.gmra.mrb[0].mxu0 %v9058
      %v9179 = vpop.f32.mrb[0].mxu0
      %v9180 = vadd.f32 %v9044, %v9179
      %v9181 = vpop.f32.mrb[0].mxu0
      %9182 = vmatprep.mubr.f32.mxu0 0.0
      %9183 = vmatmul.mubr.f32.gmra.mrb[0].mxu0 %v9061
      %v9184 = vpop.f32.mrb[0].mxu0
      %v9185 = vadd.f32 %v9044, %v9184
      %v9186 = vpop.f32.mrb[0].mxu0
      %9187 = vmatprep.mubr.f32.mxu0 0.0
      %9188 = vmatmul.mubr.f32.gmra.mrb[0].mxu0 %v9064
      %v9189 = vpop.f32.mrb[0].mxu0
      %v9190 = vadd.f32 %v9044, %v9189
      %v9191 = vpop.f32.mrb[0].mxu0
      %9192 = vmatprep.mubr.f32.mxu0 0.0
      %9193 = vmatmul.mubr.f32.gmra.mrb[0].mxu0 %v9067
      %v9194 = vpop.f32.mrb[0].mxu0
      %v9195 = vadd.f32 %v9044, %v9194
      %v9196 = vpop.f32.mrb[0].mxu0
      %9197 = vmatprep.mubr.f32.mxu0 0.0
      %9198 = vmatmul.mubr.f32.gmra.mrb[0].mxu0 %v9070
      %v9199 = vpop.f32.mrb[0].mxu0
      %v9200 = vadd.f32 %v9044, %v9199
      %v9201 = vpop.f32.mrb[0].mxu0
      %9202 = vmatprep.mubr.f32.mxu0 0.0
      %9203 = vmatmul.mubr.f32.gmra.mrb[0].mxu0 %v9073
      %v9204 = vpop.f32.mrb[0].mxu0
      %v9205 = vadd.f32 %v9044, %v9204
      %v9206 = vpop.f32.mrb[0].mxu0
      %9207 = vmatprep.mubr.f32.mxu0 0.0
      %9208 = vmatmul.mubr.f32.gmra.mrb[0].mxu0 %v9076
      %v9209 = vpop.f32.mrb[0].mxu0
      %v9210 = vadd.f32 %v9044, %v9209
      %v9211 = vpop.f32.mrb[0].mxu0
      %9212 = vmatprep.mubr.f32.mxu0 0.0
      %9213 = vmatmul.mubr.f32.gmra.mrb[0].mxu0 %v9079
      %v9214 = vpop.f32.mrb[0].mxu0
      %v9215 = vadd.f32 %v9044, %v9214
      %v9216 = vpop.f32.mrb[0].mxu0
      %9217 = vmatprep.mubr.f32.mxu0 0.0
      %9218 = vmatmul.mubr.f32.gmra.mrb[0].mxu0 %v9082
      %v9219 = vpop.f32.mrb[0].mxu0
      %v9220 = vadd.f32 %v9044, %v9219
      %v9221 = vpop.f32.mrb[0].mxu0
      %9222 = vmatprep.mubr.f32.mxu0 0.0
      %9223 = vmatmul.mubr.f32.gmra.mrb[0].mxu0 %v9085
      %v9224 = vpop.f32.mrb[0].mxu0
      %v9225 = vadd.f32 %v9044, %v9224
      %v9226 = vpop.f32.mrb[0].mxu0
      %9227 = vmatprep.mubr.f32.mxu0 0.0
      %9228 = vmatmul.mubr.f32.gmra.mrb[0].mxu0 %v9088
      %v9229 = vpop.f32.mrb[0].mxu0
      %v9230 = vadd.f32 %v9044, %v9229
      %v9231 = vpop.f32.mrb[0].mxu0
      %9232 = vmatprep.mubr.f32.mxu0 0.0
      %9233 = vmatmul.mubr.f32.gmra.mrb[0].mxu0 %v9091
      %v9234 = vpop.f32.mrb[0].mxu0
      %v9235 = vadd.f32 %v9044, %v9234
      %v9236 = vpop.f32.mrb[0].mxu0
      %9237 = vdwg.mxu0
      %v9238 = vadd.f32 %v9160, %v8797
      %v9239 = vadd.f32 %v9165, %v8798
      %v9240 = vadd.f32 %v9170, %v8799
      %v9241 = vadd.f32 %v9175, %v8800
      %v9242 = vadd.f32 %v9180, %v8801
      %v9243 = vadd.f32 %v9185, %v8802
      %v9244 = vadd.f32 %v9190, %v8803
      %v9245 = vadd.f32 %v9195, %v8804
      %v9246 = vadd.f32 %v9200, %v8805
      %v9247 = vadd.f32 %v9205, %v8806
      %v9248 = vadd.f32 %v9210, %v8807
      %v9249 = vadd.f32 %v9215, %v8808
      %v9250 = vadd.f32 %v9220, %v8809
      %v9251 = vadd.f32 %v9225, %v8810
      %v9252 = vadd.f32 %v9230, %v8811
      %v9253 = vadd.f32 %v9235, %v8812
      %v9254 = vsel %vm553, %v9238, 0.0
      %9255 = vadd.xlane.f32.xlu0 %v9254
      %v9256 = vpop.xlane.xlu0 %9255
      %v9257 = vsel %vm553, %v9239, 0.0
      %9258 = vadd.xlane.f32.xlu0 %v9257
      %v9259 = vpop.xlane.xlu0 %9258
      %v9260 = vsel %vm553, %v9240, 0.0
      %9261 = vadd.xlane.f32.xlu0 %v9260
      %v9262 = vpop.xlane.xlu0 %9261
      %v9263 = vsel %vm553, %v9241, 0.0
      %9264 = vadd.xlane.f32.xlu0 %v9263
      %v9265 = vpop.xlane.xlu0 %9264
      %v9266 = vsel %vm553, %v9242, 0.0
      %9267 = vadd.xlane.f32.xlu0 %v9266
      %v9268 = vpop.xlane.xlu0 %9267
      %v9269 = vsel %vm553, %v9243, 0.0
      %9270 = vadd.xlane.f32.xlu0 %v9269
      %v9271 = vpop.xlane.xlu0 %9270
      %v9272 = vsel %vm553, %v9244, 0.0
      %9273 = vadd.xlane.f32.xlu0 %v9272
      %v9274 = vpop.xlane.xlu0 %9273
      %v9275 = vsel %vm553, %v9245, 0.0
      %9276 = vadd.xlane.f32.xlu0 %v9275
      %v9277 = vpop.xlane.xlu0 %9276
      %v9278 = vsel %vm553, %v9246, 0.0
      %9279 = vadd.xlane.f32.xlu0 %v9278
      %v9280 = vpop.xlane.xlu0 %9279
      %v9281 = vsel %vm553, %v9247, 0.0
      %9282 = vadd.xlane.f32.xlu0 %v9281
      %v9283 = vpop.xlane.xlu0 %9282
      %v9284 = vsel %vm553, %v9248, 0.0
      %9285 = vadd.xlane.f32.xlu0 %v9284
      %v9286 = vpop.xlane.xlu0 %9285
      %v9287 = vsel %vm553, %v9249, 0.0
      %9288 = vadd.xlane.f32.xlu0 %v9287
      %v9289 = vpop.xlane.xlu0 %9288
      %v9290 = vsel %vm553, %v9250, 0.0
      %9291 = vadd.xlane.f32.xlu0 %v9290
      %v9292 = vpop.xlane.xlu0 %9291
      %v9293 = vsel %vm553, %v9251, 0.0
      %9294 = vadd.xlane.f32.xlu0 %v9293
      %v9295 = vpop.xlane.xlu0 %9294
      %v9296 = vsel %vm553, %v9252, 0.0
      %9297 = vadd.xlane.f32.xlu0 %v9296
      %v9298 = vpop.xlane.xlu0 %9297
      %v9299 = vsel %vm553, %v9253, 0.0
      %9300 = vadd.xlane.f32.xlu0 %v9299
      %v9301 = vpop.xlane.xlu0 %9300
      %v9302 = vmul.f32 %v9256, %v8612
      %v9303 = vmul.f32 %v9259, %v8612
      %v9304 = vmul.f32 %v9262, %v8612
      %v9305 = vmul.f32 %v9265, %v8612
      %v9306 = vmul.f32 %v9268, %v8612
      %v9307 = vmul.f32 %v9271, %v8612
      %v9308 = vmul.f32 %v9274, %v8612
      %v9309 = vmul.f32 %v9277, %v8612
      %v9310 = vmul.f32 %v9280, %v8612
      %v9311 = vmul.f32 %v9283, %v8612
      %v9312 = vmul.f32 %v9286, %v8612
      %v9313 = vmul.f32 %v9289, %v8612
      %v9314 = vmul.f32 %v9292, %v8612
      %v9315 = vmul.f32 %v9295, %v8612
      %v9316 = vmul.f32 %v9298, %v8612
      %v9317 = vmul.f32 %v9301, %v8612
      %v9318 = vsub.f32 %v9238, %v9302
      %v9319 = vsub.f32 %v9239, %v9303
      %v9320 = vsub.f32 %v9240, %v9304
      %v9321 = vsub.f32 %v9241, %v9305
      %v9322 = vsub.f32 %v9242, %v9306
      %v9323 = vsub.f32 %v9243, %v9307
      %v9324 = vsub.f32 %v9244, %v9308
      %v9325 = vsub.f32 %v9245, %v9309
      %v9326 = vsub.f32 %v9246, %v9310
      %v9327 = vsub.f32 %v9247, %v9311
      %v9328 = vsub.f32 %v9248, %v9312
      %v9329 = vsub.f32 %v9249, %v9313
      %v9330 = vsub.f32 %v9250, %v9314
      %v9331 = vsub.f32 %v9251, %v9315
      %v9332 = vsub.f32 %v9252, %v9316
      %v9333 = vsub.f32 %v9253, %v9317
      %v9334 = vmul.f32 %v9318, %v9318
      %v9335 = vmul.f32 %v9319, %v9319
      %v9336 = vmul.f32 %v9320, %v9320
      %v9337 = vmul.f32 %v9321, %v9321
      %v9338 = vmul.f32 %v9322, %v9322
      %v9339 = vmul.f32 %v9323, %v9323
      %v9340 = vmul.f32 %v9324, %v9324
      %v9341 = vmul.f32 %v9325, %v9325
      %v9342 = vmul.f32 %v9326, %v9326
      %v9343 = vmul.f32 %v9327, %v9327
      %v9344 = vmul.f32 %v9328, %v9328
      %v9345 = vmul.f32 %v9329, %v9329
      %v9346 = vmul.f32 %v9330, %v9330
      %v9347 = vmul.f32 %v9331, %v9331
      %v9348 = vmul.f32 %v9332, %v9332
      %v9349 = vmul.f32 %v9333, %v9333
      %v9350 = vsel %vm553, %v9334, 0.0
      %9351 = vadd.xlane.f32.xlu0 %v9350
      %v9352 = vpop.xlane.xlu0 %9351
      %v9353 = vsel %vm553, %v9335, 0.0
      %9354 = vadd.xlane.f32.xlu0 %v9353
      %v9355 = vpop.xlane.xlu0 %9354
      %v9356 = vsel %vm553, %v9336, 0.0
      %9357 = vadd.xlane.f32.xlu0 %v9356
      %v9358 = vpop.xlane.xlu0 %9357
      %v9359 = vsel %vm553, %v9337, 0.0
      %9360 = vadd.xlane.f32.xlu0 %v9359
      %v9361 = vpop.xlane.xlu0 %9360
      %v9362 = vsel %vm553, %v9338, 0.0
      %9363 = vadd.xlane.f32.xlu0 %v9362
      %v9364 = vpop.xlane.xlu0 %9363
      %v9365 = vsel %vm553, %v9339, 0.0
      %9366 = vadd.xlane.f32.xlu0 %v9365
      %v9367 = vpop.xlane.xlu0 %9366
      %v9368 = vsel %vm553, %v9340, 0.0
      %9369 = vadd.xlane.f32.xlu0 %v9368
      %v9370 = vpop.xlane.xlu0 %9369
      %v9371 = vsel %vm553, %v9341, 0.0
      %9372 = vadd.xlane.f32.xlu0 %v9371
      %v9373 = vpop.xlane.xlu0 %9372
      %v9374 = vsel %vm553, %v9342, 0.0
      %9375 = vadd.xlane.f32.xlu0 %v9374
      %v9376 = vpop.xlane.xlu0 %9375
      %v9377 = vsel %vm553, %v9343, 0.0
      %9378 = vadd.xlane.f32.xlu0 %v9377
      %v9379 = vpop.xlane.xlu0 %9378
      %v9380 = vsel %vm553, %v9344, 0.0
      %9381 = vadd.xlane.f32.xlu0 %v9380
      %v9382 = vpop.xlane.xlu0 %9381
      %v9383 = vsel %vm553, %v9345, 0.0
      %9384 = vadd.xlane.f32.xlu0 %v9383
      %v9385 = vpop.xlane.xlu0 %9384
      %v9386 = vsel %vm553, %v9346, 0.0
      %9387 = vadd.xlane.f32.xlu0 %v9386
      %v9388 = vpop.xlane.xlu0 %9387
      %v9389 = vsel %vm553, %v9347, 0.0
      %9390 = vadd.xlane.f32.xlu0 %v9389
      %v9391 = vpop.xlane.xlu0 %9390
      %v9392 = vsel %vm553, %v9348, 0.0
      %9393 = vadd.xlane.f32.xlu0 %v9392
      %v9394 = vpop.xlane.xlu0 %9393
      %v9395 = vsel %vm553, %v9349, 0.0
      %9396 = vadd.xlane.f32.xlu0 %v9395
      %v9397 = vpop.xlane.xlu0 %9396
      %v9398 = vmul.f32 %v9352, %v8612
      %v9399 = vmul.f32 %v9355, %v8612
      %v9400 = vmul.f32 %v9358, %v8612
      %v9401 = vmul.f32 %v9361, %v8612
      %v9402 = vmul.f32 %v9364, %v8612
      %v9403 = vmul.f32 %v9367, %v8612
      %v9404 = vmul.f32 %v9370, %v8612
      %v9405 = vmul.f32 %v9373, %v8612
      %v9406 = vmul.f32 %v9376, %v8612
      %v9407 = vmul.f32 %v9379, %v8612
      %v9408 = vmul.f32 %v9382, %v8612
      %v9409 = vmul.f32 %v9385, %v8612
      %v9410 = vmul.f32 %v9388, %v8612
      %v9411 = vmul.f32 %v9391, %v8612
      %v9412 = vmul.f32 %v9394, %v8612
      %v9413 = vmul.f32 %v9397, %v8612
      %v9414 = vadd.f32 %v9398, 1e-05
      %v9415 = vadd.f32 %v9399, 1e-05
      %v9416 = vadd.f32 %v9400, 1e-05
      %v9417 = vadd.f32 %v9401, 1e-05
      %v9418 = vadd.f32 %v9402, 1e-05
      %v9419 = vadd.f32 %v9403, 1e-05
      %v9420 = vadd.f32 %v9404, 1e-05
      %v9421 = vadd.f32 %v9405, 1e-05
      %v9422 = vadd.f32 %v9406, 1e-05
      %v9423 = vadd.f32 %v9407, 1e-05
      %v9424 = vadd.f32 %v9408, 1e-05
      %v9425 = vadd.f32 %v9409, 1e-05
      %v9426 = vadd.f32 %v9410, 1e-05
      %v9427 = vadd.f32 %v9411, 1e-05
      %v9428 = vadd.f32 %v9412, 1e-05
      %v9429 = vadd.f32 %v9413, 1e-05
      %v9430 = vrsqrt.pop %v9414
      %v9431 = vrsqrt.pop %v9415
      %v9432 = vrsqrt.pop %v9416
      %v9433 = vrsqrt.pop %v9417
      %v9434 = vrsqrt.pop %v9418
      %v9435 = vrsqrt.pop %v9419
      %v9436 = vrsqrt.pop %v9420
      %v9437 = vrsqrt.pop %v9421
      %v9438 = vrsqrt.pop %v9422
      %v9439 = vrsqrt.pop %v9423
      %v9440 = vrsqrt.pop %v9424
      %v9441 = vrsqrt.pop %v9425
      %v9442 = vrsqrt.pop %v9426
      %v9443 = vrsqrt.pop %v9427
      %v9444 = vrsqrt.pop %v9428
      %v9445 = vrsqrt.pop %v9429
      %v9446 = vmul.f32 %v9318, %v9430
      %v9447 = vmul.f32 %v9319, %v9431
      %v9448 = vmul.f32 %v9320, %v9432
      %v9449 = vmul.f32 %v9321, %v9433
      %v9450 = vmul.f32 %v9322, %v9434
      %v9451 = vmul.f32 %v9323, %v9435
      %v9452 = vmul.f32 %v9324, %v9436
      %v9453 = vmul.f32 %v9325, %v9437
      %v9454 = vmul.f32 %v9326, %v9438
      %v9455 = vmul.f32 %v9327, %v9439
      %v9456 = vmul.f32 %v9328, %v9440
      %v9457 = vmul.f32 %v9329, %v9441
      %v9458 = vmul.f32 %v9330, %v9442
      %v9459 = vmul.f32 %v9331, %v9443
      %v9460 = vmul.f32 %v9332, %v9444
      %v9461 = vmul.f32 %v9333, %v9445
      %v9462 = vlaneseq
      %v9463 = vshrl.u32 %v9462, 7
      %v9464 = vsub.s32 4, %v9463
      %v9465 = vrot.slane %v547, %v9464
      %v9466 = vmul.f32 %v9446, %v9465
      %v9467 = vmul.f32 %v9447, %v9465
      %v9468 = vmul.f32 %v9448, %v9465
      %v9469 = vmul.f32 %v9449, %v9465
      %v9470 = vmul.f32 %v9450, %v9465
      %v9471 = vmul.f32 %v9451, %v9465
      %v9472 = vmul.f32 %v9452, %v9465
      %v9473 = vmul.f32 %v9453, %v9465
      %v9474 = vmul.f32 %v9454, %v9465
      %v9475 = vmul.f32 %v9455, %v9465
      %v9476 = vmul.f32 %v9456, %v9465
      %v9477 = vmul.f32 %v9457, %v9465
      %v9478 = vmul.f32 %v9458, %v9465
      %v9479 = vmul.f32 %v9459, %v9465
      %v9480 = vmul.f32 %v9460, %v9465
      %v9481 = vmul.f32 %v9461, %v9465
      %v9482 = vlaneseq
      %v9483 = vshrl.u32 %v9482, 7
      %v9484 = vsub.s32 5, %v9483
      %v9485 = vrot.slane %v547, %v9484
      %v9486 = vadd.f32 %v9466, %v9485
      %v9487 = vadd.f32 %v9467, %v9485
      %v9488 = vadd.f32 %v9468, %v9485
      %v9489 = vadd.f32 %v9469, %v9485
      %v9490 = vadd.f32 %v9470, %v9485
      %v9491 = vadd.f32 %v9471, %v9485
      %v9492 = vadd.f32 %v9472, %v9485
      %v9493 = vadd.f32 %v9473, %v9485
      %v9494 = vadd.f32 %v9474, %v9485
      %v9495 = vadd.f32 %v9475, %v9485
      %v9496 = vadd.f32 %v9476, %v9485
      %v9497 = vadd.f32 %v9477, %v9485
      %v9498 = vadd.f32 %v9478, %v9485
      %v9499 = vadd.f32 %v9479, %v9485
      %v9500 = vadd.f32 %v9480, %v9485
      %v9501 = vadd.f32 %v9481, %v9485
      %s9502 = scalar_lea.vmem %s5, 128
      %v9503 = vld [vmem:[%s9502] sm:$0xff]
      %v9504 = vld [vmem:[%s9502 + $0x8] sm:$0xff]
      %v9505 = vld [vmem:[%s9502 + $0x10] sm:$0xff]
      %v9506 = vld [vmem:[%s9502 + $0x18] sm:$0xff]
      %v9507 = vlaneseq
      %v9508 = vshrl.u32 %v9507, 7
      %v9509 = vsub.s32 7, %v9508
      %v9510 = vrot.slane %v547, %v9509
      %v9512 = vsel %vm553, %v9486, 0
      %v9515 = vsel %vm553, %v9487, 0
      %v9518 = vsel %vm553, %v9488, 0
      %v9521 = vsel %vm553, %v9489, 0
      %v9524 = vsel %vm553, %v9490, 0
      %v9527 = vsel %vm553, %v9491, 0
      %v9530 = vsel %vm553, %v9492, 0
      %v9533 = vsel %vm553, %v9493, 0
      %v9536 = vsel %vm553, %v9494, 0
      %v9539 = vsel %vm553, %v9495, 0
      %v9542 = vsel %vm553, %v9496, 0
      %v9545 = vsel %vm553, %v9497, 0
      %v9548 = vsel %vm553, %v9498, 0
      %v9551 = vsel %vm553, %v9499, 0
      %v9554 = vsel %vm553, %v9500, 0
      %v9557 = vsel %vm553, %v9501, 0
      %9559 = vmatprep.subr.mxu0 0.0
      %9560 = vmatpush1.msra.mxu0 %v9503
      %9561 = vmatprep.subr.mxu0 0.0
      %9562 = vmatpush1.msra.mxu0 %v9504
      %9563 = vmatprep.subr.mxu0 0.0
      %9564 = vmatpush1.msra.mxu0 %v9505
      %9565 = vmatprep.subr.mxu0 0.0
      %9566 = vmatpush1.msra.mxu0 %v9506
      %9567 = vmatprep.subr.mxu0 0.0
      %9568 = vmatpush1.msra.mxu0 0.0
      %9569 = vmatprep.subr.mxu0 0.0
      %9570 = vmatpush1.msra.mxu0 0.0
      %9571 = vmatprep.subr.mxu0 0.0
      %9572 = vmatpush1.msra.mxu0 0.0
      %9573 = vmatprep.subr.mxu0 0.0
      %9574 = vmatpush1.msra.mxu0 0.0
      %9575 = vmatprep.subr.mxu0 0.0
      %9576 = vmatpush1.msra.mxu0 0.0
      %9577 = vmatprep.subr.mxu0 0.0
      %9578 = vmatpush1.msra.mxu0 0.0
      %9579 = vmatprep.subr.mxu0 0.0
      %9580 = vmatpush1.msra.mxu0 0.0
      %9581 = vmatprep.subr.mxu0 0.0
      %9582 = vmatpush1.msra.mxu0 0.0
      %9583 = vmatprep.subr.mxu0 0.0
      %9584 = vmatpush1.msra.mxu0 0.0
      %9585 = vmatprep.subr.mxu0 0.0
      %9586 = vmatpush1.msra.mxu0 0.0
      %9587 = vmatprep.subr.mxu0 0.0
      %9588 = vmatpush1.msra.mxu0 0.0
      %9589 = vmatprep.subr.mxu0 0.0
      %9590 = vmatpush1.msra.mxu0 0.0
      %9591 = vmatprep.subr.mxu0 0.0
      %9592 = vmatpush1.msra.mxu0 0.0
      %9593 = vmatprep.subr.mxu0 0.0
      %9594 = vmatpush1.msra.mxu0 0.0
      %9595 = vmatprep.subr.mxu0 0.0
      %9596 = vmatpush1.msra.mxu0 0.0
      %9597 = vmatprep.subr.mxu0 0.0
      %9598 = vmatpush1.msra.mxu0 0.0
      %9599 = vmatprep.subr.mxu0 0.0
      %9600 = vmatpush1.msra.mxu0 0.0
      %9601 = vmatprep.subr.mxu0 0.0
      %9602 = vmatpush1.msra.mxu0 0.0
      %9603 = vmatprep.subr.mxu0 0.0
      %9604 = vmatpush1.msra.mxu0 0.0
      %9605 = vmatprep.subr.mxu0 0.0
      %9606 = vmatpush1.msra.mxu0 0.0
      %9607 = vmatprep.subr.mxu0 0.0
      %9608 = vmatpush1.msra.mxu0 0.0
      %9609 = vmatprep.subr.mxu0 0.0
      %9610 = vmatpush1.msra.mxu0 0.0
      %9611 = vmatprep.subr.mxu0 0.0
      %9612 = vmatpush1.msra.mxu0 0.0
      %9613 = vmatprep.subr.mxu0 0.0
      %9614 = vmatpush1.msra.mxu0 0.0
      %9615 = vmatprep.subr.mxu0 0.0
      %9616 = vmatpush1.msra.mxu0 0.0
      %9617 = vmatprep.subr.mxu0 0.0
      %9618 = vmatpush1.msra.mxu0 0.0
      %9619 = vmatprep.subr.mxu0 0.0
      %9620 = vmatpush1.msra.mxu0 0.0
      %9621 = vmatprep.subr.mxu0 0.0
      %9622 = vmatpush1.msra.mxu0 0.0
      %9623 = vmatprep.mubr.f32.mxu0 0.0
      %9624 = vmatmul.mubr.f32.gmra.mrb[0].mxu0 %v9512
      %v9625 = vpop.f32.mrb[0].mxu0
      %v9626 = vadd.f32 %v9510, %v9625
      %v9627 = vpop.f32.mrb[0].mxu0
      %9628 = vmatprep.mubr.f32.mxu0 0.0
      %9629 = vmatmul.mubr.f32.gmra.mrb[0].mxu0 %v9515
      %v9630 = vpop.f32.mrb[0].mxu0
      %v9631 = vadd.f32 %v9510, %v9630
      %v9632 = vpop.f32.mrb[0].mxu0
      %9633 = vmatprep.mubr.f32.mxu0 0.0
      %9634 = vmatmul.mubr.f32.gmra.mrb[0].mxu0 %v9518
      %v9635 = vpop.f32.mrb[0].mxu0
      %v9636 = vadd.f32 %v9510, %v9635
      %v9637 = vpop.f32.mrb[0].mxu0
      %9638 = vmatprep.mubr.f32.mxu0 0.0
      %9639 = vmatmul.mubr.f32.gmra.mrb[0].mxu0 %v9521
      %v9640 = vpop.f32.mrb[0].mxu0
      %v9641 = vadd.f32 %v9510, %v9640
      %v9642 = vpop.f32.mrb[0].mxu0
      %9643 = vmatprep.mubr.f32.mxu0 0.0
      %9644 = vmatmul.mubr.f32.gmra.mrb[0].mxu0 %v9524
      %v9645 = vpop.f32.mrb[0].mxu0
      %v9646 = vadd.f32 %v9510, %v9645
      %v9647 = vpop.f32.mrb[0].mxu0
      %9648 = vmatprep.mubr.f32.mxu0 0.0
      %9649 = vmatmul.mubr.f32.gmra.mrb[0].mxu0 %v9527
      %v9650 = vpop.f32.mrb[0].mxu0
      %v9651 = vadd.f32 %v9510, %v9650
      %v9652 = vpop.f32.mrb[0].mxu0
      %9653 = vmatprep.mubr.f32.mxu0 0.0
      %9654 = vmatmul.mubr.f32.gmra.mrb[0].mxu0 %v9530
      %v9655 = vpop.f32.mrb[0].mxu0
      %v9656 = vadd.f32 %v9510, %v9655
      %v9657 = vpop.f32.mrb[0].mxu0
      %9658 = vmatprep.mubr.f32.mxu0 0.0
      %9659 = vmatmul.mubr.f32.gmra.mrb[0].mxu0 %v9533
      %v9660 = vpop.f32.mrb[0].mxu0
      %v9661 = vadd.f32 %v9510, %v9660
      %v9662 = vpop.f32.mrb[0].mxu0
      %9663 = vmatprep.mubr.f32.mxu0 0.0
      %9664 = vmatmul.mubr.f32.gmra.mrb[0].mxu0 %v9536
      %v9665 = vpop.f32.mrb[0].mxu0
      %v9666 = vadd.f32 %v9510, %v9665
      %v9667 = vpop.f32.mrb[0].mxu0
      %9668 = vmatprep.mubr.f32.mxu0 0.0
      %9669 = vmatmul.mubr.f32.gmra.mrb[0].mxu0 %v9539
      %v9670 = vpop.f32.mrb[0].mxu0
      %v9671 = vadd.f32 %v9510, %v9670
      %v9672 = vpop.f32.mrb[0].mxu0
      %9673 = vmatprep.mubr.f32.mxu0 0.0
      %9674 = vmatmul.mubr.f32.gmra.mrb[0].mxu0 %v9542
      %v9675 = vpop.f32.mrb[0].mxu0
      %v9676 = vadd.f32 %v9510, %v9675
      %v9677 = vpop.f32.mrb[0].mxu0
      %9678 = vmatprep.mubr.f32.mxu0 0.0
      %9679 = vmatmul.mubr.f32.gmra.mrb[0].mxu0 %v9545
      %v9680 = vpop.f32.mrb[0].mxu0
      %v9681 = vadd.f32 %v9510, %v9680
      %v9682 = vpop.f32.mrb[0].mxu0
      %9683 = vmatprep.mubr.f32.mxu0 0.0
      %9684 = vmatmul.mubr.f32.gmra.mrb[0].mxu0 %v9548
      %v9685 = vpop.f32.mrb[0].mxu0
      %v9686 = vadd.f32 %v9510, %v9685
      %v9687 = vpop.f32.mrb[0].mxu0
      %9688 = vmatprep.mubr.f32.mxu0 0.0
      %9689 = vmatmul.mubr.f32.gmra.mrb[0].mxu0 %v9551
      %v9690 = vpop.f32.mrb[0].mxu0
      %v9691 = vadd.f32 %v9510, %v9690
      %v9692 = vpop.f32.mrb[0].mxu0
      %9693 = vmatprep.mubr.f32.mxu0 0.0
      %9694 = vmatmul.mubr.f32.gmra.mrb[0].mxu0 %v9554
      %v9695 = vpop.f32.mrb[0].mxu0
      %v9696 = vadd.f32 %v9510, %v9695
      %v9697 = vpop.f32.mrb[0].mxu0
      %9698 = vmatprep.mubr.f32.mxu0 0.0
      %9699 = vmatmul.mubr.f32.gmra.mrb[0].mxu0 %v9557
      %v9700 = vpop.f32.mrb[0].mxu0
      %v9701 = vadd.f32 %v9510, %v9700
      %v9702 = vpop.f32.mrb[0].mxu0
      %9703 = vdwg.mxu0
      %s9704 = scalar_lea.vmem %s5, 160
      %v9705 = vld [vmem:[%s9704] sm:$0xff]
      %v9706 = vld [vmem:[%s9704 + $0x8] sm:$0xff]
      %v9707 = vld [vmem:[%s9704 + $0x10] sm:$0xff]
      %v9708 = vld [vmem:[%s9704 + $0x18] sm:$0xff]
      %v9709 = vlaneseq
      %v9710 = vshrl.u32 %v9709, 7
      %v9711 = vsub.s32 0, %v9710
      %v9712 = vrot.slane %v548, %v9711
      %v9714 = vsel %vm553, %v1442, 0
      %v9717 = vsel %vm553, %v1443, 0
      %v9720 = vsel %vm553, %v1444, 0
      %v9723 = vsel %vm553, %v1445, 0
      %v9726 = vsel %vm553, %v1446, 0
      %v9729 = vsel %vm553, %v1447, 0
      %v9732 = vsel %vm553, %v1448, 0
      %v9735 = vsel %vm553, %v1449, 0
      %v9738 = vsel %vm553, %v1450, 0
      %v9741 = vsel %vm553, %v1451, 0
      %v9744 = vsel %vm553, %v1452, 0
      %v9747 = vsel %vm553, %v1453, 0
      %v9750 = vsel %vm553, %v1454, 0
      %v9753 = vsel %vm553, %v1455, 0
      %v9756 = vsel %vm553, %v1456, 0
      %v9759 = vsel %vm553, %v1457, 0
      %9761 = vmatprep.subr.mxu0 0.0
      %9762 = vmatpush1.msra.mxu0 %v9705
      %9763 = vmatprep.subr.mxu0 0.0
      %9764 = vmatpush1.msra.mxu0 %v9706
      %9765 = vmatprep.subr.mxu0 0.0
      %9766 = vmatpush1.msra.mxu0 %v9707
      %9767 = vmatprep.subr.mxu0 0.0
      %9768 = vmatpush1.msra.mxu0 %v9708
      %9769 = vmatprep.subr.mxu0 0.0
      %9770 = vmatpush1.msra.mxu0 0.0
      %9771 = vmatprep.subr.mxu0 0.0
      %9772 = vmatpush1.msra.mxu0 0.0
      %9773 = vmatprep.subr.mxu0 0.0
      %9774 = vmatpush1.msra.mxu0 0.0
      %9775 = vmatprep.subr.mxu0 0.0
      %9776 = vmatpush1.msra.mxu0 0.0
      %9777 = vmatprep.subr.mxu0 0.0
      %9778 = vmatpush1.msra.mxu0 0.0
      %9779 = vmatprep.subr.mxu0 0.0
      %9780 = vmatpush1.msra.mxu0 0.0
      %9781 = vmatprep.subr.mxu0 0.0
      %9782 = vmatpush1.msra.mxu0 0.0
      %9783 = vmatprep.subr.mxu0 0.0
      %9784 = vmatpush1.msra.mxu0 0.0
      %9785 = vmatprep.subr.mxu0 0.0
      %9786 = vmatpush1.msra.mxu0 0.0
      %9787 = vmatprep.subr.mxu0 0.0
      %9788 = vmatpush1.msra.mxu0 0.0
      %9789 = vmatprep.subr.mxu0 0.0
      %9790 = vmatpush1.msra.mxu0 0.0
      %9791 = vmatprep.subr.mxu0 0.0
      %9792 = vmatpush1.msra.mxu0 0.0
      %9793 = vmatprep.subr.mxu0 0.0
      %9794 = vmatpush1.msra.mxu0 0.0
      %9795 = vmatprep.subr.mxu0 0.0
      %9796 = vmatpush1.msra.mxu0 0.0
      %9797 = vmatprep.subr.mxu0 0.0
      %9798 = vmatpush1.msra.mxu0 0.0
      %9799 = vmatprep.subr.mxu0 0.0
      %9800 = vmatpush1.msra.mxu0 0.0
      %9801 = vmatprep.subr.mxu0 0.0
      %9802 = vmatpush1.msra.mxu0 0.0
      %9803 = vmatprep.subr.mxu0 0.0
      %9804 = vmatpush1.msra.mxu0 0.0
      %9805 = vmatprep.subr.mxu0 0.0
      %9806 = vmatpush1.msra.mxu0 0.0
      %9807 = vmatprep.subr.mxu0 0.0
      %9808 = vmatpush1.msra.mxu0 0.0
      %9809 = vmatprep.subr.mxu0 0.0
      %9810 = vmatpush1.msra.mxu0 0.0
      %9811 = vmatprep.subr.mxu0 0.0
      %9812 = vmatpush1.msra.mxu0 0.0
      %9813 = vmatprep.subr.mxu0 0.0
      %9814 = vmatpush1.msra.mxu0 0.0
      %9815 = vmatprep.subr.mxu0 0.0
      %9816 = vmatpush1.msra.mxu0 0.0
      %9817 = vmatprep.subr.mxu0 0.0
      %9818 = vmatpush1.msra.mxu0 0.0
      %9819 = vmatprep.subr.mxu0 0.0
      %9820 = vmatpush1.msra.mxu0 0.0
      %9821 = vmatprep.subr.mxu0 0.0
      %9822 = vmatpush1.msra.mxu0 0.0
      %9823 = vmatprep.subr.mxu0 0.0
      %9824 = vmatpush1.msra.mxu0 0.0
      %9825 = vmatprep.mubr.f32.mxu0 0.0
      %9826 = vmatmul.mubr.f32.gmra.mrb[0].mxu0 %v9714
      %v9827 = vpop.f32.mrb[0].mxu0
      %v9828 = vadd.f32 %v9712, %v9827
      %v9829 = vpop.f32.mrb[0].mxu0
      %9830 = vmatprep.mubr.f32.mxu0 0.0
      %9831 = vmatmul.mubr.f32.gmra.mrb[0].mxu0 %v9717
      %v9832 = vpop.f32.mrb[0].mxu0
      %v9833 = vadd.f32 %v9712, %v9832
      %v9834 = vpop.f32.mrb[0].mxu0
      %9835 = vmatprep.mubr.f32.mxu0 0.0
      %9836 = vmatmul.mubr.f32.gmra.mrb[0].mxu0 %v9720
      %v9837 = vpop.f32.mrb[0].mxu0
      %v9838 = vadd.f32 %v9712, %v9837
      %v9839 = vpop.f32.mrb[0].mxu0
      %9840 = vmatprep.mubr.f32.mxu0 0.0
      %9841 = vmatmul.mubr.f32.gmra.mrb[0].mxu0 %v9723
      %v9842 = vpop.f32.mrb[0].mxu0
      %v9843 = vadd.f32 %v9712, %v9842
      %v9844 = vpop.f32.mrb[0].mxu0
      %9845 = vmatprep.mubr.f32.mxu0 0.0
      %9846 = vmatmul.mubr.f32.gmra.mrb[0].mxu0 %v9726
      %v9847 = vpop.f32.mrb[0].mxu0
      %v9848 = vadd.f32 %v9712, %v9847
      %v9849 = vpop.f32.mrb[0].mxu0
      %9850 = vmatprep.mubr.f32.mxu0 0.0
      %9851 = vmatmul.mubr.f32.gmra.mrb[0].mxu0 %v9729
      %v9852 = vpop.f32.mrb[0].mxu0
      %v9853 = vadd.f32 %v9712, %v9852
      %v9854 = vpop.f32.mrb[0].mxu0
      %9855 = vmatprep.mubr.f32.mxu0 0.0
      %9856 = vmatmul.mubr.f32.gmra.mrb[0].mxu0 %v9732
      %v9857 = vpop.f32.mrb[0].mxu0
      %v9858 = vadd.f32 %v9712, %v9857
      %v9859 = vpop.f32.mrb[0].mxu0
      %9860 = vmatprep.mubr.f32.mxu0 0.0
      %9861 = vmatmul.mubr.f32.gmra.mrb[0].mxu0 %v9735
      %v9862 = vpop.f32.mrb[0].mxu0
      %v9863 = vadd.f32 %v9712, %v9862
      %v9864 = vpop.f32.mrb[0].mxu0
      %9865 = vmatprep.mubr.f32.mxu0 0.0
      %9866 = vmatmul.mubr.f32.gmra.mrb[0].mxu0 %v9738
      %v9867 = vpop.f32.mrb[0].mxu0
      %v9868 = vadd.f32 %v9712, %v9867
      %v9869 = vpop.f32.mrb[0].mxu0
      %9870 = vmatprep.mubr.f32.mxu0 0.0
      %9871 = vmatmul.mubr.f32.gmra.mrb[0].mxu0 %v9741
      %v9872 = vpop.f32.mrb[0].mxu0
      %v9873 = vadd.f32 %v9712, %v9872
      %v9874 = vpop.f32.mrb[0].mxu0
      %9875 = vmatprep.mubr.f32.mxu0 0.0
      %9876 = vmatmul.mubr.f32.gmra.mrb[0].mxu0 %v9744
      %v9877 = vpop.f32.mrb[0].mxu0
      %v9878 = vadd.f32 %v9712, %v9877
      %v9879 = vpop.f32.mrb[0].mxu0
      %9880 = vmatprep.mubr.f32.mxu0 0.0
      %9881 = vmatmul.mubr.f32.gmra.mrb[0].mxu0 %v9747
      %v9882 = vpop.f32.mrb[0].mxu0
      %v9883 = vadd.f32 %v9712, %v9882
      %v9884 = vpop.f32.mrb[0].mxu0
      %9885 = vmatprep.mubr.f32.mxu0 0.0
      %9886 = vmatmul.mubr.f32.gmra.mrb[0].mxu0 %v9750
      %v9887 = vpop.f32.mrb[0].mxu0
      %v9888 = vadd.f32 %v9712, %v9887
      %v9889 = vpop.f32.mrb[0].mxu0
      %9890 = vmatprep.mubr.f32.mxu0 0.0
      %9891 = vmatmul.mubr.f32.gmra.mrb[0].mxu0 %v9753
      %v9892 = vpop.f32.mrb[0].mxu0
      %v9893 = vadd.f32 %v9712, %v9892
      %v9894 = vpop.f32.mrb[0].mxu0
      %9895 = vmatprep.mubr.f32.mxu0 0.0
      %9896 = vmatmul.mubr.f32.gmra.mrb[0].mxu0 %v9756
      %v9897 = vpop.f32.mrb[0].mxu0
      %v9898 = vadd.f32 %v9712, %v9897
      %v9899 = vpop.f32.mrb[0].mxu0
      %9900 = vmatprep.mubr.f32.mxu0 0.0
      %9901 = vmatmul.mubr.f32.gmra.mrb[0].mxu0 %v9759
      %v9902 = vpop.f32.mrb[0].mxu0
      %v9903 = vadd.f32 %v9712, %v9902
      %v9904 = vpop.f32.mrb[0].mxu0
      %9905 = vdwg.mxu0
      %v9906 = vadd.f32 %v9626, %v9828
      %v9907 = vadd.f32 %v9631, %v9833
      %v9908 = vadd.f32 %v9636, %v9838
      %v9909 = vadd.f32 %v9641, %v9843
      %v9910 = vadd.f32 %v9646, %v9848
      %v9911 = vadd.f32 %v9651, %v9853
      %v9912 = vadd.f32 %v9656, %v9858
      %v9913 = vadd.f32 %v9661, %v9863
      %v9914 = vadd.f32 %v9666, %v9868
      %v9915 = vadd.f32 %v9671, %v9873
      %v9916 = vadd.f32 %v9676, %v9878
      %v9917 = vadd.f32 %v9681, %v9883
      %v9918 = vadd.f32 %v9686, %v9888
      %v9919 = vadd.f32 %v9691, %v9893
      %v9920 = vadd.f32 %v9696, %v9898
      %v9921 = vadd.f32 %v9701, %v9903
      %v9922 = vxor.u32 %v9906, 2147483648
      %v9923 = vxor.u32 %v9907, 2147483648
      %v9924 = vxor.u32 %v9908, 2147483648
      %v9925 = vxor.u32 %v9909, 2147483648
      %v9926 = vxor.u32 %v9910, 2147483648
      %v9927 = vxor.u32 %v9911, 2147483648
      %v9928 = vxor.u32 %v9912, 2147483648
      %v9929 = vxor.u32 %v9913, 2147483648
      %v9930 = vxor.u32 %v9914, 2147483648
      %v9931 = vxor.u32 %v9915, 2147483648
      %v9932 = vxor.u32 %v9916, 2147483648
      %v9933 = vxor.u32 %v9917, 2147483648
      %v9934 = vxor.u32 %v9918, 2147483648
      %v9935 = vxor.u32 %v9919, 2147483648
      %v9936 = vxor.u32 %v9920, 2147483648
      %v9937 = vxor.u32 %v9921, 2147483648
      %v9938 = vmul.f32 %v9922, 1.442695
      %v9939 = vpow.pop %v9938
      %v9940 = vmul.f32 %v9923, 1.442695
      %v9941 = vpow.pop %v9940
      %v9942 = vmul.f32 %v9924, 1.442695
      %v9943 = vpow.pop %v9942
      %v9944 = vmul.f32 %v9925, 1.442695
      %v9945 = vpow.pop %v9944
      %v9946 = vmul.f32 %v9926, 1.442695
      %v9947 = vpow.pop %v9946
      %v9948 = vmul.f32 %v9927, 1.442695
      %v9949 = vpow.pop %v9948
      %v9950 = vmul.f32 %v9928, 1.442695
      %v9951 = vpow.pop %v9950
      %v9952 = vmul.f32 %v9929, 1.442695
      %v9953 = vpow.pop %v9952
      %v9954 = vmul.f32 %v9930, 1.442695
      %v9955 = vpow.pop %v9954
      %v9956 = vmul.f32 %v9931, 1.442695
      %v9957 = vpow.pop %v9956
      %v9958 = vmul.f32 %v9932, 1.442695
      %v9959 = vpow.pop %v9958
      %v9960 = vmul.f32 %v9933, 1.442695
      %v9961 = vpow.pop %v9960
      %v9962 = vmul.f32 %v9934, 1.442695
      %v9963 = vpow.pop %v9962
      %v9964 = vmul.f32 %v9935, 1.442695
      %v9965 = vpow.pop %v9964
      %v9966 = vmul.f32 %v9936, 1.442695
      %v9967 = vpow.pop %v9966
      %v9968 = vmul.f32 %v9937, 1.442695
      %v9969 = vpow.pop %v9968
      %v9970 = vadd.f32 %v9939, 1.0
      %v9971 = vadd.f32 %v9941, 1.0
      %v9972 = vadd.f32 %v9943, 1.0
      %v9973 = vadd.f32 %v9945, 1.0
      %v9974 = vadd.f32 %v9947, 1.0
      %v9975 = vadd.f32 %v9949, 1.0
      %v9976 = vadd.f32 %v9951, 1.0
      %v9977 = vadd.f32 %v9953, 1.0
      %v9978 = vadd.f32 %v9955, 1.0
      %v9979 = vadd.f32 %v9957, 1.0
      %v9980 = vadd.f32 %v9959, 1.0
      %v9981 = vadd.f32 %v9961, 1.0
      %v9982 = vadd.f32 %v9963, 1.0
      %v9983 = vadd.f32 %v9965, 1.0
      %v9984 = vadd.f32 %v9967, 1.0
      %v9985 = vadd.f32 %v9969, 1.0
      %v9986 = vrcp.pop %v9970
      %v9987 = vmul.f32 1.0, %v9986
      %v9988 = vrcp.pop %v9971
      %v9989 = vmul.f32 1.0, %v9988
      %v9990 = vrcp.pop %v9972
      %v9991 = vmul.f32 1.0, %v9990
      %v9992 = vrcp.pop %v9973
      %v9993 = vmul.f32 1.0, %v9992
      %v9994 = vrcp.pop %v9974
      %v9995 = vmul.f32 1.0, %v9994
      %v9996 = vrcp.pop %v9975
      %v9997 = vmul.f32 1.0, %v9996
      %v9998 = vrcp.pop %v9976
      %v9999 = vmul.f32 1.0, %v9998
      %v10000 = vrcp.pop %v9977
      %v10001 = vmul.f32 1.0, %v10000
      %v10002 = vrcp.pop %v9978
      %v10003 = vmul.f32 1.0, %v10002
      %v10004 = vrcp.pop %v9979
      %v10005 = vmul.f32 1.0, %v10004
      %v10006 = vrcp.pop %v9980
      %v10007 = vmul.f32 1.0, %v10006
      %v10008 = vrcp.pop %v9981
      %v10009 = vmul.f32 1.0, %v10008
      %v10010 = vrcp.pop %v9982
      %v10011 = vmul.f32 1.0, %v10010
      %v10012 = vrcp.pop %v9983
      %v10013 = vmul.f32 1.0, %v10012
      %v10014 = vrcp.pop %v9984
      %v10015 = vmul.f32 1.0, %v10014
      %v10016 = vrcp.pop %v9985
      %v10017 = vmul.f32 1.0, %v10016
      %v10018 = vmul.f32 %v9987, %v9486
      %v10019 = vmul.f32 %v9989, %v9487
      %v10020 = vmul.f32 %v9991, %v9488
      %v10021 = vmul.f32 %v9993, %v9489
      %v10022 = vmul.f32 %v9995, %v9490
      %v10023 = vmul.f32 %v9997, %v9491
      %v10024 = vmul.f32 %v9999, %v9492
      %v10025 = vmul.f32 %v10001, %v9493
      %v10026 = vmul.f32 %v10003, %v9494
      %v10027 = vmul.f32 %v10005, %v9495
      %v10028 = vmul.f32 %v10007, %v9496
      %v10029 = vmul.f32 %v10009, %v9497
      %v10030 = vmul.f32 %v10011, %v9498
      %v10031 = vmul.f32 %v10013, %v9499
      %v10032 = vmul.f32 %v10015, %v9500
      %v10033 = vmul.f32 %v10017, %v9501
      %v10034 = vsub.f32 1.0, %v9987
      %v10035 = vsub.f32 1.0, %v9989
      %v10036 = vsub.f32 1.0, %v9991
      %v10037 = vsub.f32 1.0, %v9993
      %v10038 = vsub.f32 1.0, %v9995
      %v10039 = vsub.f32 1.0, %v9997
      %v10040 = vsub.f32 1.0, %v9999
      %v10041 = vsub.f32 1.0, %v10001
      %v10042 = vsub.f32 1.0, %v10003
      %v10043 = vsub.f32 1.0, %v10005
      %v10044 = vsub.f32 1.0, %v10007
      %v10045 = vsub.f32 1.0, %v10009
      %v10046 = vsub.f32 1.0, %v10011
      %v10047 = vsub.f32 1.0, %v10013
      %v10048 = vsub.f32 1.0, %v10015
      %v10049 = vsub.f32 1.0, %v10017
      %v10050 = vmul.f32 %v10034, %v1442
      %v10051 = vmul.f32 %v10035, %v1443
      %v10052 = vmul.f32 %v10036, %v1444
      %v10053 = vmul.f32 %v10037, %v1445
      %v10054 = vmul.f32 %v10038, %v1446
      %v10055 = vmul.f32 %v10039, %v1447
      %v10056 = vmul.f32 %v10040, %v1448
      %v10057 = vmul.f32 %v10041, %v1449
      %v10058 = vmul.f32 %v10042, %v1450
      %v10059 = vmul.f32 %v10043, %v1451
      %v10060 = vmul.f32 %v10044, %v1452
      %v10061 = vmul.f32 %v10045, %v1453
      %v10062 = vmul.f32 %v10046, %v1454
      %v10063 = vmul.f32 %v10047, %v1455
      %v10064 = vmul.f32 %v10048, %v1456
      %v10065 = vmul.f32 %v10049, %v1457
      %v10066 = vadd.f32 %v10018, %v10050
      %v10067 = vadd.f32 %v10019, %v10051
      %v10068 = vadd.f32 %v10020, %v10052
      %v10069 = vadd.f32 %v10021, %v10053
      %v10070 = vadd.f32 %v10022, %v10054
      %v10071 = vadd.f32 %v10023, %v10055
      %v10072 = vadd.f32 %v10024, %v10056
      %v10073 = vadd.f32 %v10025, %v10057
      %v10074 = vadd.f32 %v10026, %v10058
      %v10075 = vadd.f32 %v10027, %v10059
      %v10076 = vadd.f32 %v10028, %v10060
      %v10077 = vadd.f32 %v10029, %v10061
      %v10078 = vadd.f32 %v10030, %v10062
      %v10079 = vadd.f32 %v10031, %v10063
      %v10080 = vadd.f32 %v10032, %v10064
      %v10081 = vadd.f32 %v10033, %v10065
      %10082 = vst.msk [vmem:[%s480] sm:$0xff] %vm553, %v10066
      %10083 = vst.msk [vmem:[%s480 + $0x8] sm:$0xff] %vm553, %v10067
      %10084 = vst.msk [vmem:[%s480 + $0x10] sm:$0xff] %vm553, %v10068
      %10085 = vst.msk [vmem:[%s480 + $0x18] sm:$0xff] %vm553, %v10069
      %10086 = vst.msk [vmem:[%s480 + $0x20] sm:$0xff] %vm553, %v10070
      %10087 = vst.msk [vmem:[%s480 + $0x28] sm:$0xff] %vm553, %v10071
      %10088 = vst.msk [vmem:[%s480 + $0x30] sm:$0xff] %vm553, %v10072
      %10089 = vst.msk [vmem:[%s480 + $0x38] sm:$0xff] %vm553, %v10073
      %10090 = vst.msk [vmem:[%s480 + $0x40] sm:$0xff] %vm553, %v10074
      %10091 = vst.msk [vmem:[%s480 + $0x48] sm:$0xff] %vm553, %v10075
      %10092 = vst.msk [vmem:[%s480 + $0x50] sm:$0xff] %vm553, %v10076
      %10093 = vst.msk [vmem:[%s480 + $0x58] sm:$0xff] %vm553, %v10077
      %10094 = vst.msk [vmem:[%s480 + $0x60] sm:$0xff] %vm553, %v10078
      %10095 = vst.msk [vmem:[%s480 + $0x68] sm:$0xff] %vm553, %v10079
      %10096 = vst.msk [vmem:[%s480 + $0x70] sm:$0xff] %vm553, %v10080
      %10097 = vst.msk [vmem:[%s480 + $0x78] sm:$0xff] %vm553, %v10081
      %p10098 = scmp.lt.s32.totalorder %s24, 1
      %s10099 = scalar_select %p10098, %s24, 1
      %s10100 = smul.addr %s10099, 16
      %s10101 = smul.addr %s10100, 8
      %s10102 = scalar_lea.vmem %s13, %s10101
      // Predicated region
      $region73: #{tpu_custom_call.1} parent=71 // pred_check
        %p10103 = pneg %p330
      $region74: #{tpu_custom_call.1} parent=71 // pred_check_branch
        %10105 = sbr.rel (%p10103) target = $region76
      $region75: #{tpu_custom_call.1} parent=71 // pred_region
        _
      $region76: #{tpu_custom_call.1} parent=71 // pred_fallthru
        _
    $region72: #{tpu_custom_call.1} parent=5 // pred_fallthru
      _
    %p10106 = scmp.le.s32.totalorder 2, %s19
    // Predicated region
    $region77: #{tpu_custom_call.1} parent=5 // pred_check
      %p10107 = pneg %p10106
    $region78: #{tpu_custom_call.1} parent=5 // pred_check_branch
      %10109 = sbr.rel (%p10107) target = $region80
    $region79: #{tpu_custom_call.1} parent=5 // pred_region
      %s10110 = ssub.s32 %s19, 2
      // Predicated region
      $region81: #{tpu_custom_call.1} parent=79 // pred_check
        %p10111 = pneg %p336
      $region82: #{tpu_custom_call.1} parent=79 // pred_check_branch
        %10113 = sbr.rel (%p10111) target = $region84
      $region83: #{tpu_custom_call.1} parent=79 // pred_region
        %p10114 = scmp.lt.s32.totalorder %s25, 1
        %s10115 = scalar_select %p10114, %s25, 1
        %s10116 = smul.addr %s10115, 16
        %s10117 = smul.addr %s10116, 8
        %s10118 = scalar_lea.vmem %s13, %s10117
      $region84: #{tpu_custom_call.1} parent=79 // pred_fallthru
        _
    $region80: #{tpu_custom_call.1} parent=5 // pred_fallthru
      _
  $region6: #{tpu_custom_call.1} parent=0 // loop_footer
    %s23 = sadd.s32 1, %s19
  $region7: #{tpu_custom_call.1} parent=0 // loop_footer_branch
    %18 = sbr.rel target = $region3
  $region8: #{tpu_custom_call.1} parent=0 // loop_exit
    _

</llo_original>
